<compile_context>
chip_gen: v7x
topology: tpu7x:2x2x1
jax: 0.10.0
libtpu: 0.0.40
codegen_flags: <defaults>
</compile_context>

<pallas_src>
import functools
import math

import jax
import jax.numpy as jnp
from jax.experimental import pallas as pl
from jax.experimental.pallas import tpu as pltpu


# ----------------------------- tile-size helpers -----------------------------


def _sub_tile(m, target=256):
    """Row (sublane) tile: <= target, multiple of 16 (bf16 safe) or 8, else full."""
    if m <= target:
        return m
    for align in (16, 8):
        t = (target // align) * align
        while t >= align:
            if m % t == 0:
                return t
            t -= align
    return m


def _lane_tile(n, target=512):
    """Lane tile: <= target, multiple of 128, else full."""
    if n <= target:
        return n
    t = (target // 128) * 128
    while t >= 128:
        if n % t == 0:
            return t
        t -= 128
    return n


# ----------------------------- Pallas kernels --------------------------------


def _proj_kernel(*refs, n_out, do_norm, activation, eps):
    """Optional Norm (torch.std semantics) fused into 1..3 linear projections."""
    idx = 0
    x_ref = refs[idx]; idx += 1
    if do_norm:
        a_ref, bn_ref = refs[idx], refs[idx + 1]; idx += 2
    wb_refs = refs[idx: idx + 2 * n_out]; idx += 2 * n_out
    out_refs = refs[idx: idx + n_out]

    x = x_ref[...].astype(jnp.float32)
    if do_norm:
        d = x.shape[-1]
        mean = jnp.mean(x, axis=-1, keepdims=True)
        diff = x - mean
        var = jnp.sum(diff * diff, axis=-1, keepdims=True) / (d - 1)
        x = a_ref[...] * diff / (jnp.sqrt(var) + eps) + bn_ref[...]
    xb = x.astype(jnp.bfloat16)

    for t in range(n_out):
        w_ref, b_ref = wb_refs[2 * t], wb_refs[2 * t + 1]
        y = jnp.dot(xb, w_ref[...].astype(jnp.bfloat16),
                    preferred_element_type=jnp.float32) + b_ref[...]
        if activation == "relu":
            y = jnp.maximum(y, 0.0)
        elif activation == "swish":
            y = y * jax.nn.sigmoid(y)
        out_refs[t][...] = y.astype(out_refs[t].dtype)


def _linear_kernel(*refs, has_add):
    """M/N/K-tiled matmul, bf16 operands, f32 accumulator, optional fused add."""
    if has_add:
        x_ref, w_ref, b_ref, add_ref, o_ref, acc_ref = refs
    else:
        x_ref, w_ref, b_ref, o_ref, acc_ref = refs
        add_ref = None
    k = pl.program_id(2)

    @pl.when(k == 0)
    def _():
        acc_ref[...] = jnp.zeros_like(acc_ref)

    acc_ref[...] += jnp.dot(x_ref[...].astype(jnp.bfloat16),
                            w_ref[...].astype(jnp.bfloat16),
                            preferred_element_type=jnp.float32)

    @pl.when(k == pl.num_programs(2) - 1)
    def _():
        y = acc_ref[...] + b_ref[...]
        if add_ref is not None:
            y = y + add_ref[...].astype(jnp.float32)
        o_ref[...] = y.astype(o_ref.dtype)


def _flash_attn_kernel(q_ref, k_ref, v_ref, m_ref, o_ref, m_sc, l_sc, acc_sc,
                       *, heads, scale):
    """All heads of one batch, Tk-blocked online softmax (mask == 0 -> -1e9)."""
    kv = pl.program_id(2)
    dk = q_ref.shape[-1] // heads

    @pl.when(kv == 0)
    def _():
        m_sc[...] = jnp.full_like(m_sc, -jnp.inf)
        l_sc[...] = jnp.zeros_like(l_sc)
        acc_sc[...] = jnp.zeros_like(acc_sc)

    mask = m_ref[0]                                    # (1 or tq, tk) f32

    for h in range(heads):                             # heads is small & static
        lo, hi = h * dk, (h + 1) * dk
        q_h = q_ref[0, :, lo:hi]                       # (tq, dk) bf16
        k_h = k_ref[0, :, lo:hi]                       # (tk, dk) bf16
        v_h = v_ref[0, :, lo:hi]                       # (tk, dk) bf16
        s = jax.lax.dot_general(q_h, k_h, (((1,), (1,)), ((), ())),
                                preferred_element_type=jnp.float32) * scale
        s = jnp.where(mask == 0, -1e9, s)              # (tq, tk) f32
        m_prev = m_sc[h]                               # (tq, 1)
        m_new = jnp.maximum(m_prev, jnp.max(s, axis=-1, keepdims=True))
        alpha = jnp.exp(m_prev - m_new)
        p = jnp.exp(s - m_new)
        l_sc[h] = alpha * l_sc[h] + jnp.sum(p, axis=-1, keepdims=True)
        acc_sc[h] = alpha * acc_sc[h] + jnp.dot(p.astype(jnp.bfloat16), v_h,
                                                preferred_element_type=jnp.float32)
        m_sc[h] = m_new

    @pl.when(kv == pl.num_programs(2) - 1)
    def _():
        for h in range(heads):
            lo, hi = h * dk, (h + 1) * dk
            inv = pl.reciprocal(l_sc[h], approx=True)
            o_ref[0, :, lo:hi] = (acc_sc[h] * inv).astype(o_ref.dtype)


def _ffn_kernel(x_ref, a_ref, bn_ref, w1_ref, b1_ref, w2_ref, b2_ref, o_ref,
                xn_sc, acc_sc, *, eps):
    """Norm + W1 + swish + W2 + residual, d_ff tiled on the grid's second axis."""
    f = pl.program_id(1)

    @pl.when(f == 0)
    def _():
        x = x_ref[...].astype(jnp.float32)
        d = x.shape[-1]
        mean = jnp.mean(x, axis=-1, keepdims=True)
        diff = x - mean
        var = jnp.sum(diff * diff, axis=-1, keepdims=True) / (d - 1)
        xn = a_ref[...] * diff / (jnp.sqrt(var) + eps) + bn_ref[...]
        xn_sc[...] = xn.astype(jnp.bfloat16)
        acc_sc[...] = jnp.zeros_like(acc_sc)

    h = jnp.dot(xn_sc[...], w1_ref[...].astype(jnp.bfloat16),
                preferred_element_type=jnp.float32) + b1_ref[...]
    h = h * jax.nn.sigmoid(h)                          # swish, kept in f32
    acc_sc[...] += jnp.dot(h.astype(jnp.bfloat16), w2_ref[...].astype(jnp.bfloat16),
                           preferred_element_type=jnp.float32)

    @pl.when(f == pl.num_programs(1) - 1)
    def _():
        o_ref[...] = (acc_sc[...] + b2_ref[...] + x_ref[...]).astype(o_ref.dtype)


def _norm_mask_kernel(x_ref, a_ref, b_ref, m_ref, o_ref, *, eps):
    """Norm (torch.std semantics) + masked_fill(mask == 0, 0) fused."""
    x = x_ref[...]
    d = x.shape[-1]
    mean = jnp.mean(x, axis=-1, keepdims=True)
    diff = x - mean
    var = jnp.sum(diff * diff, axis=-1, keepdims=True) / (d - 1)
    y = a_ref[...] * diff / (jnp.sqrt(var) + eps) + b_ref[...]
    o_ref[...] = jnp.where(m_ref[...] == 0, 0.0, y)


def _sepconv_kernel(*refs, activation, has_add):
    """Depthwise causal conv (taps unrolled) + pointwise 1x1 matmul (+relu/+add)."""
    if has_add:
        x_ref, dww_ref, dwb_ref, pww_ref, pwb_ref, add_ref, o_ref = refs
    else:
        x_ref, dww_ref, dwb_ref, pww_ref, pwb_ref, o_ref = refs
        add_ref = None
    K = dww_ref.shape[0]
    T = o_ref.shape[1]

    x = x_ref[0]                                       # (T+K-1, Cin) f32
    acc = x[0:T, :] * dww_ref[0:1, :]
    for kk in range(1, K):                             # K in {7, 11}, fully unrolled
        acc = acc + x[kk:kk + T, :] * dww_ref[kk:kk + 1, :]
    acc = acc + dwb_ref[...]

    y = jnp.dot(acc.astype(jnp.bfloat16), pww_ref[...].astype(jnp.bfloat16),
                preferred_element_type=jnp.float32) + pwb_ref[...]
    if activation == "relu":
        y = jnp.maximum(y, 0.0)
    if add_ref is not None:
        y = y + add_ref[0]
    o_ref[0] = y.astype(o_ref.dtype)


# ------------------------------ kernel wrappers -------------------------------


def proj(x2d, norm_p, weight_biases, activation="none",
         out_dtype=jnp.bfloat16, eps=1e-6):
    """Fused (optional norm) + 1..3 projections from a single kernel launch."""
    M, Din = x2d.shape
    tm = _sub_tile(M)
    grid = (M // tm,)

    in_specs = [pl.BlockSpec((tm, Din), lambda i: (i, 0))]
    args = [x2d]
    if norm_p is not None:
        in_specs += [pl.BlockSpec((1, Din), lambda i: (0, 0)),
                     pl.BlockSpec((1, Din), lambda i: (0, 0))]
        args += [norm_p["alpha"].reshape(1, Din), norm_p["bias"].reshape(1, Din)]

    out_shapes, out_specs = [], []
    for (w, b) in weight_biases:
        Dout = w.shape[1]
        in_specs += [pl.BlockSpec((Din, Dout), lambda i: (0, 0)),
                     pl.BlockSpec((1, Dout), lambda i: (0, 0))]
        args += [w, b.reshape(1, Dout)]
        out_shapes.append(jax.ShapeDtypeStruct((M, Dout), out_dtype))
        out_specs.append(pl.BlockSpec((tm, Dout), lambda i: (i, 0)))

    outs = pl.pallas_call(
        functools.partial(_proj_kernel, n_out=len(weight_biases),
                          do_norm=norm_p is not None, activation=activation, eps=eps),
        out_shape=tuple(out_shapes),
        grid=grid,
        in_specs=in_specs,
        out_specs=tuple(out_specs),
        compiler_params=pltpu.CompilerParams(dimension_semantics=("parallel",)),
    )(*args)
    if not isinstance(outs, (tuple, list)):
        outs = (outs,)
    return tuple(outs)


def linear(x2d, w, b, add=None, out_dtype=jnp.float32):
    """Tiled matmul with f32 accumulator; optional fused elementwise add."""
    M, K = x2d.shape
    N = w.shape[1]
    tm = _sub_tile(M)
    tn = _lane_tile(N)
    tk = _lane_tile(K)
    grid = (M // tm, N // tn, K // tk)

    in_specs = [pl.BlockSpec((tm, tk), lambda i, j, k: (i, k)),
                pl.BlockSpec((tk, tn), lambda i, j, k: (k, j)),
                pl.BlockSpec((1, tn), lambda i, j, k: (0, j))]
    args = [x2d, w, b.reshape(1, N)]
    if add is not None:
        in_specs.append(pl.BlockSpec((tm, tn), lambda i, j, k: (i, j)))
        args.append(add)

    return pl.pallas_call(
        functools.partial(_linear_kernel, has_add=add is not None),
        out_shape=jax.ShapeDtypeStruct((M, N), out_dtype),
        grid=grid,
        in_specs=in_specs,
        out_specs=pl.BlockSpec((tm, tn), lambda i, j, k: (i, j)),
        scratch_shapes=[pltpu.VMEM((tm, tn), jnp.float32)],
        compiler_params=pltpu.CompilerParams(
            dimension_semantics=("parallel", "parallel", "arbitrary")),
    )(*args)


def flash_attention(q, k, v, mask, heads):
    """q:(B,Tq,D) k,v:(B,Tk,D) bf16; mask:(B,1|Tq,Tk) f32 -> (B,Tq,D) bf16."""
    B, Tq, D = q.shape
    Tk = k.shape[1]
    dk = D // heads
    scale = 1.0 / math.sqrt(dk)
    tq = _sub_tile(Tq)
    tk = _lane_tile(Tk)
    grid = (B, Tq // tq, Tk // tk)

    if mask.shape[1] == 1:
        mask_spec = pl.BlockSpec((1, 1, tk), lambda b, qi, kj: (b, 0, kj))
    else:
        mask_spec = pl.BlockSpec((1, tq, tk), lambda b, qi, kj: (b, qi, kj))

    return pl.pallas_call(
        functools.partial(_flash_attn_kernel, heads=heads, scale=scale),
        out_shape=jax.ShapeDtypeStruct((B, Tq, D), jnp.bfloat16),
        grid=grid,
        in_specs=[pl.BlockSpec((1, tq, D), lambda b, qi, kj: (b, qi, 0)),
                  pl.BlockSpec((1, tk, D), lambda b, qi, kj: (b, kj, 0)),
                  pl.BlockSpec((1, tk, D), lambda b, qi, kj: (b, kj, 0)),
                  mask_spec],
        out_specs=pl.BlockSpec((1, tq, D), lambda b, qi, kj: (b, qi, 0)),
        scratch_shapes=[pltpu.VMEM((heads, tq, 1), jnp.float32),
                        pltpu.VMEM((heads, tq, 1), jnp.float32),
                        pltpu.VMEM((heads, tq, dk), jnp.float32)],
        compiler_params=pltpu.CompilerParams(
            dimension_semantics=("parallel", "parallel", "arbitrary")),
    )(q, k, v, mask)


def ffn_block(x, norm_p, ff_p, eps=1e-6):
    """Fused Norm + FFN(swish) + residual. d_ff tiled as the reduction axis."""
    B, T, D = x.shape
    M = B * T
    x2 = x.reshape(M, D)
    d_ff = ff_p["w1"].shape[1]
    tm = _sub_tile(M)
    tf = _lane_tile(d_ff)
    grid = (M // tm, d_ff // tf)

    out = pl.pallas_call(
        functools.partial(_ffn_kernel, eps=eps),
        out_shape=jax.ShapeDtypeStruct((M, D), jnp.float32),
        grid=grid,
        in_specs=[pl.BlockSpec((tm, D), lambda i, f: (i, 0)),
                  pl.BlockSpec((1, D), lambda i, f: (0, 0)),
                  pl.BlockSpec((1, D), lambda i, f: (0, 0)),
                  pl.BlockSpec((D, tf), lambda i, f: (0, f)),
                  pl.BlockSpec((1, tf), lambda i, f: (0, f)),
                  pl.BlockSpec((tf, D), lambda i, f: (f, 0)),
                  pl.BlockSpec((1, D), lambda i, f: (0, 0))],
        out_specs=pl.BlockSpec((tm, D), lambda i, f: (i, 0)),
        scratch_shapes=[pltpu.VMEM((tm, D), jnp.bfloat16),
                        pltpu.VMEM((tm, D), jnp.float32)],
        compiler_params=pltpu.CompilerParams(
            dimension_semantics=("parallel", "arbitrary")),
    )(x2, norm_p["alpha"].reshape(1, D), norm_p["bias"].reshape(1, D),
      ff_p["w1"], ff_p["b1"].reshape(1, d_ff), ff_p["w2"], ff_p["b2"].reshape(1, D))
    return out.reshape(B, T, D)


def norm_mask(x, p, mask, eps=1e-6):
    """Norm + masked_fill(mask == 0, 0) for the conv branch."""
    B, T, D = x.shape
    M = B * T
    tm = _sub_tile(M)
    out = pl.pallas_call(
        functools.partial(_norm_mask_kernel, eps=eps),
        out_shape=jax.ShapeDtypeStruct((M, D), jnp.float32),
        grid=(M // tm,),
        in_specs=[pl.BlockSpec((tm, D), lambda i: (i, 0)),
                  pl.BlockSpec((1, D), lambda i: (0, 0)),
                  pl.BlockSpec((1, D), lambda i: (0, 0)),
                  pl.BlockSpec((tm, 1), lambda i: (i, 0))],
        out_specs=pl.BlockSpec((tm, D), lambda i: (i, 0)),
        compiler_params=pltpu.CompilerParams(dimension_semantics=("parallel",)),
    )(x.reshape(M, D), p["alpha"].reshape(1, D), p["bias"].reshape(1, D),
      mask.reshape(M, 1))
    return out.reshape(B, T, D)


def sep_conv(x_padded, p, activation="none", add=None):
    """Fused depthwise causal conv + pointwise 1x1 conv (+relu / +residual)."""
    B, Tp, Cin = x_padded.shape
    K = p["dw_w"].shape[0]
    T = Tp - K + 1
    Cout = p["pw_w"].shape[1]

    in_specs = [pl.BlockSpec((1, Tp, Cin), lambda b: (b, 0, 0)),
                pl.BlockSpec((K, Cin), lambda b: (0, 0)),
                pl.BlockSpec((1, Cin), lambda b: (0, 0)),
                pl.BlockSpec((Cin, Cout), lambda b: (0, 0)),
                pl.BlockSpec((1, Cout), lambda b: (0, 0))]
    args = [x_padded, p["dw_w"], p["dw_b"].reshape(1, Cin),
            p["pw_w"], p["pw_b"].reshape(1, Cout)]
    if add is not None:
        in_specs.append(pl.BlockSpec((1, T, Cout), lambda b: (b, 0, 0)))
        args.append(add)

    return pl.pallas_call(
        functools.partial(_sepconv_kernel, activation=activation,
                          has_add=add is not None),
        out_shape=jax.ShapeDtypeStruct((B, T, Cout), jnp.float32),
        grid=(B,),
        in_specs=in_specs,
        out_specs=pl.BlockSpec((1, T, Cout), lambda b: (b, 0, 0)),
        compiler_params=pltpu.CompilerParams(dimension_semantics=("parallel",)),
    )(*args)


# ----------------------------- DecoderLayer forward ---------------------------


def decoder_layer_forward(params, x, e_outputs, src_mask, trg_mask, heads):
    B, T, D = x.shape
    S = e_outputs.shape[1]
    x = x.astype(jnp.float32)
    trg_mask = trg_mask.astype(jnp.float32)
    src_mask = src_mask.astype(jnp.float32)
    e2 = e_outputs.astype(jnp.float32).reshape(B * S, D)

    def self_attn(p_attn, p_norm, xin, nheads):
        q, k, v = proj(xin.reshape(B * T, D), p_norm,
                       [(p_attn["q"]["w"], p_attn["q"]["b"]),
                        (p_attn["k"]["w"], p_attn["k"]["b"]),
                        (p_attn["v"]["w"], p_attn["v"]["b"])])
        o = flash_attention(q.reshape(B, T, D), k.reshape(B, T, D),
                            v.reshape(B, T, D), trg_mask, nheads)
        return o.reshape(B * T, D)

    def cross_attn(p_attn, p_norm, xin, nheads):
        (q,) = proj(xin.reshape(B * T, D), p_norm,
                    [(p_attn["q"]["w"], p_attn["q"]["b"])])
        k, v = proj(e2, None,
                    [(p_attn["k"]["w"], p_attn["k"]["b"]),
                     (p_attn["v"]["w"], p_attn["v"]["b"])])
        o = flash_attention(q.reshape(B, T, D), k.reshape(B, S, D),
                            v.reshape(B, S, D), src_mask, nheads)
        return o.reshape(B * T, D)

    # --- block 1: self attention (heads*2) + encoder attention ---
    residual = x.reshape(B * T, D)
    self_o = self_attn(params["self_attn_1"], params["norm_attn_1"], x, heads * 2)
    enc_o = cross_attn(params["enc_attn_1"], params["norm_attn_1"], x, heads)
    t = linear(self_o, params["self_attn_1"]["out"]["w"],
               params["self_attn_1"]["out"]["b"], add=residual)
    x = linear(enc_o, params["enc_attn_1"]["out"]["w"],
               params["enc_attn_1"]["out"]["b"], add=t).reshape(B, T, D)

    # --- block 2: separable-conv branch ---
    conv_mask = trg_mask[:, -1, :][..., None]                       # (B, T, 1)
    residual = x
    xn = norm_mask(x, params["norm_conv1"], conv_mask)
    left = sep_conv(jnp.pad(xn, ((0, 0), (10, 0), (0, 0))),         # causal pad, k=11
                    params["left_sep_conv"], activation="relu")      # (B, T, 2D)
    right = sep_conv(jnp.pad(xn, ((0, 0), (6, 0), (0, 0))),          # causal pad, k=7
                     params["right_sep_conv"])                       # (B, T, D//2)
    hidden = left.at[:, :, :D // 2].add(right)                       # fused pad+add
    hidden = norm_mask(hidden, params["norm_conv2"], conv_mask)
    x = sep_conv(jnp.pad(hidden, ((0, 0), (6, 0), (0, 0))),
                 params["sep_conv"], add=residual)                   # residual fused

    # --- block 3: self attention ---
    residual = x.reshape(B * T, D)
    o = self_attn(params["self_attn_2"], params["norm_attn_2"], x, heads)
    x = linear(o, params["self_attn_2"]["out"]["w"],
               params["self_attn_2"]["out"]["b"], add=residual).reshape(B, T, D)

    # --- block 4: encoder attention ---
    residual = x.reshape(B * T, D)
    o = cross_attn(params["enc_attn_3"], params["norm_attn_3"], x, heads)
    x = linear(o, params["enc_attn_3"]["out"]["w"],
               params["enc_attn_3"]["out"]["b"], add=residual).reshape(B, T, D)

    # --- block 5: feed-forward with swish (fused norm + FFN + residual) ---
    x = ffn_block(x, params["norm_ff"], params["ff"])
    return x


# ------------------------------ parameter init --------------------------------


def init_params(key, d_model, d_ff, heads):
    keys = iter(jax.random.split(key, 64))

    def lin(din, dout, scale=0.1):
        kw, kb = jax.random.split(next(keys))
        # matmul weights stored in bf16 (MXU-native, halves weight DMA traffic)
        return {"w": (jax.random.normal(kw, (din, dout), jnp.float32) * scale
                      ).astype(jnp.bfloat16),
                "b": jax.random.normal(kb, (dout,), jnp.float32) * 0.01}

    def mha_p(d):
        return {"q": lin(d, d), "k": lin(d, d), "v": lin(d, d), "out": lin(d, d)}

    def norm_p(d):
        return {"alpha": jnp.ones((d,), jnp.float32),
                "bias": jnp.zeros((d,), jnp.float32)}

    def sepconv_p(cin, cout, ksize):
        kw, kb = jax.random.split(next(keys))
        pw = lin(cin, cout)
        return {"dw_w": jax.random.normal(kw, (ksize, cin), jnp.float32) * 0.1,
                "dw_b": jax.random.normal(kb, (cin,), jnp.float32) * 0.01,
                "pw_w": pw["w"], "pw_b": pw["b"]}

    ff1 = lin(d_model, d_ff)
    ff2 = lin(d_ff, d_model)
    return {
        "norm_attn_1": norm_p(d_model),
        "self_attn_1": mha_p(d_model),
        "enc_attn_1": mha_p(d_model),
        "norm_conv1": norm_p(d_model),
        "norm_conv2": norm_p(d_model * 2),
        "left_sep_conv": sepconv_p(d_model, d_model * 2, 11),
        "right_sep_conv": sepconv_p(d_model, d_model // 2, 7),
        "sep_conv": sepconv_p(d_model * 2, d_model, 7),
        "norm_attn_2": norm_p(d_model),
        "self_attn_2": mha_p(d_model),
        "norm_attn_3": norm_p(d_model),
        "enc_attn_3": mha_p(d_model),
        "norm_ff": norm_p(d_model),
        "ff": {"w1": ff1["w"], "b1": ff1["b"], "w2": ff2["w"], "b2": ff2["b"]},
    }


# ----------------------------------- main --------------------------------------


if __name__ == "__main__":
    B, T, S = 2, 8, 8
    D_MODEL, D_FF, HEADS = 32, 64, 2

    key = jax.random.PRNGKey(0)
    kp, kx, ke = jax.random.split(key, 3)

    params = init_params(kp, D_MODEL, D_FF, HEADS)
    x = jax.random.normal(kx, (B, T, D_MODEL), jnp.float32)
    e_outputs = jax.random.normal(ke, (B, S, D_MODEL), jnp.float32)
    src_mask = jnp.ones((B, 1, S), jnp.float32)
    trg_mask = jnp.broadcast_to(jnp.tril(jnp.ones((T, T), jnp.float32)), (B, T, T))

    fwd = jax.jit(functools.partial(decoder_layer_forward, heads=HEADS))
    out = fwd(params, x, e_outputs, src_mask, trg_mask)
    out = jax.block_until_ready(out)

    assert out.shape == (B, T, D_MODEL), out.shape
    assert bool(jnp.all(jnp.isfinite(out)))
    print("KERNEL_OK")
</pallas_src>

<mosaic_0001>
module attributes {stable_mosaic.version = 11 : i64} {
  func.func @_linear_kernel(%arg0: i32, %arg1: i32, %arg2: i32, %arg3: memref<16x32xbf16, #tpu.memory_space<vmem>>, %arg4: memref<32x32xbf16, #tpu.memory_space<vmem>>, %arg5: memref<1x32xf32, #tpu.memory_space<vmem>>, %arg6: memref<16x32xf32, #tpu.memory_space<vmem>>, %arg7: memref<16x32xf32, #tpu.memory_space<vmem>>, %arg8: memref<16x32xf32, #tpu.memory_space<vmem>>) attributes {dimension_semantics = [#tpu.dimension_semantics<parallel>, #tpu.dimension_semantics<parallel>, #tpu.dimension_semantics<arbitrary>], iteration_bounds = array<i64: 1, 1, 1>, scalar_prefetch = 0 : i64, scratch_operands = 1 : i64, tpu.core_type = #tpu.core_type<tc>, window_params = [{transform_indices = @transform_0, window_bounds = array<i64: 16, 32>}, {transform_indices = @transform_1, window_bounds = array<i64: 32, 32>}, {transform_indices = @transform_2, window_bounds = array<i64: 1, 32>}, {transform_indices = @transform_3, window_bounds = array<i64: 16, 32>}, {transform_indices = @transform_4, window_bounds = array<i64: 16, 32>}]} {
    %c0_i32 = arith.constant 0 : i32
    %0 = arith.cmpi eq, %arg2, %c0_i32 : i32
    %1 = arith.extui %0 : i1 to i32
    %c0_i32_0 = arith.constant 0 : i32
    %2 = arith.cmpi ne, %1, %c0_i32_0 : i32
    scf.if %2 {
      %cst_10 = arith.constant 0.000000e+00 : f32
      %12 = vector.broadcast %cst_10 : f32 to vector<16x32xf32>
      %c0_11 = arith.constant 0 : index
      %c0_12 = arith.constant 0 : index
      %13 = vector.load %arg8[%c0_11, %c0_12] : memref<16x32xf32, #tpu.memory_space<vmem>>, vector<16x32xf32>
      tpu.vector_store %arg8[%c0_11, %c0_12], %12 {strides = array<i32>} : memref<16x32xf32, #tpu.memory_space<vmem>>, vector<16x32xf32>,
    } else {
    }
    %c0 = arith.constant 0 : index
    %c0_1 = arith.constant 0 : index
    %3 = vector.load %arg8[%c0, %c0_1] : memref<16x32xf32, #tpu.memory_space<vmem>>, vector<16x32xf32>
    %c0_2 = arith.constant 0 : index
    %c0_3 = arith.constant 0 : index
    %4 = vector.load %arg3[%c0_2, %c0_3] : memref<16x32xbf16, #tpu.memory_space<vmem>>, vector<16x32xbf16>
    %c0_4 = arith.constant 0 : index
    %c0_5 = arith.constant 0 : index
    %5 = vector.load %arg4[%c0_4, %c0_5] : memref<32x32xbf16, #tpu.memory_space<vmem>>, vector<32x32xbf16>
    %cst = arith.constant dense<0.000000e+00> : vector<16x32xf32>
    %6 = tpu.matmul %4, %5, %cst {dimension_numbers = #tpu.dot_dimension_numbers<[1], [0], [0], [1], [0, 0, 1, 1], [], []>} : vector<16x32xbf16>, vector<32x32xbf16>, vector<16x32xf32> -> vector<16x32xf32>
    %7 = arith.addf %3, %6 : vector<16x32xf32>
    %c0_6 = arith.constant 0 : index
    %c0_7 = arith.constant 0 : index
    %8 = vector.load %arg8[%c0_6, %c0_7] : memref<16x32xf32, #tpu.memory_space<vmem>>, vector<16x32xf32>
    tpu.vector_store %arg8[%c0_6, %c0_7], %7 {strides = array<i32>} : memref<16x32xf32, #tpu.memory_space<vmem>>, vector<16x32xf32>,
    %c0_i32_8 = arith.constant 0 : i32
    %9 = arith.cmpi eq, %arg2, %c0_i32_8 : i32
    %10 = arith.extui %9 : i1 to i32
    %c0_i32_9 = arith.constant 0 : i32
    %11 = arith.cmpi ne, %10, %c0_i32_9 : i32
    scf.if %11 {
      %c0_10 = arith.constant 0 : index
      %c0_11 = arith.constant 0 : index
      %12 = vector.load %arg8[%c0_10, %c0_11] : memref<16x32xf32, #tpu.memory_space<vmem>>, vector<16x32xf32>
      %c0_12 = arith.constant 0 : index
      %c0_13 = arith.constant 0 : index
      %13 = vector.load %arg5[%c0_12, %c0_13] : memref<1x32xf32, #tpu.memory_space<vmem>>, vector<1x32xf32>
      %14 = vector.broadcast %13 : vector<1x32xf32> to vector<16x32xf32>
      %15 = arith.addf %12, %14 : vector<16x32xf32>
      %c0_14 = arith.constant 0 : index
      %c0_15 = arith.constant 0 : index
      %16 = vector.load %arg6[%c0_14, %c0_15] : memref<16x32xf32, #tpu.memory_space<vmem>>, vector<16x32xf32>
      %17 = arith.addf %15, %16 : vector<16x32xf32>
      %c0_16 = arith.constant 0 : index
      %c0_17 = arith.constant 0 : index
      %18 = vector.load %arg7[%c0_16, %c0_17] : memref<16x32xf32, #tpu.memory_space<vmem>>, vector<16x32xf32>
      tpu.vector_store %arg7[%c0_16, %c0_17], %17 {strides = array<i32>} : memref<16x32xf32, #tpu.memory_space<vmem>>, vector<16x32xf32>,
    } else {
    }
    return
  }
  func.func @transform_0(%arg0: i32, %arg1: i32, %arg2: i32) -> (i32, i32) {
    %c0_i32 = arith.constant 0 : i32
    return %arg0, %arg2 : i32, i32
  }
  func.func @transform_1(%arg0: i32, %arg1: i32, %arg2: i32) -> (i32, i32) {
    %c0_i32 = arith.constant 0 : i32
    return %arg2, %arg1 : i32, i32
  }
  func.func @transform_2(%arg0: i32, %arg1: i32, %arg2: i32) -> (i32, i32) {
    %c0_i32 = arith.constant 0 : i32
    %c0_i32_0 = arith.constant 0 : i32
    return %c0_i32, %arg1 : i32, i32
  }
  func.func @transform_3(%arg0: i32, %arg1: i32, %arg2: i32) -> (i32, i32) {
    %c0_i32 = arith.constant 0 : i32
    return %arg0, %arg1 : i32, i32
  }
  func.func @transform_4(%arg0: i32, %arg1: i32, %arg2: i32) -> (i32, i32) {
    %c0_i32 = arith.constant 0 : i32
    return %arg0, %arg1 : i32, i32
  }
}

module attributes {stable_mosaic.version = 11 : i64} {
  func.func @_proj_kernel(%arg0: i32, %arg1: memref<16x32xf32, #tpu.memory_space<vmem>>, %arg2: memref<1x32xf32, #tpu.memory_space<vmem>>, %arg3: memref<1x32xf32, #tpu.memory_space<vmem>>, %arg4: memref<32x32xbf16, #tpu.memory_space<vmem>>, %arg5: memref<1x32xf32, #tpu.memory_space<vmem>>, %arg6: memref<32x32xbf16, #tpu.memory_space<vmem>>, %arg7: memref<1x32xf32, #tpu.memory_space<vmem>>, %arg8: memref<32x32xbf16, #tpu.memory_space<vmem>>, %arg9: memref<1x32xf32, #tpu.memory_space<vmem>>, %arg10: memref<16x32xbf16, #tpu.memory_space<vmem>>, %arg11: memref<16x32xbf16, #tpu.memory_space<vmem>>, %arg12: memref<16x32xbf16, #tpu.memory_space<vmem>>) attributes {dimension_semantics = [#tpu.dimension_semantics<parallel>], iteration_bounds = array<i64: 1>, scalar_prefetch = 0 : i64, scratch_operands = 0 : i64, tpu.core_type = #tpu.core_type<tc>, window_params = [{transform_indices = @transform_0, window_bounds = array<i64: 16, 32>}, {pipeline_mode = #tpu.pipeline_mode<synchronous>, transform_indices = @transform_1, window_bounds = array<i64: 1, 32>}, {pipeline_mode = #tpu.pipeline_mode<synchronous>, transform_indices = @transform_2, window_bounds = array<i64: 1, 32>}, {pipeline_mode = #tpu.pipeline_mode<synchronous>, transform_indices = @transform_3, window_bounds = array<i64: 32, 32>}, {pipeline_mode = #tpu.pipeline_mode<synchronous>, transform_indices = @transform_4, window_bounds = array<i64: 1, 32>}, {pipeline_mode = #tpu.pipeline_mode<synchronous>, transform_indices = @transform_5, window_bounds = array<i64: 32, 32>}, {pipeline_mode = #tpu.pipeline_mode<synchronous>, transform_indices = @transform_6, window_bounds = array<i64: 1, 32>}, {pipeline_mode = #tpu.pipeline_mode<synchronous>, transform_indices = @transform_7, window_bounds = array<i64: 32, 32>}, {pipeline_mode = #tpu.pipeline_mode<synchronous>, transform_indices = @transform_8, window_bounds = array<i64: 1, 32>}, {transform_indices = @transform_9, window_bounds = array<i64: 16, 32>}, {transform_indices = @transform_10, window_bounds = array<i64: 16, 32>}, {transform_indices = @transform_11, window_bounds = array<i64: 16, 32>}]} {
    %c0 = arith.constant 0 : index
    %c0_0 = arith.constant 0 : index
    %0 = vector.load %arg1[%c0, %c0_0] : memref<16x32xf32, #tpu.memory_space<vmem>>, vector<16x32xf32>
    %cst = arith.constant dense<0.000000e+00> : vector<16xf32>
    %1 = vector.multi_reduction <add>, %0, %cst [1] : vector<16x32xf32> to vector<16xf32>
    %2 = vector.shape_cast %1 : vector<16xf32> to vector<16x1xf32>
    %cst_1 = arith.constant 3.200000e+01 : f32
    %3 = vector.broadcast %cst_1 : f32 to vector<16x1xf32>
    %4 = arith.divf %2, %3 : vector<16x1xf32>
    %5 = vector.broadcast %4 : vector<16x1xf32> to vector<16x32xf32>
    %6 = arith.subf %0, %5 : vector<16x32xf32>
    %7 = arith.mulf %6, %6 : vector<16x32xf32>
    %cst_2 = arith.constant dense<0.000000e+00> : vector<16xf32>
    %8 = vector.multi_reduction <add>, %7, %cst_2 [1] : vector<16x32xf32> to vector<16xf32>
    %9 = vector.shape_cast %8 : vector<16xf32> to vector<16x1xf32>
    %cst_3 = arith.constant 3.100000e+01 : f32
    %10 = vector.broadcast %cst_3 : f32 to vector<16x1xf32>
    %11 = arith.divf %9, %10 : vector<16x1xf32>
    %c0_4 = arith.constant 0 : index
    %c0_5 = arith.constant 0 : index
    %12 = vector.load %arg2[%c0_4, %c0_5] : memref<1x32xf32, #tpu.memory_space<vmem>>, vector<1x32xf32>
    %13 = vector.broadcast %12 : vector<1x32xf32> to vector<16x32xf32>
    %14 = arith.mulf %13, %6 : vector<16x32xf32>
    %15 = math.sqrt %11 : vector<16x1xf32>
    %cst_6 = arith.constant 9.99999997E-7 : f32
    %16 = vector.broadcast %cst_6 : f32 to vector<16x1xf32>
    %17 = arith.addf %15, %16 : vector<16x1xf32>
    %18 = vector.broadcast %17 : vector<16x1xf32> to vector<16x32xf32>
    %19 = arith.divf %14, %18 : vector<16x32xf32>
    %c0_7 = arith.constant 0 : index
    %c0_8 = arith.constant 0 : index
    %20 = vector.load %arg3[%c0_7, %c0_8] : memref<1x32xf32, #tpu.memory_space<vmem>>, vector<1x32xf32>
    %21 = vector.broadcast %20 : vector<1x32xf32> to vector<16x32xf32>
    %22 = arith.addf %19, %21 : vector<16x32xf32>
    %23 = arith.truncf %22 : vector<16x32xf32> to vector<16x32xbf16>
    %c0_9 = arith.constant 0 : index
    %c0_10 = arith.constant 0 : index
    %24 = vector.load %arg4[%c0_9, %c0_10] : memref<32x32xbf16, #tpu.memory_space<vmem>>, vector<32x32xbf16>
    %cst_11 = arith.constant dense<0.000000e+00> : vector<16x32xf32>
    %25 = tpu.matmul %23, %24, %cst_11 {dimension_numbers = #tpu.dot_dimension_numbers<[1], [0], [0], [1], [0, 0, 1, 1], [], []>} : vector<16x32xbf16>, vector<32x32xbf16>, vector<16x32xf32> -> vector<16x32xf32>
    %c0_12 = arith.constant 0 : index
    %c0_13 = arith.constant 0 : index
    %26 = vector.load %arg5[%c0_12, %c0_13] : memref<1x32xf32, #tpu.memory_space<vmem>>, vector<1x32xf32>
    %27 = vector.broadcast %26 : vector<1x32xf32> to vector<16x32xf32>
    %28 = arith.addf %25, %27 : vector<16x32xf32>
    %29 = arith.truncf %28 : vector<16x32xf32> to vector<16x32xbf16>
    %c0_14 = arith.constant 0 : index
    %c0_15 = arith.constant 0 : index
    %30 = vector.load %arg10[%c0_14, %c0_15] : memref<16x32xbf16, #tpu.memory_space<vmem>>, vector<16x32xbf16>
    tpu.vector_store %arg10[%c0_14, %c0_15], %29 {strides = array<i32>} : memref<16x32xbf16, #tpu.memory_space<vmem>>, vector<16x32xbf16>,
    %c0_16 = arith.constant 0 : index
    %c0_17 = arith.constant 0 : index
    %31 = vector.load %arg6[%c0_16, %c0_17] : memref<32x32xbf16, #tpu.memory_space<vmem>>, vector<32x32xbf16>
    %cst_18 = arith.constant dense<0.000000e+00> : vector<16x32xf32>
    %32 = tpu.matmul %23, %31, %cst_18 {dimension_numbers = #tpu.dot_dimension_numbers<[1], [0], [0], [1], [0, 0, 1, 1], [], []>} : vector<16x32xbf16>, vector<32x32xbf16>, vector<16x32xf32> -> vector<16x32xf32>
    %c0_19 = arith.constant 0 : index
    %c0_20 = arith.constant 0 : index
    %33 = vector.load %arg7[%c0_19, %c0_20] : memref<1x32xf32, #tpu.memory_space<vmem>>, vector<1x32xf32>
    %34 = vector.broadcast %33 : vector<1x32xf32> to vector<16x32xf32>
    %35 = arith.addf %32, %34 : vector<16x32xf32>
    %36 = arith.truncf %35 : vector<16x32xf32> to vector<16x32xbf16>
    %c0_21 = arith.constant 0 : index
    %c0_22 = arith.constant 0 : index
    %37 = vector.load %arg11[%c0_21, %c0_22] : memref<16x32xbf16, #tpu.memory_space<vmem>>, vector<16x32xbf16>
    tpu.vector_store %arg11[%c0_21, %c0_22], %36 {strides = array<i32>} : memref<16x32xbf16, #tpu.memory_space<vmem>>, vector<16x32xbf16>,
    %c0_23 = arith.constant 0 : index
    %c0_24 = arith.constant 0 : index
    %38 = vector.load %arg8[%c0_23, %c0_24] : memref<32x32xbf16, #tpu.memory_space<vmem>>, vector<32x32xbf16>
    %cst_25 = arith.constant dense<0.000000e+00> : vector<16x32xf32>
    %39 = tpu.matmul %23, %38, %cst_25 {dimension_numbers = #tpu.dot_dimension_numbers<[1], [0], [0], [1], [0, 0, 1, 1], [], []>} : vector<16x32xbf16>, vector<32x32xbf16>, vector<16x32xf32> -> vector<16x32xf32>
    %c0_26 = arith.constant 0 : index
    %c0_27 = arith.constant 0 : index
    %40 = vector.load %arg9[%c0_26, %c0_27] : memref<1x32xf32, #tpu.memory_space<vmem>>, vector<1x32xf32>
    %41 = vector.broadcast %40 : vector<1x32xf32> to vector<16x32xf32>
    %42 = arith.addf %39, %41 : vector<16x32xf32>
    %43 = arith.truncf %42 : vector<16x32xf32> to vector<16x32xbf16>
    %c0_28 = arith.constant 0 : index
    %c0_29 = arith.constant 0 : index
    %44 = vector.load %arg12[%c0_28, %c0_29] : memref<16x32xbf16, #tpu.memory_space<vmem>>, vector<16x32xbf16>
    tpu.vector_store %arg12[%c0_28, %c0_29], %43 {strides = array<i32>} : memref<16x32xbf16, #tpu.memory_space<vmem>>, vector<16x32xbf16>,
    return
  }
  func.func @transform_0(%arg0: i32) -> (i32, i32) {
    %c0_i32 = arith.constant 0 : i32
    %c0_i32_0 = arith.constant 0 : i32
    return %arg0, %c0_i32 : i32, i32
  }
  func.func @transform_1(%arg0: i32) -> (i32, i32) {
    %c0_i32 = arith.constant 0 : i32
    %c0_i32_0 = arith.constant 0 : i32
    %c0_i32_1 = arith.constant 0 : i32
    return %c0_i32, %c0_i32_0 : i32, i32
  }
  func.func @transform_2(%arg0: i32) -> (i32, i32) {
    %c0_i32 = arith.constant 0 : i32
    %c0_i32_0 = arith.constant 0 : i32
    %c0_i32_1 = arith.constant 0 : i32
    return %c0_i32, %c0_i32_0 : i32, i32
  }
  func.func @transform_3(%arg0: i32) -> (i32, i32) {
    %c0_i32 = arith.constant 0 : i32
    %c0_i32_0 = arith.constant 0 : i32
    %c0_i32_1 = arith.constant 0 : i32
    return %c0_i32, %c0_i32_0 : i32, i32
  }
  func.func @transform_4(%arg0: i32) -> (i32, i32) {
    %c0_i32 = arith.constant 0 : i32
    %c0_i32_0 = arith.constant 0 : i32
    %c0_i32_1 = arith.constant 0 : i32
    return %c0_i32, %c0_i32_0 : i32, i32
  }
  func.func @transform_5(%arg0: i32) -> (i32, i32) {
    %c0_i32 = arith.constant 0 : i32
    %c0_i32_0 = arith.constant 0 : i32
    %c0_i32_1 = arith.constant 0 : i32
    return %c0_i32, %c0_i32_0 : i32, i32
  }
  func.func @transform_6(%arg0: i32) -> (i32, i32) {
    %c0_i32 = arith.constant 0 : i32
    %c0_i32_0 = arith.constant 0 : i32
    %c0_i32_1 = arith.constant 0 : i32
    return %c0_i32, %c0_i32_0 : i32, i32
  }
  func.func @transform_7(%arg0: i32) -> (i32, i32) {
    %c0_i32 = arith.constant 0 : i32
    %c0_i32_0 = arith.constant 0 : i32
    %c0_i32_1 = arith.constant 0 : i32
    return %c0_i32, %c0_i32_0 : i32, i32
  }
  func.func @transform_8(%arg0: i32) -> (i32, i32) {
    %c0_i32 = arith.constant 0 : i32
    %c0_i32_0 = arith.constant 0 : i32
    %c0_i32_1 = arith.constant 0 : i32
    return %c0_i32, %c0_i32_0 : i32, i32
  }
  func.func @transform_9(%arg0: i32) -> (i32, i32) {
    %c0_i32 = arith.constant 0 : i32
    %c0_i32_0 = arith.constant 0 : i32
    return %arg0, %c0_i32 : i32, i32
  }
  func.func @transform_10(%arg0: i32) -> (i32, i32) {
    %c0_i32 = arith.constant 0 : i32
    %c0_i32_0 = arith.constant 0 : i32
    return %arg0, %c0_i32 : i32, i32
  }
  func.func @transform_11(%arg0: i32) -> (i32, i32) {
    %c0_i32 = arith.constant 0 : i32
    %c0_i32_0 = arith.constant 0 : i32
    return %arg0, %c0_i32 : i32, i32
  }
}

module attributes {stable_mosaic.version = 11 : i64} {
  func.func @_flash_attn_kernel(%arg0: i32, %arg1: i32, %arg2: i32, %arg3: memref<1x8x32xbf16, #tpu.memory_space<vmem>>, %arg4: memref<1x8x32xbf16, #tpu.memory_space<vmem>>, %arg5: memref<1x8x32xbf16, #tpu.memory_space<vmem>>, %arg6: memref<1x8x8xf32, #tpu.memory_space<vmem>>, %arg7: memref<1x8x32xbf16, #tpu.memory_space<vmem>>, %arg8: memref<4x8x1xf32, #tpu.memory_space<vmem>>, %arg9: memref<4x8x1xf32, #tpu.memory_space<vmem>>, %arg10: memref<4x8x8xf32, #tpu.memory_space<vmem>>) attributes {dimension_semantics = [#tpu.dimension_semantics<parallel>, #tpu.dimension_semantics<parallel>, #tpu.dimension_semantics<arbitrary>], iteration_bounds = array<i64: 2, 1, 1>, scalar_prefetch = 0 : i64, scratch_operands = 3 : i64, tpu.core_type = #tpu.core_type<tc>, window_params = [{transform_indices = @transform_0, window_bounds = array<i64: 1, 8, 32>}, {transform_indices = @transform_1, window_bounds = array<i64: 1, 8, 32>}, {transform_indices = @transform_2, window_bounds = array<i64: 1, 8, 32>}, {transform_indices = @transform_3, window_bounds = array<i64: 1, 8, 8>}, {transform_indices = @transform_4, window_bounds = array<i64: 1, 8, 32>}]} {
    %c0_i32 = arith.constant 0 : i32
    %0 = arith.cmpi eq, %arg2, %c0_i32 : i32
    %1 = arith.extui %0 : i1 to i32
    %c0_i32_0 = arith.constant 0 : i32
    %2 = arith.cmpi ne, %1, %c0_i32_0 : i32
    scf.if %2 {
      %cst_134 = arith.constant 0xFF800000 : f32
      %188 = vector.broadcast %cst_134 : f32 to vector<4x8x1xf32>
      %c0_135 = arith.constant 0 : index
      %c0_136 = arith.constant 0 : index
      %c0_137 = arith.constant 0 : index
      %189 = vector.load %arg8[%c0_135, %c0_136, %c0_137] : memref<4x8x1xf32, #tpu.memory_space<vmem>>, vector<4x8x1xf32>
      tpu.vector_store %arg8[%c0_135, %c0_136, %c0_137], %188 {strides = array<i32>} : memref<4x8x1xf32, #tpu.memory_space<vmem>>, vector<4x8x1xf32>,
      %cst_138 = arith.constant 0.000000e+00 : f32
      %190 = vector.broadcast %cst_138 : f32 to vector<4x8x1xf32>
      %c0_139 = arith.constant 0 : index
      %c0_140 = arith.constant 0 : index
      %c0_141 = arith.constant 0 : index
      %191 = vector.load %arg9[%c0_139, %c0_140, %c0_141] : memref<4x8x1xf32, #tpu.memory_space<vmem>>, vector<4x8x1xf32>
      tpu.vector_store %arg9[%c0_139, %c0_140, %c0_141], %190 {strides = array<i32>} : memref<4x8x1xf32, #tpu.memory_space<vmem>>, vector<4x8x1xf32>,
      %cst_142 = arith.constant 0.000000e+00 : f32
      %192 = vector.broadcast %cst_142 : f32 to vector<4x8x8xf32>
      %c0_143 = arith.constant 0 : index
      %c0_144 = arith.constant 0 : index
      %c0_145 = arith.constant 0 : index
      %193 = vector.load %arg10[%c0_143, %c0_144, %c0_145] : memref<4x8x8xf32, #tpu.memory_space<vmem>>, vector<4x8x8xf32>
      tpu.vector_store %arg10[%c0_143, %c0_144, %c0_145], %192 {strides = array<i32>} : memref<4x8x8xf32, #tpu.memory_space<vmem>>, vector<4x8x8xf32>,
    } else {
    }
    %c0 = arith.constant 0 : index
    %c0_1 = arith.constant 0 : index
    %c0_2 = arith.constant 0 : index
    %3 = vector.load %arg6[%c0, %c0_1, %c0_2] : memref<1x8x8xf32, #tpu.memory_space<vmem>>, vector<1x8x8xf32>
    %4 = vector.shape_cast %3 : vector<1x8x8xf32> to vector<8x8xf32>
    %c0_3 = arith.constant 0 : index
    %c0_4 = arith.constant 0 : index
    %c0_5 = arith.constant 0 : index
    %5 = vector.load %arg3[%c0_3, %c0_4, %c0_5] : memref<1x8x32xbf16, #tpu.memory_space<vmem>>, vector<1x8x8xbf16>
    %6 = vector.shape_cast %5 : vector<1x8x8xbf16> to vector<8x8xbf16>
    %c0_6 = arith.constant 0 : index
    %c0_7 = arith.constant 0 : index
    %c0_8 = arith.constant 0 : index
    %7 = vector.load %arg4[%c0_6, %c0_7, %c0_8] : memref<1x8x32xbf16, #tpu.memory_space<vmem>>, vector<1x8x8xbf16>
    %8 = vector.shape_cast %7 : vector<1x8x8xbf16> to vector<8x8xbf16>
    %c0_9 = arith.constant 0 : index
    %c0_10 = arith.constant 0 : index
    %c0_11 = arith.constant 0 : index
    %9 = vector.load %arg5[%c0_9, %c0_10, %c0_11] : memref<1x8x32xbf16, #tpu.memory_space<vmem>>, vector<1x8x8xbf16>
    %10 = vector.shape_cast %9 : vector<1x8x8xbf16> to vector<8x8xbf16>
    %cst = arith.constant dense<0.000000e+00> : vector<8x8xf32>
    %11 = tpu.matmul %6, %8, %cst {dimension_numbers = #tpu.dot_dimension_numbers<[1], [1], [0], [0], [0, 0, 1, 0], [], []>} : vector<8x8xbf16>, vector<8x8xbf16>, vector<8x8xf32> -> vector<8x8xf32>
    %cst_12 = arith.constant 0.353553385 : f32
    %12 = vector.broadcast %cst_12 : f32 to vector<8x8xf32>
    %13 = arith.mulf %11, %12 : vector<8x8xf32>
    %cst_13 = arith.constant 0.000000e+00 : f32
    %14 = vector.broadcast %cst_13 : f32 to vector<8x8xf32>
    %15 = arith.cmpf oeq, %4, %14 : vector<8x8xf32>
    %cst_14 = arith.constant -1.000000e+09 : f32
    %16 = vector.broadcast %cst_14 : f32 to vector<8x8xf32>
    %17 = arith.select %15, %16, %13 : vector<8x8xi1>, vector<8x8xf32>
    %c0_15 = arith.constant 0 : index
    %c0_16 = arith.constant 0 : index
    %c0_17 = arith.constant 0 : index
    %18 = vector.load %arg8[%c0_15, %c0_16, %c0_17] : memref<4x8x1xf32, #tpu.memory_space<vmem>>, vector<1x8x1xf32>
    %19 = vector.shape_cast %18 : vector<1x8x1xf32> to vector<8x1xf32>
    %cst_18 = arith.constant dense<0xFF800000> : vector<8xf32>
    %20 = vector.multi_reduction <maximumf>, %17, %cst_18 [1] : vector<8x8xf32> to vector<8xf32>
    %21 = vector.shape_cast %20 : vector<8xf32> to vector<8x1xf32>
    %22 = arith.maximumf %19, %21 : vector<8x1xf32>
    %23 = arith.subf %19, %22 : vector<8x1xf32>
    %24 = math.exp %23 : vector<8x1xf32>
    %25 = vector.broadcast %22 : vector<8x1xf32> to vector<8x8xf32>
    %26 = arith.subf %17, %25 : vector<8x8xf32>
    %27 = math.exp %26 : vector<8x8xf32>
    %c0_19 = arith.constant 0 : index
    %c0_20 = arith.constant 0 : index
    %c0_21 = arith.constant 0 : index
    %28 = vector.load %arg9[%c0_19, %c0_20, %c0_21] : memref<4x8x1xf32, #tpu.memory_space<vmem>>, vector<1x8x1xf32>
    %29 = vector.shape_cast %28 : vector<1x8x1xf32> to vector<8x1xf32>
    %30 = arith.mulf %24, %29 : vector<8x1xf32>
    %cst_22 = arith.constant dense<0.000000e+00> : vector<8xf32>
    %31 = vector.multi_reduction <add>, %27, %cst_22 [1] : vector<8x8xf32> to vector<8xf32>
    %32 = vector.shape_cast %31 : vector<8xf32> to vector<8x1xf32>
    %33 = arith.addf %30, %32 : vector<8x1xf32>
    %c0_23 = arith.constant 0 : index
    %c0_24 = arith.constant 0 : index
    %c0_25 = arith.constant 0 : index
    %34 = vector.load %arg9[%c0_23, %c0_24, %c0_25] : memref<4x8x1xf32, #tpu.memory_space<vmem>>, vector<1x8x1xf32>
    %35 = vector.shape_cast %34 : vector<1x8x1xf32> to vector<8x1xf32>
    %36 = vector.shape_cast %33 : vector<8x1xf32> to vector<1x8x1xf32>
    tpu.vector_store %arg9[%c0_23, %c0_24, %c0_25], %36 {strides = array<i32>} : memref<4x8x1xf32, #tpu.memory_space<vmem>>, vector<1x8x1xf32>,
    %c0_26 = arith.constant 0 : index
    %c0_27 = arith.constant 0 : index
    %c0_28 = arith.constant 0 : index
    %37 = vector.load %arg10[%c0_26, %c0_27, %c0_28] : memref<4x8x8xf32, #tpu.memory_space<vmem>>, vector<1x8x8xf32>
    %38 = vector.shape_cast %37 : vector<1x8x8xf32> to vector<8x8xf32>
    %39 = vector.broadcast %24 : vector<8x1xf32> to vector<8x8xf32>
    %40 = arith.mulf %39, %38 : vector<8x8xf32>
    %41 = arith.truncf %27 : vector<8x8xf32> to vector<8x8xbf16>
    %cst_29 = arith.constant dense<0.000000e+00> : vector<8x8xf32>
    %42 = tpu.matmul %41, %10, %cst_29 {dimension_numbers = #tpu.dot_dimension_numbers<[1], [0], [0], [1], [0, 0, 1, 1], [], []>} : vector<8x8xbf16>, vector<8x8xbf16>, vector<8x8xf32> -> vector<8x8xf32>
    %43 = arith.addf %40, %42 : vector<8x8xf32>
    %c0_30 = arith.constant 0 : index
    %c0_31 = arith.constant 0 : index
    %c0_32 = arith.constant 0 : index
    %44 = vector.load %arg10[%c0_30, %c0_31, %c0_32] : memref<4x8x8xf32, #tpu.memory_space<vmem>>, vector<1x8x8xf32>
    %45 = vector.shape_cast %44 : vector<1x8x8xf32> to vector<8x8xf32>
    %46 = vector.shape_cast %43 : vector<8x8xf32> to vector<1x8x8xf32>
    tpu.vector_store %arg10[%c0_30, %c0_31, %c0_32], %46 {strides = array<i32>} : memref<4x8x8xf32, #tpu.memory_space<vmem>>, vector<1x8x8xf32>,
    %c0_33 = arith.constant 0 : index
    %c0_34 = arith.constant 0 : index
    %c0_35 = arith.constant 0 : index
    %47 = vector.load %arg8[%c0_33, %c0_34, %c0_35] : memref<4x8x1xf32, #tpu.memory_space<vmem>>, vector<1x8x1xf32>
    %48 = vector.shape_cast %47 : vector<1x8x1xf32> to vector<8x1xf32>
    %49 = vector.shape_cast %22 : vector<8x1xf32> to vector<1x8x1xf32>
    tpu.vector_store %arg8[%c0_33, %c0_34, %c0_35], %49 {strides = array<i32>} : memref<4x8x1xf32, #tpu.memory_space<vmem>>, vector<1x8x1xf32>,
    %c0_36 = arith.constant 0 : index
    %c0_37 = arith.constant 0 : index
    %c8 = arith.constant 8 : index
    %50 = vector.load %arg3[%c0_36, %c0_37, %c8] : memref<1x8x32xbf16, #tpu.memory_space<vmem>>, vector<1x8x8xbf16>
    %51 = vector.shape_cast %50 : vector<1x8x8xbf16> to vector<8x8xbf16>
    %c0_38 = arith.constant 0 : index
    %c0_39 = arith.constant 0 : index
    %c8_40 = arith.constant 8 : index
    %52 = vector.load %arg4[%c0_38, %c0_39, %c8_40] : memref<1x8x32xbf16, #tpu.memory_space<vmem>>, vector<1x8x8xbf16>
    %53 = vector.shape_cast %52 : vector<1x8x8xbf16> to vector<8x8xbf16>
    %c0_41 = arith.constant 0 : index
    %c0_42 = arith.constant 0 : index
    %c8_43 = arith.constant 8 : index
    %54 = vector.load %arg5[%c0_41, %c0_42, %c8_43] : memref<1x8x32xbf16, #tpu.memory_space<vmem>>, vector<1x8x8xbf16>
    %55 = vector.shape_cast %54 : vector<1x8x8xbf16> to vector<8x8xbf16>
    %cst_44 = arith.constant dense<0.000000e+00> : vector<8x8xf32>
    %56 = tpu.matmul %51, %53, %cst_44 {dimension_numbers = #tpu.dot_dimension_numbers<[1], [1], [0], [0], [0, 0, 1, 0], [], []>} : vector<8x8xbf16>, vector<8x8xbf16>, vector<8x8xf32> -> vector<8x8xf32>
    %cst_45 = arith.constant 0.353553385 : f32
    %57 = vector.broadcast %cst_45 : f32 to vector<8x8xf32>
    %58 = arith.mulf %56, %57 : vector<8x8xf32>
    %cst_46 = arith.constant 0.000000e+00 : f32
    %59 = vector.broadcast %cst_46 : f32 to vector<8x8xf32>
    %60 = arith.cmpf oeq, %4, %59 : vector<8x8xf32>
    %cst_47 = arith.constant -1.000000e+09 : f32
    %61 = vector.broadcast %cst_47 : f32 to vector<8x8xf32>
    %62 = arith.select %60, %61, %58 : vector<8x8xi1>, vector<8x8xf32>
    %c1 = arith.constant 1 : index
    %c0_48 = arith.constant 0 : index
    %c0_49 = arith.constant 0 : index
    %63 = vector.load %arg8[%c1, %c0_48, %c0_49] : memref<4x8x1xf32, #tpu.memory_space<vmem>>, vector<1x8x1xf32>
    %64 = vector.shape_cast %63 : vector<1x8x1xf32> to vector<8x1xf32>
    %cst_50 = arith.constant dense<0xFF800000> : vector<8xf32>
    %65 = vector.multi_reduction <maximumf>, %62, %cst_50 [1] : vector<8x8xf32> to vector<8xf32>
    %66 = vector.shape_cast %65 : vector<8xf32> to vector<8x1xf32>
    %67 = arith.maximumf %64, %66 : vector<8x1xf32>
    %68 = arith.subf %64, %67 : vector<8x1xf32>
    %69 = math.exp %68 : vector<8x1xf32>
    %70 = vector.broadcast %67 : vector<8x1xf32> to vector<8x8xf32>
    %71 = arith.subf %62, %70 : vector<8x8xf32>
    %72 = math.exp %71 : vector<8x8xf32>
    %c1_51 = arith.constant 1 : index
    %c0_52 = arith.constant 0 : index
    %c0_53 = arith.constant 0 : index
    %73 = vector.load %arg9[%c1_51, %c0_52, %c0_53] : memref<4x8x1xf32, #tpu.memory_space<vmem>>, vector<1x8x1xf32>
    %74 = vector.shape_cast %73 : vector<1x8x1xf32> to vector<8x1xf32>
    %75 = arith.mulf %69, %74 : vector<8x1xf32>
    %cst_54 = arith.constant dense<0.000000e+00> : vector<8xf32>
    %76 = vector.multi_reduction <add>, %72, %cst_54 [1] : vector<8x8xf32> to vector<8xf32>
    %77 = vector.shape_cast %76 : vector<8xf32> to vector<8x1xf32>
    %78 = arith.addf %75, %77 : vector<8x1xf32>
    %c1_55 = arith.constant 1 : index
    %c0_56 = arith.constant 0 : index
    %c0_57 = arith.constant 0 : index
    %79 = vector.load %arg9[%c1_55, %c0_56, %c0_57] : memref<4x8x1xf32, #tpu.memory_space<vmem>>, vector<1x8x1xf32>
    %80 = vector.shape_cast %79 : vector<1x8x1xf32> to vector<8x1xf32>
    %81 = vector.shape_cast %78 : vector<8x1xf32> to vector<1x8x1xf32>
    tpu.vector_store %arg9[%c1_55, %c0_56, %c0_57], %81 {strides = array<i32>} : memref<4x8x1xf32, #tpu.memory_space<vmem>>, vector<1x8x1xf32>,
    %c1_58 = arith.constant 1 : index
    %c0_59 = arith.constant 0 : index
    %c0_60 = arith.constant 0 : index
    %82 = vector.load %arg10[%c1_58, %c0_59, %c0_60] : memref<4x8x8xf32, #tpu.memory_space<vmem>>, vector<1x8x8xf32>
    %83 = vector.shape_cast %82 : vector<1x8x8xf32> to vector<8x8xf32>
    %84 = vector.broadcast %69 : vector<8x1xf32> to vector<8x8xf32>
    %85 = arith.mulf %84, %83 : vector<8x8xf32>
    %86 = arith.truncf %72 : vector<8x8xf32> to vector<8x8xbf16>
    %cst_61 = arith.constant dense<0.000000e+00> : vector<8x8xf32>
    %87 = tpu.matmul %86, %55, %cst_61 {dimension_numbers = #tpu.dot_dimension_numbers<[1], [0], [0], [1], [0, 0, 1, 1], [], []>} : vector<8x8xbf16>, vector<8x8xbf16>, vector<8x8xf32> -> vector<8x8xf32>
    %88 = arith.addf %85, %87 : vector<8x8xf32>
    %c1_62 = arith.constant 1 : index
    %c0_63 = arith.constant 0 : index
    %c0_64 = arith.constant 0 : index
    %89 = vector.load %arg10[%c1_62, %c0_63, %c0_64] : memref<4x8x8xf32, #tpu.memory_space<vmem>>, vector<1x8x8xf32>
    %90 = vector.shape_cast %89 : vector<1x8x8xf32> to vector<8x8xf32>
    %91 = vector.shape_cast %88 : vector<8x8xf32> to vector<1x8x8xf32>
    tpu.vector_store %arg10[%c1_62, %c0_63, %c0_64], %91 {strides = array<i32>} : memref<4x8x8xf32, #tpu.memory_space<vmem>>, vector<1x8x8xf32>,
    %c1_65 = arith.constant 1 : index
    %c0_66 = arith.constant 0 : index
    %c0_67 = arith.constant 0 : index
    %92 = vector.load %arg8[%c1_65, %c0_66, %c0_67] : memref<4x8x1xf32, #tpu.memory_space<vmem>>, vector<1x8x1xf32>
    %93 = vector.shape_cast %92 : vector<1x8x1xf32> to vector<8x1xf32>
    %94 = vector.shape_cast %67 : vector<8x1xf32> to vector<1x8x1xf32>
    tpu.vector_store %arg8[%c1_65, %c0_66, %c0_67], %94 {strides = array<i32>} : memref<4x8x1xf32, #tpu.memory_space<vmem>>, vector<1x8x1xf32>,
    %c0_68 = arith.constant 0 : index
    %c0_69 = arith.constant 0 : index
    %c16 = arith.constant 16 : index
    %95 = vector.load %arg3[%c0_68, %c0_69, %c16] : memref<1x8x32xbf16, #tpu.memory_space<vmem>>, vector<1x8x8xbf16>
    %96 = vector.shape_cast %95 : vector<1x8x8xbf16> to vector<8x8xbf16>
    %c0_70 = arith.constant 0 : index
    %c0_71 = arith.constant 0 : index
    %c16_72 = arith.constant 16 : index
    %97 = vector.load %arg4[%c0_70, %c0_71, %c16_72] : memref<1x8x32xbf16, #tpu.memory_space<vmem>>, vector<1x8x8xbf16>
    %98 = vector.shape_cast %97 : vector<1x8x8xbf16> to vector<8x8xbf16>
    %c0_73 = arith.constant 0 : index
    %c0_74 = arith.constant 0 : index
    %c16_75 = arith.constant 16 : index
    %99 = vector.load %arg5[%c0_73, %c0_74, %c16_75] : memref<1x8x32xbf16, #tpu.memory_space<vmem>>, vector<1x8x8xbf16>
    %100 = vector.shape_cast %99 : vector<1x8x8xbf16> to vector<8x8xbf16>
    %cst_76 = arith.constant dense<0.000000e+00> : vector<8x8xf32>
    %101 = tpu.matmul %96, %98, %cst_76 {dimension_numbers = #tpu.dot_dimension_numbers<[1], [1], [0], [0], [0, 0, 1, 0], [], []>} : vector<8x8xbf16>, vector<8x8xbf16>, vector<8x8xf32> -> vector<8x8xf32>
    %cst_77 = arith.constant 0.353553385 : f32
    %102 = vector.broadcast %cst_77 : f32 to vector<8x8xf32>
    %103 = arith.mulf %101, %102 : vector<8x8xf32>
    %cst_78 = arith.constant 0.000000e+00 : f32
    %104 = vector.broadcast %cst_78 : f32 to vector<8x8xf32>
    %105 = arith.cmpf oeq, %4, %104 : vector<8x8xf32>
    %cst_79 = arith.constant -1.000000e+09 : f32
    %106 = vector.broadcast %cst_79 : f32 to vector<8x8xf32>
    %107 = arith.select %105, %106, %103 : vector<8x8xi1>, vector<8x8xf32>
    %c2 = arith.constant 2 : index
    %c0_80 = arith.constant 0 : index
    %c0_81 = arith.constant 0 : index
    %108 = vector.load %arg8[%c2, %c0_80, %c0_81] : memref<4x8x1xf32, #tpu.memory_space<vmem>>, vector<1x8x1xf32>
    %109 = vector.shape_cast %108 : vector<1x8x1xf32> to vector<8x1xf32>
    %cst_82 = arith.constant dense<0xFF800000> : vector<8xf32>
    %110 = vector.multi_reduction <maximumf>, %107, %cst_82 [1] : vector<8x8xf32> to vector<8xf32>
    %111 = vector.shape_cast %110 : vector<8xf32> to vector<8x1xf32>
    %112 = arith.maximumf %109, %111 : vector<8x1xf32>
    %113 = arith.subf %109, %112 : vector<8x1xf32>
    %114 = math.exp %113 : vector<8x1xf32>
    %115 = vector.broadcast %112 : vector<8x1xf32> to vector<8x8xf32>
    %116 = arith.subf %107, %115 : vector<8x8xf32>
    %117 = math.exp %116 : vector<8x8xf32>
    %c2_83 = arith.constant 2 : index
    %c0_84 = arith.constant 0 : index
    %c0_85 = arith.constant 0 : index
    %118 = vector.load %arg9[%c2_83, %c0_84, %c0_85] : memref<4x8x1xf32, #tpu.memory_space<vmem>>, vector<1x8x1xf32>
    %119 = vector.shape_cast %118 : vector<1x8x1xf32> to vector<8x1xf32>
    %120 = arith.mulf %114, %119 : vector<8x1xf32>
    %cst_86 = arith.constant dense<0.000000e+00> : vector<8xf32>
    %121 = vector.multi_reduction <add>, %117, %cst_86 [1] : vector<8x8xf32> to vector<8xf32>
    %122 = vector.shape_cast %121 : vector<8xf32> to vector<8x1xf32>
    %123 = arith.addf %120, %122 : vector<8x1xf32>
    %c2_87 = arith.constant 2 : index
    %c0_88 = arith.constant 0 : index
    %c0_89 = arith.constant 0 : index
    %124 = vector.load %arg9[%c2_87, %c0_88, %c0_89] : memref<4x8x1xf32, #tpu.memory_space<vmem>>, vector<1x8x1xf32>
    %125 = vector.shape_cast %124 : vector<1x8x1xf32> to vector<8x1xf32>
    %126 = vector.shape_cast %123 : vector<8x1xf32> to vector<1x8x1xf32>
    tpu.vector_store %arg9[%c2_87, %c0_88, %c0_89], %126 {strides = array<i32>} : memref<4x8x1xf32, #tpu.memory_space<vmem>>, vector<1x8x1xf32>,
    %c2_90 = arith.constant 2 : index
    %c0_91 = arith.constant 0 : index
    %c0_92 = arith.constant 0 : index
    %127 = vector.load %arg10[%c2_90, %c0_91, %c0_92] : memref<4x8x8xf32, #tpu.memory_space<vmem>>, vector<1x8x8xf32>
    %128 = vector.shape_cast %127 : vector<1x8x8xf32> to vector<8x8xf32>
    %129 = vector.broadcast %114 : vector<8x1xf32> to vector<8x8xf32>
    %130 = arith.mulf %129, %128 : vector<8x8xf32>
    %131 = arith.truncf %117 : vector<8x8xf32> to vector<8x8xbf16>
    %cst_93 = arith.constant dense<0.000000e+00> : vector<8x8xf32>
    %132 = tpu.matmul %131, %100, %cst_93 {dimension_numbers = #tpu.dot_dimension_numbers<[1], [0], [0], [1], [0, 0, 1, 1], [], []>} : vector<8x8xbf16>, vector<8x8xbf16>, vector<8x8xf32> -> vector<8x8xf32>
    %133 = arith.addf %130, %132 : vector<8x8xf32>
    %c2_94 = arith.constant 2 : index
    %c0_95 = arith.constant 0 : index
    %c0_96 = arith.constant 0 : index
    %134 = vector.load %arg10[%c2_94, %c0_95, %c0_96] : memref<4x8x8xf32, #tpu.memory_space<vmem>>, vector<1x8x8xf32>
    %135 = vector.shape_cast %134 : vector<1x8x8xf32> to vector<8x8xf32>
    %136 = vector.shape_cast %133 : vector<8x8xf32> to vector<1x8x8xf32>
    tpu.vector_store %arg10[%c2_94, %c0_95, %c0_96], %136 {strides = array<i32>} : memref<4x8x8xf32, #tpu.memory_space<vmem>>, vector<1x8x8xf32>,
    %c2_97 = arith.constant 2 : index
    %c0_98 = arith.constant 0 : index
    %c0_99 = arith.constant 0 : index
    %137 = vector.load %arg8[%c2_97, %c0_98, %c0_99] : memref<4x8x1xf32, #tpu.memory_space<vmem>>, vector<1x8x1xf32>
    %138 = vector.shape_cast %137 : vector<1x8x1xf32> to vector<8x1xf32>
    %139 = vector.shape_cast %112 : vector<8x1xf32> to vector<1x8x1xf32>
    tpu.vector_store %arg8[%c2_97, %c0_98, %c0_99], %139 {strides = array<i32>} : memref<4x8x1xf32, #tpu.memory_space<vmem>>, vector<1x8x1xf32>,
    %c0_100 = arith.constant 0 : index
    %c0_101 = arith.constant 0 : index
    %c24 = arith.constant 24 : index
    %140 = vector.load %arg3[%c0_100, %c0_101, %c24] : memref<1x8x32xbf16, #tpu.memory_space<vmem>>, vector<1x8x8xbf16>
    %141 = vector.shape_cast %140 : vector<1x8x8xbf16> to vector<8x8xbf16>
    %c0_102 = arith.constant 0 : index
    %c0_103 = arith.constant 0 : index
    %c24_104 = arith.constant 24 : index
    %142 = vector.load %arg4[%c0_102, %c0_103, %c24_104] : memref<1x8x32xbf16, #tpu.memory_space<vmem>>, vector<1x8x8xbf16>
    %143 = vector.shape_cast %142 : vector<1x8x8xbf16> to vector<8x8xbf16>
    %c0_105 = arith.constant 0 : index
    %c0_106 = arith.constant 0 : index
    %c24_107 = arith.constant 24 : index
    %144 = vector.load %arg5[%c0_105, %c0_106, %c24_107] : memref<1x8x32xbf16, #tpu.memory_space<vmem>>, vector<1x8x8xbf16>
    %145 = vector.shape_cast %144 : vector<1x8x8xbf16> to vector<8x8xbf16>
    %cst_108 = arith.constant dense<0.000000e+00> : vector<8x8xf32>
    %146 = tpu.matmul %141, %143, %cst_108 {dimension_numbers = #tpu.dot_dimension_numbers<[1], [1], [0], [0], [0, 0, 1, 0], [], []>} : vector<8x8xbf16>, vector<8x8xbf16>, vector<8x8xf32> -> vector<8x8xf32>
    %cst_109 = arith.constant 0.353553385 : f32
    %147 = vector.broadcast %cst_109 : f32 to vector<8x8xf32>
    %148 = arith.mulf %146, %147 : vector<8x8xf32>
    %cst_110 = arith.constant 0.000000e+00 : f32
    %149 = vector.broadcast %cst_110 : f32 to vector<8x8xf32>
    %150 = arith.cmpf oeq, %4, %149 : vector<8x8xf32>
    %cst_111 = arith.constant -1.000000e+09 : f32
    %151 = vector.broadcast %cst_111 : f32 to vector<8x8xf32>
    %152 = arith.select %150, %151, %148 : vector<8x8xi1>, vector<8x8xf32>
    %c3 = arith.constant 3 : index
    %c0_112 = arith.constant 0 : index
    %c0_113 = arith.constant 0 : index
    %153 = vector.load %arg8[%c3, %c0_112, %c0_113] : memref<4x8x1xf32, #tpu.memory_space<vmem>>, vector<1x8x1xf32>
    %154 = vector.shape_cast %153 : vector<1x8x1xf32> to vector<8x1xf32>
    %cst_114 = arith.constant dense<0xFF800000> : vector<8xf32>
    %155 = vector.multi_reduction <maximumf>, %152, %cst_114 [1] : vector<8x8xf32> to vector<8xf32>
    %156 = vector.shape_cast %155 : vector<8xf32> to vector<8x1xf32>
    %157 = arith.maximumf %154, %156 : vector<8x1xf32>
    %158 = arith.subf %154, %157 : vector<8x1xf32>
    %159 = math.exp %158 : vector<8x1xf32>
    %160 = vector.broadcast %157 : vector<8x1xf32> to vector<8x8xf32>
    %161 = arith.subf %152, %160 : vector<8x8xf32>
    %162 = math.exp %161 : vector<8x8xf32>
    %c3_115 = arith.constant 3 : index
    %c0_116 = arith.constant 0 : index
    %c0_117 = arith.constant 0 : index
    %163 = vector.load %arg9[%c3_115, %c0_116, %c0_117] : memref<4x8x1xf32, #tpu.memory_space<vmem>>, vector<1x8x1xf32>
    %164 = vector.shape_cast %163 : vector<1x8x1xf32> to vector<8x1xf32>
    %165 = arith.mulf %159, %164 : vector<8x1xf32>
    %cst_118 = arith.constant dense<0.000000e+00> : vector<8xf32>
    %166 = vector.multi_reduction <add>, %162, %cst_118 [1] : vector<8x8xf32> to vector<8xf32>
    %167 = vector.shape_cast %166 : vector<8xf32> to vector<8x1xf32>
    %168 = arith.addf %165, %167 : vector<8x1xf32>
    %c3_119 = arith.constant 3 : index
    %c0_120 = arith.constant 0 : index
    %c0_121 = arith.constant 0 : index
    %169 = vector.load %arg9[%c3_119, %c0_120, %c0_121] : memref<4x8x1xf32, #tpu.memory_space<vmem>>, vector<1x8x1xf32>
    %170 = vector.shape_cast %169 : vector<1x8x1xf32> to vector<8x1xf32>
    %171 = vector.shape_cast %168 : vector<8x1xf32> to vector<1x8x1xf32>
    tpu.vector_store %arg9[%c3_119, %c0_120, %c0_121], %171 {strides = array<i32>} : memref<4x8x1xf32, #tpu.memory_space<vmem>>, vector<1x8x1xf32>,
    %c3_122 = arith.constant 3 : index
    %c0_123 = arith.constant 0 : index
    %c0_124 = arith.constant 0 : index
    %172 = vector.load %arg10[%c3_122, %c0_123, %c0_124] : memref<4x8x8xf32, #tpu.memory_space<vmem>>, vector<1x8x8xf32>
    %173 = vector.shape_cast %172 : vector<1x8x8xf32> to vector<8x8xf32>
    %174 = vector.broadcast %159 : vector<8x1xf32> to vector<8x8xf32>
    %175 = arith.mulf %174, %173 : vector<8x8xf32>
    %176 = arith.truncf %162 : vector<8x8xf32> to vector<8x8xbf16>
    %cst_125 = arith.constant dense<0.000000e+00> : vector<8x8xf32>
    %177 = tpu.matmul %176, %145, %cst_125 {dimension_numbers = #tpu.dot_dimension_numbers<[1], [0], [0], [1], [0, 0, 1, 1], [], []>} : vector<8x8xbf16>, vector<8x8xbf16>, vector<8x8xf32> -> vector<8x8xf32>
    %178 = arith.addf %175, %177 : vector<8x8xf32>
    %c3_126 = arith.constant 3 : index
    %c0_127 = arith.constant 0 : index
    %c0_128 = arith.constant 0 : index
    %179 = vector.load %arg10[%c3_126, %c0_127, %c0_128] : memref<4x8x8xf32, #tpu.memory_space<vmem>>, vector<1x8x8xf32>
    %180 = vector.shape_cast %179 : vector<1x8x8xf32> to vector<8x8xf32>
    %181 = vector.shape_cast %178 : vector<8x8xf32> to vector<1x8x8xf32>
    tpu.vector_store %arg10[%c3_126, %c0_127, %c0_128], %181 {strides = array<i32>} : memref<4x8x8xf32, #tpu.memory_space<vmem>>, vector<1x8x8xf32>,
    %c3_129 = arith.constant 3 : index
    %c0_130 = arith.constant 0 : index
    %c0_131 = arith.constant 0 : index
    %182 = vector.load %arg8[%c3_129, %c0_130, %c0_131] : memref<4x8x1xf32, #tpu.memory_space<vmem>>, vector<1x8x1xf32>
    %183 = vector.shape_cast %182 : vector<1x8x1xf32> to vector<8x1xf32>
    %184 = vector.shape_cast %157 : vector<8x1xf32> to vector<1x8x1xf32>
    tpu.vector_store %arg8[%c3_129, %c0_130, %c0_131], %184 {strides = array<i32>} : memref<4x8x1xf32, #tpu.memory_space<vmem>>, vector<1x8x1xf32>,
    %c0_i32_132 = arith.constant 0 : i32
    %185 = arith.cmpi eq, %arg2, %c0_i32_132 : i32
    %186 = arith.extui %185 : i1 to i32
    %c0_i32_133 = arith.constant 0 : i32
    %187 = arith.cmpi ne, %186, %c0_i32_133 : i32
    scf.if %187 {
      %c0_134 = arith.constant 0 : index
      %c0_135 = arith.constant 0 : index
      %c0_136 = arith.constant 0 : index
      %188 = vector.load %arg9[%c0_134, %c0_135, %c0_136] : memref<4x8x1xf32, #tpu.memory_space<vmem>>, vector<1x8x1xf32>
      %189 = vector.shape_cast %188 : vector<1x8x1xf32> to vector<8x1xf32>
      %190 = tpu.reciprocal %189 {approx = true} : vector<8x1xf32> -> vector<8x1xf32>
      %c0_137 = arith.constant 0 : index
      %c0_138 = arith.constant 0 : index
      %c0_139 = arith.constant 0 : index
      %191 = vector.load %arg10[%c0_137, %c0_138, %c0_139] : memref<4x8x8xf32, #tpu.memory_space<vmem>>, vector<1x8x8xf32>
      %192 = vector.shape_cast %191 : vector<1x8x8xf32> to vector<8x8xf32>
      %193 = vector.broadcast %190 : vector<8x1xf32> to vector<8x8xf32>
      %194 = arith.mulf %192, %193 : vector<8x8xf32>
      %195 = arith.truncf %194 : vector<8x8xf32> to vector<8x8xbf16>
      %c0_140 = arith.constant 0 : index
      %c0_141 = arith.constant 0 : index
      %c0_142 = arith.constant 0 : index
      %196 = vector.load %arg7[%c0_140, %c0_141, %c0_142] : memref<1x8x32xbf16, #tpu.memory_space<vmem>>, vector<1x8x8xbf16>
      %197 = vector.shape_cast %196 : vector<1x8x8xbf16> to vector<8x8xbf16>
      %198 = vector.shape_cast %195 : vector<8x8xbf16> to vector<1x8x8xbf16>
      tpu.vector_store %arg7[%c0_140, %c0_141, %c0_142], %198 {strides = array<i32>} : memref<1x8x32xbf16, #tpu.memory_space<vmem>>, vector<1x8x8xbf16>,
      %c1_143 = arith.constant 1 : index
      %c0_144 = arith.constant 0 : index
      %c0_145 = arith.constant 0 : index
      %199 = vector.load %arg9[%c1_143, %c0_144, %c0_145] : memref<4x8x1xf32, #tpu.memory_space<vmem>>, vector<1x8x1xf32>
      %200 = vector.shape_cast %199 : vector<1x8x1xf32> to vector<8x1xf32>
      %201 = tpu.reciprocal %200 {approx = true} : vector<8x1xf32> -> vector<8x1xf32>
      %c1_146 = arith.constant 1 : index
      %c0_147 = arith.constant 0 : index
      %c0_148 = arith.constant 0 : index
      %202 = vector.load %arg10[%c1_146, %c0_147, %c0_148] : memref<4x8x8xf32, #tpu.memory_space<vmem>>, vector<1x8x8xf32>
      %203 = vector.shape_cast %202 : vector<1x8x8xf32> to vector<8x8xf32>
      %204 = vector.broadcast %201 : vector<8x1xf32> to vector<8x8xf32>
      %205 = arith.mulf %203, %204 : vector<8x8xf32>
      %206 = arith.truncf %205 : vector<8x8xf32> to vector<8x8xbf16>
      %c0_149 = arith.constant 0 : index
      %c0_150 = arith.constant 0 : index
      %c8_151 = arith.constant 8 : index
      %207 = vector.load %arg7[%c0_149, %c0_150, %c8_151] : memref<1x8x32xbf16, #tpu.memory_space<vmem>>, vector<1x8x8xbf16>
      %208 = vector.shape_cast %207 : vector<1x8x8xbf16> to vector<8x8xbf16>
      %209 = vector.shape_cast %206 : vector<8x8xbf16> to vector<1x8x8xbf16>
      tpu.vector_store %arg7[%c0_149, %c0_150, %c8_151], %209 {strides = array<i32>} : memref<1x8x32xbf16, #tpu.memory_space<vmem>>, vector<1x8x8xbf16>,
      %c2_152 = arith.constant 2 : index
      %c0_153 = arith.constant 0 : index
      %c0_154 = arith.constant 0 : index
      %210 = vector.load %arg9[%c2_152, %c0_153, %c0_154] : memref<4x8x1xf32, #tpu.memory_space<vmem>>, vector<1x8x1xf32>
      %211 = vector.shape_cast %210 : vector<1x8x1xf32> to vector<8x1xf32>
      %212 = tpu.reciprocal %211 {approx = true} : vector<8x1xf32> -> vector<8x1xf32>
      %c2_155 = arith.constant 2 : index
      %c0_156 = arith.constant 0 : index
      %c0_157 = arith.constant 0 : index
      %213 = vector.load %arg10[%c2_155, %c0_156, %c0_157] : memref<4x8x8xf32, #tpu.memory_space<vmem>>, vector<1x8x8xf32>
      %214 = vector.shape_cast %213 : vector<1x8x8xf32> to vector<8x8xf32>
      %215 = vector.broadcast %212 : vector<8x1xf32> to vector<8x8xf32>
      %216 = arith.mulf %214, %215 : vector<8x8xf32>
      %217 = arith.truncf %216 : vector<8x8xf32> to vector<8x8xbf16>
      %c0_158 = arith.constant 0 : index
      %c0_159 = arith.constant 0 : index
      %c16_160 = arith.constant 16 : index
      %218 = vector.load %arg7[%c0_158, %c0_159, %c16_160] : memref<1x8x32xbf16, #tpu.memory_space<vmem>>, vector<1x8x8xbf16>
      %219 = vector.shape_cast %218 : vector<1x8x8xbf16> to vector<8x8xbf16>
      %220 = vector.shape_cast %217 : vector<8x8xbf16> to vector<1x8x8xbf16>
      tpu.vector_store %arg7[%c0_158, %c0_159, %c16_160], %220 {strides = array<i32>} : memref<1x8x32xbf16, #tpu.memory_space<vmem>>, vector<1x8x8xbf16>,
      %c3_161 = arith.constant 3 : index
      %c0_162 = arith.constant 0 : index
      %c0_163 = arith.constant 0 : index
      %221 = vector.load %arg9[%c3_161, %c0_162, %c0_163] : memref<4x8x1xf32, #tpu.memory_space<vmem>>, vector<1x8x1xf32>
      %222 = vector.shape_cast %221 : vector<1x8x1xf32> to vector<8x1xf32>
      %223 = tpu.reciprocal %222 {approx = true} : vector<8x1xf32> -> vector<8x1xf32>
      %c3_164 = arith.constant 3 : index
      %c0_165 = arith.constant 0 : index
      %c0_166 = arith.constant 0 : index
      %224 = vector.load %arg10[%c3_164, %c0_165, %c0_166] : memref<4x8x8xf32, #tpu.memory_space<vmem>>, vector<1x8x8xf32>
      %225 = vector.shape_cast %224 : vector<1x8x8xf32> to vector<8x8xf32>
      %226 = vector.broadcast %223 : vector<8x1xf32> to vector<8x8xf32>
      %227 = arith.mulf %225, %226 : vector<8x8xf32>
      %228 = arith.truncf %227 : vector<8x8xf32> to vector<8x8xbf16>
      %c0_167 = arith.constant 0 : index
      %c0_168 = arith.constant 0 : index
      %c24_169 = arith.constant 24 : index
      %229 = vector.load %arg7[%c0_167, %c0_168, %c24_169] : memref<1x8x32xbf16, #tpu.memory_space<vmem>>, vector<1x8x8xbf16>
      %230 = vector.shape_cast %229 : vector<1x8x8xbf16> to vector<8x8xbf16>
      %231 = vector.shape_cast %228 : vector<8x8xbf16> to vector<1x8x8xbf16>
      tpu.vector_store %arg7[%c0_167, %c0_168, %c24_169], %231 {strides = array<i32>} : memref<1x8x32xbf16, #tpu.memory_space<vmem>>, vector<1x8x8xbf16>,
    } else {
    }
    return
  }
  func.func @transform_0(%arg0: i32, %arg1: i32, %arg2: i32) -> (i32, i32, i32) {
    %c0_i32 = arith.constant 0 : i32
    %c0_i32_0 = arith.constant 0 : i32
    return %arg0, %arg1, %c0_i32 : i32, i32, i32
  }
  func.func @transform_1(%arg0: i32, %arg1: i32, %arg2: i32) -> (i32, i32, i32) {
    %c0_i32 = arith.constant 0 : i32
    %c0_i32_0 = arith.constant 0 : i32
    return %arg0, %arg2, %c0_i32 : i32, i32, i32
  }
  func.func @transform_2(%arg0: i32, %arg1: i32, %arg2: i32) -> (i32, i32, i32) {
    %c0_i32 = arith.constant 0 : i32
    %c0_i32_0 = arith.constant 0 : i32
    return %arg0, %arg2, %c0_i32 : i32, i32, i32
  }
  func.func @transform_3(%arg0: i32, %arg1: i32, %arg2: i32) -> (i32, i32, i32) {
    %c0_i32 = arith.constant 0 : i32
    return %arg0, %arg1, %arg2 : i32, i32, i32
  }
  func.func @transform_4(%arg0: i32, %arg1: i32, %arg2: i32) -> (i32, i32, i32) {
    %c0_i32 = arith.constant 0 : i32
    %c0_i32_0 = arith.constant 0 : i32
    return %arg0, %arg1, %c0_i32 : i32, i32, i32
  }
}

module attributes {stable_mosaic.version = 11 : i64} {
  func.func @_proj_kernel(%arg0: i32, %arg1: memref<16x32xf32, #tpu.memory_space<vmem>>, %arg2: memref<1x32xf32, #tpu.memory_space<vmem>>, %arg3: memref<1x32xf32, #tpu.memory_space<vmem>>, %arg4: memref<32x32xbf16, #tpu.memory_space<vmem>>, %arg5: memref<1x32xf32, #tpu.memory_space<vmem>>, %arg6: memref<16x32xbf16, #tpu.memory_space<vmem>>) attributes {dimension_semantics = [#tpu.dimension_semantics<parallel>], iteration_bounds = array<i64: 1>, scalar_prefetch = 0 : i64, scratch_operands = 0 : i64, tpu.core_type = #tpu.core_type<tc>, window_params = [{transform_indices = @transform_0, window_bounds = array<i64: 16, 32>}, {pipeline_mode = #tpu.pipeline_mode<synchronous>, transform_indices = @transform_1, window_bounds = array<i64: 1, 32>}, {pipeline_mode = #tpu.pipeline_mode<synchronous>, transform_indices = @transform_2, window_bounds = array<i64: 1, 32>}, {pipeline_mode = #tpu.pipeline_mode<synchronous>, transform_indices = @transform_3, window_bounds = array<i64: 32, 32>}, {pipeline_mode = #tpu.pipeline_mode<synchronous>, transform_indices = @transform_4, window_bounds = array<i64: 1, 32>}, {transform_indices = @transform_5, window_bounds = array<i64: 16, 32>}]} {
    %c0 = arith.constant 0 : index
    %c0_0 = arith.constant 0 : index
    %0 = vector.load %arg1[%c0, %c0_0] : memref<16x32xf32, #tpu.memory_space<vmem>>, vector<16x32xf32>
    %cst = arith.constant dense<0.000000e+00> : vector<16xf32>
    %1 = vector.multi_reduction <add>, %0, %cst [1] : vector<16x32xf32> to vector<16xf32>
    %2 = vector.shape_cast %1 : vector<16xf32> to vector<16x1xf32>
    %cst_1 = arith.constant 3.200000e+01 : f32
    %3 = vector.broadcast %cst_1 : f32 to vector<16x1xf32>
    %4 = arith.divf %2, %3 : vector<16x1xf32>
    %5 = vector.broadcast %4 : vector<16x1xf32> to vector<16x32xf32>
    %6 = arith.subf %0, %5 : vector<16x32xf32>
    %7 = arith.mulf %6, %6 : vector<16x32xf32>
    %cst_2 = arith.constant dense<0.000000e+00> : vector<16xf32>
    %8 = vector.multi_reduction <add>, %7, %cst_2 [1] : vector<16x32xf32> to vector<16xf32>
    %9 = vector.shape_cast %8 : vector<16xf32> to vector<16x1xf32>
    %cst_3 = arith.constant 3.100000e+01 : f32
    %10 = vector.broadcast %cst_3 : f32 to vector<16x1xf32>
    %11 = arith.divf %9, %10 : vector<16x1xf32>
    %c0_4 = arith.constant 0 : index
    %c0_5 = arith.constant 0 : index
    %12 = vector.load %arg2[%c0_4, %c0_5] : memref<1x32xf32, #tpu.memory_space<vmem>>, vector<1x32xf32>
    %13 = vector.broadcast %12 : vector<1x32xf32> to vector<16x32xf32>
    %14 = arith.mulf %13, %6 : vector<16x32xf32>
    %15 = math.sqrt %11 : vector<16x1xf32>
    %cst_6 = arith.constant 9.99999997E-7 : f32
    %16 = vector.broadcast %cst_6 : f32 to vector<16x1xf32>
    %17 = arith.addf %15, %16 : vector<16x1xf32>
    %18 = vector.broadcast %17 : vector<16x1xf32> to vector<16x32xf32>
    %19 = arith.divf %14, %18 : vector<16x32xf32>
    %c0_7 = arith.constant 0 : index
    %c0_8 = arith.constant 0 : index
    %20 = vector.load %arg3[%c0_7, %c0_8] : memref<1x32xf32, #tpu.memory_space<vmem>>, vector<1x32xf32>
    %21 = vector.broadcast %20 : vector<1x32xf32> to vector<16x32xf32>
    %22 = arith.addf %19, %21 : vector<16x32xf32>
    %23 = arith.truncf %22 : vector<16x32xf32> to vector<16x32xbf16>
    %c0_9 = arith.constant 0 : index
    %c0_10 = arith.constant 0 : index
    %24 = vector.load %arg4[%c0_9, %c0_10] : memref<32x32xbf16, #tpu.memory_space<vmem>>, vector<32x32xbf16>
    %cst_11 = arith.constant dense<0.000000e+00> : vector<16x32xf32>
    %25 = tpu.matmul %23, %24, %cst_11 {dimension_numbers = #tpu.dot_dimension_numbers<[1], [0], [0], [1], [0, 0, 1, 1], [], []>} : vector<16x32xbf16>, vector<32x32xbf16>, vector<16x32xf32> -> vector<16x32xf32>
    %c0_12 = arith.constant 0 : index
    %c0_13 = arith.constant 0 : index
    %26 = vector.load %arg5[%c0_12, %c0_13] : memref<1x32xf32, #tpu.memory_space<vmem>>, vector<1x32xf32>
    %27 = vector.broadcast %26 : vector<1x32xf32> to vector<16x32xf32>
    %28 = arith.addf %25, %27 : vector<16x32xf32>
    %29 = arith.truncf %28 : vector<16x32xf32> to vector<16x32xbf16>
    %c0_14 = arith.constant 0 : index
    %c0_15 = arith.constant 0 : index
    %30 = vector.load %arg6[%c0_14, %c0_15] : memref<16x32xbf16, #tpu.memory_space<vmem>>, vector<16x32xbf16>
    tpu.vector_store %arg6[%c0_14, %c0_15], %29 {strides = array<i32>} : memref<16x32xbf16, #tpu.memory_space<vmem>>, vector<16x32xbf16>,
    return
  }
  func.func @transform_0(%arg0: i32) -> (i32, i32) {
    %c0_i32 = arith.constant 0 : i32
    %c0_i32_0 = arith.constant 0 : i32
    return %arg0, %c0_i32 : i32, i32
  }
  func.func @transform_1(%arg0: i32) -> (i32, i32) {
    %c0_i32 = arith.constant 0 : i32
    %c0_i32_0 = arith.constant 0 : i32
    %c0_i32_1 = arith.constant 0 : i32
    return %c0_i32, %c0_i32_0 : i32, i32
  }
  func.func @transform_2(%arg0: i32) -> (i32, i32) {
    %c0_i32 = arith.constant 0 : i32
    %c0_i32_0 = arith.constant 0 : i32
    %c0_i32_1 = arith.constant 0 : i32
    return %c0_i32, %c0_i32_0 : i32, i32
  }
  func.func @transform_3(%arg0: i32) -> (i32, i32) {
    %c0_i32 = arith.constant 0 : i32
    %c0_i32_0 = arith.constant 0 : i32
    %c0_i32_1 = arith.constant 0 : i32
    return %c0_i32, %c0_i32_0 : i32, i32
  }
  func.func @transform_4(%arg0: i32) -> (i32, i32) {
    %c0_i32 = arith.constant 0 : i32
    %c0_i32_0 = arith.constant 0 : i32
    %c0_i32_1 = arith.constant 0 : i32
    return %c0_i32, %c0_i32_0 : i32, i32
  }
  func.func @transform_5(%arg0: i32) -> (i32, i32) {
    %c0_i32 = arith.constant 0 : i32
    %c0_i32_0 = arith.constant 0 : i32
    return %arg0, %c0_i32 : i32, i32
  }
}

module attributes {stable_mosaic.version = 11 : i64} {
  func.func @_proj_kernel(%arg0: i32, %arg1: memref<16x32xf32, #tpu.memory_space<vmem>>, %arg2: memref<32x32xbf16, #tpu.memory_space<vmem>>, %arg3: memref<1x32xf32, #tpu.memory_space<vmem>>, %arg4: memref<32x32xbf16, #tpu.memory_space<vmem>>, %arg5: memref<1x32xf32, #tpu.memory_space<vmem>>, %arg6: memref<16x32xbf16, #tpu.memory_space<vmem>>, %arg7: memref<16x32xbf16, #tpu.memory_space<vmem>>) attributes {dimension_semantics = [#tpu.dimension_semantics<parallel>], iteration_bounds = array<i64: 1>, scalar_prefetch = 0 : i64, scratch_operands = 0 : i64, tpu.core_type = #tpu.core_type<tc>, window_params = [{transform_indices = @transform_0, window_bounds = array<i64: 16, 32>}, {pipeline_mode = #tpu.pipeline_mode<synchronous>, transform_indices = @transform_1, window_bounds = array<i64: 32, 32>}, {pipeline_mode = #tpu.pipeline_mode<synchronous>, transform_indices = @transform_2, window_bounds = array<i64: 1, 32>}, {pipeline_mode = #tpu.pipeline_mode<synchronous>, transform_indices = @transform_3, window_bounds = array<i64: 32, 32>}, {pipeline_mode = #tpu.pipeline_mode<synchronous>, transform_indices = @transform_4, window_bounds = array<i64: 1, 32>}, {transform_indices = @transform_5, window_bounds = array<i64: 16, 32>}, {transform_indices = @transform_6, window_bounds = array<i64: 16, 32>}]} {
    %c0 = arith.constant 0 : index
    %c0_0 = arith.constant 0 : index
    %0 = vector.load %arg1[%c0, %c0_0] : memref<16x32xf32, #tpu.memory_space<vmem>>, vector<16x32xf32>
    %1 = arith.truncf %0 : vector<16x32xf32> to vector<16x32xbf16>
    %c0_1 = arith.constant 0 : index
    %c0_2 = arith.constant 0 : index
    %2 = vector.load %arg2[%c0_1, %c0_2] : memref<32x32xbf16, #tpu.memory_space<vmem>>, vector<32x32xbf16>
    %cst = arith.constant dense<0.000000e+00> : vector<16x32xf32>
    %3 = tpu.matmul %1, %2, %cst {dimension_numbers = #tpu.dot_dimension_numbers<[1], [0], [0], [1], [0, 0, 1, 1], [], []>} : vector<16x32xbf16>, vector<32x32xbf16>, vector<16x32xf32> -> vector<16x32xf32>
    %c0_3 = arith.constant 0 : index
    %c0_4 = arith.constant 0 : index
    %4 = vector.load %arg3[%c0_3, %c0_4] : memref<1x32xf32, #tpu.memory_space<vmem>>, vector<1x32xf32>
    %5 = vector.broadcast %4 : vector<1x32xf32> to vector<16x32xf32>
    %6 = arith.addf %3, %5 : vector<16x32xf32>
    %7 = arith.truncf %6 : vector<16x32xf32> to vector<16x32xbf16>
    %c0_5 = arith.constant 0 : index
    %c0_6 = arith.constant 0 : index
    %8 = vector.load %arg6[%c0_5, %c0_6] : memref<16x32xbf16, #tpu.memory_space<vmem>>, vector<16x32xbf16>
    tpu.vector_store %arg6[%c0_5, %c0_6], %7 {strides = array<i32>} : memref<16x32xbf16, #tpu.memory_space<vmem>>, vector<16x32xbf16>,
    %c0_7 = arith.constant 0 : index
    %c0_8 = arith.constant 0 : index
    %9 = vector.load %arg4[%c0_7, %c0_8] : memref<32x32xbf16, #tpu.memory_space<vmem>>, vector<32x32xbf16>
    %cst_9 = arith.constant dense<0.000000e+00> : vector<16x32xf32>
    %10 = tpu.matmul %1, %9, %cst_9 {dimension_numbers = #tpu.dot_dimension_numbers<[1], [0], [0], [1], [0, 0, 1, 1], [], []>} : vector<16x32xbf16>, vector<32x32xbf16>, vector<16x32xf32> -> vector<16x32xf32>
    %c0_10 = arith.constant 0 : index
    %c0_11 = arith.constant 0 : index
    %11 = vector.load %arg5[%c0_10, %c0_11] : memref<1x32xf32, #tpu.memory_space<vmem>>, vector<1x32xf32>
    %12 = vector.broadcast %11 : vector<1x32xf32> to vector<16x32xf32>
    %13 = arith.addf %10, %12 : vector<16x32xf32>
    %14 = arith.truncf %13 : vector<16x32xf32> to vector<16x32xbf16>
    %c0_12 = arith.constant 0 : index
    %c0_13 = arith.constant 0 : index
    %15 = vector.load %arg7[%c0_12, %c0_13] : memref<16x32xbf16, #tpu.memory_space<vmem>>, vector<16x32xbf16>
    tpu.vector_store %arg7[%c0_12, %c0_13], %14 {strides = array<i32>} : memref<16x32xbf16, #tpu.memory_space<vmem>>, vector<16x32xbf16>,
    return
  }
  func.func @transform_0(%arg0: i32) -> (i32, i32) {
    %c0_i32 = arith.constant 0 : i32
    %c0_i32_0 = arith.constant 0 : i32
    return %arg0, %c0_i32 : i32, i32
  }
  func.func @transform_1(%arg0: i32) -> (i32, i32) {
    %c0_i32 = arith.constant 0 : i32
    %c0_i32_0 = arith.constant 0 : i32
    %c0_i32_1 = arith.constant 0 : i32
    return %c0_i32, %c0_i32_0 : i32, i32
  }
  func.func @transform_2(%arg0: i32) -> (i32, i32) {
    %c0_i32 = arith.constant 0 : i32
    %c0_i32_0 = arith.constant 0 : i32
    %c0_i32_1 = arith.constant 0 : i32
    return %c0_i32, %c0_i32_0 : i32, i32
  }
  func.func @transform_3(%arg0: i32) -> (i32, i32) {
    %c0_i32 = arith.constant 0 : i32
    %c0_i32_0 = arith.constant 0 : i32
    %c0_i32_1 = arith.constant 0 : i32
    return %c0_i32, %c0_i32_0 : i32, i32
  }
  func.func @transform_4(%arg0: i32) -> (i32, i32) {
    %c0_i32 = arith.constant 0 : i32
    %c0_i32_0 = arith.constant 0 : i32
    %c0_i32_1 = arith.constant 0 : i32
    return %c0_i32, %c0_i32_0 : i32, i32
  }
  func.func @transform_5(%arg0: i32) -> (i32, i32) {
    %c0_i32 = arith.constant 0 : i32
    %c0_i32_0 = arith.constant 0 : i32
    return %arg0, %c0_i32 : i32, i32
  }
  func.func @transform_6(%arg0: i32) -> (i32, i32) {
    %c0_i32 = arith.constant 0 : i32
    %c0_i32_0 = arith.constant 0 : i32
    return %arg0, %c0_i32 : i32, i32
  }
}

module attributes {stable_mosaic.version = 11 : i64} {
  func.func @_flash_attn_kernel(%arg0: i32, %arg1: i32, %arg2: i32, %arg3: memref<1x8x32xbf16, #tpu.memory_space<vmem>>, %arg4: memref<1x8x32xbf16, #tpu.memory_space<vmem>>, %arg5: memref<1x8x32xbf16, #tpu.memory_space<vmem>>, %arg6: memref<1x1x8xf32, #tpu.memory_space<vmem>>, %arg7: memref<1x8x32xbf16, #tpu.memory_space<vmem>>, %arg8: memref<2x8x1xf32, #tpu.memory_space<vmem>>, %arg9: memref<2x8x1xf32, #tpu.memory_space<vmem>>, %arg10: memref<2x8x16xf32, #tpu.memory_space<vmem>>) attributes {dimension_semantics = [#tpu.dimension_semantics<parallel>, #tpu.dimension_semantics<parallel>, #tpu.dimension_semantics<arbitrary>], iteration_bounds = array<i64: 2, 1, 1>, scalar_prefetch = 0 : i64, scratch_operands = 3 : i64, tpu.core_type = #tpu.core_type<tc>, window_params = [{transform_indices = @transform_0, window_bounds = array<i64: 1, 8, 32>}, {transform_indices = @transform_1, window_bounds = array<i64: 1, 8, 32>}, {transform_indices = @transform_2, window_bounds = array<i64: 1, 8, 32>}, {transform_indices = @transform_3, window_bounds = array<i64: 1, 1, 8>}, {transform_indices = @transform_4, window_bounds = array<i64: 1, 8, 32>}]} {
    %c0_i32 = arith.constant 0 : i32
    %0 = arith.cmpi eq, %arg2, %c0_i32 : i32
    %1 = arith.extui %0 : i1 to i32
    %c0_i32_0 = arith.constant 0 : i32
    %2 = arith.cmpi ne, %1, %c0_i32_0 : i32
    scf.if %2 {
      %cst_70 = arith.constant 0xFF800000 : f32
      %102 = vector.broadcast %cst_70 : f32 to vector<2x8x1xf32>
      %c0_71 = arith.constant 0 : index
      %c0_72 = arith.constant 0 : index
      %c0_73 = arith.constant 0 : index
      %103 = vector.load %arg8[%c0_71, %c0_72, %c0_73] : memref<2x8x1xf32, #tpu.memory_space<vmem>>, vector<2x8x1xf32>
      tpu.vector_store %arg8[%c0_71, %c0_72, %c0_73], %102 {strides = array<i32>} : memref<2x8x1xf32, #tpu.memory_space<vmem>>, vector<2x8x1xf32>,
      %cst_74 = arith.constant 0.000000e+00 : f32
      %104 = vector.broadcast %cst_74 : f32 to vector<2x8x1xf32>
      %c0_75 = arith.constant 0 : index
      %c0_76 = arith.constant 0 : index
      %c0_77 = arith.constant 0 : index
      %105 = vector.load %arg9[%c0_75, %c0_76, %c0_77] : memref<2x8x1xf32, #tpu.memory_space<vmem>>, vector<2x8x1xf32>
      tpu.vector_store %arg9[%c0_75, %c0_76, %c0_77], %104 {strides = array<i32>} : memref<2x8x1xf32, #tpu.memory_space<vmem>>, vector<2x8x1xf32>,
      %cst_78 = arith.constant 0.000000e+00 : f32
      %106 = vector.broadcast %cst_78 : f32 to vector<2x8x16xf32>
      %c0_79 = arith.constant 0 : index
      %c0_80 = arith.constant 0 : index
      %c0_81 = arith.constant 0 : index
      %107 = vector.load %arg10[%c0_79, %c0_80, %c0_81] : memref<2x8x16xf32, #tpu.memory_space<vmem>>, vector<2x8x16xf32>
      tpu.vector_store %arg10[%c0_79, %c0_80, %c0_81], %106 {strides = array<i32>} : memref<2x8x16xf32, #tpu.memory_space<vmem>>, vector<2x8x16xf32>,
    } else {
    }
    %c0 = arith.constant 0 : index
    %c0_1 = arith.constant 0 : index
    %c0_2 = arith.constant 0 : index
    %3 = vector.load %arg6[%c0, %c0_1, %c0_2] : memref<1x1x8xf32, #tpu.memory_space<vmem>>, vector<1x1x8xf32>
    %4 = vector.shape_cast %3 : vector<1x1x8xf32> to vector<1x8xf32>
    %c0_3 = arith.constant 0 : index
    %c0_4 = arith.constant 0 : index
    %c0_5 = arith.constant 0 : index
    %5 = vector.load %arg3[%c0_3, %c0_4, %c0_5] : memref<1x8x32xbf16, #tpu.memory_space<vmem>>, vector<1x8x16xbf16>
    %6 = vector.shape_cast %5 : vector<1x8x16xbf16> to vector<8x16xbf16>
    %c0_6 = arith.constant 0 : index
    %c0_7 = arith.constant 0 : index
    %c0_8 = arith.constant 0 : index
    %7 = vector.load %arg4[%c0_6, %c0_7, %c0_8] : memref<1x8x32xbf16, #tpu.memory_space<vmem>>, vector<1x8x16xbf16>
    %8 = vector.shape_cast %7 : vector<1x8x16xbf16> to vector<8x16xbf16>
    %c0_9 = arith.constant 0 : index
    %c0_10 = arith.constant 0 : index
    %c0_11 = arith.constant 0 : index
    %9 = vector.load %arg5[%c0_9, %c0_10, %c0_11] : memref<1x8x32xbf16, #tpu.memory_space<vmem>>, vector<1x8x16xbf16>
    %10 = vector.shape_cast %9 : vector<1x8x16xbf16> to vector<8x16xbf16>
    %cst = arith.constant dense<0.000000e+00> : vector<8x8xf32>
    %11 = tpu.matmul %6, %8, %cst {dimension_numbers = #tpu.dot_dimension_numbers<[1], [1], [0], [0], [0, 0, 1, 0], [], []>} : vector<8x16xbf16>, vector<8x16xbf16>, vector<8x8xf32> -> vector<8x8xf32>
    %cst_12 = arith.constant 2.500000e-01 : f32
    %12 = vector.broadcast %cst_12 : f32 to vector<8x8xf32>
    %13 = arith.mulf %11, %12 : vector<8x8xf32>
    %cst_13 = arith.constant 0.000000e+00 : f32
    %14 = vector.broadcast %cst_13 : f32 to vector<1x8xf32>
    %15 = arith.cmpf oeq, %4, %14 : vector<1x8xf32>
    %cst_14 = arith.constant -1.000000e+09 : f32
    %16 = vector.shape_cast %15 : vector<1x8xi1> to vector<1x8xi1>
    %17 = vector.broadcast %16 : vector<1x8xi1> to vector<8x8xi1>
    %18 = vector.broadcast %cst_14 : f32 to vector<8x8xf32>
    %19 = arith.select %17, %18, %13 : vector<8x8xi1>, vector<8x8xf32>
    %c0_15 = arith.constant 0 : index
    %c0_16 = arith.constant 0 : index
    %c0_17 = arith.constant 0 : index
    %20 = vector.load %arg8[%c0_15, %c0_16, %c0_17] : memref<2x8x1xf32, #tpu.memory_space<vmem>>, vector<1x8x1xf32>
    %21 = vector.shape_cast %20 : vector<1x8x1xf32> to vector<8x1xf32>
    %cst_18 = arith.constant dense<0xFF800000> : vector<8xf32>
    %22 = vector.multi_reduction <maximumf>, %19, %cst_18 [1] : vector<8x8xf32> to vector<8xf32>
    %23 = vector.shape_cast %22 : vector<8xf32> to vector<8x1xf32>
    %24 = arith.maximumf %21, %23 : vector<8x1xf32>
    %25 = arith.subf %21, %24 : vector<8x1xf32>
    %26 = math.exp %25 : vector<8x1xf32>
    %27 = vector.broadcast %24 : vector<8x1xf32> to vector<8x8xf32>
    %28 = arith.subf %19, %27 : vector<8x8xf32>
    %29 = math.exp %28 : vector<8x8xf32>
    %c0_19 = arith.constant 0 : index
    %c0_20 = arith.constant 0 : index
    %c0_21 = arith.constant 0 : index
    %30 = vector.load %arg9[%c0_19, %c0_20, %c0_21] : memref<2x8x1xf32, #tpu.memory_space<vmem>>, vector<1x8x1xf32>
    %31 = vector.shape_cast %30 : vector<1x8x1xf32> to vector<8x1xf32>
    %32 = arith.mulf %26, %31 : vector<8x1xf32>
    %cst_22 = arith.constant dense<0.000000e+00> : vector<8xf32>
    %33 = vector.multi_reduction <add>, %29, %cst_22 [1] : vector<8x8xf32> to vector<8xf32>
    %34 = vector.shape_cast %33 : vector<8xf32> to vector<8x1xf32>
    %35 = arith.addf %32, %34 : vector<8x1xf32>
    %c0_23 = arith.constant 0 : index
    %c0_24 = arith.constant 0 : index
    %c0_25 = arith.constant 0 : index
    %36 = vector.load %arg9[%c0_23, %c0_24, %c0_25] : memref<2x8x1xf32, #tpu.memory_space<vmem>>, vector<1x8x1xf32>
    %37 = vector.shape_cast %36 : vector<1x8x1xf32> to vector<8x1xf32>
    %38 = vector.shape_cast %35 : vector<8x1xf32> to vector<1x8x1xf32>
    tpu.vector_store %arg9[%c0_23, %c0_24, %c0_25], %38 {strides = array<i32>} : memref<2x8x1xf32, #tpu.memory_space<vmem>>, vector<1x8x1xf32>,
    %c0_26 = arith.constant 0 : index
    %c0_27 = arith.constant 0 : index
    %c0_28 = arith.constant 0 : index
    %39 = vector.load %arg10[%c0_26, %c0_27, %c0_28] : memref<2x8x16xf32, #tpu.memory_space<vmem>>, vector<1x8x16xf32>
    %40 = vector.shape_cast %39 : vector<1x8x16xf32> to vector<8x16xf32>
    %41 = vector.broadcast %26 : vector<8x1xf32> to vector<8x16xf32>
    %42 = arith.mulf %41, %40 : vector<8x16xf32>
    %43 = arith.truncf %29 : vector<8x8xf32> to vector<8x8xbf16>
    %cst_29 = arith.constant dense<0.000000e+00> : vector<8x16xf32>
    %44 = tpu.matmul %43, %10, %cst_29 {dimension_numbers = #tpu.dot_dimension_numbers<[1], [0], [0], [1], [0, 0, 1, 1], [], []>} : vector<8x8xbf16>, vector<8x16xbf16>, vector<8x16xf32> -> vector<8x16xf32>
    %45 = arith.addf %42, %44 : vector<8x16xf32>
    %c0_30 = arith.constant 0 : index
    %c0_31 = arith.constant 0 : index
    %c0_32 = arith.constant 0 : index
    %46 = vector.load %arg10[%c0_30, %c0_31, %c0_32] : memref<2x8x16xf32, #tpu.memory_space<vmem>>, vector<1x8x16xf32>
    %47 = vector.shape_cast %46 : vector<1x8x16xf32> to vector<8x16xf32>
    %48 = vector.shape_cast %45 : vector<8x16xf32> to vector<1x8x16xf32>
    tpu.vector_store %arg10[%c0_30, %c0_31, %c0_32], %48 {strides = array<i32>} : memref<2x8x16xf32, #tpu.memory_space<vmem>>, vector<1x8x16xf32>,
    %c0_33 = arith.constant 0 : index
    %c0_34 = arith.constant 0 : index
    %c0_35 = arith.constant 0 : index
    %49 = vector.load %arg8[%c0_33, %c0_34, %c0_35] : memref<2x8x1xf32, #tpu.memory_space<vmem>>, vector<1x8x1xf32>
    %50 = vector.shape_cast %49 : vector<1x8x1xf32> to vector<8x1xf32>
    %51 = vector.shape_cast %24 : vector<8x1xf32> to vector<1x8x1xf32>
    tpu.vector_store %arg8[%c0_33, %c0_34, %c0_35], %51 {strides = array<i32>} : memref<2x8x1xf32, #tpu.memory_space<vmem>>, vector<1x8x1xf32>,
    %c0_36 = arith.constant 0 : index
    %c0_37 = arith.constant 0 : index
    %c16 = arith.constant 16 : index
    %52 = vector.load %arg3[%c0_36, %c0_37, %c16] : memref<1x8x32xbf16, #tpu.memory_space<vmem>>, vector<1x8x16xbf16>
    %53 = vector.shape_cast %52 : vector<1x8x16xbf16> to vector<8x16xbf16>
    %c0_38 = arith.constant 0 : index
    %c0_39 = arith.constant 0 : index
    %c16_40 = arith.constant 16 : index
    %54 = vector.load %arg4[%c0_38, %c0_39, %c16_40] : memref<1x8x32xbf16, #tpu.memory_space<vmem>>, vector<1x8x16xbf16>
    %55 = vector.shape_cast %54 : vector<1x8x16xbf16> to vector<8x16xbf16>
    %c0_41 = arith.constant 0 : index
    %c0_42 = arith.constant 0 : index
    %c16_43 = arith.constant 16 : index
    %56 = vector.load %arg5[%c0_41, %c0_42, %c16_43] : memref<1x8x32xbf16, #tpu.memory_space<vmem>>, vector<1x8x16xbf16>
    %57 = vector.shape_cast %56 : vector<1x8x16xbf16> to vector<8x16xbf16>
    %cst_44 = arith.constant dense<0.000000e+00> : vector<8x8xf32>
    %58 = tpu.matmul %53, %55, %cst_44 {dimension_numbers = #tpu.dot_dimension_numbers<[1], [1], [0], [0], [0, 0, 1, 0], [], []>} : vector<8x16xbf16>, vector<8x16xbf16>, vector<8x8xf32> -> vector<8x8xf32>
    %cst_45 = arith.constant 2.500000e-01 : f32
    %59 = vector.broadcast %cst_45 : f32 to vector<8x8xf32>
    %60 = arith.mulf %58, %59 : vector<8x8xf32>
    %cst_46 = arith.constant 0.000000e+00 : f32
    %61 = vector.broadcast %cst_46 : f32 to vector<1x8xf32>
    %62 = arith.cmpf oeq, %4, %61 : vector<1x8xf32>
    %cst_47 = arith.constant -1.000000e+09 : f32
    %63 = vector.shape_cast %62 : vector<1x8xi1> to vector<1x8xi1>
    %64 = vector.broadcast %63 : vector<1x8xi1> to vector<8x8xi1>
    %65 = vector.broadcast %cst_47 : f32 to vector<8x8xf32>
    %66 = arith.select %64, %65, %60 : vector<8x8xi1>, vector<8x8xf32>
    %c1 = arith.constant 1 : index
    %c0_48 = arith.constant 0 : index
    %c0_49 = arith.constant 0 : index
    %67 = vector.load %arg8[%c1, %c0_48, %c0_49] : memref<2x8x1xf32, #tpu.memory_space<vmem>>, vector<1x8x1xf32>
    %68 = vector.shape_cast %67 : vector<1x8x1xf32> to vector<8x1xf32>
    %cst_50 = arith.constant dense<0xFF800000> : vector<8xf32>
    %69 = vector.multi_reduction <maximumf>, %66, %cst_50 [1] : vector<8x8xf32> to vector<8xf32>
    %70 = vector.shape_cast %69 : vector<8xf32> to vector<8x1xf32>
    %71 = arith.maximumf %68, %70 : vector<8x1xf32>
    %72 = arith.subf %68, %71 : vector<8x1xf32>
    %73 = math.exp %72 : vector<8x1xf32>
    %74 = vector.broadcast %71 : vector<8x1xf32> to vector<8x8xf32>
    %75 = arith.subf %66, %74 : vector<8x8xf32>
    %76 = math.exp %75 : vector<8x8xf32>
    %c1_51 = arith.constant 1 : index
    %c0_52 = arith.constant 0 : index
    %c0_53 = arith.constant 0 : index
    %77 = vector.load %arg9[%c1_51, %c0_52, %c0_53] : memref<2x8x1xf32, #tpu.memory_space<vmem>>, vector<1x8x1xf32>
    %78 = vector.shape_cast %77 : vector<1x8x1xf32> to vector<8x1xf32>
    %79 = arith.mulf %73, %78 : vector<8x1xf32>
    %cst_54 = arith.constant dense<0.000000e+00> : vector<8xf32>
    %80 = vector.multi_reduction <add>, %76, %cst_54 [1] : vector<8x8xf32> to vector<8xf32>
    %81 = vector.shape_cast %80 : vector<8xf32> to vector<8x1xf32>
    %82 = arith.addf %79, %81 : vector<8x1xf32>
    %c1_55 = arith.constant 1 : index
    %c0_56 = arith.constant 0 : index
    %c0_57 = arith.constant 0 : index
    %83 = vector.load %arg9[%c1_55, %c0_56, %c0_57] : memref<2x8x1xf32, #tpu.memory_space<vmem>>, vector<1x8x1xf32>
    %84 = vector.shape_cast %83 : vector<1x8x1xf32> to vector<8x1xf32>
    %85 = vector.shape_cast %82 : vector<8x1xf32> to vector<1x8x1xf32>
    tpu.vector_store %arg9[%c1_55, %c0_56, %c0_57], %85 {strides = array<i32>} : memref<2x8x1xf32, #tpu.memory_space<vmem>>, vector<1x8x1xf32>,
    %c1_58 = arith.constant 1 : index
    %c0_59 = arith.constant 0 : index
    %c0_60 = arith.constant 0 : index
    %86 = vector.load %arg10[%c1_58, %c0_59, %c0_60] : memref<2x8x16xf32, #tpu.memory_space<vmem>>, vector<1x8x16xf32>
    %87 = vector.shape_cast %86 : vector<1x8x16xf32> to vector<8x16xf32>
    %88 = vector.broadcast %73 : vector<8x1xf32> to vector<8x16xf32>
    %89 = arith.mulf %88, %87 : vector<8x16xf32>
    %90 = arith.truncf %76 : vector<8x8xf32> to vector<8x8xbf16>
    %cst_61 = arith.constant dense<0.000000e+00> : vector<8x16xf32>
    %91 = tpu.matmul %90, %57, %cst_61 {dimension_numbers = #tpu.dot_dimension_numbers<[1], [0], [0], [1], [0, 0, 1, 1], [], []>} : vector<8x8xbf16>, vector<8x16xbf16>, vector<8x16xf32> -> vector<8x16xf32>
    %92 = arith.addf %89, %91 : vector<8x16xf32>
    %c1_62 = arith.constant 1 : index
    %c0_63 = arith.constant 0 : index
    %c0_64 = arith.constant 0 : index
    %93 = vector.load %arg10[%c1_62, %c0_63, %c0_64] : memref<2x8x16xf32, #tpu.memory_space<vmem>>, vector<1x8x16xf32>
    %94 = vector.shape_cast %93 : vector<1x8x16xf32> to vector<8x16xf32>
    %95 = vector.shape_cast %92 : vector<8x16xf32> to vector<1x8x16xf32>
    tpu.vector_store %arg10[%c1_62, %c0_63, %c0_64], %95 {strides = array<i32>} : memref<2x8x16xf32, #tpu.memory_space<vmem>>, vector<1x8x16xf32>,
    %c1_65 = arith.constant 1 : index
    %c0_66 = arith.constant 0 : index
    %c0_67 = arith.constant 0 : index
    %96 = vector.load %arg8[%c1_65, %c0_66, %c0_67] : memref<2x8x1xf32, #tpu.memory_space<vmem>>, vector<1x8x1xf32>
    %97 = vector.shape_cast %96 : vector<1x8x1xf32> to vector<8x1xf32>
    %98 = vector.shape_cast %71 : vector<8x1xf32> to vector<1x8x1xf32>
    tpu.vector_store %arg8[%c1_65, %c0_66, %c0_67], %98 {strides = array<i32>} : memref<2x8x1xf32, #tpu.memory_space<vmem>>, vector<1x8x1xf32>,
    %c0_i32_68 = arith.constant 0 : i32
    %99 = arith.cmpi eq, %arg2, %c0_i32_68 : i32
    %100 = arith.extui %99 : i1 to i32
    %c0_i32_69 = arith.constant 0 : i32
    %101 = arith.cmpi ne, %100, %c0_i32_69 : i32
    scf.if %101 {
      %c0_70 = arith.constant 0 : index
      %c0_71 = arith.constant 0 : index
      %c0_72 = arith.constant 0 : index
      %102 = vector.load %arg9[%c0_70, %c0_71, %c0_72] : memref<2x8x1xf32, #tpu.memory_space<vmem>>, vector<1x8x1xf32>
      %103 = vector.shape_cast %102 : vector<1x8x1xf32> to vector<8x1xf32>
      %104 = tpu.reciprocal %103 {approx = true} : vector<8x1xf32> -> vector<8x1xf32>
      %c0_73 = arith.constant 0 : index
      %c0_74 = arith.constant 0 : index
      %c0_75 = arith.constant 0 : index
      %105 = vector.load %arg10[%c0_73, %c0_74, %c0_75] : memref<2x8x16xf32, #tpu.memory_space<vmem>>, vector<1x8x16xf32>
      %106 = vector.shape_cast %105 : vector<1x8x16xf32> to vector<8x16xf32>
      %107 = vector.broadcast %104 : vector<8x1xf32> to vector<8x16xf32>
      %108 = arith.mulf %106, %107 : vector<8x16xf32>
      %109 = arith.truncf %108 : vector<8x16xf32> to vector<8x16xbf16>
      %c0_76 = arith.constant 0 : index
      %c0_77 = arith.constant 0 : index
      %c0_78 = arith.constant 0 : index
      %110 = vector.load %arg7[%c0_76, %c0_77, %c0_78] : memref<1x8x32xbf16, #tpu.memory_space<vmem>>, vector<1x8x16xbf16>
      %111 = vector.shape_cast %110 : vector<1x8x16xbf16> to vector<8x16xbf16>
      %112 = vector.shape_cast %109 : vector<8x16xbf16> to vector<1x8x16xbf16>
      tpu.vector_store %arg7[%c0_76, %c0_77, %c0_78], %112 {strides = array<i32>} : memref<1x8x32xbf16, #tpu.memory_space<vmem>>, vector<1x8x16xbf16>,
      %c1_79 = arith.constant 1 : index
      %c0_80 = arith.constant 0 : index
      %c0_81 = arith.constant 0 : index
      %113 = vector.load %arg9[%c1_79, %c0_80, %c0_81] : memref<2x8x1xf32, #tpu.memory_space<vmem>>, vector<1x8x1xf32>
      %114 = vector.shape_cast %113 : vector<1x8x1xf32> to vector<8x1xf32>
      %115 = tpu.reciprocal %114 {approx = true} : vector<8x1xf32> -> vector<8x1xf32>
      %c1_82 = arith.constant 1 : index
      %c0_83 = arith.constant 0 : index
      %c0_84 = arith.constant 0 : index
      %116 = vector.load %arg10[%c1_82, %c0_83, %c0_84] : memref<2x8x16xf32, #tpu.memory_space<vmem>>, vector<1x8x16xf32>
      %117 = vector.shape_cast %116 : vector<1x8x16xf32> to vector<8x16xf32>
      %118 = vector.broadcast %115 : vector<8x1xf32> to vector<8x16xf32>
      %119 = arith.mulf %117, %118 : vector<8x16xf32>
      %120 = arith.truncf %119 : vector<8x16xf32> to vector<8x16xbf16>
      %c0_85 = arith.constant 0 : index
      %c0_86 = arith.constant 0 : index
      %c16_87 = arith.constant 16 : index
      %121 = vector.load %arg7[%c0_85, %c0_86, %c16_87] : memref<1x8x32xbf16, #tpu.memory_space<vmem>>, vector<1x8x16xbf16>
      %122 = vector.shape_cast %121 : vector<1x8x16xbf16> to vector<8x16xbf16>
      %123 = vector.shape_cast %120 : vector<8x16xbf16> to vector<1x8x16xbf16>
      tpu.vector_store %arg7[%c0_85, %c0_86, %c16_87], %123 {strides = array<i32>} : memref<1x8x32xbf16, #tpu.memory_space<vmem>>, vector<1x8x16xbf16>,
    } else {
    }
    return
  }
  func.func @transform_0(%arg0: i32, %arg1: i32, %arg2: i32) -> (i32, i32, i32) {
    %c0_i32 = arith.constant 0 : i32
    %c0_i32_0 = arith.constant 0 : i32
    return %arg0, %arg1, %c0_i32 : i32, i32, i32
  }
  func.func @transform_1(%arg0: i32, %arg1: i32, %arg2: i32) -> (i32, i32, i32) {
    %c0_i32 = arith.constant 0 : i32
    %c0_i32_0 = arith.constant 0 : i32
    return %arg0, %arg2, %c0_i32 : i32, i32, i32
  }
  func.func @transform_2(%arg0: i32, %arg1: i32, %arg2: i32) -> (i32, i32, i32) {
    %c0_i32 = arith.constant 0 : i32
    %c0_i32_0 = arith.constant 0 : i32
    return %arg0, %arg2, %c0_i32 : i32, i32, i32
  }
  func.func @transform_3(%arg0: i32, %arg1: i32, %arg2: i32) -> (i32, i32, i32) {
    %c0_i32 = arith.constant 0 : i32
    %c0_i32_0 = arith.constant 0 : i32
    return %arg0, %c0_i32, %arg2 : i32, i32, i32
  }
  func.func @transform_4(%arg0: i32, %arg1: i32, %arg2: i32) -> (i32, i32, i32) {
    %c0_i32 = arith.constant 0 : i32
    %c0_i32_0 = arith.constant 0 : i32
    return %arg0, %arg1, %c0_i32 : i32, i32, i32
  }
}

module attributes {stable_mosaic.version = 11 : i64} {
  func.func @_norm_mask_kernel(%arg0: i32, %arg1: memref<16x32xf32, #tpu.memory_space<vmem>>, %arg2: memref<1x32xf32, #tpu.memory_space<vmem>>, %arg3: memref<1x32xf32, #tpu.memory_space<vmem>>, %arg4: memref<16x1xf32, #tpu.memory_space<vmem>>, %arg5: memref<16x32xf32, #tpu.memory_space<vmem>>) attributes {dimension_semantics = [#tpu.dimension_semantics<parallel>], iteration_bounds = array<i64: 1>, scalar_prefetch = 0 : i64, scratch_operands = 0 : i64, tpu.core_type = #tpu.core_type<tc>, window_params = [{transform_indices = @transform_0, window_bounds = array<i64: 16, 32>}, {pipeline_mode = #tpu.pipeline_mode<synchronous>, transform_indices = @transform_1, window_bounds = array<i64: 1, 32>}, {pipeline_mode = #tpu.pipeline_mode<synchronous>, transform_indices = @transform_2, window_bounds = array<i64: 1, 32>}, {transform_indices = @transform_3, window_bounds = array<i64: 16, 1>}, {transform_indices = @transform_4, window_bounds = array<i64: 16, 32>}]} {
    %c0 = arith.constant 0 : index
    %c0_0 = arith.constant 0 : index
    %0 = vector.load %arg1[%c0, %c0_0] : memref<16x32xf32, #tpu.memory_space<vmem>>, vector<16x32xf32>
    %cst = arith.constant dense<0.000000e+00> : vector<16xf32>
    %1 = vector.multi_reduction <add>, %0, %cst [1] : vector<16x32xf32> to vector<16xf32>
    %2 = vector.shape_cast %1 : vector<16xf32> to vector<16x1xf32>
    %cst_1 = arith.constant 3.200000e+01 : f32
    %3 = vector.broadcast %cst_1 : f32 to vector<16x1xf32>
    %4 = arith.divf %2, %3 : vector<16x1xf32>
    %5 = vector.broadcast %4 : vector<16x1xf32> to vector<16x32xf32>
    %6 = arith.subf %0, %5 : vector<16x32xf32>
    %7 = arith.mulf %6, %6 : vector<16x32xf32>
    %cst_2 = arith.constant dense<0.000000e+00> : vector<16xf32>
    %8 = vector.multi_reduction <add>, %7, %cst_2 [1] : vector<16x32xf32> to vector<16xf32>
    %9 = vector.shape_cast %8 : vector<16xf32> to vector<16x1xf32>
    %cst_3 = arith.constant 3.100000e+01 : f32
    %10 = vector.broadcast %cst_3 : f32 to vector<16x1xf32>
    %11 = arith.divf %9, %10 : vector<16x1xf32>
    %c0_4 = arith.constant 0 : index
    %c0_5 = arith.constant 0 : index
    %12 = vector.load %arg2[%c0_4, %c0_5] : memref<1x32xf32, #tpu.memory_space<vmem>>, vector<1x32xf32>
    %13 = vector.broadcast %12 : vector<1x32xf32> to vector<16x32xf32>
    %14 = arith.mulf %13, %6 : vector<16x32xf32>
    %15 = math.sqrt %11 : vector<16x1xf32>
    %cst_6 = arith.constant 9.99999997E-7 : f32
    %16 = vector.broadcast %cst_6 : f32 to vector<16x1xf32>
    %17 = arith.addf %15, %16 : vector<16x1xf32>
    %18 = vector.broadcast %17 : vector<16x1xf32> to vector<16x32xf32>
    %19 = arith.divf %14, %18 : vector<16x32xf32>
    %c0_7 = arith.constant 0 : index
    %c0_8 = arith.constant 0 : index
    %20 = vector.load %arg3[%c0_7, %c0_8] : memref<1x32xf32, #tpu.memory_space<vmem>>, vector<1x32xf32>
    %21 = vector.broadcast %20 : vector<1x32xf32> to vector<16x32xf32>
    %22 = arith.addf %19, %21 : vector<16x32xf32>
    %c0_9 = arith.constant 0 : index
    %c0_10 = arith.constant 0 : index
    %23 = vector.load %arg4[%c0_9, %c0_10] : memref<16x1xf32, #tpu.memory_space<vmem>>, vector<16x1xf32>
    %cst_11 = arith.constant 0.000000e+00 : f32
    %24 = vector.broadcast %cst_11 : f32 to vector<16x1xf32>
    %25 = arith.cmpf oeq, %23, %24 : vector<16x1xf32>
    %cst_12 = arith.constant 0.000000e+00 : f32
    %26 = vector.shape_cast %25 : vector<16x1xi1> to vector<16x1xi1>
    %27 = vector.broadcast %26 : vector<16x1xi1> to vector<16x32xi1>
    %28 = vector.broadcast %cst_12 : f32 to vector<16x32xf32>
    %29 = arith.select %27, %28, %22 : vector<16x32xi1>, vector<16x32xf32>
    %c0_13 = arith.constant 0 : index
    %c0_14 = arith.constant 0 : index
    %30 = vector.load %arg5[%c0_13, %c0_14] : memref<16x32xf32, #tpu.memory_space<vmem>>, vector<16x32xf32>
    tpu.vector_store %arg5[%c0_13, %c0_14], %29 {strides = array<i32>} : memref<16x32xf32, #tpu.memory_space<vmem>>, vector<16x32xf32>,
    return
  }
  func.func @transform_0(%arg0: i32) -> (i32, i32) {
    %c0_i32 = arith.constant 0 : i32
    %c0_i32_0 = arith.constant 0 : i32
    return %arg0, %c0_i32 : i32, i32
  }
  func.func @transform_1(%arg0: i32) -> (i32, i32) {
    %c0_i32 = arith.constant 0 : i32
    %c0_i32_0 = arith.constant 0 : i32
    %c0_i32_1 = arith.constant 0 : i32
    return %c0_i32, %c0_i32_0 : i32, i32
  }
  func.func @transform_2(%arg0: i32) -> (i32, i32) {
    %c0_i32 = arith.constant 0 : i32
    %c0_i32_0 = arith.constant 0 : i32
    %c0_i32_1 = arith.constant 0 : i32
    return %c0_i32, %c0_i32_0 : i32, i32
  }
  func.func @transform_3(%arg0: i32) -> (i32, i32) {
    %c0_i32 = arith.constant 0 : i32
    %c0_i32_0 = arith.constant 0 : i32
    return %arg0, %c0_i32 : i32, i32
  }
  func.func @transform_4(%arg0: i32) -> (i32, i32) {
    %c0_i32 = arith.constant 0 : i32
    %c0_i32_0 = arith.constant 0 : i32
    return %arg0, %c0_i32 : i32, i32
  }
}

module attributes {stable_mosaic.version = 11 : i64} {
  func.func @_sepconv_kernel(%arg0: i32, %arg1: memref<1x18x32xf32, #tpu.memory_space<vmem>>, %arg2: memref<11x32xf32, #tpu.memory_space<vmem>>, %arg3: memref<1x32xf32, #tpu.memory_space<vmem>>, %arg4: memref<32x64xbf16, #tpu.memory_space<vmem>>, %arg5: memref<1x64xf32, #tpu.memory_space<vmem>>, %arg6: memref<1x8x64xf32, #tpu.memory_space<vmem>>) attributes {dimension_semantics = [#tpu.dimension_semantics<parallel>], iteration_bounds = array<i64: 2>, scalar_prefetch = 0 : i64, scratch_operands = 0 : i64, tpu.core_type = #tpu.core_type<tc>, window_params = [{transform_indices = @transform_0, window_bounds = array<i64: 1, 18, 32>}, {pipeline_mode = #tpu.pipeline_mode<synchronous>, transform_indices = @transform_1, window_bounds = array<i64: 11, 32>}, {pipeline_mode = #tpu.pipeline_mode<synchronous>, transform_indices = @transform_2, window_bounds = array<i64: 1, 32>}, {pipeline_mode = #tpu.pipeline_mode<synchronous>, transform_indices = @transform_3, window_bounds = array<i64: 32, 64>}, {pipeline_mode = #tpu.pipeline_mode<synchronous>, transform_indices = @transform_4, window_bounds = array<i64: 1, 64>}, {transform_indices = @transform_5, window_bounds = array<i64: 1, 8, 64>}]} {
    %c0 = arith.constant 0 : index
    %c0_0 = arith.constant 0 : index
    %c0_1 = arith.constant 0 : index
    %0 = vector.load %arg1[%c0, %c0_0, %c0_1] : memref<1x18x32xf32, #tpu.memory_space<vmem>>, vector<1x18x32xf32>
    %1 = vector.shape_cast %0 : vector<1x18x32xf32> to vector<18x32xf32>
    %2 = vector.extract_strided_slice %1 {offsets = [0, 0], sizes = [8, 32], strides = [1, 1]} : vector<18x32xf32> to vector<8x32xf32>
    %c0_2 = arith.constant 0 : index
    %c0_3 = arith.constant 0 : index
    %3 = vector.load %arg2[%c0_2, %c0_3] : memref<11x32xf32, #tpu.memory_space<vmem>>, vector<1x32xf32>
    %4 = vector.broadcast %3 : vector<1x32xf32> to vector<8x32xf32>
    %5 = arith.mulf %2, %4 : vector<8x32xf32>
    %6 = vector.extract_strided_slice %1 {offsets = [1, 0], sizes = [8, 32], strides = [1, 1]} : vector<18x32xf32> to vector<8x32xf32>
    %c1 = arith.constant 1 : index
    %c0_4 = arith.constant 0 : index
    %7 = vector.load %arg2[%c1, %c0_4] : memref<11x32xf32, #tpu.memory_space<vmem>>, vector<1x32xf32>
    %8 = vector.broadcast %7 : vector<1x32xf32> to vector<8x32xf32>
    %9 = arith.mulf %6, %8 : vector<8x32xf32>
    %10 = arith.addf %5, %9 : vector<8x32xf32>
    %11 = vector.extract_strided_slice %1 {offsets = [2, 0], sizes = [8, 32], strides = [1, 1]} : vector<18x32xf32> to vector<8x32xf32>
    %c2 = arith.constant 2 : index
    %c0_5 = arith.constant 0 : index
    %12 = vector.load %arg2[%c2, %c0_5] : memref<11x32xf32, #tpu.memory_space<vmem>>, vector<1x32xf32>
    %13 = vector.broadcast %12 : vector<1x32xf32> to vector<8x32xf32>
    %14 = arith.mulf %11, %13 : vector<8x32xf32>
    %15 = arith.addf %10, %14 : vector<8x32xf32>
    %16 = vector.extract_strided_slice %1 {offsets = [3, 0], sizes = [8, 32], strides = [1, 1]} : vector<18x32xf32> to vector<8x32xf32>
    %c3 = arith.constant 3 : index
    %c0_6 = arith.constant 0 : index
    %17 = vector.load %arg2[%c3, %c0_6] : memref<11x32xf32, #tpu.memory_space<vmem>>, vector<1x32xf32>
    %18 = vector.broadcast %17 : vector<1x32xf32> to vector<8x32xf32>
    %19 = arith.mulf %16, %18 : vector<8x32xf32>
    %20 = arith.addf %15, %19 : vector<8x32xf32>
    %21 = vector.extract_strided_slice %1 {offsets = [4, 0], sizes = [8, 32], strides = [1, 1]} : vector<18x32xf32> to vector<8x32xf32>
    %c4 = arith.constant 4 : index
    %c0_7 = arith.constant 0 : index
    %22 = vector.load %arg2[%c4, %c0_7] : memref<11x32xf32, #tpu.memory_space<vmem>>, vector<1x32xf32>
    %23 = vector.broadcast %22 : vector<1x32xf32> to vector<8x32xf32>
    %24 = arith.mulf %21, %23 : vector<8x32xf32>
    %25 = arith.addf %20, %24 : vector<8x32xf32>
    %26 = vector.extract_strided_slice %1 {offsets = [5, 0], sizes = [8, 32], strides = [1, 1]} : vector<18x32xf32> to vector<8x32xf32>
    %c5 = arith.constant 5 : index
    %c0_8 = arith.constant 0 : index
    %27 = vector.load %arg2[%c5, %c0_8] : memref<11x32xf32, #tpu.memory_space<vmem>>, vector<1x32xf32>
    %28 = vector.broadcast %27 : vector<1x32xf32> to vector<8x32xf32>
    %29 = arith.mulf %26, %28 : vector<8x32xf32>
    %30 = arith.addf %25, %29 : vector<8x32xf32>
    %31 = vector.extract_strided_slice %1 {offsets = [6, 0], sizes = [8, 32], strides = [1, 1]} : vector<18x32xf32> to vector<8x32xf32>
    %c6 = arith.constant 6 : index
    %c0_9 = arith.constant 0 : index
    %32 = vector.load %arg2[%c6, %c0_9] : memref<11x32xf32, #tpu.memory_space<vmem>>, vector<1x32xf32>
    %33 = vector.broadcast %32 : vector<1x32xf32> to vector<8x32xf32>
    %34 = arith.mulf %31, %33 : vector<8x32xf32>
    %35 = arith.addf %30, %34 : vector<8x32xf32>
    %36 = vector.extract_strided_slice %1 {offsets = [7, 0], sizes = [8, 32], strides = [1, 1]} : vector<18x32xf32> to vector<8x32xf32>
    %c7 = arith.constant 7 : index
    %c0_10 = arith.constant 0 : index
    %37 = vector.load %arg2[%c7, %c0_10] : memref<11x32xf32, #tpu.memory_space<vmem>>, vector<1x32xf32>
    %38 = vector.broadcast %37 : vector<1x32xf32> to vector<8x32xf32>
    %39 = arith.mulf %36, %38 : vector<8x32xf32>
    %40 = arith.addf %35, %39 : vector<8x32xf32>
    %41 = vector.extract_strided_slice %1 {offsets = [8, 0], sizes = [8, 32], strides = [1, 1]} : vector<18x32xf32> to vector<8x32xf32>
    %c8 = arith.constant 8 : index
    %c0_11 = arith.constant 0 : index
    %42 = vector.load %arg2[%c8, %c0_11] : memref<11x32xf32, #tpu.memory_space<vmem>>, vector<1x32xf32>
    %43 = vector.broadcast %42 : vector<1x32xf32> to vector<8x32xf32>
    %44 = arith.mulf %41, %43 : vector<8x32xf32>
    %45 = arith.addf %40, %44 : vector<8x32xf32>
    %46 = vector.extract_strided_slice %1 {offsets = [9, 0], sizes = [8, 32], strides = [1, 1]} : vector<18x32xf32> to vector<8x32xf32>
    %c9 = arith.constant 9 : index
    %c0_12 = arith.constant 0 : index
    %47 = vector.load %arg2[%c9, %c0_12] : memref<11x32xf32, #tpu.memory_space<vmem>>, vector<1x32xf32>
    %48 = vector.broadcast %47 : vector<1x32xf32> to vector<8x32xf32>
    %49 = arith.mulf %46, %48 : vector<8x32xf32>
    %50 = arith.addf %45, %49 : vector<8x32xf32>
    %51 = vector.extract_strided_slice %1 {offsets = [10, 0], sizes = [8, 32], strides = [1, 1]} : vector<18x32xf32> to vector<8x32xf32>
    %c10 = arith.constant 10 : index
    %c0_13 = arith.constant 0 : index
    %52 = vector.load %arg2[%c10, %c0_13] : memref<11x32xf32, #tpu.memory_space<vmem>>, vector<1x32xf32>
    %53 = vector.broadcast %52 : vector<1x32xf32> to vector<8x32xf32>
    %54 = arith.mulf %51, %53 : vector<8x32xf32>
    %55 = arith.addf %50, %54 : vector<8x32xf32>
    %c0_14 = arith.constant 0 : index
    %c0_15 = arith.constant 0 : index
    %56 = vector.load %arg3[%c0_14, %c0_15] : memref<1x32xf32, #tpu.memory_space<vmem>>, vector<1x32xf32>
    %57 = vector.broadcast %56 : vector<1x32xf32> to vector<8x32xf32>
    %58 = arith.addf %55, %57 : vector<8x32xf32>
    %59 = arith.truncf %58 : vector<8x32xf32> to vector<8x32xbf16>
    %c0_16 = arith.constant 0 : index
    %c0_17 = arith.constant 0 : index
    %60 = vector.load %arg4[%c0_16, %c0_17] : memref<32x64xbf16, #tpu.memory_space<vmem>>, vector<32x64xbf16>
    %cst = arith.constant dense<0.000000e+00> : vector<8x64xf32>
    %61 = tpu.matmul %59, %60, %cst {dimension_numbers = #tpu.dot_dimension_numbers<[1], [0], [0], [1], [0, 0, 1, 1], [], []>} : vector<8x32xbf16>, vector<32x64xbf16>, vector<8x64xf32> -> vector<8x64xf32>
    %c0_18 = arith.constant 0 : index
    %c0_19 = arith.constant 0 : index
    %62 = vector.load %arg5[%c0_18, %c0_19] : memref<1x64xf32, #tpu.memory_space<vmem>>, vector<1x64xf32>
    %63 = vector.broadcast %62 : vector<1x64xf32> to vector<8x64xf32>
    %64 = arith.addf %61, %63 : vector<8x64xf32>
    %cst_20 = arith.constant 0.000000e+00 : f32
    %65 = vector.broadcast %cst_20 : f32 to vector<8x64xf32>
    %66 = arith.maximumf %64, %65 : vector<8x64xf32>
    %c0_21 = arith.constant 0 : index
    %c0_22 = arith.constant 0 : index
    %c0_23 = arith.constant 0 : index
    %67 = vector.load %arg6[%c0_21, %c0_22, %c0_23] : memref<1x8x64xf32, #tpu.memory_space<vmem>>, vector<1x8x64xf32>
    %68 = vector.shape_cast %67 : vector<1x8x64xf32> to vector<8x64xf32>
    %69 = vector.shape_cast %66 : vector<8x64xf32> to vector<1x8x64xf32>
    tpu.vector_store %arg6[%c0_21, %c0_22, %c0_23], %69 {strides = array<i32>} : memref<1x8x64xf32, #tpu.memory_space<vmem>>, vector<1x8x64xf32>,
    return
  }
  func.func @transform_0(%arg0: i32) -> (i32, i32, i32) {
    %c0_i32 = arith.constant 0 : i32
    %c0_i32_0 = arith.constant 0 : i32
    %c0_i32_1 = arith.constant 0 : i32
    return %arg0, %c0_i32, %c0_i32_0 : i32, i32, i32
  }
  func.func @transform_1(%arg0: i32) -> (i32, i32) {
    %c0_i32 = arith.constant 0 : i32
    %c0_i32_0 = arith.constant 0 : i32
    %c0_i32_1 = arith.constant 0 : i32
    return %c0_i32, %c0_i32_0 : i32, i32
  }
  func.func @transform_2(%arg0: i32) -> (i32, i32) {
    %c0_i32 = arith.constant 0 : i32
    %c0_i32_0 = arith.constant 0 : i32
    %c0_i32_1 = arith.constant 0 : i32
    return %c0_i32, %c0_i32_0 : i32, i32
  }
  func.func @transform_3(%arg0: i32) -> (i32, i32) {
    %c0_i32 = arith.constant 0 : i32
    %c0_i32_0 = arith.constant 0 : i32
    %c0_i32_1 = arith.constant 0 : i32
    return %c0_i32, %c0_i32_0 : i32, i32
  }
  func.func @transform_4(%arg0: i32) -> (i32, i32) {
    %c0_i32 = arith.constant 0 : i32
    %c0_i32_0 = arith.constant 0 : i32
    %c0_i32_1 = arith.constant 0 : i32
    return %c0_i32, %c0_i32_0 : i32, i32
  }
  func.func @transform_5(%arg0: i32) -> (i32, i32, i32) {
    %c0_i32 = arith.constant 0 : i32
    %c0_i32_0 = arith.constant 0 : i32
    %c0_i32_1 = arith.constant 0 : i32
    return %arg0, %c0_i32, %c0_i32_0 : i32, i32, i32
  }
}

module attributes {stable_mosaic.version = 11 : i64} {
  func.func @_sepconv_kernel(%arg0: i32, %arg1: memref<1x14x32xf32, #tpu.memory_space<vmem>>, %arg2: memref<7x32xf32, #tpu.memory_space<vmem>>, %arg3: memref<1x32xf32, #tpu.memory_space<vmem>>, %arg4: memref<32x16xbf16, #tpu.memory_space<vmem>>, %arg5: memref<1x16xf32, #tpu.memory_space<vmem>>, %arg6: memref<1x8x16xf32, #tpu.memory_space<vmem>>) attributes {dimension_semantics = [#tpu.dimension_semantics<parallel>], iteration_bounds = array<i64: 2>, scalar_prefetch = 0 : i64, scratch_operands = 0 : i64, tpu.core_type = #tpu.core_type<tc>, window_params = [{transform_indices = @transform_0, window_bounds = array<i64: 1, 14, 32>}, {pipeline_mode = #tpu.pipeline_mode<synchronous>, transform_indices = @transform_1, window_bounds = array<i64: 7, 32>}, {pipeline_mode = #tpu.pipeline_mode<synchronous>, transform_indices = @transform_2, window_bounds = array<i64: 1, 32>}, {pipeline_mode = #tpu.pipeline_mode<synchronous>, transform_indices = @transform_3, window_bounds = array<i64: 32, 16>}, {pipeline_mode = #tpu.pipeline_mode<synchronous>, transform_indices = @transform_4, window_bounds = array<i64: 1, 16>}, {transform_indices = @transform_5, window_bounds = array<i64: 1, 8, 16>}]} {
    %c0 = arith.constant 0 : index
    %c0_0 = arith.constant 0 : index
    %c0_1 = arith.constant 0 : index
    %0 = vector.load %arg1[%c0, %c0_0, %c0_1] : memref<1x14x32xf32, #tpu.memory_space<vmem>>, vector<1x14x32xf32>
    %1 = vector.shape_cast %0 : vector<1x14x32xf32> to vector<14x32xf32>
    %2 = vector.extract_strided_slice %1 {offsets = [0, 0], sizes = [8, 32], strides = [1, 1]} : vector<14x32xf32> to vector<8x32xf32>
    %c0_2 = arith.constant 0 : index
    %c0_3 = arith.constant 0 : index
    %3 = vector.load %arg2[%c0_2, %c0_3] : memref<7x32xf32, #tpu.memory_space<vmem>>, vector<1x32xf32>
    %4 = vector.broadcast %3 : vector<1x32xf32> to vector<8x32xf32>
    %5 = arith.mulf %2, %4 : vector<8x32xf32>
    %6 = vector.extract_strided_slice %1 {offsets = [1, 0], sizes = [8, 32], strides = [1, 1]} : vector<14x32xf32> to vector<8x32xf32>
    %c1 = arith.constant 1 : index
    %c0_4 = arith.constant 0 : index
    %7 = vector.load %arg2[%c1, %c0_4] : memref<7x32xf32, #tpu.memory_space<vmem>>, vector<1x32xf32>
    %8 = vector.broadcast %7 : vector<1x32xf32> to vector<8x32xf32>
    %9 = arith.mulf %6, %8 : vector<8x32xf32>
    %10 = arith.addf %5, %9 : vector<8x32xf32>
    %11 = vector.extract_strided_slice %1 {offsets = [2, 0], sizes = [8, 32], strides = [1, 1]} : vector<14x32xf32> to vector<8x32xf32>
    %c2 = arith.constant 2 : index
    %c0_5 = arith.constant 0 : index
    %12 = vector.load %arg2[%c2, %c0_5] : memref<7x32xf32, #tpu.memory_space<vmem>>, vector<1x32xf32>
    %13 = vector.broadcast %12 : vector<1x32xf32> to vector<8x32xf32>
    %14 = arith.mulf %11, %13 : vector<8x32xf32>
    %15 = arith.addf %10, %14 : vector<8x32xf32>
    %16 = vector.extract_strided_slice %1 {offsets = [3, 0], sizes = [8, 32], strides = [1, 1]} : vector<14x32xf32> to vector<8x32xf32>
    %c3 = arith.constant 3 : index
    %c0_6 = arith.constant 0 : index
    %17 = vector.load %arg2[%c3, %c0_6] : memref<7x32xf32, #tpu.memory_space<vmem>>, vector<1x32xf32>
    %18 = vector.broadcast %17 : vector<1x32xf32> to vector<8x32xf32>
    %19 = arith.mulf %16, %18 : vector<8x32xf32>
    %20 = arith.addf %15, %19 : vector<8x32xf32>
    %21 = vector.extract_strided_slice %1 {offsets = [4, 0], sizes = [8, 32], strides = [1, 1]} : vector<14x32xf32> to vector<8x32xf32>
    %c4 = arith.constant 4 : index
    %c0_7 = arith.constant 0 : index
    %22 = vector.load %arg2[%c4, %c0_7] : memref<7x32xf32, #tpu.memory_space<vmem>>, vector<1x32xf32>
    %23 = vector.broadcast %22 : vector<1x32xf32> to vector<8x32xf32>
    %24 = arith.mulf %21, %23 : vector<8x32xf32>
    %25 = arith.addf %20, %24 : vector<8x32xf32>
    %26 = vector.extract_strided_slice %1 {offsets = [5, 0], sizes = [8, 32], strides = [1, 1]} : vector<14x32xf32> to vector<8x32xf32>
    %c5 = arith.constant 5 : index
    %c0_8 = arith.constant 0 : index
    %27 = vector.load %arg2[%c5, %c0_8] : memref<7x32xf32, #tpu.memory_space<vmem>>, vector<1x32xf32>
    %28 = vector.broadcast %27 : vector<1x32xf32> to vector<8x32xf32>
    %29 = arith.mulf %26, %28 : vector<8x32xf32>
    %30 = arith.addf %25, %29 : vector<8x32xf32>
    %31 = vector.extract_strided_slice %1 {offsets = [6, 0], sizes = [8, 32], strides = [1, 1]} : vector<14x32xf32> to vector<8x32xf32>
    %c6 = arith.constant 6 : index
    %c0_9 = arith.constant 0 : index
    %32 = vector.load %arg2[%c6, %c0_9] : memref<7x32xf32, #tpu.memory_space<vmem>>, vector<1x32xf32>
    %33 = vector.broadcast %32 : vector<1x32xf32> to vector<8x32xf32>
    %34 = arith.mulf %31, %33 : vector<8x32xf32>
    %35 = arith.addf %30, %34 : vector<8x32xf32>
    %c0_10 = arith.constant 0 : index
    %c0_11 = arith.constant 0 : index
    %36 = vector.load %arg3[%c0_10, %c0_11] : memref<1x32xf32, #tpu.memory_space<vmem>>, vector<1x32xf32>
    %37 = vector.broadcast %36 : vector<1x32xf32> to vector<8x32xf32>
    %38 = arith.addf %35, %37 : vector<8x32xf32>
    %39 = arith.truncf %38 : vector<8x32xf32> to vector<8x32xbf16>
    %c0_12 = arith.constant 0 : index
    %c0_13 = arith.constant 0 : index
    %40 = vector.load %arg4[%c0_12, %c0_13] : memref<32x16xbf16, #tpu.memory_space<vmem>>, vector<32x16xbf16>
    %cst = arith.constant dense<0.000000e+00> : vector<8x16xf32>
    %41 = tpu.matmul %39, %40, %cst {dimension_numbers = #tpu.dot_dimension_numbers<[1], [0], [0], [1], [0, 0, 1, 1], [], []>} : vector<8x32xbf16>, vector<32x16xbf16>, vector<8x16xf32> -> vector<8x16xf32>
    %c0_14 = arith.constant 0 : index
    %c0_15 = arith.constant 0 : index
    %42 = vector.load %arg5[%c0_14, %c0_15] : memref<1x16xf32, #tpu.memory_space<vmem>>, vector<1x16xf32>
    %43 = vector.broadcast %42 : vector<1x16xf32> to vector<8x16xf32>
    %44 = arith.addf %41, %43 : vector<8x16xf32>
    %c0_16 = arith.constant 0 : index
    %c0_17 = arith.constant 0 : index
    %c0_18 = arith.constant 0 : index
    %45 = vector.load %arg6[%c0_16, %c0_17, %c0_18] : memref<1x8x16xf32, #tpu.memory_space<vmem>>, vector<1x8x16xf32>
    %46 = vector.shape_cast %45 : vector<1x8x16xf32> to vector<8x16xf32>
    %47 = vector.shape_cast %44 : vector<8x16xf32> to vector<1x8x16xf32>
    tpu.vector_store %arg6[%c0_16, %c0_17, %c0_18], %47 {strides = array<i32>} : memref<1x8x16xf32, #tpu.memory_space<vmem>>, vector<1x8x16xf32>,
    return
  }
  func.func @transform_0(%arg0: i32) -> (i32, i32, i32) {
    %c0_i32 = arith.constant 0 : i32
    %c0_i32_0 = arith.constant 0 : i32
    %c0_i32_1 = arith.constant 0 : i32
    return %arg0, %c0_i32, %c0_i32_0 : i32, i32, i32
  }
  func.func @transform_1(%arg0: i32) -> (i32, i32) {
    %c0_i32 = arith.constant 0 : i32
    %c0_i32_0 = arith.constant 0 : i32
    %c0_i32_1 = arith.constant 0 : i32
    return %c0_i32, %c0_i32_0 : i32, i32
  }
  func.func @transform_2(%arg0: i32) -> (i32, i32) {
    %c0_i32 = arith.constant 0 : i32
    %c0_i32_0 = arith.constant 0 : i32
    %c0_i32_1 = arith.constant 0 : i32
    return %c0_i32, %c0_i32_0 : i32, i32
  }
  func.func @transform_3(%arg0: i32) -> (i32, i32) {
    %c0_i32 = arith.constant 0 : i32
    %c0_i32_0 = arith.constant 0 : i32
    %c0_i32_1 = arith.constant 0 : i32
    return %c0_i32, %c0_i32_0 : i32, i32
  }
  func.func @transform_4(%arg0: i32) -> (i32, i32) {
    %c0_i32 = arith.constant 0 : i32
    %c0_i32_0 = arith.constant 0 : i32
    %c0_i32_1 = arith.constant 0 : i32
    return %c0_i32, %c0_i32_0 : i32, i32
  }
  func.func @transform_5(%arg0: i32) -> (i32, i32, i32) {
    %c0_i32 = arith.constant 0 : i32
    %c0_i32_0 = arith.constant 0 : i32
    %c0_i32_1 = arith.constant 0 : i32
    return %arg0, %c0_i32, %c0_i32_0 : i32, i32, i32
  }
}

module attributes {stable_mosaic.version = 11 : i64} {
  func.func @_norm_mask_kernel(%arg0: i32, %arg1: memref<16x64xf32, #tpu.memory_space<vmem>>, %arg2: memref<1x64xf32, #tpu.memory_space<vmem>>, %arg3: memref<1x64xf32, #tpu.memory_space<vmem>>, %arg4: memref<16x1xf32, #tpu.memory_space<vmem>>, %arg5: memref<16x64xf32, #tpu.memory_space<vmem>>) attributes {dimension_semantics = [#tpu.dimension_semantics<parallel>], iteration_bounds = array<i64: 1>, scalar_prefetch = 0 : i64, scratch_operands = 0 : i64, tpu.core_type = #tpu.core_type<tc>, window_params = [{transform_indices = @transform_0, window_bounds = array<i64: 16, 64>}, {pipeline_mode = #tpu.pipeline_mode<synchronous>, transform_indices = @transform_1, window_bounds = array<i64: 1, 64>}, {pipeline_mode = #tpu.pipeline_mode<synchronous>, transform_indices = @transform_2, window_bounds = array<i64: 1, 64>}, {transform_indices = @transform_3, window_bounds = array<i64: 16, 1>}, {transform_indices = @transform_4, window_bounds = array<i64: 16, 64>}]} {
    %c0 = arith.constant 0 : index
    %c0_0 = arith.constant 0 : index
    %0 = vector.load %arg1[%c0, %c0_0] : memref<16x64xf32, #tpu.memory_space<vmem>>, vector<16x64xf32>
    %cst = arith.constant dense<0.000000e+00> : vector<16xf32>
    %1 = vector.multi_reduction <add>, %0, %cst [1] : vector<16x64xf32> to vector<16xf32>
    %2 = vector.shape_cast %1 : vector<16xf32> to vector<16x1xf32>
    %cst_1 = arith.constant 6.400000e+01 : f32
    %3 = vector.broadcast %cst_1 : f32 to vector<16x1xf32>
    %4 = arith.divf %2, %3 : vector<16x1xf32>
    %5 = vector.broadcast %4 : vector<16x1xf32> to vector<16x64xf32>
    %6 = arith.subf %0, %5 : vector<16x64xf32>
    %7 = arith.mulf %6, %6 : vector<16x64xf32>
    %cst_2 = arith.constant dense<0.000000e+00> : vector<16xf32>
    %8 = vector.multi_reduction <add>, %7, %cst_2 [1] : vector<16x64xf32> to vector<16xf32>
    %9 = vector.shape_cast %8 : vector<16xf32> to vector<16x1xf32>
    %cst_3 = arith.constant 6.300000e+01 : f32
    %10 = vector.broadcast %cst_3 : f32 to vector<16x1xf32>
    %11 = arith.divf %9, %10 : vector<16x1xf32>
    %c0_4 = arith.constant 0 : index
    %c0_5 = arith.constant 0 : index
    %12 = vector.load %arg2[%c0_4, %c0_5] : memref<1x64xf32, #tpu.memory_space<vmem>>, vector<1x64xf32>
    %13 = vector.broadcast %12 : vector<1x64xf32> to vector<16x64xf32>
    %14 = arith.mulf %13, %6 : vector<16x64xf32>
    %15 = math.sqrt %11 : vector<16x1xf32>
    %cst_6 = arith.constant 9.99999997E-7 : f32
    %16 = vector.broadcast %cst_6 : f32 to vector<16x1xf32>
    %17 = arith.addf %15, %16 : vector<16x1xf32>
    %18 = vector.broadcast %17 : vector<16x1xf32> to vector<16x64xf32>
    %19 = arith.divf %14, %18 : vector<16x64xf32>
    %c0_7 = arith.constant 0 : index
    %c0_8 = arith.constant 0 : index
    %20 = vector.load %arg3[%c0_7, %c0_8] : memref<1x64xf32, #tpu.memory_space<vmem>>, vector<1x64xf32>
    %21 = vector.broadcast %20 : vector<1x64xf32> to vector<16x64xf32>
    %22 = arith.addf %19, %21 : vector<16x64xf32>
    %c0_9 = arith.constant 0 : index
    %c0_10 = arith.constant 0 : index
    %23 = vector.load %arg4[%c0_9, %c0_10] : memref<16x1xf32, #tpu.memory_space<vmem>>, vector<16x1xf32>
    %cst_11 = arith.constant 0.000000e+00 : f32
    %24 = vector.broadcast %cst_11 : f32 to vector<16x1xf32>
    %25 = arith.cmpf oeq, %23, %24 : vector<16x1xf32>
    %cst_12 = arith.constant 0.000000e+00 : f32
    %26 = vector.shape_cast %25 : vector<16x1xi1> to vector<16x1xi1>
    %27 = vector.broadcast %26 : vector<16x1xi1> to vector<16x64xi1>
    %28 = vector.broadcast %cst_12 : f32 to vector<16x64xf32>
    %29 = arith.select %27, %28, %22 : vector<16x64xi1>, vector<16x64xf32>
    %c0_13 = arith.constant 0 : index
    %c0_14 = arith.constant 0 : index
    %30 = vector.load %arg5[%c0_13, %c0_14] : memref<16x64xf32, #tpu.memory_space<vmem>>, vector<16x64xf32>
    tpu.vector_store %arg5[%c0_13, %c0_14], %29 {strides = array<i32>} : memref<16x64xf32, #tpu.memory_space<vmem>>, vector<16x64xf32>,
    return
  }
  func.func @transform_0(%arg0: i32) -> (i32, i32) {
    %c0_i32 = arith.constant 0 : i32
    %c0_i32_0 = arith.constant 0 : i32
    return %arg0, %c0_i32 : i32, i32
  }
  func.func @transform_1(%arg0: i32) -> (i32, i32) {
    %c0_i32 = arith.constant 0 : i32
    %c0_i32_0 = arith.constant 0 : i32
    %c0_i32_1 = arith.constant 0 : i32
    return %c0_i32, %c0_i32_0 : i32, i32
  }
  func.func @transform_2(%arg0: i32) -> (i32, i32) {
    %c0_i32 = arith.constant 0 : i32
    %c0_i32_0 = arith.constant 0 : i32
    %c0_i32_1 = arith.constant 0 : i32
    return %c0_i32, %c0_i32_0 : i32, i32
  }
  func.func @transform_3(%arg0: i32) -> (i32, i32) {
    %c0_i32 = arith.constant 0 : i32
    %c0_i32_0 = arith.constant 0 : i32
    return %arg0, %c0_i32 : i32, i32
  }
  func.func @transform_4(%arg0: i32) -> (i32, i32) {
    %c0_i32 = arith.constant 0 : i32
    %c0_i32_0 = arith.constant 0 : i32
    return %arg0, %c0_i32 : i32, i32
  }
}

module attributes {stable_mosaic.version = 11 : i64} {
  func.func @_sepconv_kernel(%arg0: i32, %arg1: memref<1x14x64xf32, #tpu.memory_space<vmem>>, %arg2: memref<7x64xf32, #tpu.memory_space<vmem>>, %arg3: memref<1x64xf32, #tpu.memory_space<vmem>>, %arg4: memref<64x32xbf16, #tpu.memory_space<vmem>>, %arg5: memref<1x32xf32, #tpu.memory_space<vmem>>, %arg6: memref<1x8x32xf32, #tpu.memory_space<vmem>>, %arg7: memref<1x8x32xf32, #tpu.memory_space<vmem>>) attributes {dimension_semantics = [#tpu.dimension_semantics<parallel>], iteration_bounds = array<i64: 2>, scalar_prefetch = 0 : i64, scratch_operands = 0 : i64, tpu.core_type = #tpu.core_type<tc>, window_params = [{transform_indices = @transform_0, window_bounds = array<i64: 1, 14, 64>}, {pipeline_mode = #tpu.pipeline_mode<synchronous>, transform_indices = @transform_1, window_bounds = array<i64: 7, 64>}, {pipeline_mode = #tpu.pipeline_mode<synchronous>, transform_indices = @transform_2, window_bounds = array<i64: 1, 64>}, {pipeline_mode = #tpu.pipeline_mode<synchronous>, transform_indices = @transform_3, window_bounds = array<i64: 64, 32>}, {pipeline_mode = #tpu.pipeline_mode<synchronous>, transform_indices = @transform_4, window_bounds = array<i64: 1, 32>}, {transform_indices = @transform_5, window_bounds = array<i64: 1, 8, 32>}, {transform_indices = @transform_6, window_bounds = array<i64: 1, 8, 32>}]} {
    %c0 = arith.constant 0 : index
    %c0_0 = arith.constant 0 : index
    %c0_1 = arith.constant 0 : index
    %0 = vector.load %arg1[%c0, %c0_0, %c0_1] : memref<1x14x64xf32, #tpu.memory_space<vmem>>, vector<1x14x64xf32>
    %1 = vector.shape_cast %0 : vector<1x14x64xf32> to vector<14x64xf32>
    %2 = vector.extract_strided_slice %1 {offsets = [0, 0], sizes = [8, 64], strides = [1, 1]} : vector<14x64xf32> to vector<8x64xf32>
    %c0_2 = arith.constant 0 : index
    %c0_3 = arith.constant 0 : index
    %3 = vector.load %arg2[%c0_2, %c0_3] : memref<7x64xf32, #tpu.memory_space<vmem>>, vector<1x64xf32>
    %4 = vector.broadcast %3 : vector<1x64xf32> to vector<8x64xf32>
    %5 = arith.mulf %2, %4 : vector<8x64xf32>
    %6 = vector.extract_strided_slice %1 {offsets = [1, 0], sizes = [8, 64], strides = [1, 1]} : vector<14x64xf32> to vector<8x64xf32>
    %c1 = arith.constant 1 : index
    %c0_4 = arith.constant 0 : index
    %7 = vector.load %arg2[%c1, %c0_4] : memref<7x64xf32, #tpu.memory_space<vmem>>, vector<1x64xf32>
    %8 = vector.broadcast %7 : vector<1x64xf32> to vector<8x64xf32>
    %9 = arith.mulf %6, %8 : vector<8x64xf32>
    %10 = arith.addf %5, %9 : vector<8x64xf32>
    %11 = vector.extract_strided_slice %1 {offsets = [2, 0], sizes = [8, 64], strides = [1, 1]} : vector<14x64xf32> to vector<8x64xf32>
    %c2 = arith.constant 2 : index
    %c0_5 = arith.constant 0 : index
    %12 = vector.load %arg2[%c2, %c0_5] : memref<7x64xf32, #tpu.memory_space<vmem>>, vector<1x64xf32>
    %13 = vector.broadcast %12 : vector<1x64xf32> to vector<8x64xf32>
    %14 = arith.mulf %11, %13 : vector<8x64xf32>
    %15 = arith.addf %10, %14 : vector<8x64xf32>
    %16 = vector.extract_strided_slice %1 {offsets = [3, 0], sizes = [8, 64], strides = [1, 1]} : vector<14x64xf32> to vector<8x64xf32>
    %c3 = arith.constant 3 : index
    %c0_6 = arith.constant 0 : index
    %17 = vector.load %arg2[%c3, %c0_6] : memref<7x64xf32, #tpu.memory_space<vmem>>, vector<1x64xf32>
    %18 = vector.broadcast %17 : vector<1x64xf32> to vector<8x64xf32>
    %19 = arith.mulf %16, %18 : vector<8x64xf32>
    %20 = arith.addf %15, %19 : vector<8x64xf32>
    %21 = vector.extract_strided_slice %1 {offsets = [4, 0], sizes = [8, 64], strides = [1, 1]} : vector<14x64xf32> to vector<8x64xf32>
    %c4 = arith.constant 4 : index
    %c0_7 = arith.constant 0 : index
    %22 = vector.load %arg2[%c4, %c0_7] : memref<7x64xf32, #tpu.memory_space<vmem>>, vector<1x64xf32>
    %23 = vector.broadcast %22 : vector<1x64xf32> to vector<8x64xf32>
    %24 = arith.mulf %21, %23 : vector<8x64xf32>
    %25 = arith.addf %20, %24 : vector<8x64xf32>
    %26 = vector.extract_strided_slice %1 {offsets = [5, 0], sizes = [8, 64], strides = [1, 1]} : vector<14x64xf32> to vector<8x64xf32>
    %c5 = arith.constant 5 : index
    %c0_8 = arith.constant 0 : index
    %27 = vector.load %arg2[%c5, %c0_8] : memref<7x64xf32, #tpu.memory_space<vmem>>, vector<1x64xf32>
    %28 = vector.broadcast %27 : vector<1x64xf32> to vector<8x64xf32>
    %29 = arith.mulf %26, %28 : vector<8x64xf32>
    %30 = arith.addf %25, %29 : vector<8x64xf32>
    %31 = vector.extract_strided_slice %1 {offsets = [6, 0], sizes = [8, 64], strides = [1, 1]} : vector<14x64xf32> to vector<8x64xf32>
    %c6 = arith.constant 6 : index
    %c0_9 = arith.constant 0 : index
    %32 = vector.load %arg2[%c6, %c0_9] : memref<7x64xf32, #tpu.memory_space<vmem>>, vector<1x64xf32>
    %33 = vector.broadcast %32 : vector<1x64xf32> to vector<8x64xf32>
    %34 = arith.mulf %31, %33 : vector<8x64xf32>
    %35 = arith.addf %30, %34 : vector<8x64xf32>
    %c0_10 = arith.constant 0 : index
    %c0_11 = arith.constant 0 : index
    %36 = vector.load %arg3[%c0_10, %c0_11] : memref<1x64xf32, #tpu.memory_space<vmem>>, vector<1x64xf32>
    %37 = vector.broadcast %36 : vector<1x64xf32> to vector<8x64xf32>
    %38 = arith.addf %35, %37 : vector<8x64xf32>
    %39 = arith.truncf %38 : vector<8x64xf32> to vector<8x64xbf16>
    %c0_12 = arith.constant 0 : index
    %c0_13 = arith.constant 0 : index
    %40 = vector.load %arg4[%c0_12, %c0_13] : memref<64x32xbf16, #tpu.memory_space<vmem>>, vector<64x32xbf16>
    %cst = arith.constant dense<0.000000e+00> : vector<8x32xf32>
    %41 = tpu.matmul %39, %40, %cst {dimension_numbers = #tpu.dot_dimension_numbers<[1], [0], [0], [1], [0, 0, 1, 1], [], []>} : vector<8x64xbf16>, vector<64x32xbf16>, vector<8x32xf32> -> vector<8x32xf32>
    %c0_14 = arith.constant 0 : index
    %c0_15 = arith.constant 0 : index
    %42 = vector.load %arg5[%c0_14, %c0_15] : memref<1x32xf32, #tpu.memory_space<vmem>>, vector<1x32xf32>
    %43 = vector.broadcast %42 : vector<1x32xf32> to vector<8x32xf32>
    %44 = arith.addf %41, %43 : vector<8x32xf32>
    %c0_16 = arith.constant 0 : index
    %c0_17 = arith.constant 0 : index
    %c0_18 = arith.constant 0 : index
    %45 = vector.load %arg6[%c0_16, %c0_17, %c0_18] : memref<1x8x32xf32, #tpu.memory_space<vmem>>, vector<1x8x32xf32>
    %46 = vector.shape_cast %45 : vector<1x8x32xf32> to vector<8x32xf32>
    %47 = arith.addf %44, %46 : vector<8x32xf32>
    %c0_19 = arith.constant 0 : index
    %c0_20 = arith.constant 0 : index
    %c0_21 = arith.constant 0 : index
    %48 = vector.load %arg7[%c0_19, %c0_20, %c0_21] : memref<1x8x32xf32, #tpu.memory_space<vmem>>, vector<1x8x32xf32>
    %49 = vector.shape_cast %48 : vector<1x8x32xf32> to vector<8x32xf32>
    %50 = vector.shape_cast %47 : vector<8x32xf32> to vector<1x8x32xf32>
    tpu.vector_store %arg7[%c0_19, %c0_20, %c0_21], %50 {strides = array<i32>} : memref<1x8x32xf32, #tpu.memory_space<vmem>>, vector<1x8x32xf32>,
    return
  }
  func.func @transform_0(%arg0: i32) -> (i32, i32, i32) {
    %c0_i32 = arith.constant 0 : i32
    %c0_i32_0 = arith.constant 0 : i32
    %c0_i32_1 = arith.constant 0 : i32
    return %arg0, %c0_i32, %c0_i32_0 : i32, i32, i32
  }
  func.func @transform_1(%arg0: i32) -> (i32, i32) {
    %c0_i32 = arith.constant 0 : i32
    %c0_i32_0 = arith.constant 0 : i32
    %c0_i32_1 = arith.constant 0 : i32
    return %c0_i32, %c0_i32_0 : i32, i32
  }
  func.func @transform_2(%arg0: i32) -> (i32, i32) {
    %c0_i32 = arith.constant 0 : i32
    %c0_i32_0 = arith.constant 0 : i32
    %c0_i32_1 = arith.constant 0 : i32
    return %c0_i32, %c0_i32_0 : i32, i32
  }
  func.func @transform_3(%arg0: i32) -> (i32, i32) {
    %c0_i32 = arith.constant 0 : i32
    %c0_i32_0 = arith.constant 0 : i32
    %c0_i32_1 = arith.constant 0 : i32
    return %c0_i32, %c0_i32_0 : i32, i32
  }
  func.func @transform_4(%arg0: i32) -> (i32, i32) {
    %c0_i32 = arith.constant 0 : i32
    %c0_i32_0 = arith.constant 0 : i32
    %c0_i32_1 = arith.constant 0 : i32
    return %c0_i32, %c0_i32_0 : i32, i32
  }
  func.func @transform_5(%arg0: i32) -> (i32, i32, i32) {
    %c0_i32 = arith.constant 0 : i32
    %c0_i32_0 = arith.constant 0 : i32
    %c0_i32_1 = arith.constant 0 : i32
    return %arg0, %c0_i32, %c0_i32_0 : i32, i32, i32
  }
  func.func @transform_6(%arg0: i32) -> (i32, i32, i32) {
    %c0_i32 = arith.constant 0 : i32
    %c0_i32_0 = arith.constant 0 : i32
    %c0_i32_1 = arith.constant 0 : i32
    return %arg0, %c0_i32, %c0_i32_0 : i32, i32, i32
  }
}

module attributes {stable_mosaic.version = 11 : i64} {
  func.func @_ffn_kernel(%arg0: i32, %arg1: i32, %arg2: memref<16x32xf32, #tpu.memory_space<vmem>>, %arg3: memref<1x32xf32, #tpu.memory_space<vmem>>, %arg4: memref<1x32xf32, #tpu.memory_space<vmem>>, %arg5: memref<32x64xbf16, #tpu.memory_space<vmem>>, %arg6: memref<1x64xf32, #tpu.memory_space<vmem>>, %arg7: memref<64x32xbf16, #tpu.memory_space<vmem>>, %arg8: memref<1x32xf32, #tpu.memory_space<vmem>>, %arg9: memref<16x32xf32, #tpu.memory_space<vmem>>, %arg10: memref<16x32xbf16, #tpu.memory_space<vmem>>, %arg11: memref<16x32xf32, #tpu.memory_space<vmem>>) attributes {dimension_semantics = [#tpu.dimension_semantics<parallel>, #tpu.dimension_semantics<arbitrary>], iteration_bounds = array<i64: 1, 1>, scalar_prefetch = 0 : i64, scratch_operands = 2 : i64, tpu.core_type = #tpu.core_type<tc>, window_params = [{transform_indices = @transform_0, window_bounds = array<i64: 16, 32>}, {pipeline_mode = #tpu.pipeline_mode<synchronous>, transform_indices = @transform_1, window_bounds = array<i64: 1, 32>}, {pipeline_mode = #tpu.pipeline_mode<synchronous>, transform_indices = @transform_2, window_bounds = array<i64: 1, 32>}, {transform_indices = @transform_3, window_bounds = array<i64: 32, 64>}, {transform_indices = @transform_4, window_bounds = array<i64: 1, 64>}, {transform_indices = @transform_5, window_bounds = array<i64: 64, 32>}, {pipeline_mode = #tpu.pipeline_mode<synchronous>, transform_indices = @transform_6, window_bounds = array<i64: 1, 32>}, {transform_indices = @transform_7, window_bounds = array<i64: 16, 32>}]} {
    %c0_i32 = arith.constant 0 : i32
    %0 = arith.cmpi eq, %arg1, %c0_i32 : i32
    %1 = arith.extui %0 : i1 to i32
    %c0_i32_0 = arith.constant 0 : i32
    %2 = arith.cmpi ne, %1, %c0_i32_0 : i32
    scf.if %2 {
      %c0_16 = arith.constant 0 : index
      %c0_17 = arith.constant 0 : index
      %24 = vector.load %arg2[%c0_16, %c0_17] : memref<16x32xf32, #tpu.memory_space<vmem>>, vector<16x32xf32>
      %cst_18 = arith.constant dense<0.000000e+00> : vector<16xf32>
      %25 = vector.multi_reduction <add>, %24, %cst_18 [1] : vector<16x32xf32> to vector<16xf32>
      %26 = vector.shape_cast %25 : vector<16xf32> to vector<16x1xf32>
      %cst_19 = arith.constant 3.200000e+01 : f32
      %27 = vector.broadcast %cst_19 : f32 to vector<16x1xf32>
      %28 = arith.divf %26, %27 : vector<16x1xf32>
      %29 = vector.broadcast %28 : vector<16x1xf32> to vector<16x32xf32>
      %30 = arith.subf %24, %29 : vector<16x32xf32>
      %31 = arith.mulf %30, %30 : vector<16x32xf32>
      %cst_20 = arith.constant dense<0.000000e+00> : vector<16xf32>
      %32 = vector.multi_reduction <add>, %31, %cst_20 [1] : vector<16x32xf32> to vector<16xf32>
      %33 = vector.shape_cast %32 : vector<16xf32> to vector<16x1xf32>
      %cst_21 = arith.constant 3.100000e+01 : f32
      %34 = vector.broadcast %cst_21 : f32 to vector<16x1xf32>
      %35 = arith.divf %33, %34 : vector<16x1xf32>
      %c0_22 = arith.constant 0 : index
      %c0_23 = arith.constant 0 : index
      %36 = vector.load %arg3[%c0_22, %c0_23] : memref<1x32xf32, #tpu.memory_space<vmem>>, vector<1x32xf32>
      %37 = vector.broadcast %36 : vector<1x32xf32> to vector<16x32xf32>
      %38 = arith.mulf %37, %30 : vector<16x32xf32>
      %39 = math.sqrt %35 : vector<16x1xf32>
      %cst_24 = arith.constant 9.99999997E-7 : f32
      %40 = vector.broadcast %cst_24 : f32 to vector<16x1xf32>
      %41 = arith.addf %39, %40 : vector<16x1xf32>
      %42 = vector.broadcast %41 : vector<16x1xf32> to vector<16x32xf32>
      %43 = arith.divf %38, %42 : vector<16x32xf32>
      %c0_25 = arith.constant 0 : index
      %c0_26 = arith.constant 0 : index
      %44 = vector.load %arg4[%c0_25, %c0_26] : memref<1x32xf32, #tpu.memory_space<vmem>>, vector<1x32xf32>
      %45 = vector.broadcast %44 : vector<1x32xf32> to vector<16x32xf32>
      %46 = arith.addf %43, %45 : vector<16x32xf32>
      %47 = arith.truncf %46 : vector<16x32xf32> to vector<16x32xbf16>
      %c0_27 = arith.constant 0 : index
      %c0_28 = arith.constant 0 : index
      %48 = vector.load %arg10[%c0_27, %c0_28] : memref<16x32xbf16, #tpu.memory_space<vmem>>, vector<16x32xbf16>
      tpu.vector_store %arg10[%c0_27, %c0_28], %47 {strides = array<i32>} : memref<16x32xbf16, #tpu.memory_space<vmem>>, vector<16x32xbf16>,
      %cst_29 = arith.constant 0.000000e+00 : f32
      %49 = vector.broadcast %cst_29 : f32 to vector<16x32xf32>
      %c0_30 = arith.constant 0 : index
      %c0_31 = arith.constant 0 : index
      %50 = vector.load %arg11[%c0_30, %c0_31] : memref<16x32xf32, #tpu.memory_space<vmem>>, vector<16x32xf32>
      tpu.vector_store %arg11[%c0_30, %c0_31], %49 {strides = array<i32>} : memref<16x32xf32, #tpu.memory_space<vmem>>, vector<16x32xf32>,
    } else {
    }
    %c0 = arith.constant 0 : index
    %c0_1 = arith.constant 0 : index
    %3 = vector.load %arg10[%c0, %c0_1] : memref<16x32xbf16, #tpu.memory_space<vmem>>, vector<16x32xbf16>
    %c0_2 = arith.constant 0 : index
    %c0_3 = arith.constant 0 : index
    %4 = vector.load %arg5[%c0_2, %c0_3] : memref<32x64xbf16, #tpu.memory_space<vmem>>, vector<32x64xbf16>
    %cst = arith.constant dense<0.000000e+00> : vector<16x64xf32>
    %5 = tpu.matmul %3, %4, %cst {dimension_numbers = #tpu.dot_dimension_numbers<[1], [0], [0], [1], [0, 0, 1, 1], [], []>} : vector<16x32xbf16>, vector<32x64xbf16>, vector<16x64xf32> -> vector<16x64xf32>
    %c0_4 = arith.constant 0 : index
    %c0_5 = arith.constant 0 : index
    %6 = vector.load %arg6[%c0_4, %c0_5] : memref<1x64xf32, #tpu.memory_space<vmem>>, vector<1x64xf32>
    %7 = vector.broadcast %6 : vector<1x64xf32> to vector<16x64xf32>
    %8 = arith.addf %5, %7 : vector<16x64xf32>
    %9 = arith.negf %8 : vector<16x64xf32>
    %10 = math.exp %9 : vector<16x64xf32>
    %cst_6 = arith.constant 1.000000e+00 : f32
    %11 = vector.broadcast %cst_6 : f32 to vector<16x64xf32>
    %12 = arith.addf %11, %10 : vector<16x64xf32>
    %13 = arith.divf %11, %12 : vector<16x64xf32>
    %14 = arith.mulf %8, %13 : vector<16x64xf32>
    %c0_7 = arith.constant 0 : index
    %c0_8 = arith.constant 0 : index
    %15 = vector.load %arg11[%c0_7, %c0_8] : memref<16x32xf32, #tpu.memory_space<vmem>>, vector<16x32xf32>
    %16 = arith.truncf %14 : vector<16x64xf32> to vector<16x64xbf16>
    %c0_9 = arith.constant 0 : index
    %c0_10 = arith.constant 0 : index
    %17 = vector.load %arg7[%c0_9, %c0_10] : memref<64x32xbf16, #tpu.memory_space<vmem>>, vector<64x32xbf16>
    %cst_11 = arith.constant dense<0.000000e+00> : vector<16x32xf32>
    %18 = tpu.matmul %16, %17, %cst_11 {dimension_numbers = #tpu.dot_dimension_numbers<[1], [0], [0], [1], [0, 0, 1, 1], [], []>} : vector<16x64xbf16>, vector<64x32xbf16>, vector<16x32xf32> -> vector<16x32xf32>
    %19 = arith.addf %15, %18 : vector<16x32xf32>
    %c0_12 = arith.constant 0 : index
    %c0_13 = arith.constant 0 : index
    %20 = vector.load %arg11[%c0_12, %c0_13] : memref<16x32xf32, #tpu.memory_space<vmem>>, vector<16x32xf32>
    tpu.vector_store %arg11[%c0_12, %c0_13], %19 {strides = array<i32>} : memref<16x32xf32, #tpu.memory_space<vmem>>, vector<16x32xf32>,
    %c0_i32_14 = arith.constant 0 : i32
    %21 = arith.cmpi eq, %arg1, %c0_i32_14 : i32
    %22 = arith.extui %21 : i1 to i32
    %c0_i32_15 = arith.constant 0 : i32
    %23 = arith.cmpi ne, %22, %c0_i32_15 : i32
    scf.if %23 {
      %c0_16 = arith.constant 0 : index
      %c0_17 = arith.constant 0 : index
      %24 = vector.load %arg11[%c0_16, %c0_17] : memref<16x32xf32, #tpu.memory_space<vmem>>, vector<16x32xf32>
      %c0_18 = arith.constant 0 : index
      %c0_19 = arith.constant 0 : index
      %25 = vector.load %arg8[%c0_18, %c0_19] : memref<1x32xf32, #tpu.memory_space<vmem>>, vector<1x32xf32>
      %26 = vector.broadcast %25 : vector<1x32xf32> to vector<16x32xf32>
      %27 = arith.addf %24, %26 : vector<16x32xf32>
      %c0_20 = arith.constant 0 : index
      %c0_21 = arith.constant 0 : index
      %28 = vector.load %arg2[%c0_20, %c0_21] : memref<16x32xf32, #tpu.memory_space<vmem>>, vector<16x32xf32>
      %29 = arith.addf %27, %28 : vector<16x32xf32>
      %c0_22 = arith.constant 0 : index
      %c0_23 = arith.constant 0 : index
      %30 = vector.load %arg9[%c0_22, %c0_23] : memref<16x32xf32, #tpu.memory_space<vmem>>, vector<16x32xf32>
      tpu.vector_store %arg9[%c0_22, %c0_23], %29 {strides = array<i32>} : memref<16x32xf32, #tpu.memory_space<vmem>>, vector<16x32xf32>,
    } else {
    }
    return
  }
  func.func @transform_0(%arg0: i32, %arg1: i32) -> (i32, i32) {
    %c0_i32 = arith.constant 0 : i32
    %c0_i32_0 = arith.constant 0 : i32
    return %arg0, %c0_i32 : i32, i32
  }
  func.func @transform_1(%arg0: i32, %arg1: i32) -> (i32, i32) {
    %c0_i32 = arith.constant 0 : i32
    %c0_i32_0 = arith.constant 0 : i32
    %c0_i32_1 = arith.constant 0 : i32
    return %c0_i32, %c0_i32_0 : i32, i32
  }
  func.func @transform_2(%arg0: i32, %arg1: i32) -> (i32, i32) {
    %c0_i32 = arith.constant 0 : i32
    %c0_i32_0 = arith.constant 0 : i32
    %c0_i32_1 = arith.constant 0 : i32
    return %c0_i32, %c0_i32_0 : i32, i32
  }
  func.func @transform_3(%arg0: i32, %arg1: i32) -> (i32, i32) {
    %c0_i32 = arith.constant 0 : i32
    %c0_i32_0 = arith.constant 0 : i32
    return %c0_i32, %arg1 : i32, i32
  }
  func.func @transform_4(%arg0: i32, %arg1: i32) -> (i32, i32) {
    %c0_i32 = arith.constant 0 : i32
    %c0_i32_0 = arith.constant 0 : i32
    return %c0_i32, %arg1 : i32, i32
  }
  func.func @transform_5(%arg0: i32, %arg1: i32) -> (i32, i32) {
    %c0_i32 = arith.constant 0 : i32
    %c0_i32_0 = arith.constant 0 : i32
    return %arg1, %c0_i32 : i32, i32
  }
  func.func @transform_6(%arg0: i32, %arg1: i32) -> (i32, i32) {
    %c0_i32 = arith.constant 0 : i32
    %c0_i32_0 = arith.constant 0 : i32
    %c0_i32_1 = arith.constant 0 : i32
    return %c0_i32, %c0_i32_0 : i32, i32
  }
  func.func @transform_7(%arg0: i32, %arg1: i32) -> (i32, i32) {
    %c0_i32 = arith.constant 0 : i32
    %c0_i32_0 = arith.constant 0 : i32
    return %arg0, %c0_i32 : i32, i32
  }
}

module attributes {stable_mosaic.version = 11 : i64} {
  func.func @_flash_attn_kernel(%arg0: i32, %arg1: i32, %arg2: i32, %arg3: memref<1x8x32xbf16, #tpu.memory_space<vmem>>, %arg4: memref<1x8x32xbf16, #tpu.memory_space<vmem>>, %arg5: memref<1x8x32xbf16, #tpu.memory_space<vmem>>, %arg6: memref<1x8x8xf32, #tpu.memory_space<vmem>>, %arg7: memref<1x8x32xbf16, #tpu.memory_space<vmem>>, %arg8: memref<2x8x1xf32, #tpu.memory_space<vmem>>, %arg9: memref<2x8x1xf32, #tpu.memory_space<vmem>>, %arg10: memref<2x8x16xf32, #tpu.memory_space<vmem>>) attributes {dimension_semantics = [#tpu.dimension_semantics<parallel>, #tpu.dimension_semantics<parallel>, #tpu.dimension_semantics<arbitrary>], iteration_bounds = array<i64: 2, 1, 1>, scalar_prefetch = 0 : i64, scratch_operands = 3 : i64, tpu.core_type = #tpu.core_type<tc>, window_params = [{transform_indices = @transform_0, window_bounds = array<i64: 1, 8, 32>}, {transform_indices = @transform_1, window_bounds = array<i64: 1, 8, 32>}, {transform_indices = @transform_2, window_bounds = array<i64: 1, 8, 32>}, {transform_indices = @transform_3, window_bounds = array<i64: 1, 8, 8>}, {transform_indices = @transform_4, window_bounds = array<i64: 1, 8, 32>}]} {
    %c0_i32 = arith.constant 0 : i32
    %0 = arith.cmpi eq, %arg2, %c0_i32 : i32
    %1 = arith.extui %0 : i1 to i32
    %c0_i32_0 = arith.constant 0 : i32
    %2 = arith.cmpi ne, %1, %c0_i32_0 : i32
    scf.if %2 {
      %cst_70 = arith.constant 0xFF800000 : f32
      %98 = vector.broadcast %cst_70 : f32 to vector<2x8x1xf32>
      %c0_71 = arith.constant 0 : index
      %c0_72 = arith.constant 0 : index
      %c0_73 = arith.constant 0 : index
      %99 = vector.load %arg8[%c0_71, %c0_72, %c0_73] : memref<2x8x1xf32, #tpu.memory_space<vmem>>, vector<2x8x1xf32>
      tpu.vector_store %arg8[%c0_71, %c0_72, %c0_73], %98 {strides = array<i32>} : memref<2x8x1xf32, #tpu.memory_space<vmem>>, vector<2x8x1xf32>,
      %cst_74 = arith.constant 0.000000e+00 : f32
      %100 = vector.broadcast %cst_74 : f32 to vector<2x8x1xf32>
      %c0_75 = arith.constant 0 : index
      %c0_76 = arith.constant 0 : index
      %c0_77 = arith.constant 0 : index
      %101 = vector.load %arg9[%c0_75, %c0_76, %c0_77] : memref<2x8x1xf32, #tpu.memory_space<vmem>>, vector<2x8x1xf32>
      tpu.vector_store %arg9[%c0_75, %c0_76, %c0_77], %100 {strides = array<i32>} : memref<2x8x1xf32, #tpu.memory_space<vmem>>, vector<2x8x1xf32>,
      %cst_78 = arith.constant 0.000000e+00 : f32
      %102 = vector.broadcast %cst_78 : f32 to vector<2x8x16xf32>
      %c0_79 = arith.constant 0 : index
      %c0_80 = arith.constant 0 : index
      %c0_81 = arith.constant 0 : index
      %103 = vector.load %arg10[%c0_79, %c0_80, %c0_81] : memref<2x8x16xf32, #tpu.memory_space<vmem>>, vector<2x8x16xf32>
      tpu.vector_store %arg10[%c0_79, %c0_80, %c0_81], %102 {strides = array<i32>} : memref<2x8x16xf32, #tpu.memory_space<vmem>>, vector<2x8x16xf32>,
    } else {
    }
    %c0 = arith.constant 0 : index
    %c0_1 = arith.constant 0 : index
    %c0_2 = arith.constant 0 : index
    %3 = vector.load %arg6[%c0, %c0_1, %c0_2] : memref<1x8x8xf32, #tpu.memory_space<vmem>>, vector<1x8x8xf32>
    %4 = vector.shape_cast %3 : vector<1x8x8xf32> to vector<8x8xf32>
    %c0_3 = arith.constant 0 : index
    %c0_4 = arith.constant 0 : index
    %c0_5 = arith.constant 0 : index
    %5 = vector.load %arg3[%c0_3, %c0_4, %c0_5] : memref<1x8x32xbf16, #tpu.memory_space<vmem>>, vector<1x8x16xbf16>
    %6 = vector.shape_cast %5 : vector<1x8x16xbf16> to vector<8x16xbf16>
    %c0_6 = arith.constant 0 : index
    %c0_7 = arith.constant 0 : index
    %c0_8 = arith.constant 0 : index
    %7 = vector.load %arg4[%c0_6, %c0_7, %c0_8] : memref<1x8x32xbf16, #tpu.memory_space<vmem>>, vector<1x8x16xbf16>
    %8 = vector.shape_cast %7 : vector<1x8x16xbf16> to vector<8x16xbf16>
    %c0_9 = arith.constant 0 : index
    %c0_10 = arith.constant 0 : index
    %c0_11 = arith.constant 0 : index
    %9 = vector.load %arg5[%c0_9, %c0_10, %c0_11] : memref<1x8x32xbf16, #tpu.memory_space<vmem>>, vector<1x8x16xbf16>
    %10 = vector.shape_cast %9 : vector<1x8x16xbf16> to vector<8x16xbf16>
    %cst = arith.constant dense<0.000000e+00> : vector<8x8xf32>
    %11 = tpu.matmul %6, %8, %cst {dimension_numbers = #tpu.dot_dimension_numbers<[1], [1], [0], [0], [0, 0, 1, 0], [], []>} : vector<8x16xbf16>, vector<8x16xbf16>, vector<8x8xf32> -> vector<8x8xf32>
    %cst_12 = arith.constant 2.500000e-01 : f32
    %12 = vector.broadcast %cst_12 : f32 to vector<8x8xf32>
    %13 = arith.mulf %11, %12 : vector<8x8xf32>
    %cst_13 = arith.constant 0.000000e+00 : f32
    %14 = vector.broadcast %cst_13 : f32 to vector<8x8xf32>
    %15 = arith.cmpf oeq, %4, %14 : vector<8x8xf32>
    %cst_14 = arith.constant -1.000000e+09 : f32
    %16 = vector.broadcast %cst_14 : f32 to vector<8x8xf32>
    %17 = arith.select %15, %16, %13 : vector<8x8xi1>, vector<8x8xf32>
    %c0_15 = arith.constant 0 : index
    %c0_16 = arith.constant 0 : index
    %c0_17 = arith.constant 0 : index
    %18 = vector.load %arg8[%c0_15, %c0_16, %c0_17] : memref<2x8x1xf32, #tpu.memory_space<vmem>>, vector<1x8x1xf32>
    %19 = vector.shape_cast %18 : vector<1x8x1xf32> to vector<8x1xf32>
    %cst_18 = arith.constant dense<0xFF800000> : vector<8xf32>
    %20 = vector.multi_reduction <maximumf>, %17, %cst_18 [1] : vector<8x8xf32> to vector<8xf32>
    %21 = vector.shape_cast %20 : vector<8xf32> to vector<8x1xf32>
    %22 = arith.maximumf %19, %21 : vector<8x1xf32>
    %23 = arith.subf %19, %22 : vector<8x1xf32>
    %24 = math.exp %23 : vector<8x1xf32>
    %25 = vector.broadcast %22 : vector<8x1xf32> to vector<8x8xf32>
    %26 = arith.subf %17, %25 : vector<8x8xf32>
    %27 = math.exp %26 : vector<8x8xf32>
    %c0_19 = arith.constant 0 : index
    %c0_20 = arith.constant 0 : index
    %c0_21 = arith.constant 0 : index
    %28 = vector.load %arg9[%c0_19, %c0_20, %c0_21] : memref<2x8x1xf32, #tpu.memory_space<vmem>>, vector<1x8x1xf32>
    %29 = vector.shape_cast %28 : vector<1x8x1xf32> to vector<8x1xf32>
    %30 = arith.mulf %24, %29 : vector<8x1xf32>
    %cst_22 = arith.constant dense<0.000000e+00> : vector<8xf32>
    %31 = vector.multi_reduction <add>, %27, %cst_22 [1] : vector<8x8xf32> to vector<8xf32>
    %32 = vector.shape_cast %31 : vector<8xf32> to vector<8x1xf32>
    %33 = arith.addf %30, %32 : vector<8x1xf32>
    %c0_23 = arith.constant 0 : index
    %c0_24 = arith.constant 0 : index
    %c0_25 = arith.constant 0 : index
    %34 = vector.load %arg9[%c0_23, %c0_24, %c0_25] : memref<2x8x1xf32, #tpu.memory_space<vmem>>, vector<1x8x1xf32>
    %35 = vector.shape_cast %34 : vector<1x8x1xf32> to vector<8x1xf32>
    %36 = vector.shape_cast %33 : vector<8x1xf32> to vector<1x8x1xf32>
    tpu.vector_store %arg9[%c0_23, %c0_24, %c0_25], %36 {strides = array<i32>} : memref<2x8x1xf32, #tpu.memory_space<vmem>>, vector<1x8x1xf32>,
    %c0_26 = arith.constant 0 : index
    %c0_27 = arith.constant 0 : index
    %c0_28 = arith.constant 0 : index
    %37 = vector.load %arg10[%c0_26, %c0_27, %c0_28] : memref<2x8x16xf32, #tpu.memory_space<vmem>>, vector<1x8x16xf32>
    %38 = vector.shape_cast %37 : vector<1x8x16xf32> to vector<8x16xf32>
    %39 = vector.broadcast %24 : vector<8x1xf32> to vector<8x16xf32>
    %40 = arith.mulf %39, %38 : vector<8x16xf32>
    %41 = arith.truncf %27 : vector<8x8xf32> to vector<8x8xbf16>
    %cst_29 = arith.constant dense<0.000000e+00> : vector<8x16xf32>
    %42 = tpu.matmul %41, %10, %cst_29 {dimension_numbers = #tpu.dot_dimension_numbers<[1], [0], [0], [1], [0, 0, 1, 1], [], []>} : vector<8x8xbf16>, vector<8x16xbf16>, vector<8x16xf32> -> vector<8x16xf32>
    %43 = arith.addf %40, %42 : vector<8x16xf32>
    %c0_30 = arith.constant 0 : index
    %c0_31 = arith.constant 0 : index
    %c0_32 = arith.constant 0 : index
    %44 = vector.load %arg10[%c0_30, %c0_31, %c0_32] : memref<2x8x16xf32, #tpu.memory_space<vmem>>, vector<1x8x16xf32>
    %45 = vector.shape_cast %44 : vector<1x8x16xf32> to vector<8x16xf32>
    %46 = vector.shape_cast %43 : vector<8x16xf32> to vector<1x8x16xf32>
    tpu.vector_store %arg10[%c0_30, %c0_31, %c0_32], %46 {strides = array<i32>} : memref<2x8x16xf32, #tpu.memory_space<vmem>>, vector<1x8x16xf32>,
    %c0_33 = arith.constant 0 : index
    %c0_34 = arith.constant 0 : index
    %c0_35 = arith.constant 0 : index
    %47 = vector.load %arg8[%c0_33, %c0_34, %c0_35] : memref<2x8x1xf32, #tpu.memory_space<vmem>>, vector<1x8x1xf32>
    %48 = vector.shape_cast %47 : vector<1x8x1xf32> to vector<8x1xf32>
    %49 = vector.shape_cast %22 : vector<8x1xf32> to vector<1x8x1xf32>
    tpu.vector_store %arg8[%c0_33, %c0_34, %c0_35], %49 {strides = array<i32>} : memref<2x8x1xf32, #tpu.memory_space<vmem>>, vector<1x8x1xf32>,
    %c0_36 = arith.constant 0 : index
    %c0_37 = arith.constant 0 : index
    %c16 = arith.constant 16 : index
    %50 = vector.load %arg3[%c0_36, %c0_37, %c16] : memref<1x8x32xbf16, #tpu.memory_space<vmem>>, vector<1x8x16xbf16>
    %51 = vector.shape_cast %50 : vector<1x8x16xbf16> to vector<8x16xbf16>
    %c0_38 = arith.constant 0 : index
    %c0_39 = arith.constant 0 : index
    %c16_40 = arith.constant 16 : index
    %52 = vector.load %arg4[%c0_38, %c0_39, %c16_40] : memref<1x8x32xbf16, #tpu.memory_space<vmem>>, vector<1x8x16xbf16>
    %53 = vector.shape_cast %52 : vector<1x8x16xbf16> to vector<8x16xbf16>
    %c0_41 = arith.constant 0 : index
    %c0_42 = arith.constant 0 : index
    %c16_43 = arith.constant 16 : index
    %54 = vector.load %arg5[%c0_41, %c0_42, %c16_43] : memref<1x8x32xbf16, #tpu.memory_space<vmem>>, vector<1x8x16xbf16>
    %55 = vector.shape_cast %54 : vector<1x8x16xbf16> to vector<8x16xbf16>
    %cst_44 = arith.constant dense<0.000000e+00> : vector<8x8xf32>
    %56 = tpu.matmul %51, %53, %cst_44 {dimension_numbers = #tpu.dot_dimension_numbers<[1], [1], [0], [0], [0, 0, 1, 0], [], []>} : vector<8x16xbf16>, vector<8x16xbf16>, vector<8x8xf32> -> vector<8x8xf32>
    %cst_45 = arith.constant 2.500000e-01 : f32
    %57 = vector.broadcast %cst_45 : f32 to vector<8x8xf32>
    %58 = arith.mulf %56, %57 : vector<8x8xf32>
    %cst_46 = arith.constant 0.000000e+00 : f32
    %59 = vector.broadcast %cst_46 : f32 to vector<8x8xf32>
    %60 = arith.cmpf oeq, %4, %59 : vector<8x8xf32>
    %cst_47 = arith.constant -1.000000e+09 : f32
    %61 = vector.broadcast %cst_47 : f32 to vector<8x8xf32>
    %62 = arith.select %60, %61, %58 : vector<8x8xi1>, vector<8x8xf32>
    %c1 = arith.constant 1 : index
    %c0_48 = arith.constant 0 : index
    %c0_49 = arith.constant 0 : index
    %63 = vector.load %arg8[%c1, %c0_48, %c0_49] : memref<2x8x1xf32, #tpu.memory_space<vmem>>, vector<1x8x1xf32>
    %64 = vector.shape_cast %63 : vector<1x8x1xf32> to vector<8x1xf32>
    %cst_50 = arith.constant dense<0xFF800000> : vector<8xf32>
    %65 = vector.multi_reduction <maximumf>, %62, %cst_50 [1] : vector<8x8xf32> to vector<8xf32>
    %66 = vector.shape_cast %65 : vector<8xf32> to vector<8x1xf32>
    %67 = arith.maximumf %64, %66 : vector<8x1xf32>
    %68 = arith.subf %64, %67 : vector<8x1xf32>
    %69 = math.exp %68 : vector<8x1xf32>
    %70 = vector.broadcast %67 : vector<8x1xf32> to vector<8x8xf32>
    %71 = arith.subf %62, %70 : vector<8x8xf32>
    %72 = math.exp %71 : vector<8x8xf32>
    %c1_51 = arith.constant 1 : index
    %c0_52 = arith.constant 0 : index
    %c0_53 = arith.constant 0 : index
    %73 = vector.load %arg9[%c1_51, %c0_52, %c0_53] : memref<2x8x1xf32, #tpu.memory_space<vmem>>, vector<1x8x1xf32>
    %74 = vector.shape_cast %73 : vector<1x8x1xf32> to vector<8x1xf32>
    %75 = arith.mulf %69, %74 : vector<8x1xf32>
    %cst_54 = arith.constant dense<0.000000e+00> : vector<8xf32>
    %76 = vector.multi_reduction <add>, %72, %cst_54 [1] : vector<8x8xf32> to vector<8xf32>
    %77 = vector.shape_cast %76 : vector<8xf32> to vector<8x1xf32>
    %78 = arith.addf %75, %77 : vector<8x1xf32>
    %c1_55 = arith.constant 1 : index
    %c0_56 = arith.constant 0 : index
    %c0_57 = arith.constant 0 : index
    %79 = vector.load %arg9[%c1_55, %c0_56, %c0_57] : memref<2x8x1xf32, #tpu.memory_space<vmem>>, vector<1x8x1xf32>
    %80 = vector.shape_cast %79 : vector<1x8x1xf32> to vector<8x1xf32>
    %81 = vector.shape_cast %78 : vector<8x1xf32> to vector<1x8x1xf32>
    tpu.vector_store %arg9[%c1_55, %c0_56, %c0_57], %81 {strides = array<i32>} : memref<2x8x1xf32, #tpu.memory_space<vmem>>, vector<1x8x1xf32>,
    %c1_58 = arith.constant 1 : index
    %c0_59 = arith.constant 0 : index
    %c0_60 = arith.constant 0 : index
    %82 = vector.load %arg10[%c1_58, %c0_59, %c0_60] : memref<2x8x16xf32, #tpu.memory_space<vmem>>, vector<1x8x16xf32>
    %83 = vector.shape_cast %82 : vector<1x8x16xf32> to vector<8x16xf32>
    %84 = vector.broadcast %69 : vector<8x1xf32> to vector<8x16xf32>
    %85 = arith.mulf %84, %83 : vector<8x16xf32>
    %86 = arith.truncf %72 : vector<8x8xf32> to vector<8x8xbf16>
    %cst_61 = arith.constant dense<0.000000e+00> : vector<8x16xf32>
    %87 = tpu.matmul %86, %55, %cst_61 {dimension_numbers = #tpu.dot_dimension_numbers<[1], [0], [0], [1], [0, 0, 1, 1], [], []>} : vector<8x8xbf16>, vector<8x16xbf16>, vector<8x16xf32> -> vector<8x16xf32>
    %88 = arith.addf %85, %87 : vector<8x16xf32>
    %c1_62 = arith.constant 1 : index
    %c0_63 = arith.constant 0 : index
    %c0_64 = arith.constant 0 : index
    %89 = vector.load %arg10[%c1_62, %c0_63, %c0_64] : memref<2x8x16xf32, #tpu.memory_space<vmem>>, vector<1x8x16xf32>
    %90 = vector.shape_cast %89 : vector<1x8x16xf32> to vector<8x16xf32>
    %91 = vector.shape_cast %88 : vector<8x16xf32> to vector<1x8x16xf32>
    tpu.vector_store %arg10[%c1_62, %c0_63, %c0_64], %91 {strides = array<i32>} : memref<2x8x16xf32, #tpu.memory_space<vmem>>, vector<1x8x16xf32>,
    %c1_65 = arith.constant 1 : index
    %c0_66 = arith.constant 0 : index
    %c0_67 = arith.constant 0 : index
    %92 = vector.load %arg8[%c1_65, %c0_66, %c0_67] : memref<2x8x1xf32, #tpu.memory_space<vmem>>, vector<1x8x1xf32>
    %93 = vector.shape_cast %92 : vector<1x8x1xf32> to vector<8x1xf32>
    %94 = vector.shape_cast %67 : vector<8x1xf32> to vector<1x8x1xf32>
    tpu.vector_store %arg8[%c1_65, %c0_66, %c0_67], %94 {strides = array<i32>} : memref<2x8x1xf32, #tpu.memory_space<vmem>>, vector<1x8x1xf32>,
    %c0_i32_68 = arith.constant 0 : i32
    %95 = arith.cmpi eq, %arg2, %c0_i32_68 : i32
    %96 = arith.extui %95 : i1 to i32
    %c0_i32_69 = arith.constant 0 : i32
    %97 = arith.cmpi ne, %96, %c0_i32_69 : i32
    scf.if %97 {
      %c0_70 = arith.constant 0 : index
      %c0_71 = arith.constant 0 : index
      %c0_72 = arith.constant 0 : index
      %98 = vector.load %arg9[%c0_70, %c0_71, %c0_72] : memref<2x8x1xf32, #tpu.memory_space<vmem>>, vector<1x8x1xf32>
      %99 = vector.shape_cast %98 : vector<1x8x1xf32> to vector<8x1xf32>
      %100 = tpu.reciprocal %99 {approx = true} : vector<8x1xf32> -> vector<8x1xf32>
      %c0_73 = arith.constant 0 : index
      %c0_74 = arith.constant 0 : index
      %c0_75 = arith.constant 0 : index
      %101 = vector.load %arg10[%c0_73, %c0_74, %c0_75] : memref<2x8x16xf32, #tpu.memory_space<vmem>>, vector<1x8x16xf32>
      %102 = vector.shape_cast %101 : vector<1x8x16xf32> to vector<8x16xf32>
      %103 = vector.broadcast %100 : vector<8x1xf32> to vector<8x16xf32>
      %104 = arith.mulf %102, %103 : vector<8x16xf32>
      %105 = arith.truncf %104 : vector<8x16xf32> to vector<8x16xbf16>
      %c0_76 = arith.constant 0 : index
      %c0_77 = arith.constant 0 : index
      %c0_78 = arith.constant 0 : index
      %106 = vector.load %arg7[%c0_76, %c0_77, %c0_78] : memref<1x8x32xbf16, #tpu.memory_space<vmem>>, vector<1x8x16xbf16>
      %107 = vector.shape_cast %106 : vector<1x8x16xbf16> to vector<8x16xbf16>
      %108 = vector.shape_cast %105 : vector<8x16xbf16> to vector<1x8x16xbf16>
      tpu.vector_store %arg7[%c0_76, %c0_77, %c0_78], %108 {strides = array<i32>} : memref<1x8x32xbf16, #tpu.memory_space<vmem>>, vector<1x8x16xbf16>,
      %c1_79 = arith.constant 1 : index
      %c0_80 = arith.constant 0 : index
      %c0_81 = arith.constant 0 : index
      %109 = vector.load %arg9[%c1_79, %c0_80, %c0_81] : memref<2x8x1xf32, #tpu.memory_space<vmem>>, vector<1x8x1xf32>
      %110 = vector.shape_cast %109 : vector<1x8x1xf32> to vector<8x1xf32>
      %111 = tpu.reciprocal %110 {approx = true} : vector<8x1xf32> -> vector<8x1xf32>
      %c1_82 = arith.constant 1 : index
      %c0_83 = arith.constant 0 : index
      %c0_84 = arith.constant 0 : index
      %112 = vector.load %arg10[%c1_82, %c0_83, %c0_84] : memref<2x8x16xf32, #tpu.memory_space<vmem>>, vector<1x8x16xf32>
      %113 = vector.shape_cast %112 : vector<1x8x16xf32> to vector<8x16xf32>
      %114 = vector.broadcast %111 : vector<8x1xf32> to vector<8x16xf32>
      %115 = arith.mulf %113, %114 : vector<8x16xf32>
      %116 = arith.truncf %115 : vector<8x16xf32> to vector<8x16xbf16>
      %c0_85 = arith.constant 0 : index
      %c0_86 = arith.constant 0 : index
      %c16_87 = arith.constant 16 : index
      %117 = vector.load %arg7[%c0_85, %c0_86, %c16_87] : memref<1x8x32xbf16, #tpu.memory_space<vmem>>, vector<1x8x16xbf16>
      %118 = vector.shape_cast %117 : vector<1x8x16xbf16> to vector<8x16xbf16>
      %119 = vector.shape_cast %116 : vector<8x16xbf16> to vector<1x8x16xbf16>
      tpu.vector_store %arg7[%c0_85, %c0_86, %c16_87], %119 {strides = array<i32>} : memref<1x8x32xbf16, #tpu.memory_space<vmem>>, vector<1x8x16xbf16>,
    } else {
    }
    return
  }
  func.func @transform_0(%arg0: i32, %arg1: i32, %arg2: i32) -> (i32, i32, i32) {
    %c0_i32 = arith.constant 0 : i32
    %c0_i32_0 = arith.constant 0 : i32
    return %arg0, %arg1, %c0_i32 : i32, i32, i32
  }
  func.func @transform_1(%arg0: i32, %arg1: i32, %arg2: i32) -> (i32, i32, i32) {
    %c0_i32 = arith.constant 0 : i32
    %c0_i32_0 = arith.constant 0 : i32
    return %arg0, %arg2, %c0_i32 : i32, i32, i32
  }
  func.func @transform_2(%arg0: i32, %arg1: i32, %arg2: i32) -> (i32, i32, i32) {
    %c0_i32 = arith.constant 0 : i32
    %c0_i32_0 = arith.constant 0 : i32
    return %arg0, %arg2, %c0_i32 : i32, i32, i32
  }
  func.func @transform_3(%arg0: i32, %arg1: i32, %arg2: i32) -> (i32, i32, i32) {
    %c0_i32 = arith.constant 0 : i32
    return %arg0, %arg1, %arg2 : i32, i32, i32
  }
  func.func @transform_4(%arg0: i32, %arg1: i32, %arg2: i32) -> (i32, i32, i32) {
    %c0_i32 = arith.constant 0 : i32
    %c0_i32_0 = arith.constant 0 : i32
    return %arg0, %arg1, %c0_i32 : i32, i32, i32
  }
}

</mosaic_0001>

<llo_original>
// kernel: decoder_layer_forward.25
$region0: #{decoder_layer_forward.25}
  #allocation0 [shape = 'u32[]', space=smem, size = 0x4, offset = 0x4, fixed_abs, tag = 'smem constant byte address 0x4 - core index']
  #allocation1 [shape = 'u32[144,128]{1,0:T(1,128)}', space=vmem, size = 0x12000, scoped, tag = 'internal scratch']
  #allocation2 [shape = 'f32[16,32]{1,0:T(8,128)}', space=vmem, size = 0x2000, scoped, tag = 'scratch operand']
  %s0 = inlined_call_operand.vmem [shape: bf16[16,32], index: 0, kind: input, shape index: {}]
  %s1 = inlined_call_operand.vmem [shape: bf16[32,32], index: 1, kind: input, shape index: {}]
  %s2 = inlined_call_operand.vmem [shape: f32[1,32], index: 2, kind: input, shape index: {}]
  %s3 = inlined_call_operand.vmem [shape: f32[16,32], index: 3, kind: input, shape index: {}]
  %s4 = inlined_call_operand.vmem [shape: f32[16,32], index: 4, kind: output, shape index: {}]
  %s5 = sld [smem:[#allocation0]]
  $region34: #{decoder_layer_forward.25} parent=0
    _
  %s7 = ssub.s32 1, %s5
  %s8 = scalar_select 0, %s7, %s5
  // Predicated region
  $region2: #{decoder_layer_forward.25} parent=0 // pred_check
    _
  $region3: #{decoder_layer_forward.25} parent=0 // pred_check_branch
    %10 = sbr.rel (0) target = $region5
  $region4: #{decoder_layer_forward.25} parent=0 // pred_region
    _
  $region5: #{decoder_layer_forward.25} parent=0 // pred_fallthru
    _
  // Predicated region
  $region6: #{decoder_layer_forward.25} parent=0 // pred_check
    _
  $region7: #{decoder_layer_forward.25} parent=0 // pred_check_branch
    %12 = sbr.rel (0) target = $region9
  $region8: #{decoder_layer_forward.25} parent=0 // pred_region
    _
  $region9: #{decoder_layer_forward.25} parent=0 // pred_fallthru
    _
  // Predicated region
  $region10: #{decoder_layer_forward.25} parent=0 // pred_check
    _
  $region11: #{decoder_layer_forward.25} parent=0 // pred_check_branch
    %14 = sbr.rel (0) target = $region13
  $region12: #{decoder_layer_forward.25} parent=0 // pred_region
    _
  $region13: #{decoder_layer_forward.25} parent=0 // pred_fallthru
    _
  // Predicated region
  $region14: #{decoder_layer_forward.25} parent=0 // pred_check
    _
  $region15: #{decoder_layer_forward.25} parent=0 // pred_check_branch
    %16 = sbr.rel (0) target = $region17
  $region16: #{decoder_layer_forward.25} parent=0 // pred_region
    _
  $region17: #{decoder_layer_forward.25} parent=0 // pred_fallthru
    _
  %p18 = scmp.eq.s32.totalorder 0, 0
  // Predicated region
  $region18: #{decoder_layer_forward.25} parent=0 // pred_check
    %p19 = pneg %p18
  $region19: #{decoder_layer_forward.25} parent=0 // pred_check_branch
    %21 = sbr.rel (%p19) target = $region21
  $region20: #{decoder_layer_forward.25} parent=0 // pred_region
    %vm22 = vcmask 261120
    %23 = vst.msk [vmem:[#allocation2] sm:$0xff] %vm22, 0.0
    %24 = vst.msk [vmem:[#allocation2 + $0x8] sm:$0xff] %vm22, 0.0
  $region21: #{decoder_layer_forward.25} parent=0 // pred_fallthru
    _
  %v25 = vld [vmem:[#allocation2] sm:$0xff]
  %v26 = vld [vmem:[#allocation2 + $0x8] sm:$0xff]
  %v27 = vld [vmem:[%s0] sm:$0xf]
  %v28 = vld [vmem:[%s0 + $0x4] sm:$0xf]
  %v29 = vld [vmem:[%s1] sm:$0xf]
  %v30 = vld [vmem:[%s1 + $0x4] sm:$0xf]
  %v31 = vld [vmem:[%s1 + $0x8] sm:$0xf]
  %v32 = vld [vmem:[%s1 + $0xc] sm:$0xf]
  %v35 = vunpack.c.l.b16 %v27
  %v36 = vunpack.c.l.b16 %v28
  %v37 = vpack.c.b16 %v36, %v35
  %v42 = vunpack.c.l.b16 %v29
  %v43 = vunpack.c.l.b16 %v30
  %v44 = vunpack.c.l.b16 %v31
  %v45 = vunpack.c.l.b16 %v32
  %v46 = vpack.c.b16 %v43, %v42
  %v47 = vpack.c.b16 %v45, %v44
  %vm50 = vcmask 261120
  %v52 = vsel %vm50, %v37, 0
  %54 = vmatprep.subr.bf16.mxu0 0
  %55 = vmatpush1.bf16.msra.mxu0 %v46
  %56 = vmatprep.subr.bf16.mxu0 0
  %57 = vmatpush1.bf16.msra.mxu0 %v47
  %58 = vmatprep.subr.bf16.mxu0 0
  %59 = vmatpush1.bf16.msra.mxu0 0
  %60 = vmatprep.subr.bf16.mxu0 0
  %61 = vmatpush1.bf16.msra.mxu0 0
  %62 = vmatprep.subr.bf16.mxu0 0
  %63 = vmatpush1.bf16.msra.mxu0 0
  %64 = vmatprep.subr.bf16.mxu0 0
  %65 = vmatpush1.bf16.msra.mxu0 0
  %66 = vmatprep.subr.bf16.mxu0 0
  %67 = vmatpush1.bf16.msra.mxu0 0
  %68 = vmatprep.subr.bf16.mxu0 0
  %69 = vmatpush1.bf16.msra.mxu0 0
  %70 = vmatprep.subr.bf16.mxu0 0
  %71 = vmatpush1.bf16.msra.mxu0 0
  %72 = vmatprep.subr.bf16.mxu0 0
  %73 = vmatpush1.bf16.msra.mxu0 0
  %74 = vmatprep.subr.bf16.mxu0 0
  %75 = vmatpush1.bf16.msra.mxu0 0
  %76 = vmatprep.subr.bf16.mxu0 0
  %77 = vmatpush1.bf16.msra.mxu0 0
  %78 = vmatprep.subr.bf16.mxu0 0
  %79 = vmatpush1.bf16.msra.mxu0 0
  %80 = vmatprep.subr.bf16.mxu0 0
  %81 = vmatpush1.bf16.msra.mxu0 0
  %82 = vmatprep.subr.bf16.mxu0 0
  %83 = vmatpush1.bf16.msra.mxu0 0
  %84 = vmatprep.subr.bf16.mxu0 0
  %85 = vmatpush1.bf16.msra.mxu0 0
  %86 = vmatprep.mubr.bf16.mxu0 0
  %87 = vmatmul.mubr.bf16.gmra.mrb[0].mxu0 %v52
  %v88 = vpop.f32.mrb[0].mxu0
  %v89 = vadd.f32 0.0, %v88
  %v90 = vpop.f32.mrb[0].mxu0
  %v91 = vpop.f32.mrb[0].mxu0
  %v92 = vadd.f32 0.0, %v91
  %v93 = vpop.f32.mrb[0].mxu0
  %94 = vdwg.mxu0
  %v95 = vadd.f32 %v25, %v89
  %v96 = vadd.f32 %v26, %v92
  %97 = vst.msk [vmem:[#allocation2] sm:$0xff] %vm50, %v95
  %98 = vst.msk [vmem:[#allocation2 + $0x8] sm:$0xff] %vm50, %v96
  // Predicated region
  $region22: #{decoder_layer_forward.25} parent=0 // pred_check
    %p99 = pneg %p18
  $region23: #{decoder_layer_forward.25} parent=0 // pred_check_branch
    %101 = sbr.rel (%p99) target = $region25
  $region24: #{decoder_layer_forward.25} parent=0 // pred_region
    %v102 = vld [vmem:[#allocation2] sm:$0xff]
    %v103 = vld [vmem:[#allocation2 + $0x8] sm:$0xff]
    %v104 = vld [vmem:[%s2] sm:$0x1]
    %v106 = vlaneseq
    %v107 = vshrl.u32 %v106, 7
    %v108 = vsub.s32 0, %v107
    %v109 = vrot.slane %v104, %v108
    %v111 = vadd.f32 %v102, %v109
    %v112 = vadd.f32 %v103, %v109
    %v113 = vld [vmem:[%s3] sm:$0xff]
    %v114 = vld [vmem:[%s3 + $0x8] sm:$0xff]
    %v115 = vadd.f32 %v111, %v113
    %v116 = vadd.f32 %v112, %v114
    %117 = vst.msk [vmem:[%s4] sm:$0xff] %vm50, %v115
    %118 = vst.msk [vmem:[%s4 + $0x8] sm:$0xff] %vm50, %v116
  $region25: #{decoder_layer_forward.25} parent=0 // pred_fallthru
    _
  // Predicated region
  $region26: #{decoder_layer_forward.25} parent=0 // pred_check
    _
  $region27: #{decoder_layer_forward.25} parent=0 // pred_check_branch
    %120 = sbr.rel (0) target = $region29
  $region28: #{decoder_layer_forward.25} parent=0 // pred_region
    _
  $region29: #{decoder_layer_forward.25} parent=0 // pred_fallthru
    _
  // Predicated region
  $region30: #{decoder_layer_forward.25} parent=0 // pred_check
    _
  $region31: #{decoder_layer_forward.25} parent=0 // pred_check_branch
    %122 = sbr.rel (0) target = $region33
  $region32: #{decoder_layer_forward.25} parent=0 // pred_region
    _
  $region33: #{decoder_layer_forward.25} parent=0 // pred_fallthru
    _

// kernel: decoder_layer_forward.20
$region0: #{decoder_layer_forward.20}
  #allocation0 [shape = 'u32[]', space=smem, size = 0x4, offset = 0x4, fixed_abs, tag = 'smem constant byte address 0x4 - core index']
  #allocation1 [shape = 'u32[144,128]{1,0:T(1,128)}', space=vmem, size = 0x12000, scoped, tag = 'internal scratch']
  %s0 = inlined_call_operand.vmem [shape: f32[16,32], index: 0, kind: input, shape index: {}]
  %s1 = inlined_call_operand.vmem [shape: f32[1,32], index: 1, kind: input, shape index: {}]
  %s2 = inlined_call_operand.vmem [shape: f32[1,32], index: 2, kind: input, shape index: {}]
  %s3 = inlined_call_operand.vmem [shape: bf16[32,32], index: 3, kind: input, shape index: {}]
  %s4 = inlined_call_operand.vmem [shape: f32[1,32], index: 4, kind: input, shape index: {}]
  %s5 = inlined_call_operand.vmem [shape: bf16[32,32], index: 5, kind: input, shape index: {}]
  %s6 = inlined_call_operand.vmem [shape: f32[1,32], index: 6, kind: input, shape index: {}]
  %s7 = inlined_call_operand.vmem [shape: bf16[32,32], index: 7, kind: input, shape index: {}]
  %s8 = inlined_call_operand.vmem [shape: f32[1,32], index: 8, kind: input, shape index: {}]
  %s9 = inlined_call_operand.vmem [shape: bf16[16,32], index: 9, kind: output, shape index: {0}]
  %s10 = inlined_call_operand.vmem [shape: bf16[16,32], index: 10, kind: output, shape index: {1}]
  %s11 = inlined_call_operand.vmem [shape: bf16[16,32], index: 11, kind: output, shape index: {2}]
  %12 = xla_tuple %s9, %s10, %s11
  %s13 = sld [smem:[#allocation0]]
  $region62: #{decoder_layer_forward.20} parent=0
    _
  %s15 = ssub.s32 1, %s13
  %s16 = scalar_select 0, %s15, %s13
  // Predicated region
  $region2: #{decoder_layer_forward.20} parent=0 // pred_check
    _
  $region3: #{decoder_layer_forward.20} parent=0 // pred_check_branch
    %18 = sbr.rel (0) target = $region5
  $region4: #{decoder_layer_forward.20} parent=0 // pred_region
    _
  $region5: #{decoder_layer_forward.20} parent=0 // pred_fallthru
    _
  // Predicated region
  $region6: #{decoder_layer_forward.20} parent=0 // pred_check
    _
  $region7: #{decoder_layer_forward.20} parent=0 // pred_check_branch
    %20 = sbr.rel (0) target = $region9
  $region8: #{decoder_layer_forward.20} parent=0 // pred_region
    _
  $region9: #{decoder_layer_forward.20} parent=0 // pred_fallthru
    _
  // Predicated region
  $region10: #{decoder_layer_forward.20} parent=0 // pred_check
    _
  $region11: #{decoder_layer_forward.20} parent=0 // pred_check_branch
    %22 = sbr.rel (0) target = $region13
  $region12: #{decoder_layer_forward.20} parent=0 // pred_region
    _
  $region13: #{decoder_layer_forward.20} parent=0 // pred_fallthru
    _
  // Predicated region
  $region14: #{decoder_layer_forward.20} parent=0 // pred_check
    _
  $region15: #{decoder_layer_forward.20} parent=0 // pred_check_branch
    %24 = sbr.rel (0) target = $region17
  $region16: #{decoder_layer_forward.20} parent=0 // pred_region
    _
  $region17: #{decoder_layer_forward.20} parent=0 // pred_fallthru
    _
  // Predicated region
  $region18: #{decoder_layer_forward.20} parent=0 // pred_check
    _
  $region19: #{decoder_layer_forward.20} parent=0 // pred_check_branch
    %26 = sbr.rel (0) target = $region21
  $region20: #{decoder_layer_forward.20} parent=0 // pred_region
    _
  $region21: #{decoder_layer_forward.20} parent=0 // pred_fallthru
    _
  // Predicated region
  $region22: #{decoder_layer_forward.20} parent=0 // pred_check
    _
  $region23: #{decoder_layer_forward.20} parent=0 // pred_check_branch
    %28 = sbr.rel (0) target = $region25
  $region24: #{decoder_layer_forward.20} parent=0 // pred_region
    _
  $region25: #{decoder_layer_forward.20} parent=0 // pred_fallthru
    _
  // Predicated region
  $region26: #{decoder_layer_forward.20} parent=0 // pred_check
    _
  $region27: #{decoder_layer_forward.20} parent=0 // pred_check_branch
    %30 = sbr.rel (0) target = $region29
  $region28: #{decoder_layer_forward.20} parent=0 // pred_region
    _
  $region29: #{decoder_layer_forward.20} parent=0 // pred_fallthru
    _
  // Predicated region
  $region30: #{decoder_layer_forward.20} parent=0 // pred_check
    _
  $region31: #{decoder_layer_forward.20} parent=0 // pred_check_branch
    %32 = sbr.rel (0) target = $region33
  $region32: #{decoder_layer_forward.20} parent=0 // pred_region
    _
  $region33: #{decoder_layer_forward.20} parent=0 // pred_fallthru
    _
  // Predicated region
  $region34: #{decoder_layer_forward.20} parent=0 // pred_check
    _
  $region35: #{decoder_layer_forward.20} parent=0 // pred_check_branch
    %34 = sbr.rel (0) target = $region37
  $region36: #{decoder_layer_forward.20} parent=0 // pred_region
    _
  $region37: #{decoder_layer_forward.20} parent=0 // pred_fallthru
    _
  %v36 = vld [vmem:[%s0] sm:$0xff]
  %v37 = vld [vmem:[%s0 + $0x8] sm:$0xff]
  %vm38 = vcmask 261120
  %v39 = vsel %vm38, %v36, 0.0
  %40 = vadd.xlane.f32.xlu0 %v39
  %v41 = vpop.xlane.xlu0 %40
  %v42 = vsel %vm38, %v37, 0.0
  %43 = vadd.xlane.f32.xlu0 %v42
  %v44 = vpop.xlane.xlu0 %43
  %v45 = vrcp.pop 32.0
  %v46 = vmul.f32 %v41, %v45
  %v47 = vmul.f32 %v44, %v45
  %v48 = vsub.f32 %v36, %v46
  %v49 = vsub.f32 %v37, %v47
  %v50 = vmul.f32 %v48, %v48
  %v51 = vmul.f32 %v49, %v49
  %v52 = vsel %vm38, %v50, 0.0
  %53 = vadd.xlane.f32.xlu0 %v52
  %v54 = vpop.xlane.xlu0 %53
  %v55 = vsel %vm38, %v51, 0.0
  %56 = vadd.xlane.f32.xlu0 %v55
  %v57 = vpop.xlane.xlu0 %56
  %v58 = vrcp.pop 31.0
  %v59 = vmul.f32 %v54, %v58
  %v60 = vmul.f32 %v57, %v58
  %v61 = vld [vmem:[%s1] sm:$0x1]
  %v63 = vlaneseq
  %v64 = vshrl.u32 %v63, 7
  %v65 = vsub.s32 0, %v64
  %v66 = vrot.slane %v61, %v65
  %v68 = vmul.f32 %v66, %v48
  %v69 = vmul.f32 %v66, %v49
  %v70 = vrsqrt.pop %v59
  %v71 = vmul.f32 %v59, %v70
  %vm72 = vcmp.eq.f32.partialorder %v59, inf
  %v73 = vsel %vm72, %v59, %v71
  %vm74 = vcmp.eq.f32.partialorder %v59, 0.0
  %v75 = vand.u32 %v59, 2147483648
  %v76 = vsel %vm74, %v75, %v73
  %v77 = vrsqrt.pop %v60
  %v78 = vmul.f32 %v60, %v77
  %vm79 = vcmp.eq.f32.partialorder %v60, inf
  %v80 = vsel %vm79, %v60, %v78
  %vm81 = vcmp.eq.f32.partialorder %v60, 0.0
  %v82 = vand.u32 %v60, 2147483648
  %v83 = vsel %vm81, %v82, %v80
  %v84 = vadd.f32 %v76, 1e-06
  %v85 = vadd.f32 %v83, 1e-06
  %v86 = vrcp.pop %v84
  %v87 = vmul.f32 %v68, %v86
  %v88 = vrcp.pop %v85
  %v89 = vmul.f32 %v69, %v88
  %v90 = vld [vmem:[%s2] sm:$0x1]
  %v92 = vlaneseq
  %v93 = vshrl.u32 %v92, 7
  %v94 = vsub.s32 0, %v93
  %v95 = vrot.slane %v90, %v94
  %v97 = vadd.f32 %v87, %v95
  %v98 = vadd.f32 %v89, %v95
  %v99 = vpack.c.bf16 %v98, %v97
  %v100 = vld [vmem:[%s3] sm:$0xf]
  %v101 = vld [vmem:[%s3 + $0x4] sm:$0xf]
  %v102 = vld [vmem:[%s3 + $0x8] sm:$0xf]
  %v103 = vld [vmem:[%s3 + $0xc] sm:$0xf]
  %v104 = vld [vmem:[%s4] sm:$0x1]
  %v106 = vlaneseq
  %v107 = vshrl.u32 %v106, 7
  %v108 = vsub.s32 0, %v107
  %v109 = vrot.slane %v104, %v108
  %v115 = vunpack.c.l.b16 %v100
  %v116 = vunpack.c.l.b16 %v101
  %v117 = vunpack.c.l.b16 %v102
  %v118 = vunpack.c.l.b16 %v103
  %v119 = vpack.c.b16 %v116, %v115
  %v120 = vpack.c.b16 %v118, %v117
  %v124 = vsel %vm38, %v99, 0
  %126 = vmatprep.subr.bf16.mxu0 0
  %127 = vmatpush1.bf16.msra.mxu0 %v119
  %128 = vmatprep.subr.bf16.mxu0 0
  %129 = vmatpush1.bf16.msra.mxu0 %v120
  %130 = vmatprep.subr.bf16.mxu0 0
  %131 = vmatpush1.bf16.msra.mxu0 0
  %132 = vmatprep.subr.bf16.mxu0 0
  %133 = vmatpush1.bf16.msra.mxu0 0
  %134 = vmatprep.subr.bf16.mxu0 0
  %135 = vmatpush1.bf16.msra.mxu0 0
  %136 = vmatprep.subr.bf16.mxu0 0
  %137 = vmatpush1.bf16.msra.mxu0 0
  %138 = vmatprep.subr.bf16.mxu0 0
  %139 = vmatpush1.bf16.msra.mxu0 0
  %140 = vmatprep.subr.bf16.mxu0 0
  %141 = vmatpush1.bf16.msra.mxu0 0
  %142 = vmatprep.subr.bf16.mxu0 0
  %143 = vmatpush1.bf16.msra.mxu0 0
  %144 = vmatprep.subr.bf16.mxu0 0
  %145 = vmatpush1.bf16.msra.mxu0 0
  %146 = vmatprep.subr.bf16.mxu0 0
  %147 = vmatpush1.bf16.msra.mxu0 0
  %148 = vmatprep.subr.bf16.mxu0 0
  %149 = vmatpush1.bf16.msra.mxu0 0
  %150 = vmatprep.subr.bf16.mxu0 0
  %151 = vmatpush1.bf16.msra.mxu0 0
  %152 = vmatprep.subr.bf16.mxu0 0
  %153 = vmatpush1.bf16.msra.mxu0 0
  %154 = vmatprep.subr.bf16.mxu0 0
  %155 = vmatpush1.bf16.msra.mxu0 0
  %156 = vmatprep.subr.bf16.mxu0 0
  %157 = vmatpush1.bf16.msra.mxu0 0
  %158 = vmatprep.mubr.bf16.mxu0 0
  %159 = vmatmul.mubr.bf16.gmra.mrb[0].mxu0 %v124
  %v160 = vpop.f32.mrb[0].mxu0
  %v161 = vadd.f32 %v109, %v160
  %v162 = vpop.f32.mrb[0].mxu0
  %v163 = vpop.f32.mrb[0].mxu0
  %v164 = vadd.f32 %v109, %v163
  %v165 = vpop.f32.mrb[0].mxu0
  %166 = vdwg.mxu0
  %v167 = vpack.c.bf16 %v164, %v161
  %v169 = vunpack.c.l.b16 %v167
  %v170 = vunpack.c.h.b16 %v167
  %v171 = vpack.c.b16 %v169, %v169
  %v172 = vpack.c.b16 %v170, %v170
  %vm175 = vcmask 257024
  %176 = vst.msk [vmem:[%s9] sm:$0xf] %vm175, %v171
  %177 = vst.msk [vmem:[%s9 + $0x4] sm:$0xf] %vm175, %v172
  %v178 = vld [vmem:[%s5] sm:$0xf]
  %v179 = vld [vmem:[%s5 + $0x4] sm:$0xf]
  %v180 = vld [vmem:[%s5 + $0x8] sm:$0xf]
  %v181 = vld [vmem:[%s5 + $0xc] sm:$0xf]
  %v182 = vld [vmem:[%s6] sm:$0x1]
  %v184 = vlaneseq
  %v185 = vshrl.u32 %v184, 7
  %v186 = vsub.s32 0, %v185
  %v187 = vrot.slane %v182, %v186
  %v193 = vunpack.c.l.b16 %v178
  %v194 = vunpack.c.l.b16 %v179
  %v195 = vunpack.c.l.b16 %v180
  %v196 = vunpack.c.l.b16 %v181
  %v197 = vpack.c.b16 %v194, %v193
  %v198 = vpack.c.b16 %v196, %v195
  %201 = vmatprep.subr.bf16.mxu0 0
  %202 = vmatpush1.bf16.msra.mxu0 %v197
  %203 = vmatprep.subr.bf16.mxu0 0
  %204 = vmatpush1.bf16.msra.mxu0 %v198
  %205 = vmatprep.subr.bf16.mxu0 0
  %206 = vmatpush1.bf16.msra.mxu0 0
  %207 = vmatprep.subr.bf16.mxu0 0
  %208 = vmatpush1.bf16.msra.mxu0 0
  %209 = vmatprep.subr.bf16.mxu0 0
  %210 = vmatpush1.bf16.msra.mxu0 0
  %211 = vmatprep.subr.bf16.mxu0 0
  %212 = vmatpush1.bf16.msra.mxu0 0
  %213 = vmatprep.subr.bf16.mxu0 0
  %214 = vmatpush1.bf16.msra.mxu0 0
  %215 = vmatprep.subr.bf16.mxu0 0
  %216 = vmatpush1.bf16.msra.mxu0 0
  %217 = vmatprep.subr.bf16.mxu0 0
  %218 = vmatpush1.bf16.msra.mxu0 0
  %219 = vmatprep.subr.bf16.mxu0 0
  %220 = vmatpush1.bf16.msra.mxu0 0
  %221 = vmatprep.subr.bf16.mxu0 0
  %222 = vmatpush1.bf16.msra.mxu0 0
  %223 = vmatprep.subr.bf16.mxu0 0
  %224 = vmatpush1.bf16.msra.mxu0 0
  %225 = vmatprep.subr.bf16.mxu0 0
  %226 = vmatpush1.bf16.msra.mxu0 0
  %227 = vmatprep.subr.bf16.mxu0 0
  %228 = vmatpush1.bf16.msra.mxu0 0
  %229 = vmatprep.subr.bf16.mxu0 0
  %230 = vmatpush1.bf16.msra.mxu0 0
  %231 = vmatprep.subr.bf16.mxu0 0
  %232 = vmatpush1.bf16.msra.mxu0 0
  %233 = vmatprep.mubr.bf16.mxu0 0
  %234 = vmatmul.mubr.bf16.gmra.mrb[0].mxu0 %v124
  %v235 = vpop.f32.mrb[0].mxu0
  %v236 = vadd.f32 %v187, %v235
  %v237 = vpop.f32.mrb[0].mxu0
  %v238 = vpop.f32.mrb[0].mxu0
  %v239 = vadd.f32 %v187, %v238
  %v240 = vpop.f32.mrb[0].mxu0
  %241 = vdwg.mxu0
  %v242 = vpack.c.bf16 %v239, %v236
  %v244 = vunpack.c.l.b16 %v242
  %v245 = vunpack.c.h.b16 %v242
  %v246 = vpack.c.b16 %v244, %v244
  %v247 = vpack.c.b16 %v245, %v245
  %250 = vst.msk [vmem:[%s10] sm:$0xf] %vm175, %v246
  %251 = vst.msk [vmem:[%s10 + $0x4] sm:$0xf] %vm175, %v247
  %v252 = vld [vmem:[%s7] sm:$0xf]
  %v253 = vld [vmem:[%s7 + $0x4] sm:$0xf]
  %v254 = vld [vmem:[%s7 + $0x8] sm:$0xf]
  %v255 = vld [vmem:[%s7 + $0xc] sm:$0xf]
  %v256 = vld [vmem:[%s8] sm:$0x1]
  %v258 = vlaneseq
  %v259 = vshrl.u32 %v258, 7
  %v260 = vsub.s32 0, %v259
  %v261 = vrot.slane %v256, %v260
  %v267 = vunpack.c.l.b16 %v252
  %v268 = vunpack.c.l.b16 %v253
  %v269 = vunpack.c.l.b16 %v254
  %v270 = vunpack.c.l.b16 %v255
  %v271 = vpack.c.b16 %v268, %v267
  %v272 = vpack.c.b16 %v270, %v269
  %275 = vmatprep.subr.bf16.mxu0 0
  %276 = vmatpush1.bf16.msra.mxu0 %v271
  %277 = vmatprep.subr.bf16.mxu0 0
  %278 = vmatpush1.bf16.msra.mxu0 %v272
  %279 = vmatprep.subr.bf16.mxu0 0
  %280 = vmatpush1.bf16.msra.mxu0 0
  %281 = vmatprep.subr.bf16.mxu0 0
  %282 = vmatpush1.bf16.msra.mxu0 0
  %283 = vmatprep.subr.bf16.mxu0 0
  %284 = vmatpush1.bf16.msra.mxu0 0
  %285 = vmatprep.subr.bf16.mxu0 0
  %286 = vmatpush1.bf16.msra.mxu0 0
  %287 = vmatprep.subr.bf16.mxu0 0
  %288 = vmatpush1.bf16.msra.mxu0 0
  %289 = vmatprep.subr.bf16.mxu0 0
  %290 = vmatpush1.bf16.msra.mxu0 0
  %291 = vmatprep.subr.bf16.mxu0 0
  %292 = vmatpush1.bf16.msra.mxu0 0
  %293 = vmatprep.subr.bf16.mxu0 0
  %294 = vmatpush1.bf16.msra.mxu0 0
  %295 = vmatprep.subr.bf16.mxu0 0
  %296 = vmatpush1.bf16.msra.mxu0 0
  %297 = vmatprep.subr.bf16.mxu0 0
  %298 = vmatpush1.bf16.msra.mxu0 0
  %299 = vmatprep.subr.bf16.mxu0 0
  %300 = vmatpush1.bf16.msra.mxu0 0
  %301 = vmatprep.subr.bf16.mxu0 0
  %302 = vmatpush1.bf16.msra.mxu0 0
  %303 = vmatprep.subr.bf16.mxu0 0
  %304 = vmatpush1.bf16.msra.mxu0 0
  %305 = vmatprep.subr.bf16.mxu0 0
  %306 = vmatpush1.bf16.msra.mxu0 0
  %307 = vmatprep.mubr.bf16.mxu0 0
  %308 = vmatmul.mubr.bf16.gmra.mrb[0].mxu0 %v124
  %v309 = vpop.f32.mrb[0].mxu0
  %v310 = vadd.f32 %v261, %v309
  %v311 = vpop.f32.mrb[0].mxu0
  %v312 = vpop.f32.mrb[0].mxu0
  %v313 = vadd.f32 %v261, %v312
  %v314 = vpop.f32.mrb[0].mxu0
  %315 = vdwg.mxu0
  %v316 = vpack.c.bf16 %v313, %v310
  %v318 = vunpack.c.l.b16 %v316
  %v319 = vunpack.c.h.b16 %v316
  %v320 = vpack.c.b16 %v318, %v318
  %v321 = vpack.c.b16 %v319, %v319
  %324 = vst.msk [vmem:[%s11] sm:$0xf] %vm175, %v320
  %325 = vst.msk [vmem:[%s11 + $0x4] sm:$0xf] %vm175, %v321
  // Predicated region
  $region38: #{decoder_layer_forward.20} parent=0 // pred_check
    _
  $region39: #{decoder_layer_forward.20} parent=0 // pred_check_branch
    %327 = sbr.rel (0) target = $region41
  $region40: #{decoder_layer_forward.20} parent=0 // pred_region
    _
  $region41: #{decoder_layer_forward.20} parent=0 // pred_fallthru
    _
  // Predicated region
  $region42: #{decoder_layer_forward.20} parent=0 // pred_check
    _
  $region43: #{decoder_layer_forward.20} parent=0 // pred_check_branch
    %329 = sbr.rel (0) target = $region45
  $region44: #{decoder_layer_forward.20} parent=0 // pred_region
    _
  $region45: #{decoder_layer_forward.20} parent=0 // pred_fallthru
    _
  // Predicated region
  $region46: #{decoder_layer_forward.20} parent=0 // pred_check
    _
  $region47: #{decoder_layer_forward.20} parent=0 // pred_check_branch
    %331 = sbr.rel (0) target = $region49
  $region48: #{decoder_layer_forward.20} parent=0 // pred_region
    _
  $region49: #{decoder_layer_forward.20} parent=0 // pred_fallthru
    _
  // Predicated region
  $region50: #{decoder_layer_forward.20} parent=0 // pred_check
    _
  $region51: #{decoder_layer_forward.20} parent=0 // pred_check_branch
    %333 = sbr.rel (0) target = $region53
  $region52: #{decoder_layer_forward.20} parent=0 // pred_region
    _
  $region53: #{decoder_layer_forward.20} parent=0 // pred_fallthru
    _
  // Predicated region
  $region54: #{decoder_layer_forward.20} parent=0 // pred_check
    _
  $region55: #{decoder_layer_forward.20} parent=0 // pred_check_branch
    %335 = sbr.rel (0) target = $region57
  $region56: #{decoder_layer_forward.20} parent=0 // pred_region
    _
  $region57: #{decoder_layer_forward.20} parent=0 // pred_fallthru
    _
  // Predicated region
  $region58: #{decoder_layer_forward.20} parent=0 // pred_check
    _
  $region59: #{decoder_layer_forward.20} parent=0 // pred_check_branch
    %337 = sbr.rel (0) target = $region61
  $region60: #{decoder_layer_forward.20} parent=0 // pred_region
    _
  $region61: #{decoder_layer_forward.20} parent=0 // pred_fallthru
    _

// kernel: decoder_layer_forward.22
$region0: #{decoder_layer_forward.22}
  #allocation0 [shape = 'u32[]', space=smem, size = 0x4, offset = 0x4, fixed_abs, tag = 'smem constant byte address 0x4 - core index']
  #allocation1 [shape = 'u32[144,128]{1,0:T(1,128)}', space=vmem, size = 0x12000, scoped, tag = 'internal scratch']
  %s0 = inlined_call_operand.vmem [shape: f32[16,32], index: 0, kind: input, shape index: {}]
  %s1 = inlined_call_operand.vmem [shape: f32[1,32], index: 1, kind: input, shape index: {}]
  %s2 = inlined_call_operand.vmem [shape: f32[1,32], index: 2, kind: input, shape index: {}]
  %s3 = inlined_call_operand.vmem [shape: bf16[32,32], index: 3, kind: input, shape index: {}]
  %s4 = inlined_call_operand.vmem [shape: f32[1,32], index: 4, kind: input, shape index: {}]
  %s5 = inlined_call_operand.vmem [shape: bf16[16,32], index: 5, kind: output, shape index: {}]
  %s6 = sld [smem:[#allocation0]]
  $region30: #{decoder_layer_forward.22} parent=0
    _
  %s8 = ssub.s32 1, %s6
  %s9 = scalar_select 0, %s8, %s6
  // Predicated region
  $region2: #{decoder_layer_forward.22} parent=0 // pred_check
    _
  $region3: #{decoder_layer_forward.22} parent=0 // pred_check_branch
    %11 = sbr.rel (0) target = $region5
  $region4: #{decoder_layer_forward.22} parent=0 // pred_region
    _
  $region5: #{decoder_layer_forward.22} parent=0 // pred_fallthru
    _
  // Predicated region
  $region6: #{decoder_layer_forward.22} parent=0 // pred_check
    _
  $region7: #{decoder_layer_forward.22} parent=0 // pred_check_branch
    %13 = sbr.rel (0) target = $region9
  $region8: #{decoder_layer_forward.22} parent=0 // pred_region
    _
  $region9: #{decoder_layer_forward.22} parent=0 // pred_fallthru
    _
  // Predicated region
  $region10: #{decoder_layer_forward.22} parent=0 // pred_check
    _
  $region11: #{decoder_layer_forward.22} parent=0 // pred_check_branch
    %15 = sbr.rel (0) target = $region13
  $region12: #{decoder_layer_forward.22} parent=0 // pred_region
    _
  $region13: #{decoder_layer_forward.22} parent=0 // pred_fallthru
    _
  // Predicated region
  $region14: #{decoder_layer_forward.22} parent=0 // pred_check
    _
  $region15: #{decoder_layer_forward.22} parent=0 // pred_check_branch
    %17 = sbr.rel (0) target = $region17
  $region16: #{decoder_layer_forward.22} parent=0 // pred_region
    _
  $region17: #{decoder_layer_forward.22} parent=0 // pred_fallthru
    _
  // Predicated region
  $region18: #{decoder_layer_forward.22} parent=0 // pred_check
    _
  $region19: #{decoder_layer_forward.22} parent=0 // pred_check_branch
    %19 = sbr.rel (0) target = $region21
  $region20: #{decoder_layer_forward.22} parent=0 // pred_region
    _
  $region21: #{decoder_layer_forward.22} parent=0 // pred_fallthru
    _
  %v21 = vld [vmem:[%s0] sm:$0xff]
  %v22 = vld [vmem:[%s0 + $0x8] sm:$0xff]
  %vm23 = vcmask 261120
  %v24 = vsel %vm23, %v21, 0.0
  %25 = vadd.xlane.f32.xlu0 %v24
  %v26 = vpop.xlane.xlu0 %25
  %v27 = vsel %vm23, %v22, 0.0
  %28 = vadd.xlane.f32.xlu0 %v27
  %v29 = vpop.xlane.xlu0 %28
  %v30 = vrcp.pop 32.0
  %v31 = vmul.f32 %v26, %v30
  %v32 = vmul.f32 %v29, %v30
  %v33 = vsub.f32 %v21, %v31
  %v34 = vsub.f32 %v22, %v32
  %v35 = vmul.f32 %v33, %v33
  %v36 = vmul.f32 %v34, %v34
  %v37 = vsel %vm23, %v35, 0.0
  %38 = vadd.xlane.f32.xlu0 %v37
  %v39 = vpop.xlane.xlu0 %38
  %v40 = vsel %vm23, %v36, 0.0
  %41 = vadd.xlane.f32.xlu0 %v40
  %v42 = vpop.xlane.xlu0 %41
  %v43 = vrcp.pop 31.0
  %v44 = vmul.f32 %v39, %v43
  %v45 = vmul.f32 %v42, %v43
  %v46 = vld [vmem:[%s1] sm:$0x1]
  %v48 = vlaneseq
  %v49 = vshrl.u32 %v48, 7
  %v50 = vsub.s32 0, %v49
  %v51 = vrot.slane %v46, %v50
  %v53 = vmul.f32 %v51, %v33
  %v54 = vmul.f32 %v51, %v34
  %v55 = vrsqrt.pop %v44
  %v56 = vmul.f32 %v44, %v55
  %vm57 = vcmp.eq.f32.partialorder %v44, inf
  %v58 = vsel %vm57, %v44, %v56
  %vm59 = vcmp.eq.f32.partialorder %v44, 0.0
  %v60 = vand.u32 %v44, 2147483648
  %v61 = vsel %vm59, %v60, %v58
  %v62 = vrsqrt.pop %v45
  %v63 = vmul.f32 %v45, %v62
  %vm64 = vcmp.eq.f32.partialorder %v45, inf
  %v65 = vsel %vm64, %v45, %v63
  %vm66 = vcmp.eq.f32.partialorder %v45, 0.0
  %v67 = vand.u32 %v45, 2147483648
  %v68 = vsel %vm66, %v67, %v65
  %v69 = vadd.f32 %v61, 1e-06
  %v70 = vadd.f32 %v68, 1e-06
  %v71 = vrcp.pop %v69
  %v72 = vmul.f32 %v53, %v71
  %v73 = vrcp.pop %v70
  %v74 = vmul.f32 %v54, %v73
  %v75 = vld [vmem:[%s2] sm:$0x1]
  %v77 = vlaneseq
  %v78 = vshrl.u32 %v77, 7
  %v79 = vsub.s32 0, %v78
  %v80 = vrot.slane %v75, %v79
  %v82 = vadd.f32 %v72, %v80
  %v83 = vadd.f32 %v74, %v80
  %v84 = vpack.c.bf16 %v83, %v82
  %v85 = vld [vmem:[%s3] sm:$0xf]
  %v86 = vld [vmem:[%s3 + $0x4] sm:$0xf]
  %v87 = vld [vmem:[%s3 + $0x8] sm:$0xf]
  %v88 = vld [vmem:[%s3 + $0xc] sm:$0xf]
  %v89 = vld [vmem:[%s4] sm:$0x1]
  %v91 = vlaneseq
  %v92 = vshrl.u32 %v91, 7
  %v93 = vsub.s32 0, %v92
  %v94 = vrot.slane %v89, %v93
  %v100 = vunpack.c.l.b16 %v85
  %v101 = vunpack.c.l.b16 %v86
  %v102 = vunpack.c.l.b16 %v87
  %v103 = vunpack.c.l.b16 %v88
  %v104 = vpack.c.b16 %v101, %v100
  %v105 = vpack.c.b16 %v103, %v102
  %v109 = vsel %vm23, %v84, 0
  %111 = vmatprep.subr.bf16.mxu0 0
  %112 = vmatpush1.bf16.msra.mxu0 %v104
  %113 = vmatprep.subr.bf16.mxu0 0
  %114 = vmatpush1.bf16.msra.mxu0 %v105
  %115 = vmatprep.subr.bf16.mxu0 0
  %116 = vmatpush1.bf16.msra.mxu0 0
  %117 = vmatprep.subr.bf16.mxu0 0
  %118 = vmatpush1.bf16.msra.mxu0 0
  %119 = vmatprep.subr.bf16.mxu0 0
  %120 = vmatpush1.bf16.msra.mxu0 0
  %121 = vmatprep.subr.bf16.mxu0 0
  %122 = vmatpush1.bf16.msra.mxu0 0
  %123 = vmatprep.subr.bf16.mxu0 0
  %124 = vmatpush1.bf16.msra.mxu0 0
  %125 = vmatprep.subr.bf16.mxu0 0
  %126 = vmatpush1.bf16.msra.mxu0 0
  %127 = vmatprep.subr.bf16.mxu0 0
  %128 = vmatpush1.bf16.msra.mxu0 0
  %129 = vmatprep.subr.bf16.mxu0 0
  %130 = vmatpush1.bf16.msra.mxu0 0
  %131 = vmatprep.subr.bf16.mxu0 0
  %132 = vmatpush1.bf16.msra.mxu0 0
  %133 = vmatprep.subr.bf16.mxu0 0
  %134 = vmatpush1.bf16.msra.mxu0 0
  %135 = vmatprep.subr.bf16.mxu0 0
  %136 = vmatpush1.bf16.msra.mxu0 0
  %137 = vmatprep.subr.bf16.mxu0 0
  %138 = vmatpush1.bf16.msra.mxu0 0
  %139 = vmatprep.subr.bf16.mxu0 0
  %140 = vmatpush1.bf16.msra.mxu0 0
  %141 = vmatprep.subr.bf16.mxu0 0
  %142 = vmatpush1.bf16.msra.mxu0 0
  %143 = vmatprep.mubr.bf16.mxu0 0
  %144 = vmatmul.mubr.bf16.gmra.mrb[0].mxu0 %v109
  %v145 = vpop.f32.mrb[0].mxu0
  %v146 = vadd.f32 %v94, %v145
  %v147 = vpop.f32.mrb[0].mxu0
  %v148 = vpop.f32.mrb[0].mxu0
  %v149 = vadd.f32 %v94, %v148
  %v150 = vpop.f32.mrb[0].mxu0
  %151 = vdwg.mxu0
  %v152 = vpack.c.bf16 %v149, %v146
  %v154 = vunpack.c.l.b16 %v152
  %v155 = vunpack.c.h.b16 %v152
  %v156 = vpack.c.b16 %v154, %v154
  %v157 = vpack.c.b16 %v155, %v155
  %vm160 = vcmask 257024
  %161 = vst.msk [vmem:[%s5] sm:$0xf] %vm160, %v156
  %162 = vst.msk [vmem:[%s5 + $0x4] sm:$0xf] %vm160, %v157
  // Predicated region
  $region22: #{decoder_layer_forward.22} parent=0 // pred_check
    _
  $region23: #{decoder_layer_forward.22} parent=0 // pred_check_branch
    %164 = sbr.rel (0) target = $region25
  $region24: #{decoder_layer_forward.22} parent=0 // pred_region
    _
  $region25: #{decoder_layer_forward.22} parent=0 // pred_fallthru
    _
  // Predicated region
  $region26: #{decoder_layer_forward.22} parent=0 // pred_check
    _
  $region27: #{decoder_layer_forward.22} parent=0 // pred_check_branch
    %166 = sbr.rel (0) target = $region29
  $region28: #{decoder_layer_forward.22} parent=0 // pred_region
    _
  $region29: #{decoder_layer_forward.22} parent=0 // pred_fallthru
    _

// kernel: decoder_layer_forward.21
$region0: #{decoder_layer_forward.21}
  #allocation0 [shape = 'u32[]', space=smem, size = 0x4, offset = 0x4, fixed_abs, tag = 'smem constant byte address 0x4 - core index']
  #allocation1 [shape = 'u32[144,128]{1,0:T(1,128)}', space=vmem, size = 0x12000, scoped, tag = 'internal scratch']
  #allocation2 [shape = 'f32[4,8,1]{2,1,0:T(8,128)}', space=vmem, size = 0x4000, scoped, tag = 'scratch operand']
  #allocation3 [shape = 'f32[4,8,1]{2,1,0:T(8,128)}', space=vmem, size = 0x4000, scoped, tag = 'scratch operand']
  #allocation4 [shape = 'f32[4,8,8]{2,1,0:T(8,128)}', space=vmem, size = 0x4000, scoped, tag = 'scratch operand']
  %s0 = inlined_call_operand.vmem [shape: bf16[2,8,32], index: 0, kind: input, shape index: {}]
  %s1 = inlined_call_operand.vmem [shape: bf16[2,8,32], index: 1, kind: input, shape index: {}]
  %s2 = inlined_call_operand.vmem [shape: bf16[2,8,32], index: 2, kind: input, shape index: {}]
  %s3 = inlined_call_operand.vmem [shape: f32[2,8,8], index: 3, kind: input, shape index: {}]
  %s4 = inlined_call_operand.vmem [shape: bf16[2,8,32], index: 4, kind: output, shape index: {}]
  %s5 = sld [smem:[#allocation0]]
  $region57: #{decoder_layer_forward.21} parent=0
    _
  %s7 = ssub.s32 1, %s5
  %s8 = scalar_select 0, %s7, %s5
  loop: start=0, step=1, limit=4
  $region2: #{decoder_layer_forward.21} parent=0 // loop_pre_header
    _
  $region3: #{decoder_layer_forward.21} parent=0 // loop_header
    %s10 = sphi 0, %s14
    %p11 = scmp.ge.s32.totalorder %s10, 4
    %s17 = sphi 0, %s36
    %s18 = sphi 0, %s32
    %s19 = sphi 0, %s28
    %s20 = sphi 0, %s17
    %s21 = sphi 0, %s18
    %s22 = sphi 0, %s19
    %s23 = sphi 0, %s20
    %s24 = sphi 0, %s21
    %s25 = sphi 0, %s22
    %s41 = sphi 0, %s43
    %s44 = sphi 0, %s41
    %s45 = sphi 0, %s44
    %s61 = sphi 0, %s45
    %s69 = sphi 0, %s71
    %s72 = sphi 0, %s69
    %s73 = sphi 0, %s72
    %s89 = sphi 0, %s73
    %s97 = sphi 0, %s99
    %s100 = sphi 0, %s97
    %s101 = sphi 0, %s100
    %s117 = sphi 0, %s101
    %s127 = sphi 0, %s129
    %s130 = sphi 0, %s127
    %s131 = sphi 0, %s130
    %s147 = sphi 0, %s131
    %s155 = sphi 0, %s157
    %s158 = sphi 0, %s155
    %s159 = sphi 0, %s158
    %s175 = sphi 0, %s159
  $region4: #{decoder_layer_forward.21} parent=0 // loop_header_branch
    %13 = sbr.rel (%p11) target = $region8
  $region5: #{decoder_layer_forward.21} parent=0 // loop_body
    %s15 = ssub.s32 %s10, 1
    %s16 = ssub.s32 %s10, 2
    %s26 = sadd.s32 1, %s19
    %p27 = scmp.ge.s32.totalorder %s26, 1
    %s28 = scalar_select %p27, 0, %s26
    %s29 = sadd.s32 1, %s18
    %s30 = scalar_select %p27, %s29, %s18
    %p31 = scmp.ge.s32.totalorder %s30, 1
    %s32 = scalar_select %p31, 0, %s30
    %s33 = sadd.s32 1, %s17
    %s34 = scalar_select %p31, %s33, %s17
    %p35 = scmp.ge.s32.totalorder %s34, 2
    %s36 = scalar_select %p35, 0, %s34
    %s37 = ssub.s32 %s17, %s36
    %s38 = ssub.s32 %s18, %s32
    %s39 = sor.u32 %s37, %s38
    %p40 = scmp.eq.s32.totalorder %s39, 0
    %s42 = sadd.s32 %s41, 1
    %s43 = scalar_select %p40, %s41, %s42
    %p46 = pneg %p40
    %p47 = scmp.eq.s32.totalorder %s10, 1
    %p48 = por %p46, %p47
    %p49 = scmp.ne.s32.totalorder %s41, %s44
    %p50 = scmp.eq.s32.totalorder %s10, 0
    %p51 = por %p49, %p50
    %p52 = scmp.ne.s32.totalorder %s41, %s44
    %p53 = scmp.eq.s32.totalorder %s15, 1
    %p54 = por %p52, %p53
    %p55 = scmp.ne.s32.totalorder %s44, %s45
    %p56 = scmp.eq.s32.totalorder %s15, 0
    %p57 = por %p55, %p56
    %p58 = scmp.ne.s32.totalorder %s44, %s45
    %p59 = scmp.eq.s32.totalorder %s16, 1
    %p60 = por %p58, %p59
    %p62 = scmp.ne.s32.totalorder %s45, %s61
    %p63 = scmp.eq.s32.totalorder %s16, 0
    %p64 = por %p62, %p63
    %s65 = ssub.s32 %s17, %s36
    %s66 = ssub.s32 %s19, %s28
    %s67 = sor.u32 %s65, %s66
    %p68 = scmp.eq.s32.totalorder %s67, 0
    %s70 = sadd.s32 %s69, 1
    %s71 = scalar_select %p68, %s69, %s70
    %p74 = pneg %p68
    %p75 = scmp.eq.s32.totalorder %s10, 1
    %p76 = por %p74, %p75
    %p77 = scmp.ne.s32.totalorder %s69, %s72
    %p78 = scmp.eq.s32.totalorder %s10, 0
    %p79 = por %p77, %p78
    %p80 = scmp.ne.s32.totalorder %s69, %s72
    %p81 = scmp.eq.s32.totalorder %s15, 1
    %p82 = por %p80, %p81
    %p83 = scmp.ne.s32.totalorder %s72, %s73
    %p84 = scmp.eq.s32.totalorder %s15, 0
    %p85 = por %p83, %p84
    %p86 = scmp.ne.s32.totalorder %s72, %s73
    %p87 = scmp.eq.s32.totalorder %s16, 1
    %p88 = por %p86, %p87
    %p90 = scmp.ne.s32.totalorder %s73, %s89
    %p91 = scmp.eq.s32.totalorder %s16, 0
    %p92 = por %p90, %p91
    %s93 = ssub.s32 %s17, %s36
    %s94 = ssub.s32 %s19, %s28
    %s95 = sor.u32 %s93, %s94
    %p96 = scmp.eq.s32.totalorder %s95, 0
    %s98 = sadd.s32 %s97, 1
    %s99 = scalar_select %p96, %s97, %s98
    %p102 = pneg %p96
    %p103 = scmp.eq.s32.totalorder %s10, 1
    %p104 = por %p102, %p103
    %p105 = scmp.ne.s32.totalorder %s97, %s100
    %p106 = scmp.eq.s32.totalorder %s10, 0
    %p107 = por %p105, %p106
    %p108 = scmp.ne.s32.totalorder %s97, %s100
    %p109 = scmp.eq.s32.totalorder %s15, 1
    %p110 = por %p108, %p109
    %p111 = scmp.ne.s32.totalorder %s100, %s101
    %p112 = scmp.eq.s32.totalorder %s15, 0
    %p113 = por %p111, %p112
    %p114 = scmp.ne.s32.totalorder %s100, %s101
    %p115 = scmp.eq.s32.totalorder %s16, 1
    %p116 = por %p114, %p115
    %p118 = scmp.ne.s32.totalorder %s101, %s117
    %p119 = scmp.eq.s32.totalorder %s16, 0
    %p120 = por %p118, %p119
    %s121 = ssub.s32 %s17, %s36
    %s122 = ssub.s32 %s18, %s32
    %s123 = sor.u32 %s121, %s122
    %s124 = ssub.s32 %s19, %s28
    %s125 = sor.u32 %s123, %s124
    %p126 = scmp.eq.s32.totalorder %s125, 0
    %s128 = sadd.s32 %s127, 1
    %s129 = scalar_select %p126, %s127, %s128
    %p132 = pneg %p126
    %p133 = scmp.eq.s32.totalorder %s10, 1
    %p134 = por %p132, %p133
    %p135 = scmp.ne.s32.totalorder %s127, %s130
    %p136 = scmp.eq.s32.totalorder %s10, 0
    %p137 = por %p135, %p136
    %p138 = scmp.ne.s32.totalorder %s127, %s130
    %p139 = scmp.eq.s32.totalorder %s15, 1
    %p140 = por %p138, %p139
    %p141 = scmp.ne.s32.totalorder %s130, %s131
    %p142 = scmp.eq.s32.totalorder %s15, 0
    %p143 = por %p141, %p142
    %p144 = scmp.ne.s32.totalorder %s130, %s131
    %p145 = scmp.eq.s32.totalorder %s16, 1
    %p146 = por %p144, %p145
    %p148 = scmp.ne.s32.totalorder %s131, %s147
    %p149 = scmp.eq.s32.totalorder %s16, 0
    %p150 = por %p148, %p149
    %s151 = ssub.s32 %s17, %s36
    %s152 = ssub.s32 %s18, %s32
    %s153 = sor.u32 %s151, %s152
    %p154 = scmp.eq.s32.totalorder %s153, 0
    %s156 = sadd.s32 %s155, 1
    %s157 = scalar_select %p154, %s155, %s156
    %p160 = pneg %p154
    %p161 = scmp.eq.s32.totalorder %s10, 1
    %p162 = por %p160, %p161
    %p163 = scmp.ne.s32.totalorder %s155, %s158
    %p164 = scmp.eq.s32.totalorder %s10, 0
    %p165 = por %p163, %p164
    %p166 = scmp.ne.s32.totalorder %s155, %s158
    %p167 = scmp.eq.s32.totalorder %s15, 1
    %p168 = por %p166, %p167
    %p169 = scmp.ne.s32.totalorder %s158, %s159
    %p170 = scmp.eq.s32.totalorder %s15, 0
    %p171 = por %p169, %p170
    %p172 = scmp.ne.s32.totalorder %s158, %s159
    %p173 = scmp.eq.s32.totalorder %s16, 1
    %p174 = por %p172, %p173
    %p176 = scmp.ne.s32.totalorder %s159, %s175
    %p177 = scmp.eq.s32.totalorder %s16, 0
    %p178 = por %p176, %p177
    %p179 = scmp.le.s32.totalorder 1, %s10
    %p180 = scmp.lt.s32.totalorder %s10, 3
    %p181 = pnand %p179, %p180
    %p182 = pneg %p181
    // Predicated region
    $region9: #{decoder_layer_forward.21} parent=5 // pred_check
      _
    $region10: #{decoder_layer_forward.21} parent=5 // pred_check_branch
      %184 = sbr.rel (%p181) target = $region12
    $region11: #{decoder_layer_forward.21} parent=5 // pred_region
      %s185 = ssub.s32 %s10, 1
    $region12: #{decoder_layer_forward.21} parent=5 // pred_fallthru
      _
    %p186 = scmp.lt.s32.totalorder %s10, 2
    // Predicated region
    $region13: #{decoder_layer_forward.21} parent=5 // pred_check
      %p187 = pneg %p186
    $region14: #{decoder_layer_forward.21} parent=5 // pred_check_branch
      %189 = sbr.rel (%p187) target = $region16
    $region15: #{decoder_layer_forward.21} parent=5 // pred_region
      // Predicated region
      $region17: #{decoder_layer_forward.21} parent=15 // pred_check
        %p190 = pneg %p51
      $region18: #{decoder_layer_forward.21} parent=15 // pred_check_branch
        %192 = sbr.rel (%p190) target = $region20
      $region19: #{decoder_layer_forward.21} parent=15 // pred_region
        %p193 = scmp.lt.s32.totalorder %s17, 1
        %s194 = scalar_select %p193, %s17, 1
        %p195 = scmp.lt.s32.totalorder %s18, 0
        %s196 = scalar_select %p195, %s18, 0
        %s197 = sadd.s32 %s196, %s194
        %s198 = smul.addr %s197, 4
        %s199 = scalar_lea.vmem %s0, %s198
      $region20: #{decoder_layer_forward.21} parent=15 // pred_fallthru
        _
      // Predicated region
      $region21: #{decoder_layer_forward.21} parent=15 // pred_check
        %p200 = pneg %p79
      $region22: #{decoder_layer_forward.21} parent=15 // pred_check_branch
        %202 = sbr.rel (%p200) target = $region24
      $region23: #{decoder_layer_forward.21} parent=15 // pred_region
        %p203 = scmp.lt.s32.totalorder %s17, 1
        %s204 = scalar_select %p203, %s17, 1
        %p205 = scmp.lt.s32.totalorder %s19, 0
        %s206 = scalar_select %p205, %s19, 0
        %s207 = sadd.s32 %s206, %s204
        %s208 = smul.addr %s207, 4
        %s209 = scalar_lea.vmem %s1, %s208
      $region24: #{decoder_layer_forward.21} parent=15 // pred_fallthru
        _
      // Predicated region
      $region25: #{decoder_layer_forward.21} parent=15 // pred_check
        %p210 = pneg %p107
      $region26: #{decoder_layer_forward.21} parent=15 // pred_check_branch
        %212 = sbr.rel (%p210) target = $region28
      $region27: #{decoder_layer_forward.21} parent=15 // pred_region
        %p213 = scmp.lt.s32.totalorder %s17, 1
        %s214 = scalar_select %p213, %s17, 1
        %p215 = scmp.lt.s32.totalorder %s19, 0
        %s216 = scalar_select %p215, %s19, 0
        %s217 = sadd.s32 %s216, %s214
        %s218 = smul.addr %s217, 4
        %s219 = scalar_lea.vmem %s2, %s218
      $region28: #{decoder_layer_forward.21} parent=15 // pred_fallthru
        _
      // Predicated region
      $region29: #{decoder_layer_forward.21} parent=15 // pred_check
        %p220 = pneg %p137
      $region30: #{decoder_layer_forward.21} parent=15 // pred_check_branch
        %222 = sbr.rel (%p220) target = $region32
      $region31: #{decoder_layer_forward.21} parent=15 // pred_region
        %p223 = scmp.lt.s32.totalorder %s17, 1
        %s224 = scalar_select %p223, %s17, 1
        %p225 = scmp.lt.s32.totalorder %s18, 0
        %s226 = scalar_select %p225, %s18, 0
        %p227 = scmp.lt.s32.totalorder %s19, 0
        %s228 = scalar_select %p227, %s19, 0
        %s229 = sadd.s32 %s228, %s226
        %s230 = sadd.s32 %s229, %s224
        %s231 = smul.addr %s230, 8
        %s232 = scalar_lea.vmem %s3, %s231
      $region32: #{decoder_layer_forward.21} parent=15 // pred_fallthru
        _
    $region16: #{decoder_layer_forward.21} parent=5 // pred_fallthru
      _
    %p233 = scmp.le.s32.totalorder 1, %s10
    %p234 = scmp.lt.s32.totalorder %s10, 3
    %p235 = pnand %p233, %p234
    %p236 = pneg %p235
    // Predicated region
    $region33: #{decoder_layer_forward.21} parent=5 // pred_check
      _
    $region34: #{decoder_layer_forward.21} parent=5 // pred_check_branch
      %238 = sbr.rel (%p235) target = $region36
    $region35: #{decoder_layer_forward.21} parent=5 // pred_region
      %s239 = ssub.s32 %s10, 1
      %p240 = scmp.lt.s32.totalorder %s20, 1
      %s241 = scalar_select %p240, %s20, 1
      %p242 = scmp.lt.s32.totalorder %s21, 0
      %s243 = scalar_select %p242, %s21, 0
      %s244 = sadd.s32 %s243, %s241
      %s245 = smul.addr %s244, 4
      %s246 = scalar_lea.vmem %s0, %s245
      %p247 = pneg %p57
      %p248 = pneg %p54
      %p249 = scmp.lt.s32.totalorder %s20, 1
      %s250 = scalar_select %p249, %s20, 1
      %p251 = scmp.lt.s32.totalorder %s22, 0
      %s252 = scalar_select %p251, %s22, 0
      %s253 = sadd.s32 %s252, %s250
      %s254 = smul.addr %s253, 4
      %s255 = scalar_lea.vmem %s1, %s254
      %p256 = pneg %p85
      %p257 = pneg %p82
      %p258 = scmp.lt.s32.totalorder %s20, 1
      %s259 = scalar_select %p258, %s20, 1
      %p260 = scmp.lt.s32.totalorder %s22, 0
      %s261 = scalar_select %p260, %s22, 0
      %s262 = sadd.s32 %s261, %s259
      %s263 = smul.addr %s262, 4
      %s264 = scalar_lea.vmem %s2, %s263
      %p265 = pneg %p113
      %p266 = pneg %p110
      %p267 = scmp.lt.s32.totalorder %s20, 1
      %s268 = scalar_select %p267, %s20, 1
      %p269 = scmp.lt.s32.totalorder %s21, 0
      %s270 = scalar_select %p269, %s21, 0
      %p271 = scmp.lt.s32.totalorder %s22, 0
      %s272 = scalar_select %p271, %s22, 0
      %s273 = sadd.s32 %s272, %s270
      %s274 = sadd.s32 %s273, %s268
      %s275 = smul.addr %s274, 8
      %s276 = scalar_lea.vmem %s3, %s275
      %p277 = pneg %p143
      %p278 = pneg %p140
      %p279 = pneg %p171
      %p280 = pneg %p168
      %p281 = scmp.lt.s32.totalorder %s20, 1
      %s282 = scalar_select %p281, %s20, 1
      %p283 = scmp.lt.s32.totalorder %s21, 0
      %s284 = scalar_select %p283, %s21, 0
      %s285 = sadd.s32 %s284, %s282
      %s286 = smul.addr %s285, 4
      %s287 = scalar_lea.vmem %s4, %s286
      %p288 = scmp.lt.s32.totalorder %s20, 1
      %s289 = scalar_select %p288, %s20, 1
      %p290 = scmp.lt.s32.totalorder %s21, 0
      %s291 = scalar_select %p290, %s21, 0
      %s292 = sadd.s32 %s291, %s289
      %s293 = smul.addr %s292, 4
      %s294 = scalar_lea.vmem %s0, %s293
      %p295 = scmp.lt.s32.totalorder %s20, 1
      %s296 = scalar_select %p295, %s20, 1
      %p297 = scmp.lt.s32.totalorder %s22, 0
      %s298 = scalar_select %p297, %s22, 0
      %s299 = sadd.s32 %s298, %s296
      %s300 = smul.addr %s299, 4
      %s301 = scalar_lea.vmem %s1, %s300
      %p302 = scmp.lt.s32.totalorder %s20, 1
      %s303 = scalar_select %p302, %s20, 1
      %p304 = scmp.lt.s32.totalorder %s22, 0
      %s305 = scalar_select %p304, %s22, 0
      %s306 = sadd.s32 %s305, %s303
      %s307 = smul.addr %s306, 4
      %s308 = scalar_lea.vmem %s2, %s307
      %p309 = scmp.lt.s32.totalorder %s20, 1
      %s310 = scalar_select %p309, %s20, 1
      %p311 = scmp.lt.s32.totalorder %s21, 0
      %s312 = scalar_select %p311, %s21, 0
      %p313 = scmp.lt.s32.totalorder %s22, 0
      %s314 = scalar_select %p313, %s22, 0
      %s315 = sadd.s32 %s314, %s312
      %s316 = sadd.s32 %s315, %s310
      %s317 = smul.addr %s316, 8
      %s318 = scalar_lea.vmem %s3, %s317
      %p319 = scmp.lt.s32.totalorder %s20, 1
      %s320 = scalar_select %p319, %s20, 1
      %p321 = scmp.lt.s32.totalorder %s21, 0
      %s322 = scalar_select %p321, %s21, 0
      %s323 = sadd.s32 %s322, %s320
      %s324 = smul.addr %s323, 4
      %s325 = scalar_lea.vmem %s4, %s324
      %p327 = scmp.eq.s32.totalorder %s22, 0
      // Predicated region
      $region37: #{decoder_layer_forward.21} parent=35 // pred_check
        %p328 = pneg %p327
      $region38: #{decoder_layer_forward.21} parent=35 // pred_check_branch
        %330 = sbr.rel (%p328) target = $region40
      $region39: #{decoder_layer_forward.21} parent=35 // pred_region
        %vm331 = vcmask 7168
        %332 = vst.msk [vmem:[#allocation2] sm:$0xff] %vm331, -inf
        %333 = vst.msk [vmem:[#allocation2 + $0x8] sm:$0xff] %vm331, -inf
        %334 = vst.msk [vmem:[#allocation2 + $0x10] sm:$0xff] %vm331, -inf
        %335 = vst.msk [vmem:[#allocation2 + $0x18] sm:$0xff] %vm331, -inf
        %336 = vst.msk [vmem:[#allocation3] sm:$0xff] %vm331, 0.0
        %337 = vst.msk [vmem:[#allocation3 + $0x8] sm:$0xff] %vm331, 0.0
        %338 = vst.msk [vmem:[#allocation3 + $0x10] sm:$0xff] %vm331, 0.0
        %339 = vst.msk [vmem:[#allocation3 + $0x18] sm:$0xff] %vm331, 0.0
        %vm340 = vcmask 64512
        %341 = vst.msk [vmem:[#allocation4] sm:$0xff] %vm340, 0.0
        %342 = vst.msk [vmem:[#allocation4 + $0x8] sm:$0xff] %vm340, 0.0
        %343 = vst.msk [vmem:[#allocation4 + $0x10] sm:$0xff] %vm340, 0.0
        %344 = vst.msk [vmem:[#allocation4 + $0x18] sm:$0xff] %vm340, 0.0
      $region40: #{decoder_layer_forward.21} parent=35 // pred_fallthru
        _
      %v345 = vld [vmem:[%s318] sm:$0xff]
      %v346 = vld [vmem:[%s294] sm:$0xf]
      %v347 = vld [vmem:[%s301] sm:$0xf]
      %v348 = vld [vmem:[%s308] sm:$0xf]
      %vm349 = vcmask 64512
      %v351 = vsel %vm349, %v346, 0
      %v354 = vsel %vm349, %v347, 0
      %356 = vmatprep.subr.bf16.mxu0 0
      %357 = vmatpush1.bf16.xpose.msra.mxu0 %v354
      %358 = vmatprep.subr.bf16.mxu0 0
      %359 = vmatpush1.bf16.xpose.msra.mxu0 0
      %360 = vmatprep.subr.bf16.mxu0 0
      %361 = vmatpush1.bf16.xpose.msra.mxu0 0
      %362 = vmatprep.subr.bf16.mxu0 0
      %363 = vmatpush1.bf16.xpose.msra.mxu0 0
      %364 = vmatprep.subr.bf16.mxu0 0
      %365 = vmatpush1.bf16.xpose.msra.mxu0 0
      %366 = vmatprep.subr.bf16.mxu0 0
      %367 = vmatpush1.bf16.xpose.msra.mxu0 0
      %368 = vmatprep.subr.bf16.mxu0 0
      %369 = vmatpush1.bf16.xpose.msra.mxu0 0
      %370 = vmatprep.subr.bf16.mxu0 0
      %371 = vmatpush1.bf16.xpose.msra.mxu0 0
      %372 = vmatprep.subr.bf16.mxu0 0
      %373 = vmatpush1.bf16.xpose.msra.mxu0 0
      %374 = vmatprep.subr.bf16.mxu0 0
      %375 = vmatpush1.bf16.xpose.msra.mxu0 0
      %376 = vmatprep.subr.bf16.mxu0 0
      %377 = vmatpush1.bf16.xpose.msra.mxu0 0
      %378 = vmatprep.subr.bf16.mxu0 0
      %379 = vmatpush1.bf16.xpose.msra.mxu0 0
      %380 = vmatprep.subr.bf16.mxu0 0
      %381 = vmatpush1.bf16.xpose.msra.mxu0 0
      %382 = vmatprep.subr.bf16.mxu0 0
      %383 = vmatpush1.bf16.xpose.msra.mxu0 0
      %384 = vmatprep.subr.bf16.mxu0 0
      %385 = vmatpush1.bf16.xpose.msra.mxu0 0
      %386 = vmatprep.subr.bf16.mxu0 0
      %387 = vmatpush1.bf16.xpose.msra.mxu0 0
      %388 = vmatprep.mubr.bf16.mxu0 0
      %389 = vmatmul.mubr.bf16.gmra.mrb[0].mxu0 %v351
      %v390 = vpop.f32.mrb[0].mxu0
      %v391 = vadd.f32 0.0, %v390
      %v392 = vpop.f32.mrb[0].mxu0
      %v393 = vpop.f32.mrb[0].mxu0
      %v394 = vpop.f32.mrb[0].mxu0
      %395 = vdwg.mxu0
      %v396 = vmul.f32 %v391, 0.35355338
      %vm397 = vcmp.eq.f32.partialorder %v345, 0.0
      %v398 = vsel %vm397, -1e+09, %v396
      %v399 = vld [vmem:[#allocation2] sm:$0xff]
      %v400 = vsel %vm349, %v398, -inf
      %401 = vmax.xlane.f32.xlu0 %v400
      %v402 = vpop.xlane.xlu0 %401
      %v403 = vmax.f32 %v399, %v402
      %v404 = vsub.f32 %v399, %v403
      %v405 = vmul.f32 %v404, 1.442695
      %v406 = vpow.pop %v405
      %408 = vset.pattern.permute.xlu0 0
      %409 = vperm.xlu0 %408, %v403
      %v410 = vpop.permute.xlu0 %409
      %v412 = vsub.f32 %v398, %v410
      %v413 = vmul.f32 %v412, 1.442695
      %v414 = vpow.pop %v413
      %v415 = vld [vmem:[#allocation3] sm:$0xff]
      %v416 = vmul.f32 %v406, %v415
      %v417 = vsel %vm349, %v414, 0.0
      %418 = vadd.xlane.f32.xlu0 %v417
      %v419 = vpop.xlane.xlu0 %418
      %v420 = vadd.f32 %v416, %v419
      %vm421 = vcmask 7168
      %422 = vst.msk [vmem:[#allocation3] sm:$0xff] %vm421, %v420
      %v423 = vld [vmem:[#allocation4] sm:$0xff]
      %425 = vset.pattern.permute.xlu0 0
      %426 = vperm.xlu0 %425, %v406
      %v427 = vpop.permute.xlu0 %426
      %v429 = vmul.f32 %v427, %v423
      %v430 = vpack.c.bf16 %v414, %v414
      %v432 = vsel %vm349, %v430, 0
      %vm434 = vcmask 1043456
      %v436 = vsel %vm434, %v348, 0
      %438 = vmatprep.subr.bf16.mxu0 0
      %439 = vmatpush1.bf16.msra.mxu0 %v436
      %440 = vmatprep.subr.bf16.mxu0 0
      %441 = vmatpush1.bf16.msra.mxu0 0
      %442 = vmatprep.subr.bf16.mxu0 0
      %443 = vmatpush1.bf16.msra.mxu0 0
      %444 = vmatprep.subr.bf16.mxu0 0
      %445 = vmatpush1.bf16.msra.mxu0 0
      %446 = vmatprep.subr.bf16.mxu0 0
      %447 = vmatpush1.bf16.msra.mxu0 0
      %448 = vmatprep.subr.bf16.mxu0 0
      %449 = vmatpush1.bf16.msra.mxu0 0
      %450 = vmatprep.subr.bf16.mxu0 0
      %451 = vmatpush1.bf16.msra.mxu0 0
      %452 = vmatprep.subr.bf16.mxu0 0
      %453 = vmatpush1.bf16.msra.mxu0 0
      %454 = vmatprep.subr.bf16.mxu0 0
      %455 = vmatpush1.bf16.msra.mxu0 0
      %456 = vmatprep.subr.bf16.mxu0 0
      %457 = vmatpush1.bf16.msra.mxu0 0
      %458 = vmatprep.subr.bf16.mxu0 0
      %459 = vmatpush1.bf16.msra.mxu0 0
      %460 = vmatprep.subr.bf16.mxu0 0
      %461 = vmatpush1.bf16.msra.mxu0 0
      %462 = vmatprep.subr.bf16.mxu0 0
      %463 = vmatpush1.bf16.msra.mxu0 0
      %464 = vmatprep.subr.bf16.mxu0 0
      %465 = vmatpush1.bf16.msra.mxu0 0
      %466 = vmatprep.subr.bf16.mxu0 0
      %467 = vmatpush1.bf16.msra.mxu0 0
      %468 = vmatprep.subr.bf16.mxu0 0
      %469 = vmatpush1.bf16.msra.mxu0 0
      %470 = vmatprep.mubr.bf16.mxu0 0
      %471 = vmatmul.mubr.bf16.gmra.mrb[0].mxu0 %v432
      %v472 = vpop.f32.mrb[0].mxu0
      %v473 = vadd.f32 0.0, %v472
      %v474 = vpop.f32.mrb[0].mxu0
      %v475 = vpop.f32.mrb[0].mxu0
      %v476 = vpop.f32.mrb[0].mxu0
      %477 = vdwg.mxu0
      %v478 = vadd.f32 %v429, %v473
      %479 = vst.msk [vmem:[#allocation4] sm:$0xff] %vm349, %v478
      %480 = vst.msk [vmem:[#allocation2] sm:$0xff] %vm421, %v403
      %v481 = vld [vmem:[%s294] sm:$0xf]
      %v482 = vld [vmem:[%s301] sm:$0xf]
      %v483 = vld [vmem:[%s308] sm:$0xf]
      %v485 = vunpack.c.l.b16 %v481
      %v486 = vpack.c.b16 %v485, %v485
      %487 = vrot.lane.b32.xlu0 %v486, 120
      %v488 = vpop.permute.xlu0 %487
      %v490 = vunpack.c.l.b16 %v482
      %v491 = vpack.c.b16 %v490, %v490
      %492 = vrot.lane.b32.xlu0 %v491, 120
      %v493 = vpop.permute.xlu0 %492
      %v495 = vsel %vm349, %v488, 0
      %v498 = vsel %vm349, %v493, 0
      %500 = vmatprep.subr.bf16.mxu0 0
      %501 = vmatpush1.bf16.xpose.msra.mxu0 %v498
      %502 = vmatprep.subr.bf16.mxu0 0
      %503 = vmatpush1.bf16.xpose.msra.mxu0 0
      %504 = vmatprep.subr.bf16.mxu0 0
      %505 = vmatpush1.bf16.xpose.msra.mxu0 0
      %506 = vmatprep.subr.bf16.mxu0 0
      %507 = vmatpush1.bf16.xpose.msra.mxu0 0
      %508 = vmatprep.subr.bf16.mxu0 0
      %509 = vmatpush1.bf16.xpose.msra.mxu0 0
      %510 = vmatprep.subr.bf16.mxu0 0
      %511 = vmatpush1.bf16.xpose.msra.mxu0 0
      %512 = vmatprep.subr.bf16.mxu0 0
      %513 = vmatpush1.bf16.xpose.msra.mxu0 0
      %514 = vmatprep.subr.bf16.mxu0 0
      %515 = vmatpush1.bf16.xpose.msra.mxu0 0
      %516 = vmatprep.subr.bf16.mxu0 0
      %517 = vmatpush1.bf16.xpose.msra.mxu0 0
      %518 = vmatprep.subr.bf16.mxu0 0
      %519 = vmatpush1.bf16.xpose.msra.mxu0 0
      %520 = vmatprep.subr.bf16.mxu0 0
      %521 = vmatpush1.bf16.xpose.msra.mxu0 0
      %522 = vmatprep.subr.bf16.mxu0 0
      %523 = vmatpush1.bf16.xpose.msra.mxu0 0
      %524 = vmatprep.subr.bf16.mxu0 0
      %525 = vmatpush1.bf16.xpose.msra.mxu0 0
      %526 = vmatprep.subr.bf16.mxu0 0
      %527 = vmatpush1.bf16.xpose.msra.mxu0 0
      %528 = vmatprep.subr.bf16.mxu0 0
      %529 = vmatpush1.bf16.xpose.msra.mxu0 0
      %530 = vmatprep.subr.bf16.mxu0 0
      %531 = vmatpush1.bf16.xpose.msra.mxu0 0
      %532 = vmatprep.mubr.bf16.mxu0 0
      %533 = vmatmul.mubr.bf16.gmra.mrb[0].mxu0 %v495
      %v534 = vpop.f32.mrb[0].mxu0
      %v535 = vadd.f32 0.0, %v534
      %v536 = vpop.f32.mrb[0].mxu0
      %v537 = vpop.f32.mrb[0].mxu0
      %v538 = vpop.f32.mrb[0].mxu0
      %539 = vdwg.mxu0
      %v540 = vmul.f32 %v535, 0.35355338
      %v541 = vsel %vm397, -1e+09, %v540
      %s542 = scalar_lea.vmem [#allocation2], 8
      %v543 = vld [vmem:[%s542] sm:$0xff]
      %v544 = vsel %vm349, %v541, -inf
      %545 = vmax.xlane.f32.xlu0 %v544
      %v546 = vpop.xlane.xlu0 %545
      %v547 = vmax.f32 %v543, %v546
      %v548 = vsub.f32 %v543, %v547
      %v549 = vmul.f32 %v548, 1.442695
      %v550 = vpow.pop %v549
      %552 = vset.pattern.permute.xlu0 0
      %553 = vperm.xlu0 %552, %v547
      %v554 = vpop.permute.xlu0 %553
      %v556 = vsub.f32 %v541, %v554
      %v557 = vmul.f32 %v556, 1.442695
      %v558 = vpow.pop %v557
      %s559 = scalar_lea.vmem [#allocation3], 8
      %v560 = vld [vmem:[%s559] sm:$0xff]
      %v561 = vmul.f32 %v550, %v560
      %v562 = vsel %vm349, %v558, 0.0
      %563 = vadd.xlane.f32.xlu0 %v562
      %v564 = vpop.xlane.xlu0 %563
      %v565 = vadd.f32 %v561, %v564
      %566 = vst.msk [vmem:[%s559] sm:$0xff] %vm421, %v565
      %s567 = scalar_lea.vmem [#allocation4], 8
      %v568 = vld [vmem:[%s567] sm:$0xff]
      %570 = vset.pattern.permute.xlu0 0
      %571 = vperm.xlu0 %570, %v550
      %v572 = vpop.permute.xlu0 %571
      %v574 = vmul.f32 %v572, %v568
      %v575 = vpack.c.bf16 %v558, %v558
      %v577 = vunpack.c.l.b16 %v483
      %v578 = vpack.c.b16 %v577, %v577
      %579 = vrot.lane.b32.xlu0 %v578, 120
      %v580 = vpop.permute.xlu0 %579
      %v582 = vsel %vm349, %v575, 0
      %v585 = vsel %vm434, %v580, 0
      %587 = vmatprep.subr.bf16.mxu0 0
      %588 = vmatpush1.bf16.msra.mxu0 %v585
      %589 = vmatprep.subr.bf16.mxu0 0
      %590 = vmatpush1.bf16.msra.mxu0 0
      %591 = vmatprep.subr.bf16.mxu0 0
      %592 = vmatpush1.bf16.msra.mxu0 0
      %593 = vmatprep.subr.bf16.mxu0 0
      %594 = vmatpush1.bf16.msra.mxu0 0
      %595 = vmatprep.subr.bf16.mxu0 0
      %596 = vmatpush1.bf16.msra.mxu0 0
      %597 = vmatprep.subr.bf16.mxu0 0
      %598 = vmatpush1.bf16.msra.mxu0 0
      %599 = vmatprep.subr.bf16.mxu0 0
      %600 = vmatpush1.bf16.msra.mxu0 0
      %601 = vmatprep.subr.bf16.mxu0 0
      %602 = vmatpush1.bf16.msra.mxu0 0
      %603 = vmatprep.subr.bf16.mxu0 0
      %604 = vmatpush1.bf16.msra.mxu0 0
      %605 = vmatprep.subr.bf16.mxu0 0
      %606 = vmatpush1.bf16.msra.mxu0 0
      %607 = vmatprep.subr.bf16.mxu0 0
      %608 = vmatpush1.bf16.msra.mxu0 0
      %609 = vmatprep.subr.bf16.mxu0 0
      %610 = vmatpush1.bf16.msra.mxu0 0
      %611 = vmatprep.subr.bf16.mxu0 0
      %612 = vmatpush1.bf16.msra.mxu0 0
      %613 = vmatprep.subr.bf16.mxu0 0
      %614 = vmatpush1.bf16.msra.mxu0 0
      %615 = vmatprep.subr.bf16.mxu0 0
      %616 = vmatpush1.bf16.msra.mxu0 0
      %617 = vmatprep.subr.bf16.mxu0 0
      %618 = vmatpush1.bf16.msra.mxu0 0
      %619 = vmatprep.mubr.bf16.mxu0 0
      %620 = vmatmul.mubr.bf16.gmra.mrb[0].mxu0 %v582
      %v621 = vpop.f32.mrb[0].mxu0
      %v622 = vadd.f32 0.0, %v621
      %v623 = vpop.f32.mrb[0].mxu0
      %v624 = vpop.f32.mrb[0].mxu0
      %v625 = vpop.f32.mrb[0].mxu0
      %626 = vdwg.mxu0
      %v627 = vadd.f32 %v574, %v622
      %628 = vst.msk [vmem:[%s567] sm:$0xff] %vm349, %v627
      %629 = vst.msk [vmem:[%s542] sm:$0xff] %vm421, %v547
      %v630 = vld [vmem:[%s294] sm:$0xf]
      %v631 = vld [vmem:[%s301] sm:$0xf]
      %v632 = vld [vmem:[%s308] sm:$0xf]
      %v634 = vunpack.c.l.b16 %v630
      %v635 = vpack.c.b16 %v634, %v634
      %636 = vrot.lane.b32.xlu0 %v635, 112
      %v637 = vpop.permute.xlu0 %636
      %v639 = vunpack.c.l.b16 %v631
      %v640 = vpack.c.b16 %v639, %v639
      %641 = vrot.lane.b32.xlu0 %v640, 112
      %v642 = vpop.permute.xlu0 %641
      %v644 = vsel %vm349, %v637, 0
      %v647 = vsel %vm349, %v642, 0
      %649 = vmatprep.subr.bf16.mxu0 0
      %650 = vmatpush1.bf16.xpose.msra.mxu0 %v647
      %651 = vmatprep.subr.bf16.mxu0 0
      %652 = vmatpush1.bf16.xpose.msra.mxu0 0
      %653 = vmatprep.subr.bf16.mxu0 0
      %654 = vmatpush1.bf16.xpose.msra.mxu0 0
      %655 = vmatprep.subr.bf16.mxu0 0
      %656 = vmatpush1.bf16.xpose.msra.mxu0 0
      %657 = vmatprep.subr.bf16.mxu0 0
      %658 = vmatpush1.bf16.xpose.msra.mxu0 0
      %659 = vmatprep.subr.bf16.mxu0 0
      %660 = vmatpush1.bf16.xpose.msra.mxu0 0
      %661 = vmatprep.subr.bf16.mxu0 0
      %662 = vmatpush1.bf16.xpose.msra.mxu0 0
      %663 = vmatprep.subr.bf16.mxu0 0
      %664 = vmatpush1.bf16.xpose.msra.mxu0 0
      %665 = vmatprep.subr.bf16.mxu0 0
      %666 = vmatpush1.bf16.xpose.msra.mxu0 0
      %667 = vmatprep.subr.bf16.mxu0 0
      %668 = vmatpush1.bf16.xpose.msra.mxu0 0
      %669 = vmatprep.subr.bf16.mxu0 0
      %670 = vmatpush1.bf16.xpose.msra.mxu0 0
      %671 = vmatprep.subr.bf16.mxu0 0
      %672 = vmatpush1.bf16.xpose.msra.mxu0 0
      %673 = vmatprep.subr.bf16.mxu0 0
      %674 = vmatpush1.bf16.xpose.msra.mxu0 0
      %675 = vmatprep.subr.bf16.mxu0 0
      %676 = vmatpush1.bf16.xpose.msra.mxu0 0
      %677 = vmatprep.subr.bf16.mxu0 0
      %678 = vmatpush1.bf16.xpose.msra.mxu0 0
      %679 = vmatprep.subr.bf16.mxu0 0
      %680 = vmatpush1.bf16.xpose.msra.mxu0 0
      %681 = vmatprep.mubr.bf16.mxu0 0
      %682 = vmatmul.mubr.bf16.gmra.mrb[0].mxu0 %v644
      %v683 = vpop.f32.mrb[0].mxu0
      %v684 = vadd.f32 0.0, %v683
      %v685 = vpop.f32.mrb[0].mxu0
      %v686 = vpop.f32.mrb[0].mxu0
      %v687 = vpop.f32.mrb[0].mxu0
      %688 = vdwg.mxu0
      %v689 = vmul.f32 %v684, 0.35355338
      %v690 = vsel %vm397, -1e+09, %v689
      %s691 = scalar_lea.vmem [#allocation2], 16
      %v692 = vld [vmem:[%s691] sm:$0xff]
      %v693 = vsel %vm349, %v690, -inf
      %694 = vmax.xlane.f32.xlu0 %v693
      %v695 = vpop.xlane.xlu0 %694
      %v696 = vmax.f32 %v692, %v695
      %v697 = vsub.f32 %v692, %v696
      %v698 = vmul.f32 %v697, 1.442695
      %v699 = vpow.pop %v698
      %701 = vset.pattern.permute.xlu0 0
      %702 = vperm.xlu0 %701, %v696
      %v703 = vpop.permute.xlu0 %702
      %v705 = vsub.f32 %v690, %v703
      %v706 = vmul.f32 %v705, 1.442695
      %v707 = vpow.pop %v706
      %s708 = scalar_lea.vmem [#allocation3], 16
      %v709 = vld [vmem:[%s708] sm:$0xff]
      %v710 = vmul.f32 %v699, %v709
      %v711 = vsel %vm349, %v707, 0.0
      %712 = vadd.xlane.f32.xlu0 %v711
      %v713 = vpop.xlane.xlu0 %712
      %v714 = vadd.f32 %v710, %v713
      %715 = vst.msk [vmem:[%s708] sm:$0xff] %vm421, %v714
      %s716 = scalar_lea.vmem [#allocation4], 16
      %v717 = vld [vmem:[%s716] sm:$0xff]
      %719 = vset.pattern.permute.xlu0 0
      %720 = vperm.xlu0 %719, %v699
      %v721 = vpop.permute.xlu0 %720
      %v723 = vmul.f32 %v721, %v717
      %v724 = vpack.c.bf16 %v707, %v707
      %v726 = vunpack.c.l.b16 %v632
      %v727 = vpack.c.b16 %v726, %v726
      %728 = vrot.lane.b32.xlu0 %v727, 112
      %v729 = vpop.permute.xlu0 %728
      %v731 = vsel %vm349, %v724, 0
      %v734 = vsel %vm434, %v729, 0
      %736 = vmatprep.subr.bf16.mxu0 0
      %737 = vmatpush1.bf16.msra.mxu0 %v734
      %738 = vmatprep.subr.bf16.mxu0 0
      %739 = vmatpush1.bf16.msra.mxu0 0
      %740 = vmatprep.subr.bf16.mxu0 0
      %741 = vmatpush1.bf16.msra.mxu0 0
      %742 = vmatprep.subr.bf16.mxu0 0
      %743 = vmatpush1.bf16.msra.mxu0 0
      %744 = vmatprep.subr.bf16.mxu0 0
      %745 = vmatpush1.bf16.msra.mxu0 0
      %746 = vmatprep.subr.bf16.mxu0 0
      %747 = vmatpush1.bf16.msra.mxu0 0
      %748 = vmatprep.subr.bf16.mxu0 0
      %749 = vmatpush1.bf16.msra.mxu0 0
      %750 = vmatprep.subr.bf16.mxu0 0
      %751 = vmatpush1.bf16.msra.mxu0 0
      %752 = vmatprep.subr.bf16.mxu0 0
      %753 = vmatpush1.bf16.msra.mxu0 0
      %754 = vmatprep.subr.bf16.mxu0 0
      %755 = vmatpush1.bf16.msra.mxu0 0
      %756 = vmatprep.subr.bf16.mxu0 0
      %757 = vmatpush1.bf16.msra.mxu0 0
      %758 = vmatprep.subr.bf16.mxu0 0
      %759 = vmatpush1.bf16.msra.mxu0 0
      %760 = vmatprep.subr.bf16.mxu0 0
      %761 = vmatpush1.bf16.msra.mxu0 0
      %762 = vmatprep.subr.bf16.mxu0 0
      %763 = vmatpush1.bf16.msra.mxu0 0
      %764 = vmatprep.subr.bf16.mxu0 0
      %765 = vmatpush1.bf16.msra.mxu0 0
      %766 = vmatprep.subr.bf16.mxu0 0
      %767 = vmatpush1.bf16.msra.mxu0 0
      %768 = vmatprep.mubr.bf16.mxu0 0
      %769 = vmatmul.mubr.bf16.gmra.mrb[0].mxu0 %v731
      %v770 = vpop.f32.mrb[0].mxu0
      %v771 = vadd.f32 0.0, %v770
      %v772 = vpop.f32.mrb[0].mxu0
      %v773 = vpop.f32.mrb[0].mxu0
      %v774 = vpop.f32.mrb[0].mxu0
      %775 = vdwg.mxu0
      %v776 = vadd.f32 %v723, %v771
      %777 = vst.msk [vmem:[%s716] sm:$0xff] %vm349, %v776
      %778 = vst.msk [vmem:[%s691] sm:$0xff] %vm421, %v696
      %v779 = vld [vmem:[%s294] sm:$0xf]
      %v780 = vld [vmem:[%s301] sm:$0xf]
      %v781 = vld [vmem:[%s308] sm:$0xf]
      %v783 = vunpack.c.l.b16 %v779
      %v784 = vpack.c.b16 %v783, %v783
      %785 = vrot.lane.b32.xlu0 %v784, 104
      %v786 = vpop.permute.xlu0 %785
      %v788 = vunpack.c.l.b16 %v780
      %v789 = vpack.c.b16 %v788, %v788
      %790 = vrot.lane.b32.xlu0 %v789, 104
      %v791 = vpop.permute.xlu0 %790
      %v793 = vsel %vm349, %v786, 0
      %v796 = vsel %vm349, %v791, 0
      %798 = vmatprep.subr.bf16.mxu0 0
      %799 = vmatpush1.bf16.xpose.msra.mxu0 %v796
      %800 = vmatprep.subr.bf16.mxu0 0
      %801 = vmatpush1.bf16.xpose.msra.mxu0 0
      %802 = vmatprep.subr.bf16.mxu0 0
      %803 = vmatpush1.bf16.xpose.msra.mxu0 0
      %804 = vmatprep.subr.bf16.mxu0 0
      %805 = vmatpush1.bf16.xpose.msra.mxu0 0
      %806 = vmatprep.subr.bf16.mxu0 0
      %807 = vmatpush1.bf16.xpose.msra.mxu0 0
      %808 = vmatprep.subr.bf16.mxu0 0
      %809 = vmatpush1.bf16.xpose.msra.mxu0 0
      %810 = vmatprep.subr.bf16.mxu0 0
      %811 = vmatpush1.bf16.xpose.msra.mxu0 0
      %812 = vmatprep.subr.bf16.mxu0 0
      %813 = vmatpush1.bf16.xpose.msra.mxu0 0
      %814 = vmatprep.subr.bf16.mxu0 0
      %815 = vmatpush1.bf16.xpose.msra.mxu0 0
      %816 = vmatprep.subr.bf16.mxu0 0
      %817 = vmatpush1.bf16.xpose.msra.mxu0 0
      %818 = vmatprep.subr.bf16.mxu0 0
      %819 = vmatpush1.bf16.xpose.msra.mxu0 0
      %820 = vmatprep.subr.bf16.mxu0 0
      %821 = vmatpush1.bf16.xpose.msra.mxu0 0
      %822 = vmatprep.subr.bf16.mxu0 0
      %823 = vmatpush1.bf16.xpose.msra.mxu0 0
      %824 = vmatprep.subr.bf16.mxu0 0
      %825 = vmatpush1.bf16.xpose.msra.mxu0 0
      %826 = vmatprep.subr.bf16.mxu0 0
      %827 = vmatpush1.bf16.xpose.msra.mxu0 0
      %828 = vmatprep.subr.bf16.mxu0 0
      %829 = vmatpush1.bf16.xpose.msra.mxu0 0
      %830 = vmatprep.mubr.bf16.mxu0 0
      %831 = vmatmul.mubr.bf16.gmra.mrb[0].mxu0 %v793
      %v832 = vpop.f32.mrb[0].mxu0
      %v833 = vadd.f32 0.0, %v832
      %v834 = vpop.f32.mrb[0].mxu0
      %v835 = vpop.f32.mrb[0].mxu0
      %v836 = vpop.f32.mrb[0].mxu0
      %837 = vdwg.mxu0
      %v838 = vmul.f32 %v833, 0.35355338
      %v839 = vsel %vm397, -1e+09, %v838
      %s840 = scalar_lea.vmem [#allocation2], 24
      %v841 = vld [vmem:[%s840] sm:$0xff]
      %v842 = vsel %vm349, %v839, -inf
      %843 = vmax.xlane.f32.xlu0 %v842
      %v844 = vpop.xlane.xlu0 %843
      %v845 = vmax.f32 %v841, %v844
      %v846 = vsub.f32 %v841, %v845
      %v847 = vmul.f32 %v846, 1.442695
      %v848 = vpow.pop %v847
      %850 = vset.pattern.permute.xlu0 0
      %851 = vperm.xlu0 %850, %v845
      %v852 = vpop.permute.xlu0 %851
      %v854 = vsub.f32 %v839, %v852
      %v855 = vmul.f32 %v854, 1.442695
      %v856 = vpow.pop %v855
      %s857 = scalar_lea.vmem [#allocation3], 24
      %v858 = vld [vmem:[%s857] sm:$0xff]
      %v859 = vmul.f32 %v848, %v858
      %v860 = vsel %vm349, %v856, 0.0
      %861 = vadd.xlane.f32.xlu0 %v860
      %v862 = vpop.xlane.xlu0 %861
      %v863 = vadd.f32 %v859, %v862
      %864 = vst.msk [vmem:[%s857] sm:$0xff] %vm421, %v863
      %s865 = scalar_lea.vmem [#allocation4], 24
      %v866 = vld [vmem:[%s865] sm:$0xff]
      %868 = vset.pattern.permute.xlu0 0
      %869 = vperm.xlu0 %868, %v848
      %v870 = vpop.permute.xlu0 %869
      %v872 = vmul.f32 %v870, %v866
      %v873 = vpack.c.bf16 %v856, %v856
      %v875 = vunpack.c.l.b16 %v781
      %v876 = vpack.c.b16 %v875, %v875
      %877 = vrot.lane.b32.xlu0 %v876, 104
      %v878 = vpop.permute.xlu0 %877
      %v880 = vsel %vm349, %v873, 0
      %v883 = vsel %vm434, %v878, 0
      %885 = vmatprep.subr.bf16.mxu0 0
      %886 = vmatpush1.bf16.msra.mxu0 %v883
      %887 = vmatprep.subr.bf16.mxu0 0
      %888 = vmatpush1.bf16.msra.mxu0 0
      %889 = vmatprep.subr.bf16.mxu0 0
      %890 = vmatpush1.bf16.msra.mxu0 0
      %891 = vmatprep.subr.bf16.mxu0 0
      %892 = vmatpush1.bf16.msra.mxu0 0
      %893 = vmatprep.subr.bf16.mxu0 0
      %894 = vmatpush1.bf16.msra.mxu0 0
      %895 = vmatprep.subr.bf16.mxu0 0
      %896 = vmatpush1.bf16.msra.mxu0 0
      %897 = vmatprep.subr.bf16.mxu0 0
      %898 = vmatpush1.bf16.msra.mxu0 0
      %899 = vmatprep.subr.bf16.mxu0 0
      %900 = vmatpush1.bf16.msra.mxu0 0
      %901 = vmatprep.subr.bf16.mxu0 0
      %902 = vmatpush1.bf16.msra.mxu0 0
      %903 = vmatprep.subr.bf16.mxu0 0
      %904 = vmatpush1.bf16.msra.mxu0 0
      %905 = vmatprep.subr.bf16.mxu0 0
      %906 = vmatpush1.bf16.msra.mxu0 0
      %907 = vmatprep.subr.bf16.mxu0 0
      %908 = vmatpush1.bf16.msra.mxu0 0
      %909 = vmatprep.subr.bf16.mxu0 0
      %910 = vmatpush1.bf16.msra.mxu0 0
      %911 = vmatprep.subr.bf16.mxu0 0
      %912 = vmatpush1.bf16.msra.mxu0 0
      %913 = vmatprep.subr.bf16.mxu0 0
      %914 = vmatpush1.bf16.msra.mxu0 0
      %915 = vmatprep.subr.bf16.mxu0 0
      %916 = vmatpush1.bf16.msra.mxu0 0
      %917 = vmatprep.mubr.bf16.mxu0 0
      %918 = vmatmul.mubr.bf16.gmra.mrb[0].mxu0 %v880
      %v919 = vpop.f32.mrb[0].mxu0
      %v920 = vadd.f32 0.0, %v919
      %v921 = vpop.f32.mrb[0].mxu0
      %v922 = vpop.f32.mrb[0].mxu0
      %v923 = vpop.f32.mrb[0].mxu0
      %924 = vdwg.mxu0
      %v925 = vadd.f32 %v872, %v920
      %926 = vst.msk [vmem:[%s865] sm:$0xff] %vm349, %v925
      %927 = vst.msk [vmem:[%s840] sm:$0xff] %vm421, %v845
      // Predicated region
      $region41: #{decoder_layer_forward.21} parent=35 // pred_check
        %p928 = pneg %p327
      $region42: #{decoder_layer_forward.21} parent=35 // pred_check_branch
        %930 = sbr.rel (%p928) target = $region44
      $region43: #{decoder_layer_forward.21} parent=35 // pred_region
        %v931 = vld [vmem:[#allocation3] sm:$0xff]
        %v932 = vrcp.pop %v931
        %v933 = vld [vmem:[#allocation4] sm:$0xff]
        %935 = vset.pattern.permute.xlu0 0
        %936 = vperm.xlu0 %935, %v932
        %v937 = vpop.permute.xlu0 %936
        %v939 = vmul.f32 %v933, %v937
        %v940 = vpack.c.bf16 %v939, %v939
        %vm941 = vcmask 60416
        %942 = vst.msk [vmem:[%s325] sm:$0xf] %vm941, %v940
        %v943 = vld [vmem:[%s559] sm:$0xff]
        %v944 = vrcp.pop %v943
        %v945 = vld [vmem:[%s567] sm:$0xff]
        %947 = vset.pattern.permute.xlu0 0
        %948 = vperm.xlu0 %947, %v944
        %v949 = vpop.permute.xlu0 %948
        %v951 = vmul.f32 %v945, %v949
        %v952 = vpack.c.bf16 %v951, %v951
        %v954 = vunpack.c.l.b16 %v952
        %v955 = vpack.c.b16 %v954, %v954
        %956 = vrot.lane.b32.xlu0 %v955, 8
        %v957 = vpop.permute.xlu0 %956
        %vm959 = vcmask 126016
        %960 = vst.msk [vmem:[%s325] sm:$0xf] %vm959, %v957
        %v961 = vld [vmem:[%s708] sm:$0xff]
        %v962 = vrcp.pop %v961
        %v963 = vld [vmem:[%s716] sm:$0xff]
        %965 = vset.pattern.permute.xlu0 0
        %966 = vperm.xlu0 %965, %v962
        %v967 = vpop.permute.xlu0 %966
        %v969 = vmul.f32 %v963, %v967
        %v970 = vpack.c.bf16 %v969, %v969
        %v972 = vunpack.c.l.b16 %v970
        %v973 = vpack.c.b16 %v972, %v972
        %974 = vrot.lane.b32.xlu0 %v973, 16
        %v975 = vpop.permute.xlu0 %974
        %vm977 = vcmask 191616
        %978 = vst.msk [vmem:[%s325] sm:$0xf] %vm977, %v975
        %v979 = vld [vmem:[%s857] sm:$0xff]
        %v980 = vrcp.pop %v979
        %v981 = vld [vmem:[%s865] sm:$0xff]
        %983 = vset.pattern.permute.xlu0 0
        %984 = vperm.xlu0 %983, %v980
        %v985 = vpop.permute.xlu0 %984
        %v987 = vmul.f32 %v981, %v985
        %v988 = vpack.c.bf16 %v987, %v987
        %v990 = vunpack.c.l.b16 %v988
        %v991 = vpack.c.b16 %v990, %v990
        %992 = vrot.lane.b32.xlu0 %v991, 24
        %v993 = vpop.permute.xlu0 %992
        %vm995 = vcmask 257216
        %996 = vst.msk [vmem:[%s325] sm:$0xf] %vm995, %v993
      $region44: #{decoder_layer_forward.21} parent=35 // pred_fallthru
        _
      %p997 = scmp.lt.s32.totalorder %s20, 1
      %s998 = scalar_select %p997, %s20, 1
      %p999 = scmp.lt.s32.totalorder %s21, 0
      %s1000 = scalar_select %p999, %s21, 0
      %s1001 = sadd.s32 %s1000, %s998
      %s1002 = smul.addr %s1001, 4
      %s1003 = scalar_lea.vmem %s4, %s1002
      // Predicated region
      $region45: #{decoder_layer_forward.21} parent=35 // pred_check
        %p1004 = pneg %p168
      $region46: #{decoder_layer_forward.21} parent=35 // pred_check_branch
        %1006 = sbr.rel (%p1004) target = $region48
      $region47: #{decoder_layer_forward.21} parent=35 // pred_region
        _
      $region48: #{decoder_layer_forward.21} parent=35 // pred_fallthru
        _
    $region36: #{decoder_layer_forward.21} parent=5 // pred_fallthru
      _
    %p1007 = scmp.le.s32.totalorder 2, %s10
    // Predicated region
    $region49: #{decoder_layer_forward.21} parent=5 // pred_check
      %p1008 = pneg %p1007
    $region50: #{decoder_layer_forward.21} parent=5 // pred_check_branch
      %1010 = sbr.rel (%p1008) target = $region52
    $region51: #{decoder_layer_forward.21} parent=5 // pred_region
      %s1011 = ssub.s32 %s10, 2
      // Predicated region
      $region53: #{decoder_layer_forward.21} parent=51 // pred_check
        %p1012 = pneg %p174
      $region54: #{decoder_layer_forward.21} parent=51 // pred_check_branch
        %1014 = sbr.rel (%p1012) target = $region56
      $region55: #{decoder_layer_forward.21} parent=51 // pred_region
        %p1015 = scmp.lt.s32.totalorder %s23, 1
        %s1016 = scalar_select %p1015, %s23, 1
        %p1017 = scmp.lt.s32.totalorder %s24, 0
        %s1018 = scalar_select %p1017, %s24, 0
        %s1019 = sadd.s32 %s1018, %s1016
        %s1020 = smul.addr %s1019, 4
        %s1021 = scalar_lea.vmem %s4, %s1020
      $region56: #{decoder_layer_forward.21} parent=51 // pred_fallthru
        _
    $region52: #{decoder_layer_forward.21} parent=5 // pred_fallthru
      _
  $region6: #{decoder_layer_forward.21} parent=0 // loop_footer
    %s14 = sadd.s32 1, %s10
  $region7: #{decoder_layer_forward.21} parent=0 // loop_footer_branch
    %9 = sbr.rel target = $region3
  $region8: #{decoder_layer_forward.21} parent=0 // loop_exit
    _

// kernel: squeeze.0
$region0: #{squeeze.0}
  %s0 = inlined_call_operand.vmem [shape: f32[2,8], index: 0, kind: input, shape index: {}]
  %s1 = inlined_call_operand.vmem [shape: f32[16,1], index: 1, kind: output, shape index: {}]
  $region1: #{squeeze.0} parent=0
    #allocation0 [shape = 'u8[4096]{0}', space=vmem, size = 0x1000, scoped, tag = 'scoped mem for input reshape']
    %s3 = sshllo.u32 0, 2
    %v4 = vld [vmem:[%s0] sm:%s3]
    %5 = vst [vmem:[#allocation0] sm:%s3] %v4
    %v6 = vld [vmem:[#allocation0] sm:$0x3]
    %vm7 = vcmask 7168
    %8 = vst.msk [vmem:[%s1] ss:$8 sm:$0x3] %vm7, %v6
    %v9 = vld [vmem:[#allocation0] sm:$0x3]
    %10 = vrot.lane.b32.xlu0 %v9, 127
    %v11 = vpop.permute.xlu0 %10
    %vm12 = vcmask 7168
    %s13 = scalar_lea.vmem %s1, 1
    %14 = vst.msk [vmem:[%s13] ss:$8 sm:$0x3] %vm12, %v11
    %v15 = vld [vmem:[#allocation0] sm:$0x3]
    %16 = vrot.lane.b32.xlu0 %v15, 126
    %v17 = vpop.permute.xlu0 %16
    %vm18 = vcmask 7168
    %s19 = scalar_lea.vmem %s1, 2
    %20 = vst.msk [vmem:[%s19] ss:$8 sm:$0x3] %vm18, %v17
    %v21 = vld [vmem:[#allocation0] sm:$0x3]
    %22 = vrot.lane.b32.xlu0 %v21, 125
    %v23 = vpop.permute.xlu0 %22
    %vm24 = vcmask 7168
    %s25 = scalar_lea.vmem %s1, 3
    %26 = vst.msk [vmem:[%s25] ss:$8 sm:$0x3] %vm24, %v23
    %v27 = vld [vmem:[#allocation0] sm:$0x3]
    %28 = vrot.lane.b32.xlu0 %v27, 124
    %v29 = vpop.permute.xlu0 %28
    %vm30 = vcmask 7168
    %s31 = scalar_lea.vmem %s1, 4
    %32 = vst.msk [vmem:[%s31] ss:$8 sm:$0x3] %vm30, %v29
    %v33 = vld [vmem:[#allocation0] sm:$0x3]
    %34 = vrot.lane.b32.xlu0 %v33, 123
    %v35 = vpop.permute.xlu0 %34
    %vm36 = vcmask 7168
    %s37 = scalar_lea.vmem %s1, 5
    %38 = vst.msk [vmem:[%s37] ss:$8 sm:$0x3] %vm36, %v35
    %v39 = vld [vmem:[#allocation0] sm:$0x3]
    %40 = vrot.lane.b32.xlu0 %v39, 122
    %v41 = vpop.permute.xlu0 %40
    %vm42 = vcmask 7168
    %s43 = scalar_lea.vmem %s1, 6
    %44 = vst.msk [vmem:[%s43] ss:$8 sm:$0x3] %vm42, %v41
    %v45 = vld [vmem:[#allocation0] sm:$0x3]
    %46 = vrot.lane.b32.xlu0 %v45, 121
    %v47 = vpop.permute.xlu0 %46
    %vm48 = vcmask 7168
    %s49 = scalar_lea.vmem %s1, 7
    %50 = vst.msk [vmem:[%s49] ss:$8 sm:$0x3] %vm48, %v47

// kernel: decoder_layer_forward.23
$region0: #{decoder_layer_forward.23}
  #allocation0 [shape = 'u32[]', space=smem, size = 0x4, offset = 0x4, fixed_abs, tag = 'smem constant byte address 0x4 - core index']
  #allocation1 [shape = 'u32[144,128]{1,0:T(1,128)}', space=vmem, size = 0x12000, scoped, tag = 'internal scratch']
  %s0 = inlined_call_operand.vmem [shape: f32[16,32], index: 0, kind: input, shape index: {}]
  %s1 = inlined_call_operand.vmem [shape: bf16[32,32], index: 1, kind: input, shape index: {}]
  %s2 = inlined_call_operand.vmem [shape: f32[1,32], index: 2, kind: input, shape index: {}]
  %s3 = inlined_call_operand.vmem [shape: bf16[32,32], index: 3, kind: input, shape index: {}]
  %s4 = inlined_call_operand.vmem [shape: f32[1,32], index: 4, kind: input, shape index: {}]
  %s5 = inlined_call_operand.vmem [shape: bf16[16,32], index: 5, kind: output, shape index: {0}]
  %s6 = inlined_call_operand.vmem [shape: bf16[16,32], index: 6, kind: output, shape index: {1}]
  %7 = xla_tuple %s5, %s6
  %s8 = sld [smem:[#allocation0]]
  $region38: #{decoder_layer_forward.23} parent=0
    _
  %s10 = ssub.s32 1, %s8
  %s11 = scalar_select 0, %s10, %s8
  // Predicated region
  $region2: #{decoder_layer_forward.23} parent=0 // pred_check
    _
  $region3: #{decoder_layer_forward.23} parent=0 // pred_check_branch
    %13 = sbr.rel (0) target = $region5
  $region4: #{decoder_layer_forward.23} parent=0 // pred_region
    _
  $region5: #{decoder_layer_forward.23} parent=0 // pred_fallthru
    _
  // Predicated region
  $region6: #{decoder_layer_forward.23} parent=0 // pred_check
    _
  $region7: #{decoder_layer_forward.23} parent=0 // pred_check_branch
    %15 = sbr.rel (0) target = $region9
  $region8: #{decoder_layer_forward.23} parent=0 // pred_region
    _
  $region9: #{decoder_layer_forward.23} parent=0 // pred_fallthru
    _
  // Predicated region
  $region10: #{decoder_layer_forward.23} parent=0 // pred_check
    _
  $region11: #{decoder_layer_forward.23} parent=0 // pred_check_branch
    %17 = sbr.rel (0) target = $region13
  $region12: #{decoder_layer_forward.23} parent=0 // pred_region
    _
  $region13: #{decoder_layer_forward.23} parent=0 // pred_fallthru
    _
  // Predicated region
  $region14: #{decoder_layer_forward.23} parent=0 // pred_check
    _
  $region15: #{decoder_layer_forward.23} parent=0 // pred_check_branch
    %19 = sbr.rel (0) target = $region17
  $region16: #{decoder_layer_forward.23} parent=0 // pred_region
    _
  $region17: #{decoder_layer_forward.23} parent=0 // pred_fallthru
    _
  // Predicated region
  $region18: #{decoder_layer_forward.23} parent=0 // pred_check
    _
  $region19: #{decoder_layer_forward.23} parent=0 // pred_check_branch
    %21 = sbr.rel (0) target = $region21
  $region20: #{decoder_layer_forward.23} parent=0 // pred_region
    _
  $region21: #{decoder_layer_forward.23} parent=0 // pred_fallthru
    _
  %v23 = vld [vmem:[%s0] sm:$0xff]
  %v24 = vld [vmem:[%s0 + $0x8] sm:$0xff]
  %v25 = vpack.c.bf16 %v24, %v23
  %v26 = vld [vmem:[%s1] sm:$0xf]
  %v27 = vld [vmem:[%s1 + $0x4] sm:$0xf]
  %v28 = vld [vmem:[%s1 + $0x8] sm:$0xf]
  %v29 = vld [vmem:[%s1 + $0xc] sm:$0xf]
  %v30 = vld [vmem:[%s2] sm:$0x1]
  %v32 = vlaneseq
  %v33 = vshrl.u32 %v32, 7
  %v34 = vsub.s32 0, %v33
  %v35 = vrot.slane %v30, %v34
  %v41 = vunpack.c.l.b16 %v26
  %v42 = vunpack.c.l.b16 %v27
  %v43 = vunpack.c.l.b16 %v28
  %v44 = vunpack.c.l.b16 %v29
  %v45 = vpack.c.b16 %v42, %v41
  %v46 = vpack.c.b16 %v44, %v43
  %vm49 = vcmask 261120
  %v51 = vsel %vm49, %v25, 0
  %53 = vmatprep.subr.bf16.mxu0 0
  %54 = vmatpush1.bf16.msra.mxu0 %v45
  %55 = vmatprep.subr.bf16.mxu0 0
  %56 = vmatpush1.bf16.msra.mxu0 %v46
  %57 = vmatprep.subr.bf16.mxu0 0
  %58 = vmatpush1.bf16.msra.mxu0 0
  %59 = vmatprep.subr.bf16.mxu0 0
  %60 = vmatpush1.bf16.msra.mxu0 0
  %61 = vmatprep.subr.bf16.mxu0 0
  %62 = vmatpush1.bf16.msra.mxu0 0
  %63 = vmatprep.subr.bf16.mxu0 0
  %64 = vmatpush1.bf16.msra.mxu0 0
  %65 = vmatprep.subr.bf16.mxu0 0
  %66 = vmatpush1.bf16.msra.mxu0 0
  %67 = vmatprep.subr.bf16.mxu0 0
  %68 = vmatpush1.bf16.msra.mxu0 0
  %69 = vmatprep.subr.bf16.mxu0 0
  %70 = vmatpush1.bf16.msra.mxu0 0
  %71 = vmatprep.subr.bf16.mxu0 0
  %72 = vmatpush1.bf16.msra.mxu0 0
  %73 = vmatprep.subr.bf16.mxu0 0
  %74 = vmatpush1.bf16.msra.mxu0 0
  %75 = vmatprep.subr.bf16.mxu0 0
  %76 = vmatpush1.bf16.msra.mxu0 0
  %77 = vmatprep.subr.bf16.mxu0 0
  %78 = vmatpush1.bf16.msra.mxu0 0
  %79 = vmatprep.subr.bf16.mxu0 0
  %80 = vmatpush1.bf16.msra.mxu0 0
  %81 = vmatprep.subr.bf16.mxu0 0
  %82 = vmatpush1.bf16.msra.mxu0 0
  %83 = vmatprep.subr.bf16.mxu0 0
  %84 = vmatpush1.bf16.msra.mxu0 0
  %85 = vmatprep.mubr.bf16.mxu0 0
  %86 = vmatmul.mubr.bf16.gmra.mrb[0].mxu0 %v51
  %v87 = vpop.f32.mrb[0].mxu0
  %v88 = vadd.f32 %v35, %v87
  %v89 = vpop.f32.mrb[0].mxu0
  %v90 = vpop.f32.mrb[0].mxu0
  %v91 = vadd.f32 %v35, %v90
  %v92 = vpop.f32.mrb[0].mxu0
  %93 = vdwg.mxu0
  %v94 = vpack.c.bf16 %v91, %v88
  %v96 = vunpack.c.l.b16 %v94
  %v97 = vunpack.c.h.b16 %v94
  %v98 = vpack.c.b16 %v96, %v96
  %v99 = vpack.c.b16 %v97, %v97
  %vm102 = vcmask 257024
  %103 = vst.msk [vmem:[%s5] sm:$0xf] %vm102, %v98
  %104 = vst.msk [vmem:[%s5 + $0x4] sm:$0xf] %vm102, %v99
  %v105 = vld [vmem:[%s3] sm:$0xf]
  %v106 = vld [vmem:[%s3 + $0x4] sm:$0xf]
  %v107 = vld [vmem:[%s3 + $0x8] sm:$0xf]
  %v108 = vld [vmem:[%s3 + $0xc] sm:$0xf]
  %v109 = vld [vmem:[%s4] sm:$0x1]
  %v111 = vlaneseq
  %v112 = vshrl.u32 %v111, 7
  %v113 = vsub.s32 0, %v112
  %v114 = vrot.slane %v109, %v113
  %v120 = vunpack.c.l.b16 %v105
  %v121 = vunpack.c.l.b16 %v106
  %v122 = vunpack.c.l.b16 %v107
  %v123 = vunpack.c.l.b16 %v108
  %v124 = vpack.c.b16 %v121, %v120
  %v125 = vpack.c.b16 %v123, %v122
  %128 = vmatprep.subr.bf16.mxu0 0
  %129 = vmatpush1.bf16.msra.mxu0 %v124
  %130 = vmatprep.subr.bf16.mxu0 0
  %131 = vmatpush1.bf16.msra.mxu0 %v125
  %132 = vmatprep.subr.bf16.mxu0 0
  %133 = vmatpush1.bf16.msra.mxu0 0
  %134 = vmatprep.subr.bf16.mxu0 0
  %135 = vmatpush1.bf16.msra.mxu0 0
  %136 = vmatprep.subr.bf16.mxu0 0
  %137 = vmatpush1.bf16.msra.mxu0 0
  %138 = vmatprep.subr.bf16.mxu0 0
  %139 = vmatpush1.bf16.msra.mxu0 0
  %140 = vmatprep.subr.bf16.mxu0 0
  %141 = vmatpush1.bf16.msra.mxu0 0
  %142 = vmatprep.subr.bf16.mxu0 0
  %143 = vmatpush1.bf16.msra.mxu0 0
  %144 = vmatprep.subr.bf16.mxu0 0
  %145 = vmatpush1.bf16.msra.mxu0 0
  %146 = vmatprep.subr.bf16.mxu0 0
  %147 = vmatpush1.bf16.msra.mxu0 0
  %148 = vmatprep.subr.bf16.mxu0 0
  %149 = vmatpush1.bf16.msra.mxu0 0
  %150 = vmatprep.subr.bf16.mxu0 0
  %151 = vmatpush1.bf16.msra.mxu0 0
  %152 = vmatprep.subr.bf16.mxu0 0
  %153 = vmatpush1.bf16.msra.mxu0 0
  %154 = vmatprep.subr.bf16.mxu0 0
  %155 = vmatpush1.bf16.msra.mxu0 0
  %156 = vmatprep.subr.bf16.mxu0 0
  %157 = vmatpush1.bf16.msra.mxu0 0
  %158 = vmatprep.subr.bf16.mxu0 0
  %159 = vmatpush1.bf16.msra.mxu0 0
  %160 = vmatprep.mubr.bf16.mxu0 0
  %161 = vmatmul.mubr.bf16.gmra.mrb[0].mxu0 %v51
  %v162 = vpop.f32.mrb[0].mxu0
  %v163 = vadd.f32 %v114, %v162
  %v164 = vpop.f32.mrb[0].mxu0
  %v165 = vpop.f32.mrb[0].mxu0
  %v166 = vadd.f32 %v114, %v165
  %v167 = vpop.f32.mrb[0].mxu0
  %168 = vdwg.mxu0
  %v169 = vpack.c.bf16 %v166, %v163
  %v171 = vunpack.c.l.b16 %v169
  %v172 = vunpack.c.h.b16 %v169
  %v173 = vpack.c.b16 %v171, %v171
  %v174 = vpack.c.b16 %v172, %v172
  %177 = vst.msk [vmem:[%s6] sm:$0xf] %vm102, %v173
  %178 = vst.msk [vmem:[%s6 + $0x4] sm:$0xf] %vm102, %v174
  // Predicated region
  $region22: #{decoder_layer_forward.23} parent=0 // pred_check
    _
  $region23: #{decoder_layer_forward.23} parent=0 // pred_check_branch
    %180 = sbr.rel (0) target = $region25
  $region24: #{decoder_layer_forward.23} parent=0 // pred_region
    _
  $region25: #{decoder_layer_forward.23} parent=0 // pred_fallthru
    _
  // Predicated region
  $region26: #{decoder_layer_forward.23} parent=0 // pred_check
    _
  $region27: #{decoder_layer_forward.23} parent=0 // pred_check_branch
    %182 = sbr.rel (0) target = $region29
  $region28: #{decoder_layer_forward.23} parent=0 // pred_region
    _
  $region29: #{decoder_layer_forward.23} parent=0 // pred_fallthru
    _
  // Predicated region
  $region30: #{decoder_layer_forward.23} parent=0 // pred_check
    _
  $region31: #{decoder_layer_forward.23} parent=0 // pred_check_branch
    %184 = sbr.rel (0) target = $region33
  $region32: #{decoder_layer_forward.23} parent=0 // pred_region
    _
  $region33: #{decoder_layer_forward.23} parent=0 // pred_fallthru
    _
  // Predicated region
  $region34: #{decoder_layer_forward.23} parent=0 // pred_check
    _
  $region35: #{decoder_layer_forward.23} parent=0 // pred_check_branch
    %186 = sbr.rel (0) target = $region37
  $region36: #{decoder_layer_forward.23} parent=0 // pred_region
    _
  $region37: #{decoder_layer_forward.23} parent=0 // pred_fallthru
    _

// kernel: decoder_layer_forward.27
$region0: #{decoder_layer_forward.27}
  #allocation0 [shape = 'u32[]', space=smem, size = 0x4, offset = 0x4, fixed_abs, tag = 'smem constant byte address 0x4 - core index']
  #allocation1 [shape = 'u32[144,128]{1,0:T(1,128)}', space=vmem, size = 0x12000, scoped, tag = 'internal scratch']
  %s0 = inlined_call_operand.vmem [shape: f32[16,32], index: 0, kind: input, shape index: {}]
  %s1 = inlined_call_operand.vmem [shape: f32[1,32], index: 1, kind: input, shape index: {}]
  %s2 = inlined_call_operand.vmem [shape: f32[1,32], index: 2, kind: input, shape index: {}]
  %s3 = inlined_call_operand.vmem [shape: f32[16,1], index: 3, kind: input, shape index: {}]
  %s4 = inlined_call_operand.vmem [shape: f32[16,32], index: 4, kind: output, shape index: {}]
  %s5 = sld [smem:[#allocation0]]
  $region26: #{decoder_layer_forward.27} parent=0
    _
  %s7 = ssub.s32 1, %s5
  %s8 = scalar_select 0, %s7, %s5
  // Predicated region
  $region2: #{decoder_layer_forward.27} parent=0 // pred_check
    _
  $region3: #{decoder_layer_forward.27} parent=0 // pred_check_branch
    %10 = sbr.rel (0) target = $region5
  $region4: #{decoder_layer_forward.27} parent=0 // pred_region
    _
  $region5: #{decoder_layer_forward.27} parent=0 // pred_fallthru
    _
  // Predicated region
  $region6: #{decoder_layer_forward.27} parent=0 // pred_check
    _
  $region7: #{decoder_layer_forward.27} parent=0 // pred_check_branch
    %12 = sbr.rel (0) target = $region9
  $region8: #{decoder_layer_forward.27} parent=0 // pred_region
    _
  $region9: #{decoder_layer_forward.27} parent=0 // pred_fallthru
    _
  // Predicated region
  $region10: #{decoder_layer_forward.27} parent=0 // pred_check
    _
  $region11: #{decoder_layer_forward.27} parent=0 // pred_check_branch
    %14 = sbr.rel (0) target = $region13
  $region12: #{decoder_layer_forward.27} parent=0 // pred_region
    _
  $region13: #{decoder_layer_forward.27} parent=0 // pred_fallthru
    _
  // Predicated region
  $region14: #{decoder_layer_forward.27} parent=0 // pred_check
    _
  $region15: #{decoder_layer_forward.27} parent=0 // pred_check_branch
    %16 = sbr.rel (0) target = $region17
  $region16: #{decoder_layer_forward.27} parent=0 // pred_region
    _
  $region17: #{decoder_layer_forward.27} parent=0 // pred_fallthru
    _
  %v17 = vld [vmem:[%s0] sm:$0xff]
  %v18 = vld [vmem:[%s0 + $0x8] sm:$0xff]
  %vm19 = vcmask 261120
  %v20 = vsel %vm19, %v17, 0.0
  %21 = vadd.xlane.f32.xlu0 %v20
  %v22 = vpop.xlane.xlu0 %21
  %v23 = vsel %vm19, %v18, 0.0
  %24 = vadd.xlane.f32.xlu0 %v23
  %v25 = vpop.xlane.xlu0 %24
  %v26 = vrcp.pop 32.0
  %v27 = vmul.f32 %v22, %v26
  %v28 = vmul.f32 %v25, %v26
  %v29 = vsub.f32 %v17, %v27
  %v30 = vsub.f32 %v18, %v28
  %v31 = vmul.f32 %v29, %v29
  %v32 = vmul.f32 %v30, %v30
  %v33 = vsel %vm19, %v31, 0.0
  %34 = vadd.xlane.f32.xlu0 %v33
  %v35 = vpop.xlane.xlu0 %34
  %v36 = vsel %vm19, %v32, 0.0
  %37 = vadd.xlane.f32.xlu0 %v36
  %v38 = vpop.xlane.xlu0 %37
  %v39 = vrcp.pop 31.0
  %v40 = vmul.f32 %v35, %v39
  %v41 = vmul.f32 %v38, %v39
  %v42 = vld [vmem:[%s1] sm:$0x1]
  %v44 = vlaneseq
  %v45 = vshrl.u32 %v44, 7
  %v46 = vsub.s32 0, %v45
  %v47 = vrot.slane %v42, %v46
  %v49 = vmul.f32 %v47, %v29
  %v50 = vmul.f32 %v47, %v30
  %v51 = vrsqrt.pop %v40
  %v52 = vmul.f32 %v40, %v51
  %vm53 = vcmp.eq.f32.partialorder %v40, inf
  %v54 = vsel %vm53, %v40, %v52
  %vm55 = vcmp.eq.f32.partialorder %v40, 0.0
  %v56 = vand.u32 %v40, 2147483648
  %v57 = vsel %vm55, %v56, %v54
  %v58 = vrsqrt.pop %v41
  %v59 = vmul.f32 %v41, %v58
  %vm60 = vcmp.eq.f32.partialorder %v41, inf
  %v61 = vsel %vm60, %v41, %v59
  %vm62 = vcmp.eq.f32.partialorder %v41, 0.0
  %v63 = vand.u32 %v41, 2147483648
  %v64 = vsel %vm62, %v63, %v61
  %v65 = vadd.f32 %v57, 1e-06
  %v66 = vadd.f32 %v64, 1e-06
  %v67 = vrcp.pop %v65
  %v68 = vmul.f32 %v49, %v67
  %v69 = vrcp.pop %v66
  %v70 = vmul.f32 %v50, %v69
  %v71 = vld [vmem:[%s2] sm:$0x1]
  %v73 = vlaneseq
  %v74 = vshrl.u32 %v73, 7
  %v75 = vsub.s32 0, %v74
  %v76 = vrot.slane %v71, %v75
  %v78 = vadd.f32 %v68, %v76
  %v79 = vadd.f32 %v70, %v76
  %v80 = vld [vmem:[%s3] sm:$0xff]
  %v81 = vld [vmem:[%s3 + $0x8] sm:$0xff]
  %vm82 = vcmp.eq.f32.partialorder %v80, 0.0
  %vm83 = vcmp.eq.f32.partialorder %v81, 0.0
  %v84 = vsel %vm82, 1, 0
  %v85 = vsel %vm83, 1, 0
  %86 = vset.pattern.permute.xlu0 0
  %87 = vperm.xlu0 %86, %v84
  %v88 = vpop.permute.xlu0 %87
  %89 = vset.pattern.permute.xlu0 0
  %90 = vperm.xlu0 %89, %v85
  %v91 = vpop.permute.xlu0 %90
  %vm92 = vcmp.eq.s32.totalorder %v88, 1
  %vm93 = vcmp.eq.s32.totalorder %v91, 1
  %v94 = vsel %vm92, 0.0, %v78
  %v95 = vsel %vm93, 0.0, %v79
  %96 = vst.msk [vmem:[%s4] sm:$0xff] %vm19, %v94
  %97 = vst.msk [vmem:[%s4 + $0x8] sm:$0xff] %vm19, %v95
  // Predicated region
  $region18: #{decoder_layer_forward.27} parent=0 // pred_check
    _
  $region19: #{decoder_layer_forward.27} parent=0 // pred_check_branch
    %99 = sbr.rel (0) target = $region21
  $region20: #{decoder_layer_forward.27} parent=0 // pred_region
    _
  $region21: #{decoder_layer_forward.27} parent=0 // pred_fallthru
    _
  // Predicated region
  $region22: #{decoder_layer_forward.27} parent=0 // pred_check
    _
  $region23: #{decoder_layer_forward.27} parent=0 // pred_check_branch
    %101 = sbr.rel (0) target = $region25
  $region24: #{decoder_layer_forward.27} parent=0 // pred_region
    _
  $region25: #{decoder_layer_forward.27} parent=0 // pred_fallthru
    _

// kernel: decoder_layer_forward.24
$region0: #{decoder_layer_forward.24}
  #allocation0 [shape = 'u32[]', space=smem, size = 0x4, offset = 0x4, fixed_abs, tag = 'smem constant byte address 0x4 - core index']
  #allocation1 [shape = 'u32[144,128]{1,0:T(1,128)}', space=vmem, size = 0x12000, scoped, tag = 'internal scratch']
  #allocation2 [shape = 'f32[2,8,1]{2,1,0:T(8,128)}', space=vmem, size = 0x2000, scoped, tag = 'scratch operand']
  #allocation3 [shape = 'f32[2,8,1]{2,1,0:T(8,128)}', space=vmem, size = 0x2000, scoped, tag = 'scratch operand']
  #allocation4 [shape = 'f32[2,8,16]{2,1,0:T(8,128)}', space=vmem, size = 0x2000, scoped, tag = 'scratch operand']
  %s0 = inlined_call_operand.vmem [shape: bf16[2,8,32], index: 0, kind: input, shape index: {}]
  %s1 = inlined_call_operand.vmem [shape: bf16[2,8,32], index: 1, kind: input, shape index: {}]
  %s2 = inlined_call_operand.vmem [shape: bf16[2,8,32], index: 2, kind: input, shape index: {}]
  %s3 = inlined_call_operand.vmem [shape: f32[2,1,8], index: 3, kind: input, shape index: {}]
  %s4 = inlined_call_operand.vmem [shape: bf16[2,8,32], index: 4, kind: output, shape index: {}]
  %s5 = sld [smem:[#allocation0]]
  $region57: #{decoder_layer_forward.24} parent=0
    _
  %s7 = ssub.s32 1, %s5
  %s8 = scalar_select 0, %s7, %s5
  loop: start=0, step=1, limit=4
  $region2: #{decoder_layer_forward.24} parent=0 // loop_pre_header
    _
  $region3: #{decoder_layer_forward.24} parent=0 // loop_header
    %s10 = sphi 0, %s14
    %p11 = scmp.ge.s32.totalorder %s10, 4
    %s17 = sphi 0, %s36
    %s18 = sphi 0, %s32
    %s19 = sphi 0, %s28
    %s20 = sphi 0, %s17
    %s21 = sphi 0, %s18
    %s22 = sphi 0, %s19
    %s23 = sphi 0, %s20
    %s24 = sphi 0, %s21
    %s25 = sphi 0, %s22
    %s41 = sphi 0, %s43
    %s44 = sphi 0, %s41
    %s45 = sphi 0, %s44
    %s61 = sphi 0, %s45
    %s69 = sphi 0, %s71
    %s72 = sphi 0, %s69
    %s73 = sphi 0, %s72
    %s89 = sphi 0, %s73
    %s97 = sphi 0, %s99
    %s100 = sphi 0, %s97
    %s101 = sphi 0, %s100
    %s117 = sphi 0, %s101
    %s125 = sphi 0, %s127
    %s128 = sphi 0, %s125
    %s129 = sphi 0, %s128
    %s145 = sphi 0, %s129
    %s153 = sphi 0, %s155
    %s156 = sphi 0, %s153
    %s157 = sphi 0, %s156
    %s173 = sphi 0, %s157
  $region4: #{decoder_layer_forward.24} parent=0 // loop_header_branch
    %13 = sbr.rel (%p11) target = $region8
  $region5: #{decoder_layer_forward.24} parent=0 // loop_body
    %s15 = ssub.s32 %s10, 1
    %s16 = ssub.s32 %s10, 2
    %s26 = sadd.s32 1, %s19
    %p27 = scmp.ge.s32.totalorder %s26, 1
    %s28 = scalar_select %p27, 0, %s26
    %s29 = sadd.s32 1, %s18
    %s30 = scalar_select %p27, %s29, %s18
    %p31 = scmp.ge.s32.totalorder %s30, 1
    %s32 = scalar_select %p31, 0, %s30
    %s33 = sadd.s32 1, %s17
    %s34 = scalar_select %p31, %s33, %s17
    %p35 = scmp.ge.s32.totalorder %s34, 2
    %s36 = scalar_select %p35, 0, %s34
    %s37 = ssub.s32 %s17, %s36
    %s38 = ssub.s32 %s18, %s32
    %s39 = sor.u32 %s37, %s38
    %p40 = scmp.eq.s32.totalorder %s39, 0
    %s42 = sadd.s32 %s41, 1
    %s43 = scalar_select %p40, %s41, %s42
    %p46 = pneg %p40
    %p47 = scmp.eq.s32.totalorder %s10, 1
    %p48 = por %p46, %p47
    %p49 = scmp.ne.s32.totalorder %s41, %s44
    %p50 = scmp.eq.s32.totalorder %s10, 0
    %p51 = por %p49, %p50
    %p52 = scmp.ne.s32.totalorder %s41, %s44
    %p53 = scmp.eq.s32.totalorder %s15, 1
    %p54 = por %p52, %p53
    %p55 = scmp.ne.s32.totalorder %s44, %s45
    %p56 = scmp.eq.s32.totalorder %s15, 0
    %p57 = por %p55, %p56
    %p58 = scmp.ne.s32.totalorder %s44, %s45
    %p59 = scmp.eq.s32.totalorder %s16, 1
    %p60 = por %p58, %p59
    %p62 = scmp.ne.s32.totalorder %s45, %s61
    %p63 = scmp.eq.s32.totalorder %s16, 0
    %p64 = por %p62, %p63
    %s65 = ssub.s32 %s17, %s36
    %s66 = ssub.s32 %s19, %s28
    %s67 = sor.u32 %s65, %s66
    %p68 = scmp.eq.s32.totalorder %s67, 0
    %s70 = sadd.s32 %s69, 1
    %s71 = scalar_select %p68, %s69, %s70
    %p74 = pneg %p68
    %p75 = scmp.eq.s32.totalorder %s10, 1
    %p76 = por %p74, %p75
    %p77 = scmp.ne.s32.totalorder %s69, %s72
    %p78 = scmp.eq.s32.totalorder %s10, 0
    %p79 = por %p77, %p78
    %p80 = scmp.ne.s32.totalorder %s69, %s72
    %p81 = scmp.eq.s32.totalorder %s15, 1
    %p82 = por %p80, %p81
    %p83 = scmp.ne.s32.totalorder %s72, %s73
    %p84 = scmp.eq.s32.totalorder %s15, 0
    %p85 = por %p83, %p84
    %p86 = scmp.ne.s32.totalorder %s72, %s73
    %p87 = scmp.eq.s32.totalorder %s16, 1
    %p88 = por %p86, %p87
    %p90 = scmp.ne.s32.totalorder %s73, %s89
    %p91 = scmp.eq.s32.totalorder %s16, 0
    %p92 = por %p90, %p91
    %s93 = ssub.s32 %s17, %s36
    %s94 = ssub.s32 %s19, %s28
    %s95 = sor.u32 %s93, %s94
    %p96 = scmp.eq.s32.totalorder %s95, 0
    %s98 = sadd.s32 %s97, 1
    %s99 = scalar_select %p96, %s97, %s98
    %p102 = pneg %p96
    %p103 = scmp.eq.s32.totalorder %s10, 1
    %p104 = por %p102, %p103
    %p105 = scmp.ne.s32.totalorder %s97, %s100
    %p106 = scmp.eq.s32.totalorder %s10, 0
    %p107 = por %p105, %p106
    %p108 = scmp.ne.s32.totalorder %s97, %s100
    %p109 = scmp.eq.s32.totalorder %s15, 1
    %p110 = por %p108, %p109
    %p111 = scmp.ne.s32.totalorder %s100, %s101
    %p112 = scmp.eq.s32.totalorder %s15, 0
    %p113 = por %p111, %p112
    %p114 = scmp.ne.s32.totalorder %s100, %s101
    %p115 = scmp.eq.s32.totalorder %s16, 1
    %p116 = por %p114, %p115
    %p118 = scmp.ne.s32.totalorder %s101, %s117
    %p119 = scmp.eq.s32.totalorder %s16, 0
    %p120 = por %p118, %p119
    %s121 = ssub.s32 %s17, %s36
    %s122 = ssub.s32 %s19, %s28
    %s123 = sor.u32 %s121, %s122
    %p124 = scmp.eq.s32.totalorder %s123, 0
    %s126 = sadd.s32 %s125, 1
    %s127 = scalar_select %p124, %s125, %s126
    %p130 = pneg %p124
    %p131 = scmp.eq.s32.totalorder %s10, 1
    %p132 = por %p130, %p131
    %p133 = scmp.ne.s32.totalorder %s125, %s128
    %p134 = scmp.eq.s32.totalorder %s10, 0
    %p135 = por %p133, %p134
    %p136 = scmp.ne.s32.totalorder %s125, %s128
    %p137 = scmp.eq.s32.totalorder %s15, 1
    %p138 = por %p136, %p137
    %p139 = scmp.ne.s32.totalorder %s128, %s129
    %p140 = scmp.eq.s32.totalorder %s15, 0
    %p141 = por %p139, %p140
    %p142 = scmp.ne.s32.totalorder %s128, %s129
    %p143 = scmp.eq.s32.totalorder %s16, 1
    %p144 = por %p142, %p143
    %p146 = scmp.ne.s32.totalorder %s129, %s145
    %p147 = scmp.eq.s32.totalorder %s16, 0
    %p148 = por %p146, %p147
    %s149 = ssub.s32 %s17, %s36
    %s150 = ssub.s32 %s18, %s32
    %s151 = sor.u32 %s149, %s150
    %p152 = scmp.eq.s32.totalorder %s151, 0
    %s154 = sadd.s32 %s153, 1
    %s155 = scalar_select %p152, %s153, %s154
    %p158 = pneg %p152
    %p159 = scmp.eq.s32.totalorder %s10, 1
    %p160 = por %p158, %p159
    %p161 = scmp.ne.s32.totalorder %s153, %s156
    %p162 = scmp.eq.s32.totalorder %s10, 0
    %p163 = por %p161, %p162
    %p164 = scmp.ne.s32.totalorder %s153, %s156
    %p165 = scmp.eq.s32.totalorder %s15, 1
    %p166 = por %p164, %p165
    %p167 = scmp.ne.s32.totalorder %s156, %s157
    %p168 = scmp.eq.s32.totalorder %s15, 0
    %p169 = por %p167, %p168
    %p170 = scmp.ne.s32.totalorder %s156, %s157
    %p171 = scmp.eq.s32.totalorder %s16, 1
    %p172 = por %p170, %p171
    %p174 = scmp.ne.s32.totalorder %s157, %s173
    %p175 = scmp.eq.s32.totalorder %s16, 0
    %p176 = por %p174, %p175
    %p177 = scmp.le.s32.totalorder 1, %s10
    %p178 = scmp.lt.s32.totalorder %s10, 3
    %p179 = pnand %p177, %p178
    %p180 = pneg %p179
    // Predicated region
    $region9: #{decoder_layer_forward.24} parent=5 // pred_check
      _
    $region10: #{decoder_layer_forward.24} parent=5 // pred_check_branch
      %182 = sbr.rel (%p179) target = $region12
    $region11: #{decoder_layer_forward.24} parent=5 // pred_region
      %s183 = ssub.s32 %s10, 1
    $region12: #{decoder_layer_forward.24} parent=5 // pred_fallthru
      _
    %p184 = scmp.lt.s32.totalorder %s10, 2
    // Predicated region
    $region13: #{decoder_layer_forward.24} parent=5 // pred_check
      %p185 = pneg %p184
    $region14: #{decoder_layer_forward.24} parent=5 // pred_check_branch
      %187 = sbr.rel (%p185) target = $region16
    $region15: #{decoder_layer_forward.24} parent=5 // pred_region
      // Predicated region
      $region17: #{decoder_layer_forward.24} parent=15 // pred_check
        %p188 = pneg %p51
      $region18: #{decoder_layer_forward.24} parent=15 // pred_check_branch
        %190 = sbr.rel (%p188) target = $region20
      $region19: #{decoder_layer_forward.24} parent=15 // pred_region
        %p191 = scmp.lt.s32.totalorder %s17, 1
        %s192 = scalar_select %p191, %s17, 1
        %p193 = scmp.lt.s32.totalorder %s18, 0
        %s194 = scalar_select %p193, %s18, 0
        %s195 = sadd.s32 %s194, %s192
        %s196 = smul.addr %s195, 4
        %s197 = scalar_lea.vmem %s0, %s196
      $region20: #{decoder_layer_forward.24} parent=15 // pred_fallthru
        _
      // Predicated region
      $region21: #{decoder_layer_forward.24} parent=15 // pred_check
        %p198 = pneg %p79
      $region22: #{decoder_layer_forward.24} parent=15 // pred_check_branch
        %200 = sbr.rel (%p198) target = $region24
      $region23: #{decoder_layer_forward.24} parent=15 // pred_region
        %p201 = scmp.lt.s32.totalorder %s17, 1
        %s202 = scalar_select %p201, %s17, 1
        %p203 = scmp.lt.s32.totalorder %s19, 0
        %s204 = scalar_select %p203, %s19, 0
        %s205 = sadd.s32 %s204, %s202
        %s206 = smul.addr %s205, 4
        %s207 = scalar_lea.vmem %s1, %s206
      $region24: #{decoder_layer_forward.24} parent=15 // pred_fallthru
        _
      // Predicated region
      $region25: #{decoder_layer_forward.24} parent=15 // pred_check
        %p208 = pneg %p107
      $region26: #{decoder_layer_forward.24} parent=15 // pred_check_branch
        %210 = sbr.rel (%p208) target = $region28
      $region27: #{decoder_layer_forward.24} parent=15 // pred_region
        %p211 = scmp.lt.s32.totalorder %s17, 1
        %s212 = scalar_select %p211, %s17, 1
        %p213 = scmp.lt.s32.totalorder %s19, 0
        %s214 = scalar_select %p213, %s19, 0
        %s215 = sadd.s32 %s214, %s212
        %s216 = smul.addr %s215, 4
        %s217 = scalar_lea.vmem %s2, %s216
      $region28: #{decoder_layer_forward.24} parent=15 // pred_fallthru
        _
      // Predicated region
      $region29: #{decoder_layer_forward.24} parent=15 // pred_check
        %p218 = pneg %p135
      $region30: #{decoder_layer_forward.24} parent=15 // pred_check_branch
        %220 = sbr.rel (%p218) target = $region32
      $region31: #{decoder_layer_forward.24} parent=15 // pred_region
        %p221 = scmp.lt.s32.totalorder %s17, 1
        %s222 = scalar_select %p221, %s17, 1
        %p223 = scmp.lt.s32.totalorder %s19, 0
        %s224 = scalar_select %p223, %s19, 0
        %s225 = sadd.s32 %s224, %s222
        %s226 = scalar_lea.vmem %s3, %s225
      $region32: #{decoder_layer_forward.24} parent=15 // pred_fallthru
        _
    $region16: #{decoder_layer_forward.24} parent=5 // pred_fallthru
      _
    %p227 = scmp.le.s32.totalorder 1, %s10
    %p228 = scmp.lt.s32.totalorder %s10, 3
    %p229 = pnand %p227, %p228
    %p230 = pneg %p229
    // Predicated region
    $region33: #{decoder_layer_forward.24} parent=5 // pred_check
      _
    $region34: #{decoder_layer_forward.24} parent=5 // pred_check_branch
      %232 = sbr.rel (%p229) target = $region36
    $region35: #{decoder_layer_forward.24} parent=5 // pred_region
      %s233 = ssub.s32 %s10, 1
      %p234 = scmp.lt.s32.totalorder %s20, 1
      %s235 = scalar_select %p234, %s20, 1
      %p236 = scmp.lt.s32.totalorder %s21, 0
      %s237 = scalar_select %p236, %s21, 0
      %s238 = sadd.s32 %s237, %s235
      %s239 = smul.addr %s238, 4
      %s240 = scalar_lea.vmem %s0, %s239
      %p241 = pneg %p57
      %p242 = pneg %p54
      %p243 = scmp.lt.s32.totalorder %s20, 1
      %s244 = scalar_select %p243, %s20, 1
      %p245 = scmp.lt.s32.totalorder %s22, 0
      %s246 = scalar_select %p245, %s22, 0
      %s247 = sadd.s32 %s246, %s244
      %s248 = smul.addr %s247, 4
      %s249 = scalar_lea.vmem %s1, %s248
      %p250 = pneg %p85
      %p251 = pneg %p82
      %p252 = scmp.lt.s32.totalorder %s20, 1
      %s253 = scalar_select %p252, %s20, 1
      %p254 = scmp.lt.s32.totalorder %s22, 0
      %s255 = scalar_select %p254, %s22, 0
      %s256 = sadd.s32 %s255, %s253
      %s257 = smul.addr %s256, 4
      %s258 = scalar_lea.vmem %s2, %s257
      %p259 = pneg %p113
      %p260 = pneg %p110
      %p261 = scmp.lt.s32.totalorder %s20, 1
      %s262 = scalar_select %p261, %s20, 1
      %p263 = scmp.lt.s32.totalorder %s22, 0
      %s264 = scalar_select %p263, %s22, 0
      %s265 = sadd.s32 %s264, %s262
      %s266 = scalar_lea.vmem %s3, %s265
      %p267 = pneg %p141
      %p268 = pneg %p138
      %p269 = pneg %p169
      %p270 = pneg %p166
      %p271 = scmp.lt.s32.totalorder %s20, 1
      %s272 = scalar_select %p271, %s20, 1
      %p273 = scmp.lt.s32.totalorder %s21, 0
      %s274 = scalar_select %p273, %s21, 0
      %s275 = sadd.s32 %s274, %s272
      %s276 = smul.addr %s275, 4
      %s277 = scalar_lea.vmem %s4, %s276
      %p278 = scmp.lt.s32.totalorder %s20, 1
      %s279 = scalar_select %p278, %s20, 1
      %p280 = scmp.lt.s32.totalorder %s21, 0
      %s281 = scalar_select %p280, %s21, 0
      %s282 = sadd.s32 %s281, %s279
      %s283 = smul.addr %s282, 4
      %s284 = scalar_lea.vmem %s0, %s283
      %p285 = scmp.lt.s32.totalorder %s20, 1
      %s286 = scalar_select %p285, %s20, 1
      %p287 = scmp.lt.s32.totalorder %s22, 0
      %s288 = scalar_select %p287, %s22, 0
      %s289 = sadd.s32 %s288, %s286
      %s290 = smul.addr %s289, 4
      %s291 = scalar_lea.vmem %s1, %s290
      %p292 = scmp.lt.s32.totalorder %s20, 1
      %s293 = scalar_select %p292, %s20, 1
      %p294 = scmp.lt.s32.totalorder %s22, 0
      %s295 = scalar_select %p294, %s22, 0
      %s296 = sadd.s32 %s295, %s293
      %s297 = smul.addr %s296, 4
      %s298 = scalar_lea.vmem %s2, %s297
      %p299 = scmp.lt.s32.totalorder %s20, 1
      %s300 = scalar_select %p299, %s20, 1
      %p301 = scmp.lt.s32.totalorder %s22, 0
      %s302 = scalar_select %p301, %s22, 0
      %s303 = sadd.s32 %s302, %s300
      %s304 = scalar_lea.vmem %s3, %s303
      %p305 = scmp.lt.s32.totalorder %s20, 1
      %s306 = scalar_select %p305, %s20, 1
      %p307 = scmp.lt.s32.totalorder %s21, 0
      %s308 = scalar_select %p307, %s21, 0
      %s309 = sadd.s32 %s308, %s306
      %s310 = smul.addr %s309, 4
      %s311 = scalar_lea.vmem %s4, %s310
      %p313 = scmp.eq.s32.totalorder %s22, 0
      // Predicated region
      $region37: #{decoder_layer_forward.24} parent=35 // pred_check
        %p314 = pneg %p313
      $region38: #{decoder_layer_forward.24} parent=35 // pred_check_branch
        %316 = sbr.rel (%p314) target = $region40
      $region39: #{decoder_layer_forward.24} parent=35 // pred_region
        %vm317 = vcmask 7168
        %318 = vst.msk [vmem:[#allocation2] sm:$0xff] %vm317, -inf
        %319 = vst.msk [vmem:[#allocation2 + $0x8] sm:$0xff] %vm317, -inf
        %320 = vst.msk [vmem:[#allocation3] sm:$0xff] %vm317, 0.0
        %321 = vst.msk [vmem:[#allocation3 + $0x8] sm:$0xff] %vm317, 0.0
        %vm322 = vcmask 130048
        %323 = vst.msk [vmem:[#allocation4] sm:$0xff] %vm322, 0.0
        %324 = vst.msk [vmem:[#allocation4 + $0x8] sm:$0xff] %vm322, 0.0
      $region40: #{decoder_layer_forward.24} parent=35 // pred_fallthru
        _
      %v325 = vld [vmem:[%s304] sm:$0x1]
      %v326 = vld [vmem:[%s284] sm:$0xf]
      %v327 = vld [vmem:[%s291] sm:$0xf]
      %v328 = vld [vmem:[%s298] sm:$0xf]
      %vm329 = vcmask 130048
      %v331 = vsel %vm329, %v326, 0
      %v334 = vsel %vm329, %v327, 0
      %336 = vmatprep.subr.bf16.mxu0 0
      %337 = vmatpush1.bf16.xpose.msra.mxu0 %v334
      %338 = vmatprep.subr.bf16.mxu0 0
      %339 = vmatpush1.bf16.xpose.msra.mxu0 0
      %340 = vmatprep.subr.bf16.mxu0 0
      %341 = vmatpush1.bf16.xpose.msra.mxu0 0
      %342 = vmatprep.subr.bf16.mxu0 0
      %343 = vmatpush1.bf16.xpose.msra.mxu0 0
      %344 = vmatprep.subr.bf16.mxu0 0
      %345 = vmatpush1.bf16.xpose.msra.mxu0 0
      %346 = vmatprep.subr.bf16.mxu0 0
      %347 = vmatpush1.bf16.xpose.msra.mxu0 0
      %348 = vmatprep.subr.bf16.mxu0 0
      %349 = vmatpush1.bf16.xpose.msra.mxu0 0
      %350 = vmatprep.subr.bf16.mxu0 0
      %351 = vmatpush1.bf16.xpose.msra.mxu0 0
      %352 = vmatprep.subr.bf16.mxu0 0
      %353 = vmatpush1.bf16.xpose.msra.mxu0 0
      %354 = vmatprep.subr.bf16.mxu0 0
      %355 = vmatpush1.bf16.xpose.msra.mxu0 0
      %356 = vmatprep.subr.bf16.mxu0 0
      %357 = vmatpush1.bf16.xpose.msra.mxu0 0
      %358 = vmatprep.subr.bf16.mxu0 0
      %359 = vmatpush1.bf16.xpose.msra.mxu0 0
      %360 = vmatprep.subr.bf16.mxu0 0
      %361 = vmatpush1.bf16.xpose.msra.mxu0 0
      %362 = vmatprep.subr.bf16.mxu0 0
      %363 = vmatpush1.bf16.xpose.msra.mxu0 0
      %364 = vmatprep.subr.bf16.mxu0 0
      %365 = vmatpush1.bf16.xpose.msra.mxu0 0
      %366 = vmatprep.subr.bf16.mxu0 0
      %367 = vmatpush1.bf16.xpose.msra.mxu0 0
      %368 = vmatprep.mubr.bf16.mxu0 0
      %369 = vmatmul.mubr.bf16.gmra.mrb[0].mxu0 %v331
      %v370 = vpop.f32.mrb[0].mxu0
      %v371 = vadd.f32 0.0, %v370
      %v372 = vpop.f32.mrb[0].mxu0
      %v373 = vpop.f32.mrb[0].mxu0
      %v374 = vpop.f32.mrb[0].mxu0
      %375 = vdwg.mxu0
      %v376 = vmul.f32 %v371, 0.25
      %vm377 = vcmp.eq.f32.partialorder %v325, 0.0
      %v378 = vsel %vm377, 1, 0
      %v379 = vlaneseq
      %v380 = vshrl.u32 %v379, 7
      %v381 = vsub.s32 0, %v380
      %v382 = vrot.slane %v378, %v381
      %vm383 = vcmp.eq.s32.totalorder %v382, 1
      %v384 = vsel %vm383, -1e+09, %v376
      %v385 = vld [vmem:[#allocation2] sm:$0xff]
      %vm386 = vcmask 64512
      %v387 = vsel %vm386, %v384, -inf
      %388 = vmax.xlane.f32.xlu0 %v387
      %v389 = vpop.xlane.xlu0 %388
      %v390 = vmax.f32 %v385, %v389
      %v391 = vsub.f32 %v385, %v390
      %v392 = vmul.f32 %v391, 1.442695
      %v393 = vpow.pop %v392
      %395 = vset.pattern.permute.xlu0 0
      %396 = vperm.xlu0 %395, %v390
      %v397 = vpop.permute.xlu0 %396
      %v399 = vsub.f32 %v384, %v397
      %v400 = vmul.f32 %v399, 1.442695
      %v401 = vpow.pop %v400
      %v402 = vld [vmem:[#allocation3] sm:$0xff]
      %v403 = vmul.f32 %v393, %v402
      %v404 = vsel %vm386, %v401, 0.0
      %405 = vadd.xlane.f32.xlu0 %v404
      %v406 = vpop.xlane.xlu0 %405
      %v407 = vadd.f32 %v403, %v406
      %vm408 = vcmask 7168
      %409 = vst.msk [vmem:[#allocation3] sm:$0xff] %vm408, %v407
      %v410 = vld [vmem:[#allocation4] sm:$0xff]
      %412 = vset.pattern.permute.xlu0 0
      %413 = vperm.xlu0 %412, %v393
      %v414 = vpop.permute.xlu0 %413
      %v416 = vmul.f32 %v414, %v410
      %v417 = vpack.c.bf16 %v401, %v401
      %v419 = vsel %vm386, %v417, 0
      %vm421 = vcmask 1043456
      %v423 = vsel %vm421, %v328, 0
      %425 = vmatprep.subr.bf16.mxu0 0
      %426 = vmatpush1.bf16.msra.mxu0 %v423
      %427 = vmatprep.subr.bf16.mxu0 0
      %428 = vmatpush1.bf16.msra.mxu0 0
      %429 = vmatprep.subr.bf16.mxu0 0
      %430 = vmatpush1.bf16.msra.mxu0 0
      %431 = vmatprep.subr.bf16.mxu0 0
      %432 = vmatpush1.bf16.msra.mxu0 0
      %433 = vmatprep.subr.bf16.mxu0 0
      %434 = vmatpush1.bf16.msra.mxu0 0
      %435 = vmatprep.subr.bf16.mxu0 0
      %436 = vmatpush1.bf16.msra.mxu0 0
      %437 = vmatprep.subr.bf16.mxu0 0
      %438 = vmatpush1.bf16.msra.mxu0 0
      %439 = vmatprep.subr.bf16.mxu0 0
      %440 = vmatpush1.bf16.msra.mxu0 0
      %441 = vmatprep.subr.bf16.mxu0 0
      %442 = vmatpush1.bf16.msra.mxu0 0
      %443 = vmatprep.subr.bf16.mxu0 0
      %444 = vmatpush1.bf16.msra.mxu0 0
      %445 = vmatprep.subr.bf16.mxu0 0
      %446 = vmatpush1.bf16.msra.mxu0 0
      %447 = vmatprep.subr.bf16.mxu0 0
      %448 = vmatpush1.bf16.msra.mxu0 0
      %449 = vmatprep.subr.bf16.mxu0 0
      %450 = vmatpush1.bf16.msra.mxu0 0
      %451 = vmatprep.subr.bf16.mxu0 0
      %452 = vmatpush1.bf16.msra.mxu0 0
      %453 = vmatprep.subr.bf16.mxu0 0
      %454 = vmatpush1.bf16.msra.mxu0 0
      %455 = vmatprep.subr.bf16.mxu0 0
      %456 = vmatpush1.bf16.msra.mxu0 0
      %457 = vmatprep.mubr.bf16.mxu0 0
      %458 = vmatmul.mubr.bf16.gmra.mrb[0].mxu0 %v419
      %v459 = vpop.f32.mrb[0].mxu0
      %v460 = vadd.f32 0.0, %v459
      %v461 = vpop.f32.mrb[0].mxu0
      %v462 = vpop.f32.mrb[0].mxu0
      %v463 = vpop.f32.mrb[0].mxu0
      %464 = vdwg.mxu0
      %v465 = vadd.f32 %v416, %v460
      %466 = vst.msk [vmem:[#allocation4] sm:$0xff] %vm329, %v465
      %467 = vst.msk [vmem:[#allocation2] sm:$0xff] %vm408, %v390
      %v468 = vld [vmem:[%s284] sm:$0xf]
      %v469 = vld [vmem:[%s291] sm:$0xf]
      %v470 = vld [vmem:[%s298] sm:$0xf]
      %v472 = vunpack.c.l.b16 %v468
      %v473 = vpack.c.b16 %v472, %v472
      %474 = vrot.lane.b32.xlu0 %v473, 112
      %v475 = vpop.permute.xlu0 %474
      %v477 = vunpack.c.l.b16 %v469
      %v478 = vpack.c.b16 %v477, %v477
      %479 = vrot.lane.b32.xlu0 %v478, 112
      %v480 = vpop.permute.xlu0 %479
      %v482 = vsel %vm329, %v475, 0
      %v485 = vsel %vm329, %v480, 0
      %487 = vmatprep.subr.bf16.mxu0 0
      %488 = vmatpush1.bf16.xpose.msra.mxu0 %v485
      %489 = vmatprep.subr.bf16.mxu0 0
      %490 = vmatpush1.bf16.xpose.msra.mxu0 0
      %491 = vmatprep.subr.bf16.mxu0 0
      %492 = vmatpush1.bf16.xpose.msra.mxu0 0
      %493 = vmatprep.subr.bf16.mxu0 0
      %494 = vmatpush1.bf16.xpose.msra.mxu0 0
      %495 = vmatprep.subr.bf16.mxu0 0
      %496 = vmatpush1.bf16.xpose.msra.mxu0 0
      %497 = vmatprep.subr.bf16.mxu0 0
      %498 = vmatpush1.bf16.xpose.msra.mxu0 0
      %499 = vmatprep.subr.bf16.mxu0 0
      %500 = vmatpush1.bf16.xpose.msra.mxu0 0
      %501 = vmatprep.subr.bf16.mxu0 0
      %502 = vmatpush1.bf16.xpose.msra.mxu0 0
      %503 = vmatprep.subr.bf16.mxu0 0
      %504 = vmatpush1.bf16.xpose.msra.mxu0 0
      %505 = vmatprep.subr.bf16.mxu0 0
      %506 = vmatpush1.bf16.xpose.msra.mxu0 0
      %507 = vmatprep.subr.bf16.mxu0 0
      %508 = vmatpush1.bf16.xpose.msra.mxu0 0
      %509 = vmatprep.subr.bf16.mxu0 0
      %510 = vmatpush1.bf16.xpose.msra.mxu0 0
      %511 = vmatprep.subr.bf16.mxu0 0
      %512 = vmatpush1.bf16.xpose.msra.mxu0 0
      %513 = vmatprep.subr.bf16.mxu0 0
      %514 = vmatpush1.bf16.xpose.msra.mxu0 0
      %515 = vmatprep.subr.bf16.mxu0 0
      %516 = vmatpush1.bf16.xpose.msra.mxu0 0
      %517 = vmatprep.subr.bf16.mxu0 0
      %518 = vmatpush1.bf16.xpose.msra.mxu0 0
      %519 = vmatprep.mubr.bf16.mxu0 0
      %520 = vmatmul.mubr.bf16.gmra.mrb[0].mxu0 %v482
      %v521 = vpop.f32.mrb[0].mxu0
      %v522 = vadd.f32 0.0, %v521
      %v523 = vpop.f32.mrb[0].mxu0
      %v524 = vpop.f32.mrb[0].mxu0
      %v525 = vpop.f32.mrb[0].mxu0
      %526 = vdwg.mxu0
      %v527 = vmul.f32 %v522, 0.25
      %v528 = vsel %vm383, -1e+09, %v527
      %s529 = scalar_lea.vmem [#allocation2], 8
      %v530 = vld [vmem:[%s529] sm:$0xff]
      %v531 = vsel %vm386, %v528, -inf
      %532 = vmax.xlane.f32.xlu0 %v531
      %v533 = vpop.xlane.xlu0 %532
      %v534 = vmax.f32 %v530, %v533
      %v535 = vsub.f32 %v530, %v534
      %v536 = vmul.f32 %v535, 1.442695
      %v537 = vpow.pop %v536
      %539 = vset.pattern.permute.xlu0 0
      %540 = vperm.xlu0 %539, %v534
      %v541 = vpop.permute.xlu0 %540
      %v543 = vsub.f32 %v528, %v541
      %v544 = vmul.f32 %v543, 1.442695
      %v545 = vpow.pop %v544
      %s546 = scalar_lea.vmem [#allocation3], 8
      %v547 = vld [vmem:[%s546] sm:$0xff]
      %v548 = vmul.f32 %v537, %v547
      %v549 = vsel %vm386, %v545, 0.0
      %550 = vadd.xlane.f32.xlu0 %v549
      %v551 = vpop.xlane.xlu0 %550
      %v552 = vadd.f32 %v548, %v551
      %553 = vst.msk [vmem:[%s546] sm:$0xff] %vm408, %v552
      %s554 = scalar_lea.vmem [#allocation4], 8
      %v555 = vld [vmem:[%s554] sm:$0xff]
      %557 = vset.pattern.permute.xlu0 0
      %558 = vperm.xlu0 %557, %v537
      %v559 = vpop.permute.xlu0 %558
      %v561 = vmul.f32 %v559, %v555
      %v562 = vpack.c.bf16 %v545, %v545
      %v564 = vunpack.c.l.b16 %v470
      %v565 = vpack.c.b16 %v564, %v564
      %566 = vrot.lane.b32.xlu0 %v565, 112
      %v567 = vpop.permute.xlu0 %566
      %v569 = vsel %vm386, %v562, 0
      %v572 = vsel %vm421, %v567, 0
      %574 = vmatprep.subr.bf16.mxu0 0
      %575 = vmatpush1.bf16.msra.mxu0 %v572
      %576 = vmatprep.subr.bf16.mxu0 0
      %577 = vmatpush1.bf16.msra.mxu0 0
      %578 = vmatprep.subr.bf16.mxu0 0
      %579 = vmatpush1.bf16.msra.mxu0 0
      %580 = vmatprep.subr.bf16.mxu0 0
      %581 = vmatpush1.bf16.msra.mxu0 0
      %582 = vmatprep.subr.bf16.mxu0 0
      %583 = vmatpush1.bf16.msra.mxu0 0
      %584 = vmatprep.subr.bf16.mxu0 0
      %585 = vmatpush1.bf16.msra.mxu0 0
      %586 = vmatprep.subr.bf16.mxu0 0
      %587 = vmatpush1.bf16.msra.mxu0 0
      %588 = vmatprep.subr.bf16.mxu0 0
      %589 = vmatpush1.bf16.msra.mxu0 0
      %590 = vmatprep.subr.bf16.mxu0 0
      %591 = vmatpush1.bf16.msra.mxu0 0
      %592 = vmatprep.subr.bf16.mxu0 0
      %593 = vmatpush1.bf16.msra.mxu0 0
      %594 = vmatprep.subr.bf16.mxu0 0
      %595 = vmatpush1.bf16.msra.mxu0 0
      %596 = vmatprep.subr.bf16.mxu0 0
      %597 = vmatpush1.bf16.msra.mxu0 0
      %598 = vmatprep.subr.bf16.mxu0 0
      %599 = vmatpush1.bf16.msra.mxu0 0
      %600 = vmatprep.subr.bf16.mxu0 0
      %601 = vmatpush1.bf16.msra.mxu0 0
      %602 = vmatprep.subr.bf16.mxu0 0
      %603 = vmatpush1.bf16.msra.mxu0 0
      %604 = vmatprep.subr.bf16.mxu0 0
      %605 = vmatpush1.bf16.msra.mxu0 0
      %606 = vmatprep.mubr.bf16.mxu0 0
      %607 = vmatmul.mubr.bf16.gmra.mrb[0].mxu0 %v569
      %v608 = vpop.f32.mrb[0].mxu0
      %v609 = vadd.f32 0.0, %v608
      %v610 = vpop.f32.mrb[0].mxu0
      %v611 = vpop.f32.mrb[0].mxu0
      %v612 = vpop.f32.mrb[0].mxu0
      %613 = vdwg.mxu0
      %v614 = vadd.f32 %v561, %v609
      %615 = vst.msk [vmem:[%s554] sm:$0xff] %vm329, %v614
      %616 = vst.msk [vmem:[%s529] sm:$0xff] %vm408, %v534
      // Predicated region
      $region41: #{decoder_layer_forward.24} parent=35 // pred_check
        %p617 = pneg %p313
      $region42: #{decoder_layer_forward.24} parent=35 // pred_check_branch
        %619 = sbr.rel (%p617) target = $region44
      $region43: #{decoder_layer_forward.24} parent=35 // pred_region
        %v620 = vld [vmem:[#allocation3] sm:$0xff]
        %v621 = vrcp.pop %v620
        %v622 = vld [vmem:[#allocation4] sm:$0xff]
        %624 = vset.pattern.permute.xlu0 0
        %625 = vperm.xlu0 %624, %v621
        %v626 = vpop.permute.xlu0 %625
        %v628 = vmul.f32 %v622, %v626
        %v629 = vpack.c.bf16 %v628, %v628
        %vm630 = vcmask 125952
        %631 = vst.msk [vmem:[%s311] sm:$0xf] %vm630, %v629
        %v632 = vld [vmem:[%s546] sm:$0xff]
        %v633 = vrcp.pop %v632
        %v634 = vld [vmem:[%s554] sm:$0xff]
        %636 = vset.pattern.permute.xlu0 0
        %637 = vperm.xlu0 %636, %v633
        %v638 = vpop.permute.xlu0 %637
        %v640 = vmul.f32 %v634, %v638
        %v641 = vpack.c.bf16 %v640, %v640
        %v643 = vunpack.c.l.b16 %v641
        %v644 = vpack.c.b16 %v643, %v643
        %645 = vrot.lane.b32.xlu0 %v644, 16
        %v646 = vpop.permute.xlu0 %645
        %vm648 = vcmask 257152
        %649 = vst.msk [vmem:[%s311] sm:$0xf] %vm648, %v646
      $region44: #{decoder_layer_forward.24} parent=35 // pred_fallthru
        _
      %p650 = scmp.lt.s32.totalorder %s20, 1
      %s651 = scalar_select %p650, %s20, 1
      %p652 = scmp.lt.s32.totalorder %s21, 0
      %s653 = scalar_select %p652, %s21, 0
      %s654 = sadd.s32 %s653, %s651
      %s655 = smul.addr %s654, 4
      %s656 = scalar_lea.vmem %s4, %s655
      // Predicated region
      $region45: #{decoder_layer_forward.24} parent=35 // pred_check
        %p657 = pneg %p166
      $region46: #{decoder_layer_forward.24} parent=35 // pred_check_branch
        %659 = sbr.rel (%p657) target = $region48
      $region47: #{decoder_layer_forward.24} parent=35 // pred_region
        _
      $region48: #{decoder_layer_forward.24} parent=35 // pred_fallthru
        _
    $region36: #{decoder_layer_forward.24} parent=5 // pred_fallthru
      _
    %p660 = scmp.le.s32.totalorder 2, %s10
    // Predicated region
    $region49: #{decoder_layer_forward.24} parent=5 // pred_check
      %p661 = pneg %p660
    $region50: #{decoder_layer_forward.24} parent=5 // pred_check_branch
      %663 = sbr.rel (%p661) target = $region52
    $region51: #{decoder_layer_forward.24} parent=5 // pred_region
      %s664 = ssub.s32 %s10, 2
      // Predicated region
      $region53: #{decoder_layer_forward.24} parent=51 // pred_check
        %p665 = pneg %p172
      $region54: #{decoder_layer_forward.24} parent=51 // pred_check_branch
        %667 = sbr.rel (%p665) target = $region56
      $region55: #{decoder_layer_forward.24} parent=51 // pred_region
        %p668 = scmp.lt.s32.totalorder %s23, 1
        %s669 = scalar_select %p668, %s23, 1
        %p670 = scmp.lt.s32.totalorder %s24, 0
        %s671 = scalar_select %p670, %s24, 0
        %s672 = sadd.s32 %s671, %s669
        %s673 = smul.addr %s672, 4
        %s674 = scalar_lea.vmem %s4, %s673
      $region56: #{decoder_layer_forward.24} parent=51 // pred_fallthru
        _
    $region52: #{decoder_layer_forward.24} parent=5 // pred_fallthru
      _
  $region6: #{decoder_layer_forward.24} parent=0 // loop_footer
    %s14 = sadd.s32 1, %s10
  $region7: #{decoder_layer_forward.24} parent=0 // loop_footer_branch
    %9 = sbr.rel target = $region3
  $region8: #{decoder_layer_forward.24} parent=0 // loop_exit
    _

// kernel: decoder_layer_forward.28
$region0: #{decoder_layer_forward.28}
  #allocation0 [shape = 'u32[]', space=smem, size = 0x4, offset = 0x4, fixed_abs, tag = 'smem constant byte address 0x4 - core index']
  #allocation1 [shape = 'u32[144,128]{1,0:T(1,128)}', space=vmem, size = 0x12000, scoped, tag = 'internal scratch']
  %s0 = inlined_call_operand.vmem [shape: f32[2,18,32], index: 0, kind: input, shape index: {}]
  %s1 = inlined_call_operand.vmem [shape: f32[11,32], index: 1, kind: input, shape index: {}]
  %s2 = inlined_call_operand.vmem [shape: f32[1,32], index: 2, kind: input, shape index: {}]
  %s3 = inlined_call_operand.vmem [shape: bf16[32,64], index: 3, kind: input, shape index: {}]
  %s4 = inlined_call_operand.vmem [shape: f32[1,64], index: 4, kind: input, shape index: {}]
  %s5 = inlined_call_operand.vmem [shape: f32[2,8,64], index: 5, kind: output, shape index: {}]
  %s6 = sld [smem:[#allocation0]]
  $region53: #{decoder_layer_forward.28} parent=0
    _
  %s8 = ssub.s32 1, %s6
  %s9 = scalar_select 0, %s8, %s6
  loop: start=0, step=1, limit=4
  $region2: #{decoder_layer_forward.28} parent=0 // loop_pre_header
    _
  $region3: #{decoder_layer_forward.28} parent=0 // loop_header
    %s11 = sphi 0, %s15
    %p12 = scmp.ge.s32.totalorder %s11, 4
    %s21 = sphi 0, %s23
    %s24 = sphi 0, %s21
    %s25 = sphi 0, %s24
    %s41 = sphi 0, %s25
    %s45 = sphi 0, %s45
    %s47 = sphi 0, %s45
    %s48 = sphi 0, %s47
    %s62 = sphi 0, %s48
    %s66 = sphi 0, %s66
    %s68 = sphi 0, %s66
    %s69 = sphi 0, %s68
    %s83 = sphi 0, %s69
    %s87 = sphi 0, %s87
    %s89 = sphi 0, %s87
    %s90 = sphi 0, %s89
    %s104 = sphi 0, %s90
    %s108 = sphi 0, %s108
    %s110 = sphi 0, %s108
    %s111 = sphi 0, %s110
    %s125 = sphi 0, %s111
    %s131 = sphi 0, %s133
    %s134 = sphi 0, %s131
    %s135 = sphi 0, %s134
    %s151 = sphi 0, %s135
  $region4: #{decoder_layer_forward.28} parent=0 // loop_header_branch
    %14 = sbr.rel (%p12) target = $region8
  $region5: #{decoder_layer_forward.28} parent=0 // loop_body
    %s16 = ssub.s32 %s11, 1
    %s17 = ssub.s32 %s11, 2
    %s18 = sadd.s32 %s11, 1
    %s19 = ssub.s32 %s11, %s18
    %p20 = scmp.eq.s32.totalorder %s19, 0
    %s22 = sadd.s32 %s21, 1
    %s23 = scalar_select %p20, %s21, %s22
    %p26 = pneg %p20
    %p27 = scmp.eq.s32.totalorder %s11, 1
    %p28 = por %p26, %p27
    %p29 = scmp.ne.s32.totalorder %s21, %s24
    %p30 = scmp.eq.s32.totalorder %s11, 0
    %p31 = por %p29, %p30
    %p32 = scmp.ne.s32.totalorder %s21, %s24
    %p33 = scmp.eq.s32.totalorder %s16, 1
    %p34 = por %p32, %p33
    %p35 = scmp.ne.s32.totalorder %s24, %s25
    %p36 = scmp.eq.s32.totalorder %s16, 0
    %p37 = por %p35, %p36
    %p38 = scmp.ne.s32.totalorder %s24, %s25
    %p39 = scmp.eq.s32.totalorder %s17, 1
    %p40 = por %p38, %p39
    %p42 = scmp.ne.s32.totalorder %s25, %s41
    %p43 = scmp.eq.s32.totalorder %s17, 0
    %p44 = por %p42, %p43
    %s46 = sadd.s32 %s45, 1
    %p49 = scmp.eq.s32.totalorder %s11, 1
    %p50 = scmp.ne.s32.totalorder %s45, %s47
    %p51 = scmp.eq.s32.totalorder %s11, 0
    %p52 = por %p50, %p51
    %p53 = scmp.ne.s32.totalorder %s45, %s47
    %p54 = scmp.eq.s32.totalorder %s16, 1
    %p55 = por %p53, %p54
    %p56 = scmp.ne.s32.totalorder %s47, %s48
    %p57 = scmp.eq.s32.totalorder %s16, 0
    %p58 = por %p56, %p57
    %p59 = scmp.ne.s32.totalorder %s47, %s48
    %p60 = scmp.eq.s32.totalorder %s17, 1
    %p61 = por %p59, %p60
    %p63 = scmp.ne.s32.totalorder %s48, %s62
    %p64 = scmp.eq.s32.totalorder %s17, 0
    %p65 = por %p63, %p64
    %s67 = sadd.s32 %s66, 1
    %p70 = scmp.eq.s32.totalorder %s11, 1
    %p71 = scmp.ne.s32.totalorder %s66, %s68
    %p72 = scmp.eq.s32.totalorder %s11, 0
    %p73 = por %p71, %p72
    %p74 = scmp.ne.s32.totalorder %s66, %s68
    %p75 = scmp.eq.s32.totalorder %s16, 1
    %p76 = por %p74, %p75
    %p77 = scmp.ne.s32.totalorder %s68, %s69
    %p78 = scmp.eq.s32.totalorder %s16, 0
    %p79 = por %p77, %p78
    %p80 = scmp.ne.s32.totalorder %s68, %s69
    %p81 = scmp.eq.s32.totalorder %s17, 1
    %p82 = por %p80, %p81
    %p84 = scmp.ne.s32.totalorder %s69, %s83
    %p85 = scmp.eq.s32.totalorder %s17, 0
    %p86 = por %p84, %p85
    %s88 = sadd.s32 %s87, 1
    %p91 = scmp.eq.s32.totalorder %s11, 1
    %p92 = scmp.ne.s32.totalorder %s87, %s89
    %p93 = scmp.eq.s32.totalorder %s11, 0
    %p94 = por %p92, %p93
    %p95 = scmp.ne.s32.totalorder %s87, %s89
    %p96 = scmp.eq.s32.totalorder %s16, 1
    %p97 = por %p95, %p96
    %p98 = scmp.ne.s32.totalorder %s89, %s90
    %p99 = scmp.eq.s32.totalorder %s16, 0
    %p100 = por %p98, %p99
    %p101 = scmp.ne.s32.totalorder %s89, %s90
    %p102 = scmp.eq.s32.totalorder %s17, 1
    %p103 = por %p101, %p102
    %p105 = scmp.ne.s32.totalorder %s90, %s104
    %p106 = scmp.eq.s32.totalorder %s17, 0
    %p107 = por %p105, %p106
    %s109 = sadd.s32 %s108, 1
    %p112 = scmp.eq.s32.totalorder %s11, 1
    %p113 = scmp.ne.s32.totalorder %s108, %s110
    %p114 = scmp.eq.s32.totalorder %s11, 0
    %p115 = por %p113, %p114
    %p116 = scmp.ne.s32.totalorder %s108, %s110
    %p117 = scmp.eq.s32.totalorder %s16, 1
    %p118 = por %p116, %p117
    %p119 = scmp.ne.s32.totalorder %s110, %s111
    %p120 = scmp.eq.s32.totalorder %s16, 0
    %p121 = por %p119, %p120
    %p122 = scmp.ne.s32.totalorder %s110, %s111
    %p123 = scmp.eq.s32.totalorder %s17, 1
    %p124 = por %p122, %p123
    %p126 = scmp.ne.s32.totalorder %s111, %s125
    %p127 = scmp.eq.s32.totalorder %s17, 0
    %p128 = por %p126, %p127
    %s129 = ssub.s32 %s11, %s18
    %p130 = scmp.eq.s32.totalorder %s129, 0
    %s132 = sadd.s32 %s131, 1
    %s133 = scalar_select %p130, %s131, %s132
    %p136 = pneg %p130
    %p137 = scmp.eq.s32.totalorder %s11, 1
    %p138 = por %p136, %p137
    %p139 = scmp.ne.s32.totalorder %s131, %s134
    %p140 = scmp.eq.s32.totalorder %s11, 0
    %p141 = por %p139, %p140
    %p142 = scmp.ne.s32.totalorder %s131, %s134
    %p143 = scmp.eq.s32.totalorder %s16, 1
    %p144 = por %p142, %p143
    %p145 = scmp.ne.s32.totalorder %s134, %s135
    %p146 = scmp.eq.s32.totalorder %s16, 0
    %p147 = por %p145, %p146
    %p148 = scmp.ne.s32.totalorder %s134, %s135
    %p149 = scmp.eq.s32.totalorder %s17, 1
    %p150 = por %p148, %p149
    %p152 = scmp.ne.s32.totalorder %s135, %s151
    %p153 = scmp.eq.s32.totalorder %s17, 0
    %p154 = por %p152, %p153
    %p155 = scmp.le.s32.totalorder 1, %s11
    %p156 = scmp.lt.s32.totalorder %s11, 3
    %p157 = pnand %p155, %p156
    %p158 = pneg %p157
    // Predicated region
    $region9: #{decoder_layer_forward.28} parent=5 // pred_check
      _
    $region10: #{decoder_layer_forward.28} parent=5 // pred_check_branch
      %160 = sbr.rel (%p157) target = $region12
    $region11: #{decoder_layer_forward.28} parent=5 // pred_region
      %s161 = ssub.s32 %s11, 1
      // Predicated region
      $region13: #{decoder_layer_forward.28} parent=11 // pred_check
        %p162 = pneg %p58
      $region14: #{decoder_layer_forward.28} parent=11 // pred_check_branch
        %164 = sbr.rel (%p162) target = $region16
      $region15: #{decoder_layer_forward.28} parent=11 // pred_region
        _
      $region16: #{decoder_layer_forward.28} parent=11 // pred_fallthru
        _
      // Predicated region
      $region17: #{decoder_layer_forward.28} parent=11 // pred_check
        %p165 = pneg %p79
      $region18: #{decoder_layer_forward.28} parent=11 // pred_check_branch
        %167 = sbr.rel (%p165) target = $region20
      $region19: #{decoder_layer_forward.28} parent=11 // pred_region
        _
      $region20: #{decoder_layer_forward.28} parent=11 // pred_fallthru
        _
      // Predicated region
      $region21: #{decoder_layer_forward.28} parent=11 // pred_check
        %p168 = pneg %p100
      $region22: #{decoder_layer_forward.28} parent=11 // pred_check_branch
        %170 = sbr.rel (%p168) target = $region24
      $region23: #{decoder_layer_forward.28} parent=11 // pred_region
        _
      $region24: #{decoder_layer_forward.28} parent=11 // pred_fallthru
        _
      // Predicated region
      $region25: #{decoder_layer_forward.28} parent=11 // pred_check
        %p171 = pneg %p121
      $region26: #{decoder_layer_forward.28} parent=11 // pred_check_branch
        %173 = sbr.rel (%p171) target = $region28
      $region27: #{decoder_layer_forward.28} parent=11 // pred_region
        _
      $region28: #{decoder_layer_forward.28} parent=11 // pred_fallthru
        _
    $region12: #{decoder_layer_forward.28} parent=5 // pred_fallthru
      _
    %p174 = scmp.lt.s32.totalorder %s11, 2
    // Predicated region
    $region29: #{decoder_layer_forward.28} parent=5 // pred_check
      %p175 = pneg %p174
    $region30: #{decoder_layer_forward.28} parent=5 // pred_check_branch
      %177 = sbr.rel (%p175) target = $region32
    $region31: #{decoder_layer_forward.28} parent=5 // pred_region
      // Predicated region
      $region33: #{decoder_layer_forward.28} parent=31 // pred_check
        %p178 = pneg %p31
      $region34: #{decoder_layer_forward.28} parent=31 // pred_check_branch
        %180 = sbr.rel (%p178) target = $region36
      $region35: #{decoder_layer_forward.28} parent=31 // pred_region
        %p181 = scmp.lt.s32.totalorder %s11, 1
        %s182 = scalar_select %p181, %s11, 1
        %s183 = smul.addr %s182, 3
        %s184 = smul.addr %s183, 8
        %s185 = scalar_lea.vmem %s0, %s184
      $region36: #{decoder_layer_forward.28} parent=31 // pred_fallthru
        _
    $region32: #{decoder_layer_forward.28} parent=5 // pred_fallthru
      _
    %p186 = scmp.le.s32.totalorder 1, %s11
    %p187 = scmp.lt.s32.totalorder %s11, 3
    %p188 = pnand %p186, %p187
    %p189 = pneg %p188
    // Predicated region
    $region37: #{decoder_layer_forward.28} parent=5 // pred_check
      _
    $region38: #{decoder_layer_forward.28} parent=5 // pred_check_branch
      %191 = sbr.rel (%p188) target = $region40
    $region39: #{decoder_layer_forward.28} parent=5 // pred_region
      %s192 = ssub.s32 %s11, 1
      %p193 = scmp.lt.s32.totalorder %s16, 1
      %s194 = scalar_select %p193, %s16, 1
      %s195 = smul.addr %s194, 3
      %s196 = smul.addr %s195, 8
      %s197 = scalar_lea.vmem %s0, %s196
      %p198 = pneg %p37
      %p199 = pneg %p34
      %p200 = pneg %p58
      %p201 = pneg %p55
      %p202 = pneg %p79
      %p203 = pneg %p76
      %p204 = pneg %p100
      %p205 = pneg %p97
      %p206 = pneg %p121
      %p207 = pneg %p118
      %p208 = pneg %p147
      %p209 = pneg %p144
      %p210 = scmp.lt.s32.totalorder %s16, 1
      %s211 = scalar_select %p210, %s16, 1
      %s212 = smul.addr %s211, 8
      %s213 = scalar_lea.vmem %s5, %s212
      %p214 = scmp.lt.s32.totalorder %s16, 1
      %s215 = scalar_select %p214, %s16, 1
      %s216 = smul.addr %s215, 3
      %s217 = smul.addr %s216, 8
      %s218 = scalar_lea.vmem %s0, %s217
      %p219 = scmp.lt.s32.totalorder %s16, 1
      %s220 = scalar_select %p219, %s16, 1
      %s221 = smul.addr %s220, 8
      %s222 = scalar_lea.vmem %s5, %s221
      %v224 = vld [vmem:[%s218] sm:$0xff]
      %v225 = vld [vmem:[%s218 + $0x8] sm:$0xff]
      %v226 = vld [vmem:[%s218 + $0x10] sm:$0x3]
      %v227 = vld [vmem:[%s1] sm:$0x1]
      %v228 = vlaneseq
      %v229 = vshrl.u32 %v228, 7
      %v230 = vsub.s32 0, %v229
      %v231 = vrot.slane %v227, %v230
      %v232 = vmul.f32 %v224, %v231
      %v233 = vld [vmem:[%s1 + $0x1] sm:$0x1]
      %v234 = vlaneseq
      %v235 = vshrl.u32 %v234, 7
      %v236 = vsub.s32 0, %v235
      %v237 = vrot.slane %v233, %v236
      %v238 = vmul.f32 %v224, %v237
      %v239 = vmul.f32 %v225, %v237
      %vm242 = vcmask 1046528
      %v243 = vrot.slane %v238, 1
      %v244 = vrot.slane %v239, 1
      %v245 = vsel %vm242, %v243, %v244
      %v247 = vadd.f32 %v232, %v245
      %v248 = vld [vmem:[%s1 + $0x2] sm:$0x1]
      %v249 = vlaneseq
      %v250 = vshrl.u32 %v249, 7
      %v251 = vsub.s32 0, %v250
      %v252 = vrot.slane %v248, %v251
      %v253 = vmul.f32 %v224, %v252
      %v254 = vmul.f32 %v225, %v252
      %vm257 = vcmask 1045504
      %v258 = vrot.slane %v253, 2
      %v259 = vrot.slane %v254, 2
      %v260 = vsel %vm257, %v258, %v259
      %v262 = vadd.f32 %v247, %v260
      %v263 = vld [vmem:[%s1 + $0x3] sm:$0x1]
      %v264 = vlaneseq
      %v265 = vshrl.u32 %v264, 7
      %v266 = vsub.s32 0, %v265
      %v267 = vrot.slane %v263, %v266
      %v268 = vmul.f32 %v224, %v267
      %v269 = vmul.f32 %v225, %v267
      %vm272 = vcmask 1044480
      %v273 = vrot.slane %v268, 3
      %v274 = vrot.slane %v269, 3
      %v275 = vsel %vm272, %v273, %v274
      %v277 = vadd.f32 %v262, %v275
      %v278 = vld [vmem:[%s1 + $0x4] sm:$0x1]
      %v279 = vlaneseq
      %v280 = vshrl.u32 %v279, 7
      %v281 = vsub.s32 0, %v280
      %v282 = vrot.slane %v278, %v281
      %v283 = vmul.f32 %v224, %v282
      %v284 = vmul.f32 %v225, %v282
      %vm287 = vcmask 1043456
      %v288 = vrot.slane %v283, 4
      %v289 = vrot.slane %v284, 4
      %v290 = vsel %vm287, %v288, %v289
      %v292 = vadd.f32 %v277, %v290
      %v293 = vld [vmem:[%s1 + $0x5] sm:$0x1]
      %v294 = vlaneseq
      %v295 = vshrl.u32 %v294, 7
      %v296 = vsub.s32 0, %v295
      %v297 = vrot.slane %v293, %v296
      %v298 = vmul.f32 %v224, %v297
      %v299 = vmul.f32 %v225, %v297
      %vm302 = vcmask 1042432
      %v303 = vrot.slane %v298, 5
      %v304 = vrot.slane %v299, 5
      %v305 = vsel %vm302, %v303, %v304
      %v307 = vadd.f32 %v292, %v305
      %v308 = vld [vmem:[%s1 + $0x6] sm:$0x1]
      %v309 = vlaneseq
      %v310 = vshrl.u32 %v309, 7
      %v311 = vsub.s32 0, %v310
      %v312 = vrot.slane %v308, %v311
      %v313 = vmul.f32 %v224, %v312
      %v314 = vmul.f32 %v225, %v312
      %vm317 = vcmask 1041408
      %v318 = vrot.slane %v313, 6
      %v319 = vrot.slane %v314, 6
      %v320 = vsel %vm317, %v318, %v319
      %v322 = vadd.f32 %v307, %v320
      %v323 = vld [vmem:[%s1 + $0x7] sm:$0x1]
      %v324 = vlaneseq
      %v325 = vshrl.u32 %v324, 7
      %v326 = vsub.s32 0, %v325
      %v327 = vrot.slane %v323, %v326
      %v328 = vmul.f32 %v224, %v327
      %v329 = vmul.f32 %v225, %v327
      %vm332 = vcmask 1040384
      %v333 = vrot.slane %v328, 7
      %v334 = vrot.slane %v329, 7
      %v335 = vsel %vm332, %v333, %v334
      %v337 = vadd.f32 %v322, %v335
      %v338 = vld [vmem:[%s1 + $0x8] sm:$0x1]
      %v339 = vlaneseq
      %v340 = vshrl.u32 %v339, 7
      %v341 = vsub.s32 0, %v340
      %v342 = vrot.slane %v338, %v341
      %v343 = vmul.f32 %v225, %v342
      %v344 = vadd.f32 %v337, %v343
      %v345 = vld [vmem:[%s1 + $0x9] sm:$0x1]
      %v346 = vlaneseq
      %v347 = vshrl.u32 %v346, 7
      %v348 = vsub.s32 0, %v347
      %v349 = vrot.slane %v345, %v348
      %v350 = vmul.f32 %v225, %v349
      %v351 = vmul.f32 %v226, %v349
      %v354 = vrot.slane %v350, 1
      %v355 = vrot.slane %v351, 1
      %v356 = vsel %vm242, %v354, %v355
      %v358 = vadd.f32 %v344, %v356
      %v359 = vld [vmem:[%s1 + $0xa] sm:$0x1]
      %v360 = vlaneseq
      %v361 = vshrl.u32 %v360, 7
      %v362 = vsub.s32 0, %v361
      %v363 = vrot.slane %v359, %v362
      %v364 = vmul.f32 %v225, %v363
      %v365 = vmul.f32 %v226, %v363
      %v368 = vrot.slane %v364, 2
      %v369 = vrot.slane %v365, 2
      %v370 = vsel %vm257, %v368, %v369
      %v372 = vadd.f32 %v358, %v370
      %v373 = vld [vmem:[%s2] sm:$0x1]
      %v375 = vlaneseq
      %v376 = vshrl.u32 %v375, 7
      %v377 = vsub.s32 0, %v376
      %v378 = vrot.slane %v373, %v377
      %v380 = vadd.f32 %v372, %v378
      %v381 = vpack.c.bf16 %v380, %v380
      %v382 = vld [vmem:[%s3] sm:$0xf]
      %v383 = vld [vmem:[%s3 + $0x4] sm:$0xf]
      %v384 = vld [vmem:[%s3 + $0x8] sm:$0xf]
      %v385 = vld [vmem:[%s3 + $0xc] sm:$0xf]
      %v386 = vld [vmem:[%s4] sm:$0x1]
      %v388 = vlaneseq
      %v389 = vshrl.u32 %v388, 7
      %v390 = vsub.s32 0, %v389
      %v391 = vrot.slane %v386, %v390
      %v397 = vunpack.c.l.b16 %v382
      %v398 = vunpack.c.l.b16 %v383
      %v399 = vunpack.c.l.b16 %v384
      %v400 = vunpack.c.l.b16 %v385
      %v401 = vpack.c.b16 %v398, %v397
      %v402 = vpack.c.b16 %v400, %v399
      %vm405 = vcmask 261120
      %v407 = vsel %vm405, %v381, 0
      %409 = vmatprep.subr.bf16.mxu0 0
      %410 = vmatpush1.bf16.msra.mxu0 %v401
      %411 = vmatprep.subr.bf16.mxu0 0
      %412 = vmatpush1.bf16.msra.mxu0 %v402
      %413 = vmatprep.subr.bf16.mxu0 0
      %414 = vmatpush1.bf16.msra.mxu0 0
      %415 = vmatprep.subr.bf16.mxu0 0
      %416 = vmatpush1.bf16.msra.mxu0 0
      %417 = vmatprep.subr.bf16.mxu0 0
      %418 = vmatpush1.bf16.msra.mxu0 0
      %419 = vmatprep.subr.bf16.mxu0 0
      %420 = vmatpush1.bf16.msra.mxu0 0
      %421 = vmatprep.subr.bf16.mxu0 0
      %422 = vmatpush1.bf16.msra.mxu0 0
      %423 = vmatprep.subr.bf16.mxu0 0
      %424 = vmatpush1.bf16.msra.mxu0 0
      %425 = vmatprep.subr.bf16.mxu0 0
      %426 = vmatpush1.bf16.msra.mxu0 0
      %427 = vmatprep.subr.bf16.mxu0 0
      %428 = vmatpush1.bf16.msra.mxu0 0
      %429 = vmatprep.subr.bf16.mxu0 0
      %430 = vmatpush1.bf16.msra.mxu0 0
      %431 = vmatprep.subr.bf16.mxu0 0
      %432 = vmatpush1.bf16.msra.mxu0 0
      %433 = vmatprep.subr.bf16.mxu0 0
      %434 = vmatpush1.bf16.msra.mxu0 0
      %435 = vmatprep.subr.bf16.mxu0 0
      %436 = vmatpush1.bf16.msra.mxu0 0
      %437 = vmatprep.subr.bf16.mxu0 0
      %438 = vmatpush1.bf16.msra.mxu0 0
      %439 = vmatprep.subr.bf16.mxu0 0
      %440 = vmatpush1.bf16.msra.mxu0 0
      %441 = vmatprep.mubr.bf16.mxu0 0
      %442 = vmatmul.mubr.bf16.gmra.mrb[0].mxu0 %v407
      %v443 = vpop.f32.mrb[0].mxu0
      %v444 = vadd.f32 %v391, %v443
      %v445 = vpop.f32.mrb[0].mxu0
      %v446 = vpop.f32.mrb[0].mxu0
      %v447 = vpop.f32.mrb[0].mxu0
      %448 = vdwg.mxu0
      %v449 = vmax.f32 %v444, 0.0
      %vm450 = vcmask 523264
      %451 = vst.msk [vmem:[%s222] sm:$0xff] %vm450, %v449
      %p452 = scmp.lt.s32.totalorder %s16, 1
      %s453 = scalar_select %p452, %s16, 1
      %s454 = smul.addr %s453, 8
      %s455 = scalar_lea.vmem %s5, %s454
      // Predicated region
      $region41: #{decoder_layer_forward.28} parent=39 // pred_check
        %p456 = pneg %p144
      $region42: #{decoder_layer_forward.28} parent=39 // pred_check_branch
        %458 = sbr.rel (%p456) target = $region44
      $region43: #{decoder_layer_forward.28} parent=39 // pred_region
        _
      $region44: #{decoder_layer_forward.28} parent=39 // pred_fallthru
        _
    $region40: #{decoder_layer_forward.28} parent=5 // pred_fallthru
      _
    %p459 = scmp.le.s32.totalorder 2, %s11
    // Predicated region
    $region45: #{decoder_layer_forward.28} parent=5 // pred_check
      %p460 = pneg %p459
    $region46: #{decoder_layer_forward.28} parent=5 // pred_check_branch
      %462 = sbr.rel (%p460) target = $region48
    $region47: #{decoder_layer_forward.28} parent=5 // pred_region
      %s463 = ssub.s32 %s11, 2
      // Predicated region
      $region49: #{decoder_layer_forward.28} parent=47 // pred_check
        %p464 = pneg %p150
      $region50: #{decoder_layer_forward.28} parent=47 // pred_check_branch
        %466 = sbr.rel (%p464) target = $region52
      $region51: #{decoder_layer_forward.28} parent=47 // pred_region
        %p467 = scmp.lt.s32.totalorder %s17, 1
        %s468 = scalar_select %p467, %s17, 1
        %s469 = smul.addr %s468, 8
        %s470 = scalar_lea.vmem %s5, %s469
      $region52: #{decoder_layer_forward.28} parent=47 // pred_fallthru
        _
    $region48: #{decoder_layer_forward.28} parent=5 // pred_fallthru
      _
  $region6: #{decoder_layer_forward.28} parent=0 // loop_footer
    %s15 = sadd.s32 1, %s11
  $region7: #{decoder_layer_forward.28} parent=0 // loop_footer_branch
    %10 = sbr.rel target = $region3
  $region8: #{decoder_layer_forward.28} parent=0 // loop_exit
    _

// kernel: decoder_layer_forward.29
$region0: #{decoder_layer_forward.29}
  #allocation0 [shape = 'u32[]', space=smem, size = 0x4, offset = 0x4, fixed_abs, tag = 'smem constant byte address 0x4 - core index']
  #allocation1 [shape = 'u32[144,128]{1,0:T(1,128)}', space=vmem, size = 0x12000, scoped, tag = 'internal scratch']
  %s0 = inlined_call_operand.vmem [shape: f32[2,14,32], index: 0, kind: input, shape index: {}]
  %s1 = inlined_call_operand.vmem [shape: f32[7,32], index: 1, kind: input, shape index: {}]
  %s2 = inlined_call_operand.vmem [shape: f32[1,32], index: 2, kind: input, shape index: {}]
  %s3 = inlined_call_operand.vmem [shape: bf16[32,16], index: 3, kind: input, shape index: {}]
  %s4 = inlined_call_operand.vmem [shape: f32[1,16], index: 4, kind: input, shape index: {}]
  %s5 = inlined_call_operand.vmem [shape: f32[2,8,16], index: 5, kind: output, shape index: {}]
  %s6 = sld [smem:[#allocation0]]
  $region53: #{decoder_layer_forward.29} parent=0
    _
  %s8 = ssub.s32 1, %s6
  %s9 = scalar_select 0, %s8, %s6
  loop: start=0, step=1, limit=4
  $region2: #{decoder_layer_forward.29} parent=0 // loop_pre_header
    _
  $region3: #{decoder_layer_forward.29} parent=0 // loop_header
    %s11 = sphi 0, %s15
    %p12 = scmp.ge.s32.totalorder %s11, 4
    %s21 = sphi 0, %s23
    %s24 = sphi 0, %s21
    %s25 = sphi 0, %s24
    %s41 = sphi 0, %s25
    %s45 = sphi 0, %s45
    %s47 = sphi 0, %s45
    %s48 = sphi 0, %s47
    %s62 = sphi 0, %s48
    %s66 = sphi 0, %s66
    %s68 = sphi 0, %s66
    %s69 = sphi 0, %s68
    %s83 = sphi 0, %s69
    %s87 = sphi 0, %s87
    %s89 = sphi 0, %s87
    %s90 = sphi 0, %s89
    %s104 = sphi 0, %s90
    %s108 = sphi 0, %s108
    %s110 = sphi 0, %s108
    %s111 = sphi 0, %s110
    %s125 = sphi 0, %s111
    %s131 = sphi 0, %s133
    %s134 = sphi 0, %s131
    %s135 = sphi 0, %s134
    %s151 = sphi 0, %s135
  $region4: #{decoder_layer_forward.29} parent=0 // loop_header_branch
    %14 = sbr.rel (%p12) target = $region8
  $region5: #{decoder_layer_forward.29} parent=0 // loop_body
    %s16 = ssub.s32 %s11, 1
    %s17 = ssub.s32 %s11, 2
    %s18 = sadd.s32 %s11, 1
    %s19 = ssub.s32 %s11, %s18
    %p20 = scmp.eq.s32.totalorder %s19, 0
    %s22 = sadd.s32 %s21, 1
    %s23 = scalar_select %p20, %s21, %s22
    %p26 = pneg %p20
    %p27 = scmp.eq.s32.totalorder %s11, 1
    %p28 = por %p26, %p27
    %p29 = scmp.ne.s32.totalorder %s21, %s24
    %p30 = scmp.eq.s32.totalorder %s11, 0
    %p31 = por %p29, %p30
    %p32 = scmp.ne.s32.totalorder %s21, %s24
    %p33 = scmp.eq.s32.totalorder %s16, 1
    %p34 = por %p32, %p33
    %p35 = scmp.ne.s32.totalorder %s24, %s25
    %p36 = scmp.eq.s32.totalorder %s16, 0
    %p37 = por %p35, %p36
    %p38 = scmp.ne.s32.totalorder %s24, %s25
    %p39 = scmp.eq.s32.totalorder %s17, 1
    %p40 = por %p38, %p39
    %p42 = scmp.ne.s32.totalorder %s25, %s41
    %p43 = scmp.eq.s32.totalorder %s17, 0
    %p44 = por %p42, %p43
    %s46 = sadd.s32 %s45, 1
    %p49 = scmp.eq.s32.totalorder %s11, 1
    %p50 = scmp.ne.s32.totalorder %s45, %s47
    %p51 = scmp.eq.s32.totalorder %s11, 0
    %p52 = por %p50, %p51
    %p53 = scmp.ne.s32.totalorder %s45, %s47
    %p54 = scmp.eq.s32.totalorder %s16, 1
    %p55 = por %p53, %p54
    %p56 = scmp.ne.s32.totalorder %s47, %s48
    %p57 = scmp.eq.s32.totalorder %s16, 0
    %p58 = por %p56, %p57
    %p59 = scmp.ne.s32.totalorder %s47, %s48
    %p60 = scmp.eq.s32.totalorder %s17, 1
    %p61 = por %p59, %p60
    %p63 = scmp.ne.s32.totalorder %s48, %s62
    %p64 = scmp.eq.s32.totalorder %s17, 0
    %p65 = por %p63, %p64
    %s67 = sadd.s32 %s66, 1
    %p70 = scmp.eq.s32.totalorder %s11, 1
    %p71 = scmp.ne.s32.totalorder %s66, %s68
    %p72 = scmp.eq.s32.totalorder %s11, 0
    %p73 = por %p71, %p72
    %p74 = scmp.ne.s32.totalorder %s66, %s68
    %p75 = scmp.eq.s32.totalorder %s16, 1
    %p76 = por %p74, %p75
    %p77 = scmp.ne.s32.totalorder %s68, %s69
    %p78 = scmp.eq.s32.totalorder %s16, 0
    %p79 = por %p77, %p78
    %p80 = scmp.ne.s32.totalorder %s68, %s69
    %p81 = scmp.eq.s32.totalorder %s17, 1
    %p82 = por %p80, %p81
    %p84 = scmp.ne.s32.totalorder %s69, %s83
    %p85 = scmp.eq.s32.totalorder %s17, 0
    %p86 = por %p84, %p85
    %s88 = sadd.s32 %s87, 1
    %p91 = scmp.eq.s32.totalorder %s11, 1
    %p92 = scmp.ne.s32.totalorder %s87, %s89
    %p93 = scmp.eq.s32.totalorder %s11, 0
    %p94 = por %p92, %p93
    %p95 = scmp.ne.s32.totalorder %s87, %s89
    %p96 = scmp.eq.s32.totalorder %s16, 1
    %p97 = por %p95, %p96
    %p98 = scmp.ne.s32.totalorder %s89, %s90
    %p99 = scmp.eq.s32.totalorder %s16, 0
    %p100 = por %p98, %p99
    %p101 = scmp.ne.s32.totalorder %s89, %s90
    %p102 = scmp.eq.s32.totalorder %s17, 1
    %p103 = por %p101, %p102
    %p105 = scmp.ne.s32.totalorder %s90, %s104
    %p106 = scmp.eq.s32.totalorder %s17, 0
    %p107 = por %p105, %p106
    %s109 = sadd.s32 %s108, 1
    %p112 = scmp.eq.s32.totalorder %s11, 1
    %p113 = scmp.ne.s32.totalorder %s108, %s110
    %p114 = scmp.eq.s32.totalorder %s11, 0
    %p115 = por %p113, %p114
    %p116 = scmp.ne.s32.totalorder %s108, %s110
    %p117 = scmp.eq.s32.totalorder %s16, 1
    %p118 = por %p116, %p117
    %p119 = scmp.ne.s32.totalorder %s110, %s111
    %p120 = scmp.eq.s32.totalorder %s16, 0
    %p121 = por %p119, %p120
    %p122 = scmp.ne.s32.totalorder %s110, %s111
    %p123 = scmp.eq.s32.totalorder %s17, 1
    %p124 = por %p122, %p123
    %p126 = scmp.ne.s32.totalorder %s111, %s125
    %p127 = scmp.eq.s32.totalorder %s17, 0
    %p128 = por %p126, %p127
    %s129 = ssub.s32 %s11, %s18
    %p130 = scmp.eq.s32.totalorder %s129, 0
    %s132 = sadd.s32 %s131, 1
    %s133 = scalar_select %p130, %s131, %s132
    %p136 = pneg %p130
    %p137 = scmp.eq.s32.totalorder %s11, 1
    %p138 = por %p136, %p137
    %p139 = scmp.ne.s32.totalorder %s131, %s134
    %p140 = scmp.eq.s32.totalorder %s11, 0
    %p141 = por %p139, %p140
    %p142 = scmp.ne.s32.totalorder %s131, %s134
    %p143 = scmp.eq.s32.totalorder %s16, 1
    %p144 = por %p142, %p143
    %p145 = scmp.ne.s32.totalorder %s134, %s135
    %p146 = scmp.eq.s32.totalorder %s16, 0
    %p147 = por %p145, %p146
    %p148 = scmp.ne.s32.totalorder %s134, %s135
    %p149 = scmp.eq.s32.totalorder %s17, 1
    %p150 = por %p148, %p149
    %p152 = scmp.ne.s32.totalorder %s135, %s151
    %p153 = scmp.eq.s32.totalorder %s17, 0
    %p154 = por %p152, %p153
    %p155 = scmp.le.s32.totalorder 1, %s11
    %p156 = scmp.lt.s32.totalorder %s11, 3
    %p157 = pnand %p155, %p156
    %p158 = pneg %p157
    // Predicated region
    $region9: #{decoder_layer_forward.29} parent=5 // pred_check
      _
    $region10: #{decoder_layer_forward.29} parent=5 // pred_check_branch
      %160 = sbr.rel (%p157) target = $region12
    $region11: #{decoder_layer_forward.29} parent=5 // pred_region
      %s161 = ssub.s32 %s11, 1
      // Predicated region
      $region13: #{decoder_layer_forward.29} parent=11 // pred_check
        %p162 = pneg %p58
      $region14: #{decoder_layer_forward.29} parent=11 // pred_check_branch
        %164 = sbr.rel (%p162) target = $region16
      $region15: #{decoder_layer_forward.29} parent=11 // pred_region
        _
      $region16: #{decoder_layer_forward.29} parent=11 // pred_fallthru
        _
      // Predicated region
      $region17: #{decoder_layer_forward.29} parent=11 // pred_check
        %p165 = pneg %p79
      $region18: #{decoder_layer_forward.29} parent=11 // pred_check_branch
        %167 = sbr.rel (%p165) target = $region20
      $region19: #{decoder_layer_forward.29} parent=11 // pred_region
        _
      $region20: #{decoder_layer_forward.29} parent=11 // pred_fallthru
        _
      // Predicated region
      $region21: #{decoder_layer_forward.29} parent=11 // pred_check
        %p168 = pneg %p100
      $region22: #{decoder_layer_forward.29} parent=11 // pred_check_branch
        %170 = sbr.rel (%p168) target = $region24
      $region23: #{decoder_layer_forward.29} parent=11 // pred_region
        _
      $region24: #{decoder_layer_forward.29} parent=11 // pred_fallthru
        _
      // Predicated region
      $region25: #{decoder_layer_forward.29} parent=11 // pred_check
        %p171 = pneg %p121
      $region26: #{decoder_layer_forward.29} parent=11 // pred_check_branch
        %173 = sbr.rel (%p171) target = $region28
      $region27: #{decoder_layer_forward.29} parent=11 // pred_region
        _
      $region28: #{decoder_layer_forward.29} parent=11 // pred_fallthru
        _
    $region12: #{decoder_layer_forward.29} parent=5 // pred_fallthru
      _
    %p174 = scmp.lt.s32.totalorder %s11, 2
    // Predicated region
    $region29: #{decoder_layer_forward.29} parent=5 // pred_check
      %p175 = pneg %p174
    $region30: #{decoder_layer_forward.29} parent=5 // pred_check_branch
      %177 = sbr.rel (%p175) target = $region32
    $region31: #{decoder_layer_forward.29} parent=5 // pred_region
      // Predicated region
      $region33: #{decoder_layer_forward.29} parent=31 // pred_check
        %p178 = pneg %p31
      $region34: #{decoder_layer_forward.29} parent=31 // pred_check_branch
        %180 = sbr.rel (%p178) target = $region36
      $region35: #{decoder_layer_forward.29} parent=31 // pred_region
        %p181 = scmp.lt.s32.totalorder %s11, 1
        %s182 = scalar_select %p181, %s11, 1
        %s183 = smul.addr %s182, 2
        %s184 = smul.addr %s183, 8
        %s185 = scalar_lea.vmem %s0, %s184
      $region36: #{decoder_layer_forward.29} parent=31 // pred_fallthru
        _
    $region32: #{decoder_layer_forward.29} parent=5 // pred_fallthru
      _
    %p186 = scmp.le.s32.totalorder 1, %s11
    %p187 = scmp.lt.s32.totalorder %s11, 3
    %p188 = pnand %p186, %p187
    %p189 = pneg %p188
    // Predicated region
    $region37: #{decoder_layer_forward.29} parent=5 // pred_check
      _
    $region38: #{decoder_layer_forward.29} parent=5 // pred_check_branch
      %191 = sbr.rel (%p188) target = $region40
    $region39: #{decoder_layer_forward.29} parent=5 // pred_region
      %s192 = ssub.s32 %s11, 1
      %p193 = scmp.lt.s32.totalorder %s16, 1
      %s194 = scalar_select %p193, %s16, 1
      %s195 = smul.addr %s194, 2
      %s196 = smul.addr %s195, 8
      %s197 = scalar_lea.vmem %s0, %s196
      %p198 = pneg %p37
      %p199 = pneg %p34
      %p200 = pneg %p58
      %p201 = pneg %p55
      %p202 = pneg %p79
      %p203 = pneg %p76
      %p204 = pneg %p100
      %p205 = pneg %p97
      %p206 = pneg %p121
      %p207 = pneg %p118
      %p208 = pneg %p147
      %p209 = pneg %p144
      %p210 = scmp.lt.s32.totalorder %s16, 1
      %s211 = scalar_select %p210, %s16, 1
      %s212 = smul.addr %s211, 8
      %s213 = scalar_lea.vmem %s5, %s212
      %p214 = scmp.lt.s32.totalorder %s16, 1
      %s215 = scalar_select %p214, %s16, 1
      %s216 = smul.addr %s215, 2
      %s217 = smul.addr %s216, 8
      %s218 = scalar_lea.vmem %s0, %s217
      %p219 = scmp.lt.s32.totalorder %s16, 1
      %s220 = scalar_select %p219, %s16, 1
      %s221 = smul.addr %s220, 8
      %s222 = scalar_lea.vmem %s5, %s221
      %v224 = vld [vmem:[%s218] sm:$0xff]
      %v225 = vld [vmem:[%s218 + $0x8] sm:$0x3f]
      %v226 = vld [vmem:[%s1] sm:$0x1]
      %v227 = vlaneseq
      %v228 = vshrl.u32 %v227, 7
      %v229 = vsub.s32 0, %v228
      %v230 = vrot.slane %v226, %v229
      %v231 = vmul.f32 %v224, %v230
      %v232 = vld [vmem:[%s1 + $0x1] sm:$0x1]
      %v233 = vlaneseq
      %v234 = vshrl.u32 %v233, 7
      %v235 = vsub.s32 0, %v234
      %v236 = vrot.slane %v232, %v235
      %v237 = vmul.f32 %v224, %v236
      %v238 = vmul.f32 %v225, %v236
      %vm241 = vcmask 1046528
      %v242 = vrot.slane %v237, 1
      %v243 = vrot.slane %v238, 1
      %v244 = vsel %vm241, %v242, %v243
      %v246 = vadd.f32 %v231, %v244
      %v247 = vld [vmem:[%s1 + $0x2] sm:$0x1]
      %v248 = vlaneseq
      %v249 = vshrl.u32 %v248, 7
      %v250 = vsub.s32 0, %v249
      %v251 = vrot.slane %v247, %v250
      %v252 = vmul.f32 %v224, %v251
      %v253 = vmul.f32 %v225, %v251
      %vm256 = vcmask 1045504
      %v257 = vrot.slane %v252, 2
      %v258 = vrot.slane %v253, 2
      %v259 = vsel %vm256, %v257, %v258
      %v261 = vadd.f32 %v246, %v259
      %v262 = vld [vmem:[%s1 + $0x3] sm:$0x1]
      %v263 = vlaneseq
      %v264 = vshrl.u32 %v263, 7
      %v265 = vsub.s32 0, %v264
      %v266 = vrot.slane %v262, %v265
      %v267 = vmul.f32 %v224, %v266
      %v268 = vmul.f32 %v225, %v266
      %vm271 = vcmask 1044480
      %v272 = vrot.slane %v267, 3
      %v273 = vrot.slane %v268, 3
      %v274 = vsel %vm271, %v272, %v273
      %v276 = vadd.f32 %v261, %v274
      %v277 = vld [vmem:[%s1 + $0x4] sm:$0x1]
      %v278 = vlaneseq
      %v279 = vshrl.u32 %v278, 7
      %v280 = vsub.s32 0, %v279
      %v281 = vrot.slane %v277, %v280
      %v282 = vmul.f32 %v224, %v281
      %v283 = vmul.f32 %v225, %v281
      %vm286 = vcmask 1043456
      %v287 = vrot.slane %v282, 4
      %v288 = vrot.slane %v283, 4
      %v289 = vsel %vm286, %v287, %v288
      %v291 = vadd.f32 %v276, %v289
      %v292 = vld [vmem:[%s1 + $0x5] sm:$0x1]
      %v293 = vlaneseq
      %v294 = vshrl.u32 %v293, 7
      %v295 = vsub.s32 0, %v294
      %v296 = vrot.slane %v292, %v295
      %v297 = vmul.f32 %v224, %v296
      %v298 = vmul.f32 %v225, %v296
      %vm301 = vcmask 1042432
      %v302 = vrot.slane %v297, 5
      %v303 = vrot.slane %v298, 5
      %v304 = vsel %vm301, %v302, %v303
      %v306 = vadd.f32 %v291, %v304
      %v307 = vld [vmem:[%s1 + $0x6] sm:$0x1]
      %v308 = vlaneseq
      %v309 = vshrl.u32 %v308, 7
      %v310 = vsub.s32 0, %v309
      %v311 = vrot.slane %v307, %v310
      %v312 = vmul.f32 %v224, %v311
      %v313 = vmul.f32 %v225, %v311
      %vm316 = vcmask 1041408
      %v317 = vrot.slane %v312, 6
      %v318 = vrot.slane %v313, 6
      %v319 = vsel %vm316, %v317, %v318
      %v321 = vadd.f32 %v306, %v319
      %v322 = vld [vmem:[%s2] sm:$0x1]
      %v324 = vlaneseq
      %v325 = vshrl.u32 %v324, 7
      %v326 = vsub.s32 0, %v325
      %v327 = vrot.slane %v322, %v326
      %v329 = vadd.f32 %v321, %v327
      %v330 = vpack.c.bf16 %v329, %v329
      %v331 = vld [vmem:[%s3] sm:$0xf]
      %v332 = vld [vmem:[%s3 + $0x4] sm:$0xf]
      %v333 = vld [vmem:[%s3 + $0x8] sm:$0xf]
      %v334 = vld [vmem:[%s3 + $0xc] sm:$0xf]
      %v335 = vld [vmem:[%s4] sm:$0x1]
      %v337 = vlaneseq
      %v338 = vshrl.u32 %v337, 7
      %v339 = vsub.s32 0, %v338
      %v340 = vrot.slane %v335, %v339
      %v346 = vunpack.c.l.b16 %v331
      %v347 = vunpack.c.l.b16 %v332
      %v348 = vunpack.c.l.b16 %v333
      %v349 = vunpack.c.l.b16 %v334
      %v350 = vpack.c.b16 %v347, %v346
      %v351 = vpack.c.b16 %v349, %v348
      %vm354 = vcmask 261120
      %v356 = vsel %vm354, %v330, 0
      %358 = vmatprep.subr.bf16.mxu0 0
      %359 = vmatpush1.bf16.msra.mxu0 %v350
      %360 = vmatprep.subr.bf16.mxu0 0
      %361 = vmatpush1.bf16.msra.mxu0 %v351
      %362 = vmatprep.subr.bf16.mxu0 0
      %363 = vmatpush1.bf16.msra.mxu0 0
      %364 = vmatprep.subr.bf16.mxu0 0
      %365 = vmatpush1.bf16.msra.mxu0 0
      %366 = vmatprep.subr.bf16.mxu0 0
      %367 = vmatpush1.bf16.msra.mxu0 0
      %368 = vmatprep.subr.bf16.mxu0 0
      %369 = vmatpush1.bf16.msra.mxu0 0
      %370 = vmatprep.subr.bf16.mxu0 0
      %371 = vmatpush1.bf16.msra.mxu0 0
      %372 = vmatprep.subr.bf16.mxu0 0
      %373 = vmatpush1.bf16.msra.mxu0 0
      %374 = vmatprep.subr.bf16.mxu0 0
      %375 = vmatpush1.bf16.msra.mxu0 0
      %376 = vmatprep.subr.bf16.mxu0 0
      %377 = vmatpush1.bf16.msra.mxu0 0
      %378 = vmatprep.subr.bf16.mxu0 0
      %379 = vmatpush1.bf16.msra.mxu0 0
      %380 = vmatprep.subr.bf16.mxu0 0
      %381 = vmatpush1.bf16.msra.mxu0 0
      %382 = vmatprep.subr.bf16.mxu0 0
      %383 = vmatpush1.bf16.msra.mxu0 0
      %384 = vmatprep.subr.bf16.mxu0 0
      %385 = vmatpush1.bf16.msra.mxu0 0
      %386 = vmatprep.subr.bf16.mxu0 0
      %387 = vmatpush1.bf16.msra.mxu0 0
      %388 = vmatprep.subr.bf16.mxu0 0
      %389 = vmatpush1.bf16.msra.mxu0 0
      %390 = vmatprep.mubr.bf16.mxu0 0
      %391 = vmatmul.mubr.bf16.gmra.mrb[0].mxu0 %v356
      %v392 = vpop.f32.mrb[0].mxu0
      %v393 = vadd.f32 %v340, %v392
      %v394 = vpop.f32.mrb[0].mxu0
      %v395 = vpop.f32.mrb[0].mxu0
      %v396 = vpop.f32.mrb[0].mxu0
      %397 = vdwg.mxu0
      %vm398 = vcmask 130048
      %399 = vst.msk [vmem:[%s222] sm:$0xff] %vm398, %v393
      %p400 = scmp.lt.s32.totalorder %s16, 1
      %s401 = scalar_select %p400, %s16, 1
      %s402 = smul.addr %s401, 8
      %s403 = scalar_lea.vmem %s5, %s402
      // Predicated region
      $region41: #{decoder_layer_forward.29} parent=39 // pred_check
        %p404 = pneg %p144
      $region42: #{decoder_layer_forward.29} parent=39 // pred_check_branch
        %406 = sbr.rel (%p404) target = $region44
      $region43: #{decoder_layer_forward.29} parent=39 // pred_region
        _
      $region44: #{decoder_layer_forward.29} parent=39 // pred_fallthru
        _
    $region40: #{decoder_layer_forward.29} parent=5 // pred_fallthru
      _
    %p407 = scmp.le.s32.totalorder 2, %s11
    // Predicated region
    $region45: #{decoder_layer_forward.29} parent=5 // pred_check
      %p408 = pneg %p407
    $region46: #{decoder_layer_forward.29} parent=5 // pred_check_branch
      %410 = sbr.rel (%p408) target = $region48
    $region47: #{decoder_layer_forward.29} parent=5 // pred_region
      %s411 = ssub.s32 %s11, 2
      // Predicated region
      $region49: #{decoder_layer_forward.29} parent=47 // pred_check
        %p412 = pneg %p150
      $region50: #{decoder_layer_forward.29} parent=47 // pred_check_branch
        %414 = sbr.rel (%p412) target = $region52
      $region51: #{decoder_layer_forward.29} parent=47 // pred_region
        %p415 = scmp.lt.s32.totalorder %s17, 1
        %s416 = scalar_select %p415, %s17, 1
        %s417 = smul.addr %s416, 8
        %s418 = scalar_lea.vmem %s5, %s417
      $region52: #{decoder_layer_forward.29} parent=47 // pred_fallthru
        _
    $region48: #{decoder_layer_forward.29} parent=5 // pred_fallthru
      _
  $region6: #{decoder_layer_forward.29} parent=0 // loop_footer
    %s15 = sadd.s32 1, %s11
  $region7: #{decoder_layer_forward.29} parent=0 // loop_footer_branch
    %10 = sbr.rel target = $region3
  $region8: #{decoder_layer_forward.29} parent=0 // loop_exit
    _

// kernel: decoder_layer_forward.30
$region0: #{decoder_layer_forward.30}
  #allocation0 [shape = 'u32[]', space=smem, size = 0x4, offset = 0x4, fixed_abs, tag = 'smem constant byte address 0x4 - core index']
  #allocation1 [shape = 'u32[144,128]{1,0:T(1,128)}', space=vmem, size = 0x12000, scoped, tag = 'internal scratch']
  %s0 = inlined_call_operand.vmem [shape: f32[16,64], index: 0, kind: input, shape index: {}]
  %s1 = inlined_call_operand.vmem [shape: f32[1,64], index: 1, kind: input, shape index: {}]
  %s2 = inlined_call_operand.vmem [shape: f32[1,64], index: 2, kind: input, shape index: {}]
  %s3 = inlined_call_operand.vmem [shape: f32[16,1], index: 3, kind: input, shape index: {}]
  %s4 = inlined_call_operand.vmem [shape: f32[16,64], index: 4, kind: output, shape index: {}]
  %s5 = sld [smem:[#allocation0]]
  $region26: #{decoder_layer_forward.30} parent=0
    _
  %s7 = ssub.s32 1, %s5
  %s8 = scalar_select 0, %s7, %s5
  // Predicated region
  $region2: #{decoder_layer_forward.30} parent=0 // pred_check
    _
  $region3: #{decoder_layer_forward.30} parent=0 // pred_check_branch
    %10 = sbr.rel (0) target = $region5
  $region4: #{decoder_layer_forward.30} parent=0 // pred_region
    _
  $region5: #{decoder_layer_forward.30} parent=0 // pred_fallthru
    _
  // Predicated region
  $region6: #{decoder_layer_forward.30} parent=0 // pred_check
    _
  $region7: #{decoder_layer_forward.30} parent=0 // pred_check_branch
    %12 = sbr.rel (0) target = $region9
  $region8: #{decoder_layer_forward.30} parent=0 // pred_region
    _
  $region9: #{decoder_layer_forward.30} parent=0 // pred_fallthru
    _
  // Predicated region
  $region10: #{decoder_layer_forward.30} parent=0 // pred_check
    _
  $region11: #{decoder_layer_forward.30} parent=0 // pred_check_branch
    %14 = sbr.rel (0) target = $region13
  $region12: #{decoder_layer_forward.30} parent=0 // pred_region
    _
  $region13: #{decoder_layer_forward.30} parent=0 // pred_fallthru
    _
  // Predicated region
  $region14: #{decoder_layer_forward.30} parent=0 // pred_check
    _
  $region15: #{decoder_layer_forward.30} parent=0 // pred_check_branch
    %16 = sbr.rel (0) target = $region17
  $region16: #{decoder_layer_forward.30} parent=0 // pred_region
    _
  $region17: #{decoder_layer_forward.30} parent=0 // pred_fallthru
    _
  %v17 = vld [vmem:[%s0] sm:$0xff]
  %v18 = vld [vmem:[%s0 + $0x8] sm:$0xff]
  %vm19 = vcmask 523264
  %v20 = vsel %vm19, %v17, 0.0
  %21 = vadd.xlane.f32.xlu0 %v20
  %v22 = vpop.xlane.xlu0 %21
  %v23 = vsel %vm19, %v18, 0.0
  %24 = vadd.xlane.f32.xlu0 %v23
  %v25 = vpop.xlane.xlu0 %24
  %v26 = vrcp.pop 64.0
  %v27 = vmul.f32 %v22, %v26
  %v28 = vmul.f32 %v25, %v26
  %v29 = vsub.f32 %v17, %v27
  %v30 = vsub.f32 %v18, %v28
  %v31 = vmul.f32 %v29, %v29
  %v32 = vmul.f32 %v30, %v30
  %v33 = vsel %vm19, %v31, 0.0
  %34 = vadd.xlane.f32.xlu0 %v33
  %v35 = vpop.xlane.xlu0 %34
  %v36 = vsel %vm19, %v32, 0.0
  %37 = vadd.xlane.f32.xlu0 %v36
  %v38 = vpop.xlane.xlu0 %37
  %v39 = vrcp.pop 63.0
  %v40 = vmul.f32 %v35, %v39
  %v41 = vmul.f32 %v38, %v39
  %v42 = vld [vmem:[%s1] sm:$0x1]
  %v44 = vlaneseq
  %v45 = vshrl.u32 %v44, 7
  %v46 = vsub.s32 0, %v45
  %v47 = vrot.slane %v42, %v46
  %v49 = vmul.f32 %v47, %v29
  %v50 = vmul.f32 %v47, %v30
  %v51 = vrsqrt.pop %v40
  %v52 = vmul.f32 %v40, %v51
  %vm53 = vcmp.eq.f32.partialorder %v40, inf
  %v54 = vsel %vm53, %v40, %v52
  %vm55 = vcmp.eq.f32.partialorder %v40, 0.0
  %v56 = vand.u32 %v40, 2147483648
  %v57 = vsel %vm55, %v56, %v54
  %v58 = vrsqrt.pop %v41
  %v59 = vmul.f32 %v41, %v58
  %vm60 = vcmp.eq.f32.partialorder %v41, inf
  %v61 = vsel %vm60, %v41, %v59
  %vm62 = vcmp.eq.f32.partialorder %v41, 0.0
  %v63 = vand.u32 %v41, 2147483648
  %v64 = vsel %vm62, %v63, %v61
  %v65 = vadd.f32 %v57, 1e-06
  %v66 = vadd.f32 %v64, 1e-06
  %v67 = vrcp.pop %v65
  %v68 = vmul.f32 %v49, %v67
  %v69 = vrcp.pop %v66
  %v70 = vmul.f32 %v50, %v69
  %v71 = vld [vmem:[%s2] sm:$0x1]
  %v73 = vlaneseq
  %v74 = vshrl.u32 %v73, 7
  %v75 = vsub.s32 0, %v74
  %v76 = vrot.slane %v71, %v75
  %v78 = vadd.f32 %v68, %v76
  %v79 = vadd.f32 %v70, %v76
  %v80 = vld [vmem:[%s3] sm:$0xff]
  %v81 = vld [vmem:[%s3 + $0x8] sm:$0xff]
  %vm82 = vcmp.eq.f32.partialorder %v80, 0.0
  %vm83 = vcmp.eq.f32.partialorder %v81, 0.0
  %v84 = vsel %vm82, 1, 0
  %v85 = vsel %vm83, 1, 0
  %86 = vset.pattern.permute.xlu0 0
  %87 = vperm.xlu0 %86, %v84
  %v88 = vpop.permute.xlu0 %87
  %89 = vset.pattern.permute.xlu0 0
  %90 = vperm.xlu0 %89, %v85
  %v91 = vpop.permute.xlu0 %90
  %vm92 = vcmp.eq.s32.totalorder %v88, 1
  %vm93 = vcmp.eq.s32.totalorder %v91, 1
  %v94 = vsel %vm92, 0.0, %v78
  %v95 = vsel %vm93, 0.0, %v79
  %96 = vst.msk [vmem:[%s4] sm:$0xff] %vm19, %v94
  %97 = vst.msk [vmem:[%s4 + $0x8] sm:$0xff] %vm19, %v95
  // Predicated region
  $region18: #{decoder_layer_forward.30} parent=0 // pred_check
    _
  $region19: #{decoder_layer_forward.30} parent=0 // pred_check_branch
    %99 = sbr.rel (0) target = $region21
  $region20: #{decoder_layer_forward.30} parent=0 // pred_region
    _
  $region21: #{decoder_layer_forward.30} parent=0 // pred_fallthru
    _
  // Predicated region
  $region22: #{decoder_layer_forward.30} parent=0 // pred_check
    _
  $region23: #{decoder_layer_forward.30} parent=0 // pred_check_branch
    %101 = sbr.rel (0) target = $region25
  $region24: #{decoder_layer_forward.30} parent=0 // pred_region
    _
  $region25: #{decoder_layer_forward.30} parent=0 // pred_fallthru
    _

// kernel: decoder_layer_forward.31
$region0: #{decoder_layer_forward.31}
  #allocation0 [shape = 'u32[]', space=smem, size = 0x4, offset = 0x4, fixed_abs, tag = 'smem constant byte address 0x4 - core index']
  #allocation1 [shape = 'u32[144,128]{1,0:T(1,128)}', space=vmem, size = 0x12000, scoped, tag = 'internal scratch']
  %s0 = inlined_call_operand.vmem [shape: f32[2,14,64], index: 0, kind: input, shape index: {}]
  %s1 = inlined_call_operand.vmem [shape: f32[7,64], index: 1, kind: input, shape index: {}]
  %s2 = inlined_call_operand.vmem [shape: f32[1,64], index: 2, kind: input, shape index: {}]
  %s3 = inlined_call_operand.vmem [shape: bf16[64,32], index: 3, kind: input, shape index: {}]
  %s4 = inlined_call_operand.vmem [shape: f32[1,32], index: 4, kind: input, shape index: {}]
  %s5 = inlined_call_operand.vmem [shape: f32[2,8,32], index: 5, kind: input, shape index: {}]
  %s6 = inlined_call_operand.vmem [shape: f32[2,8,32], index: 6, kind: output, shape index: {}]
  %s7 = sld [smem:[#allocation0]]
  $region57: #{decoder_layer_forward.31} parent=0
    _
  %s9 = ssub.s32 1, %s7
  %s10 = scalar_select 0, %s9, %s7
  loop: start=0, step=1, limit=4
  $region2: #{decoder_layer_forward.31} parent=0 // loop_pre_header
    _
  $region3: #{decoder_layer_forward.31} parent=0 // loop_header
    %s12 = sphi 0, %s16
    %p13 = scmp.ge.s32.totalorder %s12, 4
    %s22 = sphi 0, %s24
    %s25 = sphi 0, %s22
    %s26 = sphi 0, %s25
    %s42 = sphi 0, %s26
    %s46 = sphi 0, %s46
    %s48 = sphi 0, %s46
    %s49 = sphi 0, %s48
    %s63 = sphi 0, %s49
    %s67 = sphi 0, %s67
    %s69 = sphi 0, %s67
    %s70 = sphi 0, %s69
    %s84 = sphi 0, %s70
    %s88 = sphi 0, %s88
    %s90 = sphi 0, %s88
    %s91 = sphi 0, %s90
    %s105 = sphi 0, %s91
    %s109 = sphi 0, %s109
    %s111 = sphi 0, %s109
    %s112 = sphi 0, %s111
    %s126 = sphi 0, %s112
    %s132 = sphi 0, %s134
    %s135 = sphi 0, %s132
    %s136 = sphi 0, %s135
    %s152 = sphi 0, %s136
    %s158 = sphi 0, %s160
    %s161 = sphi 0, %s158
    %s162 = sphi 0, %s161
    %s178 = sphi 0, %s162
  $region4: #{decoder_layer_forward.31} parent=0 // loop_header_branch
    %15 = sbr.rel (%p13) target = $region8
  $region5: #{decoder_layer_forward.31} parent=0 // loop_body
    %s17 = ssub.s32 %s12, 1
    %s18 = ssub.s32 %s12, 2
    %s19 = sadd.s32 %s12, 1
    %s20 = ssub.s32 %s12, %s19
    %p21 = scmp.eq.s32.totalorder %s20, 0
    %s23 = sadd.s32 %s22, 1
    %s24 = scalar_select %p21, %s22, %s23
    %p27 = pneg %p21
    %p28 = scmp.eq.s32.totalorder %s12, 1
    %p29 = por %p27, %p28
    %p30 = scmp.ne.s32.totalorder %s22, %s25
    %p31 = scmp.eq.s32.totalorder %s12, 0
    %p32 = por %p30, %p31
    %p33 = scmp.ne.s32.totalorder %s22, %s25
    %p34 = scmp.eq.s32.totalorder %s17, 1
    %p35 = por %p33, %p34
    %p36 = scmp.ne.s32.totalorder %s25, %s26
    %p37 = scmp.eq.s32.totalorder %s17, 0
    %p38 = por %p36, %p37
    %p39 = scmp.ne.s32.totalorder %s25, %s26
    %p40 = scmp.eq.s32.totalorder %s18, 1
    %p41 = por %p39, %p40
    %p43 = scmp.ne.s32.totalorder %s26, %s42
    %p44 = scmp.eq.s32.totalorder %s18, 0
    %p45 = por %p43, %p44
    %s47 = sadd.s32 %s46, 1
    %p50 = scmp.eq.s32.totalorder %s12, 1
    %p51 = scmp.ne.s32.totalorder %s46, %s48
    %p52 = scmp.eq.s32.totalorder %s12, 0
    %p53 = por %p51, %p52
    %p54 = scmp.ne.s32.totalorder %s46, %s48
    %p55 = scmp.eq.s32.totalorder %s17, 1
    %p56 = por %p54, %p55
    %p57 = scmp.ne.s32.totalorder %s48, %s49
    %p58 = scmp.eq.s32.totalorder %s17, 0
    %p59 = por %p57, %p58
    %p60 = scmp.ne.s32.totalorder %s48, %s49
    %p61 = scmp.eq.s32.totalorder %s18, 1
    %p62 = por %p60, %p61
    %p64 = scmp.ne.s32.totalorder %s49, %s63
    %p65 = scmp.eq.s32.totalorder %s18, 0
    %p66 = por %p64, %p65
    %s68 = sadd.s32 %s67, 1
    %p71 = scmp.eq.s32.totalorder %s12, 1
    %p72 = scmp.ne.s32.totalorder %s67, %s69
    %p73 = scmp.eq.s32.totalorder %s12, 0
    %p74 = por %p72, %p73
    %p75 = scmp.ne.s32.totalorder %s67, %s69
    %p76 = scmp.eq.s32.totalorder %s17, 1
    %p77 = por %p75, %p76
    %p78 = scmp.ne.s32.totalorder %s69, %s70
    %p79 = scmp.eq.s32.totalorder %s17, 0
    %p80 = por %p78, %p79
    %p81 = scmp.ne.s32.totalorder %s69, %s70
    %p82 = scmp.eq.s32.totalorder %s18, 1
    %p83 = por %p81, %p82
    %p85 = scmp.ne.s32.totalorder %s70, %s84
    %p86 = scmp.eq.s32.totalorder %s18, 0
    %p87 = por %p85, %p86
    %s89 = sadd.s32 %s88, 1
    %p92 = scmp.eq.s32.totalorder %s12, 1
    %p93 = scmp.ne.s32.totalorder %s88, %s90
    %p94 = scmp.eq.s32.totalorder %s12, 0
    %p95 = por %p93, %p94
    %p96 = scmp.ne.s32.totalorder %s88, %s90
    %p97 = scmp.eq.s32.totalorder %s17, 1
    %p98 = por %p96, %p97
    %p99 = scmp.ne.s32.totalorder %s90, %s91
    %p100 = scmp.eq.s32.totalorder %s17, 0
    %p101 = por %p99, %p100
    %p102 = scmp.ne.s32.totalorder %s90, %s91
    %p103 = scmp.eq.s32.totalorder %s18, 1
    %p104 = por %p102, %p103
    %p106 = scmp.ne.s32.totalorder %s91, %s105
    %p107 = scmp.eq.s32.totalorder %s18, 0
    %p108 = por %p106, %p107
    %s110 = sadd.s32 %s109, 1
    %p113 = scmp.eq.s32.totalorder %s12, 1
    %p114 = scmp.ne.s32.totalorder %s109, %s111
    %p115 = scmp.eq.s32.totalorder %s12, 0
    %p116 = por %p114, %p115
    %p117 = scmp.ne.s32.totalorder %s109, %s111
    %p118 = scmp.eq.s32.totalorder %s17, 1
    %p119 = por %p117, %p118
    %p120 = scmp.ne.s32.totalorder %s111, %s112
    %p121 = scmp.eq.s32.totalorder %s17, 0
    %p122 = por %p120, %p121
    %p123 = scmp.ne.s32.totalorder %s111, %s112
    %p124 = scmp.eq.s32.totalorder %s18, 1
    %p125 = por %p123, %p124
    %p127 = scmp.ne.s32.totalorder %s112, %s126
    %p128 = scmp.eq.s32.totalorder %s18, 0
    %p129 = por %p127, %p128
    %s130 = ssub.s32 %s12, %s19
    %p131 = scmp.eq.s32.totalorder %s130, 0
    %s133 = sadd.s32 %s132, 1
    %s134 = scalar_select %p131, %s132, %s133
    %p137 = pneg %p131
    %p138 = scmp.eq.s32.totalorder %s12, 1
    %p139 = por %p137, %p138
    %p140 = scmp.ne.s32.totalorder %s132, %s135
    %p141 = scmp.eq.s32.totalorder %s12, 0
    %p142 = por %p140, %p141
    %p143 = scmp.ne.s32.totalorder %s132, %s135
    %p144 = scmp.eq.s32.totalorder %s17, 1
    %p145 = por %p143, %p144
    %p146 = scmp.ne.s32.totalorder %s135, %s136
    %p147 = scmp.eq.s32.totalorder %s17, 0
    %p148 = por %p146, %p147
    %p149 = scmp.ne.s32.totalorder %s135, %s136
    %p150 = scmp.eq.s32.totalorder %s18, 1
    %p151 = por %p149, %p150
    %p153 = scmp.ne.s32.totalorder %s136, %s152
    %p154 = scmp.eq.s32.totalorder %s18, 0
    %p155 = por %p153, %p154
    %s156 = ssub.s32 %s12, %s19
    %p157 = scmp.eq.s32.totalorder %s156, 0
    %s159 = sadd.s32 %s158, 1
    %s160 = scalar_select %p157, %s158, %s159
    %p163 = pneg %p157
    %p164 = scmp.eq.s32.totalorder %s12, 1
    %p165 = por %p163, %p164
    %p166 = scmp.ne.s32.totalorder %s158, %s161
    %p167 = scmp.eq.s32.totalorder %s12, 0
    %p168 = por %p166, %p167
    %p169 = scmp.ne.s32.totalorder %s158, %s161
    %p170 = scmp.eq.s32.totalorder %s17, 1
    %p171 = por %p169, %p170
    %p172 = scmp.ne.s32.totalorder %s161, %s162
    %p173 = scmp.eq.s32.totalorder %s17, 0
    %p174 = por %p172, %p173
    %p175 = scmp.ne.s32.totalorder %s161, %s162
    %p176 = scmp.eq.s32.totalorder %s18, 1
    %p177 = por %p175, %p176
    %p179 = scmp.ne.s32.totalorder %s162, %s178
    %p180 = scmp.eq.s32.totalorder %s18, 0
    %p181 = por %p179, %p180
    %p182 = scmp.le.s32.totalorder 1, %s12
    %p183 = scmp.lt.s32.totalorder %s12, 3
    %p184 = pnand %p182, %p183
    %p185 = pneg %p184
    // Predicated region
    $region9: #{decoder_layer_forward.31} parent=5 // pred_check
      _
    $region10: #{decoder_layer_forward.31} parent=5 // pred_check_branch
      %187 = sbr.rel (%p184) target = $region12
    $region11: #{decoder_layer_forward.31} parent=5 // pred_region
      %s188 = ssub.s32 %s12, 1
      // Predicated region
      $region13: #{decoder_layer_forward.31} parent=11 // pred_check
        %p189 = pneg %p59
      $region14: #{decoder_layer_forward.31} parent=11 // pred_check_branch
        %191 = sbr.rel (%p189) target = $region16
      $region15: #{decoder_layer_forward.31} parent=11 // pred_region
        _
      $region16: #{decoder_layer_forward.31} parent=11 // pred_fallthru
        _
      // Predicated region
      $region17: #{decoder_layer_forward.31} parent=11 // pred_check
        %p192 = pneg %p80
      $region18: #{decoder_layer_forward.31} parent=11 // pred_check_branch
        %194 = sbr.rel (%p192) target = $region20
      $region19: #{decoder_layer_forward.31} parent=11 // pred_region
        _
      $region20: #{decoder_layer_forward.31} parent=11 // pred_fallthru
        _
      // Predicated region
      $region21: #{decoder_layer_forward.31} parent=11 // pred_check
        %p195 = pneg %p101
      $region22: #{decoder_layer_forward.31} parent=11 // pred_check_branch
        %197 = sbr.rel (%p195) target = $region24
      $region23: #{decoder_layer_forward.31} parent=11 // pred_region
        _
      $region24: #{decoder_layer_forward.31} parent=11 // pred_fallthru
        _
      // Predicated region
      $region25: #{decoder_layer_forward.31} parent=11 // pred_check
        %p198 = pneg %p122
      $region26: #{decoder_layer_forward.31} parent=11 // pred_check_branch
        %200 = sbr.rel (%p198) target = $region28
      $region27: #{decoder_layer_forward.31} parent=11 // pred_region
        _
      $region28: #{decoder_layer_forward.31} parent=11 // pred_fallthru
        _
    $region12: #{decoder_layer_forward.31} parent=5 // pred_fallthru
      _
    %p201 = scmp.lt.s32.totalorder %s12, 2
    // Predicated region
    $region29: #{decoder_layer_forward.31} parent=5 // pred_check
      %p202 = pneg %p201
    $region30: #{decoder_layer_forward.31} parent=5 // pred_check_branch
      %204 = sbr.rel (%p202) target = $region32
    $region31: #{decoder_layer_forward.31} parent=5 // pred_region
      // Predicated region
      $region33: #{decoder_layer_forward.31} parent=31 // pred_check
        %p205 = pneg %p32
      $region34: #{decoder_layer_forward.31} parent=31 // pred_check_branch
        %207 = sbr.rel (%p205) target = $region36
      $region35: #{decoder_layer_forward.31} parent=31 // pred_region
        %p208 = scmp.lt.s32.totalorder %s12, 1
        %s209 = scalar_select %p208, %s12, 1
        %s210 = smul.addr %s209, 2
        %s211 = smul.addr %s210, 8
        %s212 = scalar_lea.vmem %s0, %s211
      $region36: #{decoder_layer_forward.31} parent=31 // pred_fallthru
        _
      // Predicated region
      $region37: #{decoder_layer_forward.31} parent=31 // pred_check
        %p213 = pneg %p142
      $region38: #{decoder_layer_forward.31} parent=31 // pred_check_branch
        %215 = sbr.rel (%p213) target = $region40
      $region39: #{decoder_layer_forward.31} parent=31 // pred_region
        %p216 = scmp.lt.s32.totalorder %s12, 1
        %s217 = scalar_select %p216, %s12, 1
        %s218 = smul.addr %s217, 8
        %s219 = scalar_lea.vmem %s5, %s218
      $region40: #{decoder_layer_forward.31} parent=31 // pred_fallthru
        _
    $region32: #{decoder_layer_forward.31} parent=5 // pred_fallthru
      _
    %p220 = scmp.le.s32.totalorder 1, %s12
    %p221 = scmp.lt.s32.totalorder %s12, 3
    %p222 = pnand %p220, %p221
    %p223 = pneg %p222
    // Predicated region
    $region41: #{decoder_layer_forward.31} parent=5 // pred_check
      _
    $region42: #{decoder_layer_forward.31} parent=5 // pred_check_branch
      %225 = sbr.rel (%p222) target = $region44
    $region43: #{decoder_layer_forward.31} parent=5 // pred_region
      %s226 = ssub.s32 %s12, 1
      %p227 = scmp.lt.s32.totalorder %s17, 1
      %s228 = scalar_select %p227, %s17, 1
      %s229 = smul.addr %s228, 2
      %s230 = smul.addr %s229, 8
      %s231 = scalar_lea.vmem %s0, %s230
      %p232 = pneg %p38
      %p233 = pneg %p35
      %p234 = pneg %p59
      %p235 = pneg %p56
      %p236 = pneg %p80
      %p237 = pneg %p77
      %p238 = pneg %p101
      %p239 = pneg %p98
      %p240 = pneg %p122
      %p241 = pneg %p119
      %p242 = scmp.lt.s32.totalorder %s17, 1
      %s243 = scalar_select %p242, %s17, 1
      %s244 = smul.addr %s243, 8
      %s245 = scalar_lea.vmem %s5, %s244
      %p246 = pneg %p148
      %p247 = pneg %p145
      %p248 = pneg %p174
      %p249 = pneg %p171
      %p250 = scmp.lt.s32.totalorder %s17, 1
      %s251 = scalar_select %p250, %s17, 1
      %s252 = smul.addr %s251, 8
      %s253 = scalar_lea.vmem %s6, %s252
      %p254 = scmp.lt.s32.totalorder %s17, 1
      %s255 = scalar_select %p254, %s17, 1
      %s256 = smul.addr %s255, 2
      %s257 = smul.addr %s256, 8
      %s258 = scalar_lea.vmem %s0, %s257
      %p259 = scmp.lt.s32.totalorder %s17, 1
      %s260 = scalar_select %p259, %s17, 1
      %s261 = smul.addr %s260, 8
      %s262 = scalar_lea.vmem %s5, %s261
      %p263 = scmp.lt.s32.totalorder %s17, 1
      %s264 = scalar_select %p263, %s17, 1
      %s265 = smul.addr %s264, 8
      %s266 = scalar_lea.vmem %s6, %s265
      %v268 = vld [vmem:[%s258] sm:$0xff]
      %v269 = vld [vmem:[%s258 + $0x8] sm:$0x3f]
      %v270 = vld [vmem:[%s1] sm:$0x1]
      %v271 = vlaneseq
      %v272 = vshrl.u32 %v271, 7
      %v273 = vsub.s32 0, %v272
      %v274 = vrot.slane %v270, %v273
      %v275 = vmul.f32 %v268, %v274
      %v276 = vld [vmem:[%s1 + $0x1] sm:$0x1]
      %v277 = vlaneseq
      %v278 = vshrl.u32 %v277, 7
      %v279 = vsub.s32 0, %v278
      %v280 = vrot.slane %v276, %v279
      %v281 = vmul.f32 %v268, %v280
      %v282 = vmul.f32 %v269, %v280
      %vm285 = vcmask 1046528
      %v286 = vrot.slane %v281, 1
      %v287 = vrot.slane %v282, 1
      %v288 = vsel %vm285, %v286, %v287
      %v290 = vadd.f32 %v275, %v288
      %v291 = vld [vmem:[%s1 + $0x2] sm:$0x1]
      %v292 = vlaneseq
      %v293 = vshrl.u32 %v292, 7
      %v294 = vsub.s32 0, %v293
      %v295 = vrot.slane %v291, %v294
      %v296 = vmul.f32 %v268, %v295
      %v297 = vmul.f32 %v269, %v295
      %vm300 = vcmask 1045504
      %v301 = vrot.slane %v296, 2
      %v302 = vrot.slane %v297, 2
      %v303 = vsel %vm300, %v301, %v302
      %v305 = vadd.f32 %v290, %v303
      %v306 = vld [vmem:[%s1 + $0x3] sm:$0x1]
      %v307 = vlaneseq
      %v308 = vshrl.u32 %v307, 7
      %v309 = vsub.s32 0, %v308
      %v310 = vrot.slane %v306, %v309
      %v311 = vmul.f32 %v268, %v310
      %v312 = vmul.f32 %v269, %v310
      %vm315 = vcmask 1044480
      %v316 = vrot.slane %v311, 3
      %v317 = vrot.slane %v312, 3
      %v318 = vsel %vm315, %v316, %v317
      %v320 = vadd.f32 %v305, %v318
      %v321 = vld [vmem:[%s1 + $0x4] sm:$0x1]
      %v322 = vlaneseq
      %v323 = vshrl.u32 %v322, 7
      %v324 = vsub.s32 0, %v323
      %v325 = vrot.slane %v321, %v324
      %v326 = vmul.f32 %v268, %v325
      %v327 = vmul.f32 %v269, %v325
      %vm330 = vcmask 1043456
      %v331 = vrot.slane %v326, 4
      %v332 = vrot.slane %v327, 4
      %v333 = vsel %vm330, %v331, %v332
      %v335 = vadd.f32 %v320, %v333
      %v336 = vld [vmem:[%s1 + $0x5] sm:$0x1]
      %v337 = vlaneseq
      %v338 = vshrl.u32 %v337, 7
      %v339 = vsub.s32 0, %v338
      %v340 = vrot.slane %v336, %v339
      %v341 = vmul.f32 %v268, %v340
      %v342 = vmul.f32 %v269, %v340
      %vm345 = vcmask 1042432
      %v346 = vrot.slane %v341, 5
      %v347 = vrot.slane %v342, 5
      %v348 = vsel %vm345, %v346, %v347
      %v350 = vadd.f32 %v335, %v348
      %v351 = vld [vmem:[%s1 + $0x6] sm:$0x1]
      %v352 = vlaneseq
      %v353 = vshrl.u32 %v352, 7
      %v354 = vsub.s32 0, %v353
      %v355 = vrot.slane %v351, %v354
      %v356 = vmul.f32 %v268, %v355
      %v357 = vmul.f32 %v269, %v355
      %vm360 = vcmask 1041408
      %v361 = vrot.slane %v356, 6
      %v362 = vrot.slane %v357, 6
      %v363 = vsel %vm360, %v361, %v362
      %v365 = vadd.f32 %v350, %v363
      %v366 = vld [vmem:[%s2] sm:$0x1]
      %v368 = vlaneseq
      %v369 = vshrl.u32 %v368, 7
      %v370 = vsub.s32 0, %v369
      %v371 = vrot.slane %v366, %v370
      %v373 = vadd.f32 %v365, %v371
      %v374 = vpack.c.bf16 %v373, %v373
      %v375 = vld [vmem:[%s3] sm:$0xf]
      %v376 = vld [vmem:[%s3 + $0x4] sm:$0xf]
      %v377 = vld [vmem:[%s3 + $0x8] sm:$0xf]
      %v378 = vld [vmem:[%s3 + $0xc] sm:$0xf]
      %v379 = vld [vmem:[%s3 + $0x10] sm:$0xf]
      %v380 = vld [vmem:[%s3 + $0x14] sm:$0xf]
      %v381 = vld [vmem:[%s3 + $0x18] sm:$0xf]
      %v382 = vld [vmem:[%s3 + $0x1c] sm:$0xf]
      %v383 = vld [vmem:[%s4] sm:$0x1]
      %v385 = vlaneseq
      %v386 = vshrl.u32 %v385, 7
      %v387 = vsub.s32 0, %v386
      %v388 = vrot.slane %v383, %v387
      %v398 = vunpack.c.l.b16 %v375
      %v399 = vunpack.c.l.b16 %v376
      %v400 = vunpack.c.l.b16 %v377
      %v401 = vunpack.c.l.b16 %v378
      %v402 = vunpack.c.l.b16 %v379
      %v403 = vunpack.c.l.b16 %v380
      %v404 = vunpack.c.l.b16 %v381
      %v405 = vunpack.c.l.b16 %v382
      %v406 = vpack.c.b16 %v399, %v398
      %v407 = vpack.c.b16 %v401, %v400
      %v408 = vpack.c.b16 %v403, %v402
      %v409 = vpack.c.b16 %v405, %v404
      %vm414 = vcmask 523264
      %v416 = vsel %vm414, %v374, 0
      %418 = vmatprep.subr.bf16.mxu0 0
      %419 = vmatpush1.bf16.msra.mxu0 %v406
      %420 = vmatprep.subr.bf16.mxu0 0
      %421 = vmatpush1.bf16.msra.mxu0 %v407
      %422 = vmatprep.subr.bf16.mxu0 0
      %423 = vmatpush1.bf16.msra.mxu0 %v408
      %424 = vmatprep.subr.bf16.mxu0 0
      %425 = vmatpush1.bf16.msra.mxu0 %v409
      %426 = vmatprep.subr.bf16.mxu0 0
      %427 = vmatpush1.bf16.msra.mxu0 0
      %428 = vmatprep.subr.bf16.mxu0 0
      %429 = vmatpush1.bf16.msra.mxu0 0
      %430 = vmatprep.subr.bf16.mxu0 0
      %431 = vmatpush1.bf16.msra.mxu0 0
      %432 = vmatprep.subr.bf16.mxu0 0
      %433 = vmatpush1.bf16.msra.mxu0 0
      %434 = vmatprep.subr.bf16.mxu0 0
      %435 = vmatpush1.bf16.msra.mxu0 0
      %436 = vmatprep.subr.bf16.mxu0 0
      %437 = vmatpush1.bf16.msra.mxu0 0
      %438 = vmatprep.subr.bf16.mxu0 0
      %439 = vmatpush1.bf16.msra.mxu0 0
      %440 = vmatprep.subr.bf16.mxu0 0
      %441 = vmatpush1.bf16.msra.mxu0 0
      %442 = vmatprep.subr.bf16.mxu0 0
      %443 = vmatpush1.bf16.msra.mxu0 0
      %444 = vmatprep.subr.bf16.mxu0 0
      %445 = vmatpush1.bf16.msra.mxu0 0
      %446 = vmatprep.subr.bf16.mxu0 0
      %447 = vmatpush1.bf16.msra.mxu0 0
      %448 = vmatprep.subr.bf16.mxu0 0
      %449 = vmatpush1.bf16.msra.mxu0 0
      %450 = vmatprep.mubr.bf16.mxu0 0
      %451 = vmatmul.mubr.bf16.gmra.mrb[0].mxu0 %v416
      %v452 = vpop.f32.mrb[0].mxu0
      %v453 = vadd.f32 %v388, %v452
      %v454 = vpop.f32.mrb[0].mxu0
      %v455 = vpop.f32.mrb[0].mxu0
      %v456 = vpop.f32.mrb[0].mxu0
      %457 = vdwg.mxu0
      %v458 = vld [vmem:[%s262] sm:$0xff]
      %v459 = vadd.f32 %v453, %v458
      %vm460 = vcmask 261120
      %461 = vst.msk [vmem:[%s266] sm:$0xff] %vm460, %v459
      %p462 = scmp.lt.s32.totalorder %s17, 1
      %s463 = scalar_select %p462, %s17, 1
      %s464 = smul.addr %s463, 8
      %s465 = scalar_lea.vmem %s6, %s464
      // Predicated region
      $region45: #{decoder_layer_forward.31} parent=43 // pred_check
        %p466 = pneg %p171
      $region46: #{decoder_layer_forward.31} parent=43 // pred_check_branch
        %468 = sbr.rel (%p466) target = $region48
      $region47: #{decoder_layer_forward.31} parent=43 // pred_region
        _
      $region48: #{decoder_layer_forward.31} parent=43 // pred_fallthru
        _
    $region44: #{decoder_layer_forward.31} parent=5 // pred_fallthru
      _
    %p469 = scmp.le.s32.totalorder 2, %s12
    // Predicated region
    $region49: #{decoder_layer_forward.31} parent=5 // pred_check
      %p470 = pneg %p469
    $region50: #{decoder_layer_forward.31} parent=5 // pred_check_branch
      %472 = sbr.rel (%p470) target = $region52
    $region51: #{decoder_layer_forward.31} parent=5 // pred_region
      %s473 = ssub.s32 %s12, 2
      // Predicated region
      $region53: #{decoder_layer_forward.31} parent=51 // pred_check
        %p474 = pneg %p177
      $region54: #{decoder_layer_forward.31} parent=51 // pred_check_branch
        %476 = sbr.rel (%p474) target = $region56
      $region55: #{decoder_layer_forward.31} parent=51 // pred_region
        %p477 = scmp.lt.s32.totalorder %s18, 1
        %s478 = scalar_select %p477, %s18, 1
        %s479 = smul.addr %s478, 8
        %s480 = scalar_lea.vmem %s6, %s479
      $region56: #{decoder_layer_forward.31} parent=51 // pred_fallthru
        _
    $region52: #{decoder_layer_forward.31} parent=5 // pred_fallthru
      _
  $region6: #{decoder_layer_forward.31} parent=0 // loop_footer
    %s16 = sadd.s32 1, %s12
  $region7: #{decoder_layer_forward.31} parent=0 // loop_footer_branch
    %11 = sbr.rel target = $region3
  $region8: #{decoder_layer_forward.31} parent=0 // loop_exit
    _

// kernel: decoder_layer_forward.39
$region0: #{decoder_layer_forward.39}
  #allocation0 [shape = 'u32[]', space=smem, size = 0x4, offset = 0x4, fixed_abs, tag = 'smem constant byte address 0x4 - core index']
  #allocation1 [shape = 'u32[144,128]{1,0:T(1,128)}', space=vmem, size = 0x12000, scoped, tag = 'internal scratch']
  #allocation2 [shape = 'bf16[16,32]{1,0:T(16,128)(2,1)}', space=vmem, size = 0x1000, scoped, tag = 'scratch operand']
  #allocation3 [shape = 'f32[16,32]{1,0:T(8,128)}', space=vmem, size = 0x2000, scoped, tag = 'scratch operand']
  %s0 = inlined_call_operand.vmem [shape: f32[16,32], index: 0, kind: input, shape index: {}]
  %s1 = inlined_call_operand.vmem [shape: f32[1,32], index: 1, kind: input, shape index: {}]
  %s2 = inlined_call_operand.vmem [shape: f32[1,32], index: 2, kind: input, shape index: {}]
  %s3 = inlined_call_operand.vmem [shape: bf16[32,64], index: 3, kind: input, shape index: {}]
  %s4 = inlined_call_operand.vmem [shape: f32[1,64], index: 4, kind: input, shape index: {}]
  %s5 = inlined_call_operand.vmem [shape: bf16[64,32], index: 5, kind: input, shape index: {}]
  %s6 = inlined_call_operand.vmem [shape: f32[1,32], index: 6, kind: input, shape index: {}]
  %s7 = inlined_call_operand.hbm [shape: f32[16,32], index: 7, kind: output, shape index: {}]
  %s8 = sld [smem:[#allocation0]]
  $region46: #{decoder_layer_forward.39} parent=0
    _
  %s10 = ssub.s32 1, %s8
  %s11 = scalar_select 0, %s10, %s8
  $region1: #{decoder_layer_forward.39} parent=0
    #allocation4 [shape = 'u8[8192]{0}', space=vmem, size = 0x2000, scoped, tag = 'output window, operand 0, single buffered']
    #allocation5 [shape = 's32[1]{0}', space=sflag, size = 0x4, scoped, tag = 'scoped memory for decoder_layer_forward.39']
    %12 = vsyncpa [#allocation5], 0
    // Predicated region
    $region2: #{decoder_layer_forward.39} parent=1 // pred_check
      _
    $region3: #{decoder_layer_forward.39} parent=1 // pred_check_branch
      %14 = sbr.rel (0) target = $region5
    $region4: #{decoder_layer_forward.39} parent=1 // pred_region
      _
    $region5: #{decoder_layer_forward.39} parent=1 // pred_fallthru
      _
    // Predicated region
    $region6: #{decoder_layer_forward.39} parent=1 // pred_check
      _
    $region7: #{decoder_layer_forward.39} parent=1 // pred_check_branch
      %16 = sbr.rel (0) target = $region9
    $region8: #{decoder_layer_forward.39} parent=1 // pred_region
      _
    $region9: #{decoder_layer_forward.39} parent=1 // pred_fallthru
      _
    // Predicated region
    $region10: #{decoder_layer_forward.39} parent=1 // pred_check
      _
    $region11: #{decoder_layer_forward.39} parent=1 // pred_check_branch
      %18 = sbr.rel (0) target = $region13
    $region12: #{decoder_layer_forward.39} parent=1 // pred_region
      _
    $region13: #{decoder_layer_forward.39} parent=1 // pred_fallthru
      _
    // Predicated region
    $region14: #{decoder_layer_forward.39} parent=1 // pred_check
      _
    $region15: #{decoder_layer_forward.39} parent=1 // pred_check_branch
      %20 = sbr.rel (0) target = $region17
    $region16: #{decoder_layer_forward.39} parent=1 // pred_region
      _
    $region17: #{decoder_layer_forward.39} parent=1 // pred_fallthru
      _
    // Predicated region
    $region18: #{decoder_layer_forward.39} parent=1 // pred_check
      _
    $region19: #{decoder_layer_forward.39} parent=1 // pred_check_branch
      %22 = sbr.rel (0) target = $region21
    $region20: #{decoder_layer_forward.39} parent=1 // pred_region
      _
    $region21: #{decoder_layer_forward.39} parent=1 // pred_fallthru
      _
    // Predicated region
    $region22: #{decoder_layer_forward.39} parent=1 // pred_check
      _
    $region23: #{decoder_layer_forward.39} parent=1 // pred_check_branch
      %24 = sbr.rel (0) target = $region25
    $region24: #{decoder_layer_forward.39} parent=1 // pred_region
      _
    $region25: #{decoder_layer_forward.39} parent=1 // pred_fallthru
      _
    // Predicated region
    $region26: #{decoder_layer_forward.39} parent=1 // pred_check
      _
    $region27: #{decoder_layer_forward.39} parent=1 // pred_check_branch
      %26 = sbr.rel (0) target = $region29
    $region28: #{decoder_layer_forward.39} parent=1 // pred_region
      _
    $region29: #{decoder_layer_forward.39} parent=1 // pred_fallthru
      _
    %p28 = scmp.eq.s32.totalorder 0, 0
    // Predicated region
    $region30: #{decoder_layer_forward.39} parent=1 // pred_check
      %p29 = pneg %p28
    $region31: #{decoder_layer_forward.39} parent=1 // pred_check_branch
      %31 = sbr.rel (%p29) target = $region33
    $region32: #{decoder_layer_forward.39} parent=1 // pred_region
      %v32 = vld [vmem:[%s0] sm:$0xff]
      %v33 = vld [vmem:[%s0 + $0x8] sm:$0xff]
      %vm34 = vcmask 261120
      %v35 = vsel %vm34, %v32, 0.0
      %36 = vadd.xlane.f32.xlu0 %v35
      %v37 = vpop.xlane.xlu0 %36
      %v38 = vsel %vm34, %v33, 0.0
      %39 = vadd.xlane.f32.xlu0 %v38
      %v40 = vpop.xlane.xlu0 %39
      %v41 = vrcp.pop 32.0
      %v42 = vmul.f32 %v37, %v41
      %v43 = vmul.f32 %v40, %v41
      %v44 = vsub.f32 %v32, %v42
      %v45 = vsub.f32 %v33, %v43
      %v46 = vmul.f32 %v44, %v44
      %v47 = vmul.f32 %v45, %v45
      %v48 = vsel %vm34, %v46, 0.0
      %49 = vadd.xlane.f32.xlu0 %v48
      %v50 = vpop.xlane.xlu0 %49
      %v51 = vsel %vm34, %v47, 0.0
      %52 = vadd.xlane.f32.xlu0 %v51
      %v53 = vpop.xlane.xlu0 %52
      %v54 = vrcp.pop 31.0
      %v55 = vmul.f32 %v50, %v54
      %v56 = vmul.f32 %v53, %v54
      %v57 = vld [vmem:[%s1] sm:$0x1]
      %v59 = vlaneseq
      %v60 = vshrl.u32 %v59, 7
      %v61 = vsub.s32 0, %v60
      %v62 = vrot.slane %v57, %v61
      %v64 = vmul.f32 %v62, %v44
      %v65 = vmul.f32 %v62, %v45
      %v66 = vrsqrt.pop %v55
      %v67 = vmul.f32 %v55, %v66
      %vm68 = vcmp.eq.f32.partialorder %v55, inf
      %v69 = vsel %vm68, %v55, %v67
      %vm70 = vcmp.eq.f32.partialorder %v55, 0.0
      %v71 = vand.u32 %v55, 2147483648
      %v72 = vsel %vm70, %v71, %v69
      %v73 = vrsqrt.pop %v56
      %v74 = vmul.f32 %v56, %v73
      %vm75 = vcmp.eq.f32.partialorder %v56, inf
      %v76 = vsel %vm75, %v56, %v74
      %vm77 = vcmp.eq.f32.partialorder %v56, 0.0
      %v78 = vand.u32 %v56, 2147483648
      %v79 = vsel %vm77, %v78, %v76
      %v80 = vadd.f32 %v72, 1e-06
      %v81 = vadd.f32 %v79, 1e-06
      %v82 = vrcp.pop %v80
      %v83 = vmul.f32 %v64, %v82
      %v84 = vrcp.pop %v81
      %v85 = vmul.f32 %v65, %v84
      %v86 = vld [vmem:[%s2] sm:$0x1]
      %v88 = vlaneseq
      %v89 = vshrl.u32 %v88, 7
      %v90 = vsub.s32 0, %v89
      %v91 = vrot.slane %v86, %v90
      %v93 = vadd.f32 %v83, %v91
      %v94 = vadd.f32 %v85, %v91
      %v95 = vpack.c.bf16 %v94, %v93
      %96 = vst.msk [vmem:[#allocation2] sm:$0xff] %vm34, %v95
      %97 = vst.msk [vmem:[#allocation3] sm:$0xff] %vm34, 0.0
      %98 = vst.msk [vmem:[#allocation3 + $0x8] sm:$0xff] %vm34, 0.0
    $region33: #{decoder_layer_forward.39} parent=1 // pred_fallthru
      _
    %v99 = vld [vmem:[#allocation2] sm:$0xff]
    %v100 = vld [vmem:[%s3] sm:$0xf]
    %v101 = vld [vmem:[%s3 + $0x4] sm:$0xf]
    %v102 = vld [vmem:[%s3 + $0x8] sm:$0xf]
    %v103 = vld [vmem:[%s3 + $0xc] sm:$0xf]
    %v104 = vld [vmem:[%s4] sm:$0x1]
    %v106 = vlaneseq
    %v107 = vshrl.u32 %v106, 7
    %v108 = vsub.s32 0, %v107
    %v109 = vrot.slane %v104, %v108
    %v115 = vunpack.c.l.b16 %v100
    %v116 = vunpack.c.l.b16 %v101
    %v117 = vunpack.c.l.b16 %v102
    %v118 = vunpack.c.l.b16 %v103
    %v119 = vpack.c.b16 %v116, %v115
    %v120 = vpack.c.b16 %v118, %v117
    %vm123 = vcmask 261120
    %v125 = vsel %vm123, %v99, 0
    %127 = vmatprep.subr.bf16.mxu0 0
    %128 = vmatpush1.bf16.msra.mxu0 %v119
    %129 = vmatprep.subr.bf16.mxu0 0
    %130 = vmatpush1.bf16.msra.mxu0 %v120
    %131 = vmatprep.subr.bf16.mxu0 0
    %132 = vmatpush1.bf16.msra.mxu0 0
    %133 = vmatprep.subr.bf16.mxu0 0
    %134 = vmatpush1.bf16.msra.mxu0 0
    %135 = vmatprep.subr.bf16.mxu0 0
    %136 = vmatpush1.bf16.msra.mxu0 0
    %137 = vmatprep.subr.bf16.mxu0 0
    %138 = vmatpush1.bf16.msra.mxu0 0
    %139 = vmatprep.subr.bf16.mxu0 0
    %140 = vmatpush1.bf16.msra.mxu0 0
    %141 = vmatprep.subr.bf16.mxu0 0
    %142 = vmatpush1.bf16.msra.mxu0 0
    %143 = vmatprep.subr.bf16.mxu0 0
    %144 = vmatpush1.bf16.msra.mxu0 0
    %145 = vmatprep.subr.bf16.mxu0 0
    %146 = vmatpush1.bf16.msra.mxu0 0
    %147 = vmatprep.subr.bf16.mxu0 0
    %148 = vmatpush1.bf16.msra.mxu0 0
    %149 = vmatprep.subr.bf16.mxu0 0
    %150 = vmatpush1.bf16.msra.mxu0 0
    %151 = vmatprep.subr.bf16.mxu0 0
    %152 = vmatpush1.bf16.msra.mxu0 0
    %153 = vmatprep.subr.bf16.mxu0 0
    %154 = vmatpush1.bf16.msra.mxu0 0
    %155 = vmatprep.subr.bf16.mxu0 0
    %156 = vmatpush1.bf16.msra.mxu0 0
    %157 = vmatprep.subr.bf16.mxu0 0
    %158 = vmatpush1.bf16.msra.mxu0 0
    %159 = vmatprep.mubr.bf16.mxu0 0
    %160 = vmatmul.mubr.bf16.gmra.mrb[0].mxu0 %v125
    %v161 = vpop.f32.mrb[0].mxu0
    %v162 = vadd.f32 %v109, %v161
    %v163 = vpop.f32.mrb[0].mxu0
    %v164 = vpop.f32.mrb[0].mxu0
    %v165 = vadd.f32 %v109, %v164
    %v166 = vpop.f32.mrb[0].mxu0
    %167 = vdwg.mxu0
    %v168 = vxor.u32 %v162, 2147483648
    %v169 = vxor.u32 %v165, 2147483648
    %v170 = vmul.f32 %v168, 1.442695
    %v171 = vpow.pop %v170
    %v172 = vmul.f32 %v169, 1.442695
    %v173 = vpow.pop %v172
    %v174 = vadd.f32 %v171, 1.0
    %v175 = vadd.f32 %v173, 1.0
    %v176 = vrcp.pop %v174
    %v177 = vmul.f32 1.0, %v176
    %v178 = vrcp.pop %v175
    %v179 = vmul.f32 1.0, %v178
    %v180 = vmul.f32 %v162, %v177
    %v181 = vmul.f32 %v165, %v179
    %v182 = vld [vmem:[#allocation3] sm:$0xff]
    %v183 = vld [vmem:[#allocation3 + $0x8] sm:$0xff]
    %v184 = vpack.c.bf16 %v181, %v180
    %v185 = vld [vmem:[%s5] sm:$0xf]
    %v186 = vld [vmem:[%s5 + $0x4] sm:$0xf]
    %v187 = vld [vmem:[%s5 + $0x8] sm:$0xf]
    %v188 = vld [vmem:[%s5 + $0xc] sm:$0xf]
    %v189 = vld [vmem:[%s5 + $0x10] sm:$0xf]
    %v190 = vld [vmem:[%s5 + $0x14] sm:$0xf]
    %v191 = vld [vmem:[%s5 + $0x18] sm:$0xf]
    %v192 = vld [vmem:[%s5 + $0x1c] sm:$0xf]
    %v201 = vunpack.c.l.b16 %v185
    %v202 = vunpack.c.l.b16 %v186
    %v203 = vunpack.c.l.b16 %v187
    %v204 = vunpack.c.l.b16 %v188
    %v205 = vunpack.c.l.b16 %v189
    %v206 = vunpack.c.l.b16 %v190
    %v207 = vunpack.c.l.b16 %v191
    %v208 = vunpack.c.l.b16 %v192
    %v209 = vpack.c.b16 %v202, %v201
    %v210 = vpack.c.b16 %v204, %v203
    %v211 = vpack.c.b16 %v206, %v205
    %v212 = vpack.c.b16 %v208, %v207
    %vm217 = vcmask 523264
    %v219 = vsel %vm217, %v184, 0
    %221 = vmatprep.subr.bf16.mxu0 0
    %222 = vmatpush1.bf16.msra.mxu0 %v209
    %223 = vmatprep.subr.bf16.mxu0 0
    %224 = vmatpush1.bf16.msra.mxu0 %v210
    %225 = vmatprep.subr.bf16.mxu0 0
    %226 = vmatpush1.bf16.msra.mxu0 %v211
    %227 = vmatprep.subr.bf16.mxu0 0
    %228 = vmatpush1.bf16.msra.mxu0 %v212
    %229 = vmatprep.subr.bf16.mxu0 0
    %230 = vmatpush1.bf16.msra.mxu0 0
    %231 = vmatprep.subr.bf16.mxu0 0
    %232 = vmatpush1.bf16.msra.mxu0 0
    %233 = vmatprep.subr.bf16.mxu0 0
    %234 = vmatpush1.bf16.msra.mxu0 0
    %235 = vmatprep.subr.bf16.mxu0 0
    %236 = vmatpush1.bf16.msra.mxu0 0
    %237 = vmatprep.subr.bf16.mxu0 0
    %238 = vmatpush1.bf16.msra.mxu0 0
    %239 = vmatprep.subr.bf16.mxu0 0
    %240 = vmatpush1.bf16.msra.mxu0 0
    %241 = vmatprep.subr.bf16.mxu0 0
    %242 = vmatpush1.bf16.msra.mxu0 0
    %243 = vmatprep.subr.bf16.mxu0 0
    %244 = vmatpush1.bf16.msra.mxu0 0
    %245 = vmatprep.subr.bf16.mxu0 0
    %246 = vmatpush1.bf16.msra.mxu0 0
    %247 = vmatprep.subr.bf16.mxu0 0
    %248 = vmatpush1.bf16.msra.mxu0 0
    %249 = vmatprep.subr.bf16.mxu0 0
    %250 = vmatpush1.bf16.msra.mxu0 0
    %251 = vmatprep.subr.bf16.mxu0 0
    %252 = vmatpush1.bf16.msra.mxu0 0
    %253 = vmatprep.mubr.bf16.mxu0 0
    %254 = vmatmul.mubr.bf16.gmra.mrb[0].mxu0 %v219
    %v255 = vpop.f32.mrb[0].mxu0
    %v256 = vadd.f32 0.0, %v255
    %v257 = vpop.f32.mrb[0].mxu0
    %v258 = vpop.f32.mrb[0].mxu0
    %v259 = vadd.f32 0.0, %v258
    %v260 = vpop.f32.mrb[0].mxu0
    %261 = vdwg.mxu0
    %v262 = vadd.f32 %v182, %v256
    %v263 = vadd.f32 %v183, %v259
    %264 = vst.msk [vmem:[#allocation3] sm:$0xff] %vm123, %v262
    %265 = vst.msk [vmem:[#allocation3 + $0x8] sm:$0xff] %vm123, %v263
    // Predicated region
    $region34: #{decoder_layer_forward.39} parent=1 // pred_check
      %p266 = pneg %p28
    $region35: #{decoder_layer_forward.39} parent=1 // pred_check_branch
      %268 = sbr.rel (%p266) target = $region37
    $region36: #{decoder_layer_forward.39} parent=1 // pred_region
      %v269 = vld [vmem:[#allocation3] sm:$0xff]
      %v270 = vld [vmem:[#allocation3 + $0x8] sm:$0xff]
      %v271 = vld [vmem:[%s6] sm:$0x1]
      %v273 = vlaneseq
      %v274 = vshrl.u32 %v273, 7
      %v275 = vsub.s32 0, %v274
      %v276 = vrot.slane %v271, %v275
      %v278 = vadd.f32 %v269, %v276
      %v279 = vadd.f32 %v270, %v276
      %v280 = vld [vmem:[%s0] sm:$0xff]
      %v281 = vld [vmem:[%s0 + $0x8] sm:$0xff]
      %v282 = vadd.f32 %v278, %v280
      %v283 = vadd.f32 %v279, %v281
      %284 = vst.msk [vmem:[#allocation4] sm:$0xff] %vm123, %v282
      %285 = vst.msk [vmem:[#allocation4 + $0x8] sm:$0xff] %vm123, %v283
    $region37: #{decoder_layer_forward.39} parent=1 // pred_fallthru
      _
    // Predicated region
    $region38: #{decoder_layer_forward.39} parent=1 // pred_check
      _
    $region39: #{decoder_layer_forward.39} parent=1 // pred_check_branch
      %287 = sbr.rel (0) target = $region41
    $region40: #{decoder_layer_forward.39} parent=1 // pred_region
      %s289 = ssub.s32 256, 256
      %290 = vsyncadd [#allocation5], %s289
      %s291 = sshll.u32 [#allocation4], 4
      %s292 = int_to_ptr.vmem [resolvable:$true] %s291
      %297 = dma.vmem_to_hbm [thread:$0]  %s292, 256, %s7, [#allocation5], 128, 128, 8
    $region41: #{decoder_layer_forward.39} parent=1 // pred_fallthru
      _
    // Predicated region
    $region42: #{decoder_layer_forward.39} parent=1 // pred_check
      _
    $region43: #{decoder_layer_forward.39} parent=1 // pred_check_branch
      %299 = sbr.rel (0) target = $region45
    $region44: #{decoder_layer_forward.39} parent=1 // pred_region
      %300 = dma.done [#allocation5], 256
    $region45: #{decoder_layer_forward.39} parent=1 // pred_fallthru
      _
    %301 = vsyncpa [#allocation5], 1

// kernel: decoder_layer_forward.33
$region0: #{decoder_layer_forward.33}
  #allocation0 [shape = 'u32[]', space=smem, size = 0x4, offset = 0x4, fixed_abs, tag = 'smem constant byte address 0x4 - core index']
  #allocation1 [shape = 'u32[144,128]{1,0:T(1,128)}', space=vmem, size = 0x12000, scoped, tag = 'internal scratch']
  #allocation2 [shape = 'f32[2,8,1]{2,1,0:T(8,128)}', space=vmem, size = 0x2000, scoped, tag = 'scratch operand']
  #allocation3 [shape = 'f32[2,8,1]{2,1,0:T(8,128)}', space=vmem, size = 0x2000, scoped, tag = 'scratch operand']
  #allocation4 [shape = 'f32[2,8,16]{2,1,0:T(8,128)}', space=vmem, size = 0x2000, scoped, tag = 'scratch operand']
  %s0 = inlined_call_operand.vmem [shape: bf16[2,8,32], index: 0, kind: input, shape index: {}]
  %s1 = inlined_call_operand.vmem [shape: bf16[2,8,32], index: 1, kind: input, shape index: {}]
  %s2 = inlined_call_operand.vmem [shape: bf16[2,8,32], index: 2, kind: input, shape index: {}]
  %s3 = inlined_call_operand.vmem [shape: f32[2,8,8], index: 3, kind: input, shape index: {}]
  %s4 = inlined_call_operand.vmem [shape: bf16[2,8,32], index: 4, kind: output, shape index: {}]
  %s5 = sld [smem:[#allocation0]]
  $region57: #{decoder_layer_forward.33} parent=0
    _
  %s7 = ssub.s32 1, %s5
  %s8 = scalar_select 0, %s7, %s5
  loop: start=0, step=1, limit=4
  $region2: #{decoder_layer_forward.33} parent=0 // loop_pre_header
    _
  $region3: #{decoder_layer_forward.33} parent=0 // loop_header
    %s10 = sphi 0, %s14
    %p11 = scmp.ge.s32.totalorder %s10, 4
    %s17 = sphi 0, %s36
    %s18 = sphi 0, %s32
    %s19 = sphi 0, %s28
    %s20 = sphi 0, %s17
    %s21 = sphi 0, %s18
    %s22 = sphi 0, %s19
    %s23 = sphi 0, %s20
    %s24 = sphi 0, %s21
    %s25 = sphi 0, %s22
    %s41 = sphi 0, %s43
    %s44 = sphi 0, %s41
    %s45 = sphi 0, %s44
    %s61 = sphi 0, %s45
    %s69 = sphi 0, %s71
    %s72 = sphi 0, %s69
    %s73 = sphi 0, %s72
    %s89 = sphi 0, %s73
    %s97 = sphi 0, %s99
    %s100 = sphi 0, %s97
    %s101 = sphi 0, %s100
    %s117 = sphi 0, %s101
    %s127 = sphi 0, %s129
    %s130 = sphi 0, %s127
    %s131 = sphi 0, %s130
    %s147 = sphi 0, %s131
    %s155 = sphi 0, %s157
    %s158 = sphi 0, %s155
    %s159 = sphi 0, %s158
    %s175 = sphi 0, %s159
  $region4: #{decoder_layer_forward.33} parent=0 // loop_header_branch
    %13 = sbr.rel (%p11) target = $region8
  $region5: #{decoder_layer_forward.33} parent=0 // loop_body
    %s15 = ssub.s32 %s10, 1
    %s16 = ssub.s32 %s10, 2
    %s26 = sadd.s32 1, %s19
    %p27 = scmp.ge.s32.totalorder %s26, 1
    %s28 = scalar_select %p27, 0, %s26
    %s29 = sadd.s32 1, %s18
    %s30 = scalar_select %p27, %s29, %s18
    %p31 = scmp.ge.s32.totalorder %s30, 1
    %s32 = scalar_select %p31, 0, %s30
    %s33 = sadd.s32 1, %s17
    %s34 = scalar_select %p31, %s33, %s17
    %p35 = scmp.ge.s32.totalorder %s34, 2
    %s36 = scalar_select %p35, 0, %s34
    %s37 = ssub.s32 %s17, %s36
    %s38 = ssub.s32 %s18, %s32
    %s39 = sor.u32 %s37, %s38
    %p40 = scmp.eq.s32.totalorder %s39, 0
    %s42 = sadd.s32 %s41, 1
    %s43 = scalar_select %p40, %s41, %s42
    %p46 = pneg %p40
    %p47 = scmp.eq.s32.totalorder %s10, 1
    %p48 = por %p46, %p47
    %p49 = scmp.ne.s32.totalorder %s41, %s44
    %p50 = scmp.eq.s32.totalorder %s10, 0
    %p51 = por %p49, %p50
    %p52 = scmp.ne.s32.totalorder %s41, %s44
    %p53 = scmp.eq.s32.totalorder %s15, 1
    %p54 = por %p52, %p53
    %p55 = scmp.ne.s32.totalorder %s44, %s45
    %p56 = scmp.eq.s32.totalorder %s15, 0
    %p57 = por %p55, %p56
    %p58 = scmp.ne.s32.totalorder %s44, %s45
    %p59 = scmp.eq.s32.totalorder %s16, 1
    %p60 = por %p58, %p59
    %p62 = scmp.ne.s32.totalorder %s45, %s61
    %p63 = scmp.eq.s32.totalorder %s16, 0
    %p64 = por %p62, %p63
    %s65 = ssub.s32 %s17, %s36
    %s66 = ssub.s32 %s19, %s28
    %s67 = sor.u32 %s65, %s66
    %p68 = scmp.eq.s32.totalorder %s67, 0
    %s70 = sadd.s32 %s69, 1
    %s71 = scalar_select %p68, %s69, %s70
    %p74 = pneg %p68
    %p75 = scmp.eq.s32.totalorder %s10, 1
    %p76 = por %p74, %p75
    %p77 = scmp.ne.s32.totalorder %s69, %s72
    %p78 = scmp.eq.s32.totalorder %s10, 0
    %p79 = por %p77, %p78
    %p80 = scmp.ne.s32.totalorder %s69, %s72
    %p81 = scmp.eq.s32.totalorder %s15, 1
    %p82 = por %p80, %p81
    %p83 = scmp.ne.s32.totalorder %s72, %s73
    %p84 = scmp.eq.s32.totalorder %s15, 0
    %p85 = por %p83, %p84
    %p86 = scmp.ne.s32.totalorder %s72, %s73
    %p87 = scmp.eq.s32.totalorder %s16, 1
    %p88 = por %p86, %p87
    %p90 = scmp.ne.s32.totalorder %s73, %s89
    %p91 = scmp.eq.s32.totalorder %s16, 0
    %p92 = por %p90, %p91
    %s93 = ssub.s32 %s17, %s36
    %s94 = ssub.s32 %s19, %s28
    %s95 = sor.u32 %s93, %s94
    %p96 = scmp.eq.s32.totalorder %s95, 0
    %s98 = sadd.s32 %s97, 1
    %s99 = scalar_select %p96, %s97, %s98
    %p102 = pneg %p96
    %p103 = scmp.eq.s32.totalorder %s10, 1
    %p104 = por %p102, %p103
    %p105 = scmp.ne.s32.totalorder %s97, %s100
    %p106 = scmp.eq.s32.totalorder %s10, 0
    %p107 = por %p105, %p106
    %p108 = scmp.ne.s32.totalorder %s97, %s100
    %p109 = scmp.eq.s32.totalorder %s15, 1
    %p110 = por %p108, %p109
    %p111 = scmp.ne.s32.totalorder %s100, %s101
    %p112 = scmp.eq.s32.totalorder %s15, 0
    %p113 = por %p111, %p112
    %p114 = scmp.ne.s32.totalorder %s100, %s101
    %p115 = scmp.eq.s32.totalorder %s16, 1
    %p116 = por %p114, %p115
    %p118 = scmp.ne.s32.totalorder %s101, %s117
    %p119 = scmp.eq.s32.totalorder %s16, 0
    %p120 = por %p118, %p119
    %s121 = ssub.s32 %s17, %s36
    %s122 = ssub.s32 %s18, %s32
    %s123 = sor.u32 %s121, %s122
    %s124 = ssub.s32 %s19, %s28
    %s125 = sor.u32 %s123, %s124
    %p126 = scmp.eq.s32.totalorder %s125, 0
    %s128 = sadd.s32 %s127, 1
    %s129 = scalar_select %p126, %s127, %s128
    %p132 = pneg %p126
    %p133 = scmp.eq.s32.totalorder %s10, 1
    %p134 = por %p132, %p133
    %p135 = scmp.ne.s32.totalorder %s127, %s130
    %p136 = scmp.eq.s32.totalorder %s10, 0
    %p137 = por %p135, %p136
    %p138 = scmp.ne.s32.totalorder %s127, %s130
    %p139 = scmp.eq.s32.totalorder %s15, 1
    %p140 = por %p138, %p139
    %p141 = scmp.ne.s32.totalorder %s130, %s131
    %p142 = scmp.eq.s32.totalorder %s15, 0
    %p143 = por %p141, %p142
    %p144 = scmp.ne.s32.totalorder %s130, %s131
    %p145 = scmp.eq.s32.totalorder %s16, 1
    %p146 = por %p144, %p145
    %p148 = scmp.ne.s32.totalorder %s131, %s147
    %p149 = scmp.eq.s32.totalorder %s16, 0
    %p150 = por %p148, %p149
    %s151 = ssub.s32 %s17, %s36
    %s152 = ssub.s32 %s18, %s32
    %s153 = sor.u32 %s151, %s152
    %p154 = scmp.eq.s32.totalorder %s153, 0
    %s156 = sadd.s32 %s155, 1
    %s157 = scalar_select %p154, %s155, %s156
    %p160 = pneg %p154
    %p161 = scmp.eq.s32.totalorder %s10, 1
    %p162 = por %p160, %p161
    %p163 = scmp.ne.s32.totalorder %s155, %s158
    %p164 = scmp.eq.s32.totalorder %s10, 0
    %p165 = por %p163, %p164
    %p166 = scmp.ne.s32.totalorder %s155, %s158
    %p167 = scmp.eq.s32.totalorder %s15, 1
    %p168 = por %p166, %p167
    %p169 = scmp.ne.s32.totalorder %s158, %s159
    %p170 = scmp.eq.s32.totalorder %s15, 0
    %p171 = por %p169, %p170
    %p172 = scmp.ne.s32.totalorder %s158, %s159
    %p173 = scmp.eq.s32.totalorder %s16, 1
    %p174 = por %p172, %p173
    %p176 = scmp.ne.s32.totalorder %s159, %s175
    %p177 = scmp.eq.s32.totalorder %s16, 0
    %p178 = por %p176, %p177
    %p179 = scmp.le.s32.totalorder 1, %s10
    %p180 = scmp.lt.s32.totalorder %s10, 3
    %p181 = pnand %p179, %p180
    %p182 = pneg %p181
    // Predicated region
    $region9: #{decoder_layer_forward.33} parent=5 // pred_check
      _
    $region10: #{decoder_layer_forward.33} parent=5 // pred_check_branch
      %184 = sbr.rel (%p181) target = $region12
    $region11: #{decoder_layer_forward.33} parent=5 // pred_region
      %s185 = ssub.s32 %s10, 1
    $region12: #{decoder_layer_forward.33} parent=5 // pred_fallthru
      _
    %p186 = scmp.lt.s32.totalorder %s10, 2
    // Predicated region
    $region13: #{decoder_layer_forward.33} parent=5 // pred_check
      %p187 = pneg %p186
    $region14: #{decoder_layer_forward.33} parent=5 // pred_check_branch
      %189 = sbr.rel (%p187) target = $region16
    $region15: #{decoder_layer_forward.33} parent=5 // pred_region
      // Predicated region
      $region17: #{decoder_layer_forward.33} parent=15 // pred_check
        %p190 = pneg %p51
      $region18: #{decoder_layer_forward.33} parent=15 // pred_check_branch
        %192 = sbr.rel (%p190) target = $region20
      $region19: #{decoder_layer_forward.33} parent=15 // pred_region
        %p193 = scmp.lt.s32.totalorder %s17, 1
        %s194 = scalar_select %p193, %s17, 1
        %p195 = scmp.lt.s32.totalorder %s18, 0
        %s196 = scalar_select %p195, %s18, 0
        %s197 = sadd.s32 %s196, %s194
        %s198 = smul.addr %s197, 4
        %s199 = scalar_lea.vmem %s0, %s198
      $region20: #{decoder_layer_forward.33} parent=15 // pred_fallthru
        _
      // Predicated region
      $region21: #{decoder_layer_forward.33} parent=15 // pred_check
        %p200 = pneg %p79
      $region22: #{decoder_layer_forward.33} parent=15 // pred_check_branch
        %202 = sbr.rel (%p200) target = $region24
      $region23: #{decoder_layer_forward.33} parent=15 // pred_region
        %p203 = scmp.lt.s32.totalorder %s17, 1
        %s204 = scalar_select %p203, %s17, 1
        %p205 = scmp.lt.s32.totalorder %s19, 0
        %s206 = scalar_select %p205, %s19, 0
        %s207 = sadd.s32 %s206, %s204
        %s208 = smul.addr %s207, 4
        %s209 = scalar_lea.vmem %s1, %s208
      $region24: #{decoder_layer_forward.33} parent=15 // pred_fallthru
        _
      // Predicated region
      $region25: #{decoder_layer_forward.33} parent=15 // pred_check
        %p210 = pneg %p107
      $region26: #{decoder_layer_forward.33} parent=15 // pred_check_branch
        %212 = sbr.rel (%p210) target = $region28
      $region27: #{decoder_layer_forward.33} parent=15 // pred_region
        %p213 = scmp.lt.s32.totalorder %s17, 1
        %s214 = scalar_select %p213, %s17, 1
        %p215 = scmp.lt.s32.totalorder %s19, 0
        %s216 = scalar_select %p215, %s19, 0
        %s217 = sadd.s32 %s216, %s214
        %s218 = smul.addr %s217, 4
        %s219 = scalar_lea.vmem %s2, %s218
      $region28: #{decoder_layer_forward.33} parent=15 // pred_fallthru
        _
      // Predicated region
      $region29: #{decoder_layer_forward.33} parent=15 // pred_check
        %p220 = pneg %p137
      $region30: #{decoder_layer_forward.33} parent=15 // pred_check_branch
        %222 = sbr.rel (%p220) target = $region32
      $region31: #{decoder_layer_forward.33} parent=15 // pred_region
        %p223 = scmp.lt.s32.totalorder %s17, 1
        %s224 = scalar_select %p223, %s17, 1
        %p225 = scmp.lt.s32.totalorder %s18, 0
        %s226 = scalar_select %p225, %s18, 0
        %p227 = scmp.lt.s32.totalorder %s19, 0
        %s228 = scalar_select %p227, %s19, 0
        %s229 = sadd.s32 %s228, %s226
        %s230 = sadd.s32 %s229, %s224
        %s231 = smul.addr %s230, 8
        %s232 = scalar_lea.vmem %s3, %s231
      $region32: #{decoder_layer_forward.33} parent=15 // pred_fallthru
        _
    $region16: #{decoder_layer_forward.33} parent=5 // pred_fallthru
      _
    %p233 = scmp.le.s32.totalorder 1, %s10
    %p234 = scmp.lt.s32.totalorder %s10, 3
    %p235 = pnand %p233, %p234
    %p236 = pneg %p235
    // Predicated region
    $region33: #{decoder_layer_forward.33} parent=5 // pred_check
      _
    $region34: #{decoder_layer_forward.33} parent=5 // pred_check_branch
      %238 = sbr.rel (%p235) target = $region36
    $region35: #{decoder_layer_forward.33} parent=5 // pred_region
      %s239 = ssub.s32 %s10, 1
      %p240 = scmp.lt.s32.totalorder %s20, 1
      %s241 = scalar_select %p240, %s20, 1
      %p242 = scmp.lt.s32.totalorder %s21, 0
      %s243 = scalar_select %p242, %s21, 0
      %s244 = sadd.s32 %s243, %s241
      %s245 = smul.addr %s244, 4
      %s246 = scalar_lea.vmem %s0, %s245
      %p247 = pneg %p57
      %p248 = pneg %p54
      %p249 = scmp.lt.s32.totalorder %s20, 1
      %s250 = scalar_select %p249, %s20, 1
      %p251 = scmp.lt.s32.totalorder %s22, 0
      %s252 = scalar_select %p251, %s22, 0
      %s253 = sadd.s32 %s252, %s250
      %s254 = smul.addr %s253, 4
      %s255 = scalar_lea.vmem %s1, %s254
      %p256 = pneg %p85
      %p257 = pneg %p82
      %p258 = scmp.lt.s32.totalorder %s20, 1
      %s259 = scalar_select %p258, %s20, 1
      %p260 = scmp.lt.s32.totalorder %s22, 0
      %s261 = scalar_select %p260, %s22, 0
      %s262 = sadd.s32 %s261, %s259
      %s263 = smul.addr %s262, 4
      %s264 = scalar_lea.vmem %s2, %s263
      %p265 = pneg %p113
      %p266 = pneg %p110
      %p267 = scmp.lt.s32.totalorder %s20, 1
      %s268 = scalar_select %p267, %s20, 1
      %p269 = scmp.lt.s32.totalorder %s21, 0
      %s270 = scalar_select %p269, %s21, 0
      %p271 = scmp.lt.s32.totalorder %s22, 0
      %s272 = scalar_select %p271, %s22, 0
      %s273 = sadd.s32 %s272, %s270
      %s274 = sadd.s32 %s273, %s268
      %s275 = smul.addr %s274, 8
      %s276 = scalar_lea.vmem %s3, %s275
      %p277 = pneg %p143
      %p278 = pneg %p140
      %p279 = pneg %p171
      %p280 = pneg %p168
      %p281 = scmp.lt.s32.totalorder %s20, 1
      %s282 = scalar_select %p281, %s20, 1
      %p283 = scmp.lt.s32.totalorder %s21, 0
      %s284 = scalar_select %p283, %s21, 0
      %s285 = sadd.s32 %s284, %s282
      %s286 = smul.addr %s285, 4
      %s287 = scalar_lea.vmem %s4, %s286
      %p288 = scmp.lt.s32.totalorder %s20, 1
      %s289 = scalar_select %p288, %s20, 1
      %p290 = scmp.lt.s32.totalorder %s21, 0
      %s291 = scalar_select %p290, %s21, 0
      %s292 = sadd.s32 %s291, %s289
      %s293 = smul.addr %s292, 4
      %s294 = scalar_lea.vmem %s0, %s293
      %p295 = scmp.lt.s32.totalorder %s20, 1
      %s296 = scalar_select %p295, %s20, 1
      %p297 = scmp.lt.s32.totalorder %s22, 0
      %s298 = scalar_select %p297, %s22, 0
      %s299 = sadd.s32 %s298, %s296
      %s300 = smul.addr %s299, 4
      %s301 = scalar_lea.vmem %s1, %s300
      %p302 = scmp.lt.s32.totalorder %s20, 1
      %s303 = scalar_select %p302, %s20, 1
      %p304 = scmp.lt.s32.totalorder %s22, 0
      %s305 = scalar_select %p304, %s22, 0
      %s306 = sadd.s32 %s305, %s303
      %s307 = smul.addr %s306, 4
      %s308 = scalar_lea.vmem %s2, %s307
      %p309 = scmp.lt.s32.totalorder %s20, 1
      %s310 = scalar_select %p309, %s20, 1
      %p311 = scmp.lt.s32.totalorder %s21, 0
      %s312 = scalar_select %p311, %s21, 0
      %p313 = scmp.lt.s32.totalorder %s22, 0
      %s314 = scalar_select %p313, %s22, 0
      %s315 = sadd.s32 %s314, %s312
      %s316 = sadd.s32 %s315, %s310
      %s317 = smul.addr %s316, 8
      %s318 = scalar_lea.vmem %s3, %s317
      %p319 = scmp.lt.s32.totalorder %s20, 1
      %s320 = scalar_select %p319, %s20, 1
      %p321 = scmp.lt.s32.totalorder %s21, 0
      %s322 = scalar_select %p321, %s21, 0
      %s323 = sadd.s32 %s322, %s320
      %s324 = smul.addr %s323, 4
      %s325 = scalar_lea.vmem %s4, %s324
      %p327 = scmp.eq.s32.totalorder %s22, 0
      // Predicated region
      $region37: #{decoder_layer_forward.33} parent=35 // pred_check
        %p328 = pneg %p327
      $region38: #{decoder_layer_forward.33} parent=35 // pred_check_branch
        %330 = sbr.rel (%p328) target = $region40
      $region39: #{decoder_layer_forward.33} parent=35 // pred_region
        %vm331 = vcmask 7168
        %332 = vst.msk [vmem:[#allocation2] sm:$0xff] %vm331, -inf
        %333 = vst.msk [vmem:[#allocation2 + $0x8] sm:$0xff] %vm331, -inf
        %334 = vst.msk [vmem:[#allocation3] sm:$0xff] %vm331, 0.0
        %335 = vst.msk [vmem:[#allocation3 + $0x8] sm:$0xff] %vm331, 0.0
        %vm336 = vcmask 130048
        %337 = vst.msk [vmem:[#allocation4] sm:$0xff] %vm336, 0.0
        %338 = vst.msk [vmem:[#allocation4 + $0x8] sm:$0xff] %vm336, 0.0
      $region40: #{decoder_layer_forward.33} parent=35 // pred_fallthru
        _
      %v339 = vld [vmem:[%s318] sm:$0xff]
      %v340 = vld [vmem:[%s294] sm:$0xf]
      %v341 = vld [vmem:[%s301] sm:$0xf]
      %v342 = vld [vmem:[%s308] sm:$0xf]
      %vm343 = vcmask 130048
      %v345 = vsel %vm343, %v340, 0
      %v348 = vsel %vm343, %v341, 0
      %350 = vmatprep.subr.bf16.mxu0 0
      %351 = vmatpush1.bf16.xpose.msra.mxu0 %v348
      %352 = vmatprep.subr.bf16.mxu0 0
      %353 = vmatpush1.bf16.xpose.msra.mxu0 0
      %354 = vmatprep.subr.bf16.mxu0 0
      %355 = vmatpush1.bf16.xpose.msra.mxu0 0
      %356 = vmatprep.subr.bf16.mxu0 0
      %357 = vmatpush1.bf16.xpose.msra.mxu0 0
      %358 = vmatprep.subr.bf16.mxu0 0
      %359 = vmatpush1.bf16.xpose.msra.mxu0 0
      %360 = vmatprep.subr.bf16.mxu0 0
      %361 = vmatpush1.bf16.xpose.msra.mxu0 0
      %362 = vmatprep.subr.bf16.mxu0 0
      %363 = vmatpush1.bf16.xpose.msra.mxu0 0
      %364 = vmatprep.subr.bf16.mxu0 0
      %365 = vmatpush1.bf16.xpose.msra.mxu0 0
      %366 = vmatprep.subr.bf16.mxu0 0
      %367 = vmatpush1.bf16.xpose.msra.mxu0 0
      %368 = vmatprep.subr.bf16.mxu0 0
      %369 = vmatpush1.bf16.xpose.msra.mxu0 0
      %370 = vmatprep.subr.bf16.mxu0 0
      %371 = vmatpush1.bf16.xpose.msra.mxu0 0
      %372 = vmatprep.subr.bf16.mxu0 0
      %373 = vmatpush1.bf16.xpose.msra.mxu0 0
      %374 = vmatprep.subr.bf16.mxu0 0
      %375 = vmatpush1.bf16.xpose.msra.mxu0 0
      %376 = vmatprep.subr.bf16.mxu0 0
      %377 = vmatpush1.bf16.xpose.msra.mxu0 0
      %378 = vmatprep.subr.bf16.mxu0 0
      %379 = vmatpush1.bf16.xpose.msra.mxu0 0
      %380 = vmatprep.subr.bf16.mxu0 0
      %381 = vmatpush1.bf16.xpose.msra.mxu0 0
      %382 = vmatprep.mubr.bf16.mxu0 0
      %383 = vmatmul.mubr.bf16.gmra.mrb[0].mxu0 %v345
      %v384 = vpop.f32.mrb[0].mxu0
      %v385 = vadd.f32 0.0, %v384
      %v386 = vpop.f32.mrb[0].mxu0
      %v387 = vpop.f32.mrb[0].mxu0
      %v388 = vpop.f32.mrb[0].mxu0
      %389 = vdwg.mxu0
      %v390 = vmul.f32 %v385, 0.25
      %vm391 = vcmp.eq.f32.partialorder %v339, 0.0
      %v392 = vsel %vm391, -1e+09, %v390
      %v393 = vld [vmem:[#allocation2] sm:$0xff]
      %vm394 = vcmask 64512
      %v395 = vsel %vm394, %v392, -inf
      %396 = vmax.xlane.f32.xlu0 %v395
      %v397 = vpop.xlane.xlu0 %396
      %v398 = vmax.f32 %v393, %v397
      %v399 = vsub.f32 %v393, %v398
      %v400 = vmul.f32 %v399, 1.442695
      %v401 = vpow.pop %v400
      %403 = vset.pattern.permute.xlu0 0
      %404 = vperm.xlu0 %403, %v398
      %v405 = vpop.permute.xlu0 %404
      %v407 = vsub.f32 %v392, %v405
      %v408 = vmul.f32 %v407, 1.442695
      %v409 = vpow.pop %v408
      %v410 = vld [vmem:[#allocation3] sm:$0xff]
      %v411 = vmul.f32 %v401, %v410
      %v412 = vsel %vm394, %v409, 0.0
      %413 = vadd.xlane.f32.xlu0 %v412
      %v414 = vpop.xlane.xlu0 %413
      %v415 = vadd.f32 %v411, %v414
      %vm416 = vcmask 7168
      %417 = vst.msk [vmem:[#allocation3] sm:$0xff] %vm416, %v415
      %v418 = vld [vmem:[#allocation4] sm:$0xff]
      %420 = vset.pattern.permute.xlu0 0
      %421 = vperm.xlu0 %420, %v401
      %v422 = vpop.permute.xlu0 %421
      %v424 = vmul.f32 %v422, %v418
      %v425 = vpack.c.bf16 %v409, %v409
      %v427 = vsel %vm394, %v425, 0
      %vm429 = vcmask 1043456
      %v431 = vsel %vm429, %v342, 0
      %433 = vmatprep.subr.bf16.mxu0 0
      %434 = vmatpush1.bf16.msra.mxu0 %v431
      %435 = vmatprep.subr.bf16.mxu0 0
      %436 = vmatpush1.bf16.msra.mxu0 0
      %437 = vmatprep.subr.bf16.mxu0 0
      %438 = vmatpush1.bf16.msra.mxu0 0
      %439 = vmatprep.subr.bf16.mxu0 0
      %440 = vmatpush1.bf16.msra.mxu0 0
      %441 = vmatprep.subr.bf16.mxu0 0
      %442 = vmatpush1.bf16.msra.mxu0 0
      %443 = vmatprep.subr.bf16.mxu0 0
      %444 = vmatpush1.bf16.msra.mxu0 0
      %445 = vmatprep.subr.bf16.mxu0 0
      %446 = vmatpush1.bf16.msra.mxu0 0
      %447 = vmatprep.subr.bf16.mxu0 0
      %448 = vmatpush1.bf16.msra.mxu0 0
      %449 = vmatprep.subr.bf16.mxu0 0
      %450 = vmatpush1.bf16.msra.mxu0 0
      %451 = vmatprep.subr.bf16.mxu0 0
      %452 = vmatpush1.bf16.msra.mxu0 0
      %453 = vmatprep.subr.bf16.mxu0 0
      %454 = vmatpush1.bf16.msra.mxu0 0
      %455 = vmatprep.subr.bf16.mxu0 0
      %456 = vmatpush1.bf16.msra.mxu0 0
      %457 = vmatprep.subr.bf16.mxu0 0
      %458 = vmatpush1.bf16.msra.mxu0 0
      %459 = vmatprep.subr.bf16.mxu0 0
      %460 = vmatpush1.bf16.msra.mxu0 0
      %461 = vmatprep.subr.bf16.mxu0 0
      %462 = vmatpush1.bf16.msra.mxu0 0
      %463 = vmatprep.subr.bf16.mxu0 0
      %464 = vmatpush1.bf16.msra.mxu0 0
      %465 = vmatprep.mubr.bf16.mxu0 0
      %466 = vmatmul.mubr.bf16.gmra.mrb[0].mxu0 %v427
      %v467 = vpop.f32.mrb[0].mxu0
      %v468 = vadd.f32 0.0, %v467
      %v469 = vpop.f32.mrb[0].mxu0
      %v470 = vpop.f32.mrb[0].mxu0
      %v471 = vpop.f32.mrb[0].mxu0
      %472 = vdwg.mxu0
      %v473 = vadd.f32 %v424, %v468
      %474 = vst.msk [vmem:[#allocation4] sm:$0xff] %vm343, %v473
      %475 = vst.msk [vmem:[#allocation2] sm:$0xff] %vm416, %v398
      %v476 = vld [vmem:[%s294] sm:$0xf]
      %v477 = vld [vmem:[%s301] sm:$0xf]
      %v478 = vld [vmem:[%s308] sm:$0xf]
      %v480 = vunpack.c.l.b16 %v476
      %v481 = vpack.c.b16 %v480, %v480
      %482 = vrot.lane.b32.xlu0 %v481, 112
      %v483 = vpop.permute.xlu0 %482
      %v485 = vunpack.c.l.b16 %v477
      %v486 = vpack.c.b16 %v485, %v485
      %487 = vrot.lane.b32.xlu0 %v486, 112
      %v488 = vpop.permute.xlu0 %487
      %v490 = vsel %vm343, %v483, 0
      %v493 = vsel %vm343, %v488, 0
      %495 = vmatprep.subr.bf16.mxu0 0
      %496 = vmatpush1.bf16.xpose.msra.mxu0 %v493
      %497 = vmatprep.subr.bf16.mxu0 0
      %498 = vmatpush1.bf16.xpose.msra.mxu0 0
      %499 = vmatprep.subr.bf16.mxu0 0
      %500 = vmatpush1.bf16.xpose.msra.mxu0 0
      %501 = vmatprep.subr.bf16.mxu0 0
      %502 = vmatpush1.bf16.xpose.msra.mxu0 0
      %503 = vmatprep.subr.bf16.mxu0 0
      %504 = vmatpush1.bf16.xpose.msra.mxu0 0
      %505 = vmatprep.subr.bf16.mxu0 0
      %506 = vmatpush1.bf16.xpose.msra.mxu0 0
      %507 = vmatprep.subr.bf16.mxu0 0
      %508 = vmatpush1.bf16.xpose.msra.mxu0 0
      %509 = vmatprep.subr.bf16.mxu0 0
      %510 = vmatpush1.bf16.xpose.msra.mxu0 0
      %511 = vmatprep.subr.bf16.mxu0 0
      %512 = vmatpush1.bf16.xpose.msra.mxu0 0
      %513 = vmatprep.subr.bf16.mxu0 0
      %514 = vmatpush1.bf16.xpose.msra.mxu0 0
      %515 = vmatprep.subr.bf16.mxu0 0
      %516 = vmatpush1.bf16.xpose.msra.mxu0 0
      %517 = vmatprep.subr.bf16.mxu0 0
      %518 = vmatpush1.bf16.xpose.msra.mxu0 0
      %519 = vmatprep.subr.bf16.mxu0 0
      %520 = vmatpush1.bf16.xpose.msra.mxu0 0
      %521 = vmatprep.subr.bf16.mxu0 0
      %522 = vmatpush1.bf16.xpose.msra.mxu0 0
      %523 = vmatprep.subr.bf16.mxu0 0
      %524 = vmatpush1.bf16.xpose.msra.mxu0 0
      %525 = vmatprep.subr.bf16.mxu0 0
      %526 = vmatpush1.bf16.xpose.msra.mxu0 0
      %527 = vmatprep.mubr.bf16.mxu0 0
      %528 = vmatmul.mubr.bf16.gmra.mrb[0].mxu0 %v490
      %v529 = vpop.f32.mrb[0].mxu0
      %v530 = vadd.f32 0.0, %v529
      %v531 = vpop.f32.mrb[0].mxu0
      %v532 = vpop.f32.mrb[0].mxu0
      %v533 = vpop.f32.mrb[0].mxu0
      %534 = vdwg.mxu0
      %v535 = vmul.f32 %v530, 0.25
      %v536 = vsel %vm391, -1e+09, %v535
      %s537 = scalar_lea.vmem [#allocation2], 8
      %v538 = vld [vmem:[%s537] sm:$0xff]
      %v539 = vsel %vm394, %v536, -inf
      %540 = vmax.xlane.f32.xlu0 %v539
      %v541 = vpop.xlane.xlu0 %540
      %v542 = vmax.f32 %v538, %v541
      %v543 = vsub.f32 %v538, %v542
      %v544 = vmul.f32 %v543, 1.442695
      %v545 = vpow.pop %v544
      %547 = vset.pattern.permute.xlu0 0
      %548 = vperm.xlu0 %547, %v542
      %v549 = vpop.permute.xlu0 %548
      %v551 = vsub.f32 %v536, %v549
      %v552 = vmul.f32 %v551, 1.442695
      %v553 = vpow.pop %v552
      %s554 = scalar_lea.vmem [#allocation3], 8
      %v555 = vld [vmem:[%s554] sm:$0xff]
      %v556 = vmul.f32 %v545, %v555
      %v557 = vsel %vm394, %v553, 0.0
      %558 = vadd.xlane.f32.xlu0 %v557
      %v559 = vpop.xlane.xlu0 %558
      %v560 = vadd.f32 %v556, %v559
      %561 = vst.msk [vmem:[%s554] sm:$0xff] %vm416, %v560
      %s562 = scalar_lea.vmem [#allocation4], 8
      %v563 = vld [vmem:[%s562] sm:$0xff]
      %565 = vset.pattern.permute.xlu0 0
      %566 = vperm.xlu0 %565, %v545
      %v567 = vpop.permute.xlu0 %566
      %v569 = vmul.f32 %v567, %v563
      %v570 = vpack.c.bf16 %v553, %v553
      %v572 = vunpack.c.l.b16 %v478
      %v573 = vpack.c.b16 %v572, %v572
      %574 = vrot.lane.b32.xlu0 %v573, 112
      %v575 = vpop.permute.xlu0 %574
      %v577 = vsel %vm394, %v570, 0
      %v580 = vsel %vm429, %v575, 0
      %582 = vmatprep.subr.bf16.mxu0 0
      %583 = vmatpush1.bf16.msra.mxu0 %v580
      %584 = vmatprep.subr.bf16.mxu0 0
      %585 = vmatpush1.bf16.msra.mxu0 0
      %586 = vmatprep.subr.bf16.mxu0 0
      %587 = vmatpush1.bf16.msra.mxu0 0
      %588 = vmatprep.subr.bf16.mxu0 0
      %589 = vmatpush1.bf16.msra.mxu0 0
      %590 = vmatprep.subr.bf16.mxu0 0
      %591 = vmatpush1.bf16.msra.mxu0 0
      %592 = vmatprep.subr.bf16.mxu0 0
      %593 = vmatpush1.bf16.msra.mxu0 0
      %594 = vmatprep.subr.bf16.mxu0 0
      %595 = vmatpush1.bf16.msra.mxu0 0
      %596 = vmatprep.subr.bf16.mxu0 0
      %597 = vmatpush1.bf16.msra.mxu0 0
      %598 = vmatprep.subr.bf16.mxu0 0
      %599 = vmatpush1.bf16.msra.mxu0 0
      %600 = vmatprep.subr.bf16.mxu0 0
      %601 = vmatpush1.bf16.msra.mxu0 0
      %602 = vmatprep.subr.bf16.mxu0 0
      %603 = vmatpush1.bf16.msra.mxu0 0
      %604 = vmatprep.subr.bf16.mxu0 0
      %605 = vmatpush1.bf16.msra.mxu0 0
      %606 = vmatprep.subr.bf16.mxu0 0
      %607 = vmatpush1.bf16.msra.mxu0 0
      %608 = vmatprep.subr.bf16.mxu0 0
      %609 = vmatpush1.bf16.msra.mxu0 0
      %610 = vmatprep.subr.bf16.mxu0 0
      %611 = vmatpush1.bf16.msra.mxu0 0
      %612 = vmatprep.subr.bf16.mxu0 0
      %613 = vmatpush1.bf16.msra.mxu0 0
      %614 = vmatprep.mubr.bf16.mxu0 0
      %615 = vmatmul.mubr.bf16.gmra.mrb[0].mxu0 %v577
      %v616 = vpop.f32.mrb[0].mxu0
      %v617 = vadd.f32 0.0, %v616
      %v618 = vpop.f32.mrb[0].mxu0
      %v619 = vpop.f32.mrb[0].mxu0
      %v620 = vpop.f32.mrb[0].mxu0
      %621 = vdwg.mxu0
      %v622 = vadd.f32 %v569, %v617
      %623 = vst.msk [vmem:[%s562] sm:$0xff] %vm343, %v622
      %624 = vst.msk [vmem:[%s537] sm:$0xff] %vm416, %v542
      // Predicated region
      $region41: #{decoder_layer_forward.33} parent=35 // pred_check
        %p625 = pneg %p327
      $region42: #{decoder_layer_forward.33} parent=35 // pred_check_branch
        %627 = sbr.rel (%p625) target = $region44
      $region43: #{decoder_layer_forward.33} parent=35 // pred_region
        %v628 = vld [vmem:[#allocation3] sm:$0xff]
        %v629 = vrcp.pop %v628
        %v630 = vld [vmem:[#allocation4] sm:$0xff]
        %632 = vset.pattern.permute.xlu0 0
        %633 = vperm.xlu0 %632, %v629
        %v634 = vpop.permute.xlu0 %633
        %v636 = vmul.f32 %v630, %v634
        %v637 = vpack.c.bf16 %v636, %v636
        %vm638 = vcmask 125952
        %639 = vst.msk [vmem:[%s325] sm:$0xf] %vm638, %v637
        %v640 = vld [vmem:[%s554] sm:$0xff]
        %v641 = vrcp.pop %v640
        %v642 = vld [vmem:[%s562] sm:$0xff]
        %644 = vset.pattern.permute.xlu0 0
        %645 = vperm.xlu0 %644, %v641
        %v646 = vpop.permute.xlu0 %645
        %v648 = vmul.f32 %v642, %v646
        %v649 = vpack.c.bf16 %v648, %v648
        %v651 = vunpack.c.l.b16 %v649
        %v652 = vpack.c.b16 %v651, %v651
        %653 = vrot.lane.b32.xlu0 %v652, 16
        %v654 = vpop.permute.xlu0 %653
        %vm656 = vcmask 257152
        %657 = vst.msk [vmem:[%s325] sm:$0xf] %vm656, %v654
      $region44: #{decoder_layer_forward.33} parent=35 // pred_fallthru
        _
      %p658 = scmp.lt.s32.totalorder %s20, 1
      %s659 = scalar_select %p658, %s20, 1
      %p660 = scmp.lt.s32.totalorder %s21, 0
      %s661 = scalar_select %p660, %s21, 0
      %s662 = sadd.s32 %s661, %s659
      %s663 = smul.addr %s662, 4
      %s664 = scalar_lea.vmem %s4, %s663
      // Predicated region
      $region45: #{decoder_layer_forward.33} parent=35 // pred_check
        %p665 = pneg %p168
      $region46: #{decoder_layer_forward.33} parent=35 // pred_check_branch
        %667 = sbr.rel (%p665) target = $region48
      $region47: #{decoder_layer_forward.33} parent=35 // pred_region
        _
      $region48: #{decoder_layer_forward.33} parent=35 // pred_fallthru
        _
    $region36: #{decoder_layer_forward.33} parent=5 // pred_fallthru
      _
    %p668 = scmp.le.s32.totalorder 2, %s10
    // Predicated region
    $region49: #{decoder_layer_forward.33} parent=5 // pred_check
      %p669 = pneg %p668
    $region50: #{decoder_layer_forward.33} parent=5 // pred_check_branch
      %671 = sbr.rel (%p669) target = $region52
    $region51: #{decoder_layer_forward.33} parent=5 // pred_region
      %s672 = ssub.s32 %s10, 2
      // Predicated region
      $region53: #{decoder_layer_forward.33} parent=51 // pred_check
        %p673 = pneg %p174
      $region54: #{decoder_layer_forward.33} parent=51 // pred_check_branch
        %675 = sbr.rel (%p673) target = $region56
      $region55: #{decoder_layer_forward.33} parent=51 // pred_region
        %p676 = scmp.lt.s32.totalorder %s23, 1
        %s677 = scalar_select %p676, %s23, 1
        %p678 = scmp.lt.s32.totalorder %s24, 0
        %s679 = scalar_select %p678, %s24, 0
        %s680 = sadd.s32 %s679, %s677
        %s681 = smul.addr %s680, 4
        %s682 = scalar_lea.vmem %s4, %s681
      $region56: #{decoder_layer_forward.33} parent=51 // pred_fallthru
        _
    $region52: #{decoder_layer_forward.33} parent=5 // pred_fallthru
      _
  $region6: #{decoder_layer_forward.33} parent=0 // loop_footer
    %s14 = sadd.s32 1, %s10
  $region7: #{decoder_layer_forward.33} parent=0 // loop_footer_branch
    %9 = sbr.rel target = $region3
  $region8: #{decoder_layer_forward.33} parent=0 // loop_exit
    _

</llo_original>
